<compile_context>
chip_gen: v7x
topology: tpu7x:2x2x1
jax: 0.10.0
libtpu: 0.0.40
codegen_flags: <defaults>
</compile_context>

<pallas_src>
import jax
import jax.numpy as jnp
from jax.experimental import pallas as pl
from jax.experimental.pallas import tpu as pltpu


# ---------------------------------------------------------------------------
# Stage 1: batched input projection (gate-separated, biases folded)
# ---------------------------------------------------------------------------
def gate_proj_kernel(x_ref, wr_ref, wz_ref, wn_ref, br_ref, bz_ref, bn_ref,
                     gr_ref, gz_ref, gn_ref):
    x = x_ref[...]
    gr_ref[...] = (jnp.dot(x, wr_ref[...], preferred_element_type=jnp.float32)
                   + br_ref[...]).astype(gr_ref.dtype)
    gz_ref[...] = (jnp.dot(x, wz_ref[...], preferred_element_type=jnp.float32)
                   + bz_ref[...]).astype(gz_ref.dtype)
    gn_ref[...] = (jnp.dot(x, wn_ref[...], preferred_element_type=jnp.float32)
                   + bn_ref[...]).astype(gn_ref.dtype)


def _row_tile(m):
    # Largest tile that evenly divides the row count (falls back to full axis,
    # which is always a legal block).
    for t in (512, 256, 128, 64, 32, 16, 8):
        if m % t == 0:
            return t
    return m


def gate_input_projection(x2d, w_r, w_z, w_n, b_r, b_z, b_n):
    M, I = x2d.shape
    H = w_r.shape[1]
    mt = _row_tile(M)

    def row_spec(shp):
        return pl.BlockSpec(shp, lambda i: (i, 0))

    def full_spec(shp):
        return pl.BlockSpec(shp, lambda i: (0, 0))

    return pl.pallas_call(
        gate_proj_kernel,
        out_shape=tuple(jax.ShapeDtypeStruct((M, H), jnp.float32) for _ in range(3)),
        grid_spec=pltpu.PrefetchScalarGridSpec(
            num_scalar_prefetch=0,
            grid=(M // mt,),
            in_specs=[
                row_spec((mt, I)),
                full_spec((I, H)), full_spec((I, H)), full_spec((I, H)),
                full_spec((1, H)), full_spec((1, H)), full_spec((1, H)),
            ],
            out_specs=tuple(row_spec((mt, H)) for _ in range(3)),
        ),
        compiler_params=pltpu.CompilerParams(dimension_semantics=("parallel",)),
    )(x2d, w_r, w_z, w_n, b_r, b_z, b_n)


# ---------------------------------------------------------------------------
# Stage 2: serial GRU recurrence (T timesteps per grid iteration)
# ---------------------------------------------------------------------------
def gru_recurrence_kernel(gi_r_ref, gi_z_ref, gi_n_ref,
                          whh_r_ref, whh_z_ref, whh_n_ref, bhh_n_ref,
                          h_out_ref, h_scratch):
    # h0 = 0 (matches Model._init_hidden) on the very first time block.
    @pl.when(pl.program_id(0) == 0)
    def _():
        h_scratch[...] = jnp.zeros_like(h_scratch)

    h = h_scratch[...]                 # (B, H) carried hidden state
    # Hoist weight / bias loads out of the unrolled time loop.
    w_r = whh_r_ref[...]               # (H, H)
    w_z = whh_z_ref[...]
    w_n = whh_n_ref[...]
    b_n = bhh_n_ref[...]               # (1, H) -- must stay inside r*(...) term

    T = gi_r_ref.shape[1]
    for tl in range(T):                # statically unrolled inner time loop
        gh_r = jnp.dot(h, w_r, preferred_element_type=jnp.float32)
        gh_z = jnp.dot(h, w_z, preferred_element_type=jnp.float32)
        gh_n = jnp.dot(h, w_n, preferred_element_type=jnp.float32) + b_n
        r = jax.nn.sigmoid(gi_r_ref[:, tl, :] + gh_r)   # r/z biases pre-folded
        z = jax.nn.sigmoid(gi_z_ref[:, tl, :] + gh_z)
        n = jnp.tanh(gi_n_ref[:, tl, :] + r * gh_n)     # PyTorch n-gate form
        h = (1.0 - z) * n + z * h
        h_out_ref[:, tl, :] = h.astype(h_out_ref.dtype)

    h_scratch[...] = h                 # carry to next grid iteration


def _time_block(S):
    # Small enough to keep the unrolled loop compact, large enough that the
    # per-grid-step overhead (~0.35us) is amortized and gi DMA pipelines.
    for t in (16, 8):
        if S % t == 0:
            return t
    return S


def gru_recurrence(gi_r, gi_z, gi_n, whh_r, whh_z, whh_n, bhh_n):
    B, S, H = gi_r.shape
    T = _time_block(S)

    gi_spec = pl.BlockSpec((B, T, H), lambda t: (0, t, 0))
    w_spec = pl.BlockSpec((H, H), lambda t: (0, 0))

    return pl.pallas_call(
        gru_recurrence_kernel,
        out_shape=jax.ShapeDtypeStruct((B, S, H), jnp.float32),
        grid_spec=pltpu.PrefetchScalarGridSpec(
            num_scalar_prefetch=0,
            grid=(S // T,),
            in_specs=[gi_spec, gi_spec, gi_spec,
                      w_spec, w_spec, w_spec,
                      pl.BlockSpec((1, H), lambda t: (0, 0))],
            out_specs=pl.BlockSpec((B, T, H), lambda t: (0, t, 0)),
            scratch_shapes=[pltpu.VMEM((B, H), jnp.float32)],   # carried h
        ),
        compiler_params=pltpu.CompilerParams(
            dimension_semantics=("arbitrary",)),                # sequential
    )(gi_r, gi_z, gi_n, whh_r, whh_z, whh_n, bhh_n)


# ---------------------------------------------------------------------------
# Stage 3: batched FC head
# ---------------------------------------------------------------------------
def dense_kernel(x_ref, w_ref, b_ref, o_ref):
    o_ref[...] = (jnp.dot(x_ref[...], w_ref[...], preferred_element_type=jnp.float32)
                  + b_ref[...]).astype(o_ref.dtype)


def dense(x2d, w, b):
    M, K = x2d.shape
    N = w.shape[1]
    mt = _row_tile(M)
    return pl.pallas_call(
        dense_kernel,
        out_shape=jax.ShapeDtypeStruct((M, N), jnp.float32),
        grid_spec=pltpu.PrefetchScalarGridSpec(
            num_scalar_prefetch=0,
            grid=(M // mt,),
            in_specs=[
                pl.BlockSpec((mt, K), lambda i: (i, 0)),
                pl.BlockSpec((K, N), lambda i: (0, 0)),
                pl.BlockSpec((1, N), lambda i: (0, 0)),
            ],
            out_specs=pl.BlockSpec((mt, N), lambda i: (i, 0)),
        ),
        compiler_params=pltpu.CompilerParams(dimension_semantics=("parallel",)),
    )(x2d, w, b)


# ---------------------------------------------------------------------------
# Full model forward:  (B, S, I) -> (B*S, O)
# ---------------------------------------------------------------------------
def model_forward(x, p):
    B, S, I = x.shape
    H = p["whh_r"].shape[0]
    M = B * S
    x2d = x.reshape(M, I)                       # free reshape, no transpose

    # Fold r/z biases (b_ih + b_hh) into the hoisted input projection.
    # b_hh_n must stay inside the kernel: n = tanh(i_n + r*(h@Whh_n + b_hh_n)).
    b_r = p["bih_r"] + p["bhh_r"]
    b_z = p["bih_z"] + p["bhh_z"]
    b_n = p["bih_n"]

    gi_r, gi_z, gi_n = gate_input_projection(
        x2d, p["wih_r"], p["wih_z"], p["wih_n"], b_r, b_z, b_n)
    gi_r = gi_r.reshape(B, S, H)
    gi_z = gi_z.reshape(B, S, H)
    gi_n = gi_n.reshape(B, S, H)

    h_all = gru_recurrence(gi_r, gi_z, gi_n,
                           p["whh_r"], p["whh_z"], p["whh_n"], p["bhh_n"])

    # Matches PyTorch output.view(-1, hidden_size) row ordering (batch-major).
    return dense(h_all.reshape(M, H), p["wfc"], p["bfc"])


# ---------------------------------------------------------------------------
# Parameters (gate-separated, pre-transposed so kernels compute x @ W)
# ---------------------------------------------------------------------------
def init_params(key, input_size, hidden_size, output_size):
    ks = jax.random.split(key, 14)
    k = 1.0 / jnp.sqrt(hidden_size)
    u = lambda kk, shape: jax.random.uniform(kk, shape, jnp.float32, -k, k)
    I, H, O = input_size, hidden_size, output_size
    return {
        "wih_r": u(ks[0], (I, H)), "wih_z": u(ks[1], (I, H)), "wih_n": u(ks[2], (I, H)),
        "whh_r": u(ks[3], (H, H)), "whh_z": u(ks[4], (H, H)), "whh_n": u(ks[5], (H, H)),
        "bih_r": u(ks[6], (1, H)), "bih_z": u(ks[7], (1, H)), "bih_n": u(ks[8], (1, H)),
        "bhh_r": u(ks[9], (1, H)), "bhh_z": u(ks[10], (1, H)), "bhh_n": u(ks[11], (1, H)),
        "wfc": u(ks[12], (H, O)), "bfc": u(ks[13], (1, O)),
    }


def ref_forward(x, p):
    """Pure-JAX reference of the PyTorch forward (for verification)."""
    B, S, I = x.shape
    H = p["whh_r"].shape[0]

    def step(h, x_t):
        r = jax.nn.sigmoid(x_t @ p["wih_r"] + p["bih_r"][0]
                           + h @ p["whh_r"] + p["bhh_r"][0])
        z = jax.nn.sigmoid(x_t @ p["wih_z"] + p["bih_z"][0]
                           + h @ p["whh_z"] + p["bhh_z"][0])
        n = jnp.tanh(x_t @ p["wih_n"] + p["bih_n"][0]
                     + r * (h @ p["whh_n"] + p["bhh_n"][0]))
        h_new = (1.0 - z) * n + z * h
        return h_new, h_new

    h0 = jnp.zeros((B, H), jnp.float32)
    _, hs = jax.lax.scan(step, h0, jnp.transpose(x, (1, 0, 2)))   # (S, B, H)
    out = jnp.transpose(hs, (1, 0, 2)).reshape(-1, H)
    return out @ p["wfc"] + p["bfc"][0]


if __name__ == "__main__":
    # Small shapes consistent with the module: input_size = output_size = n_words
    B, S = 2, 32
    n_words = 64          # vocabulary size (input_size / output_size)
    hidden_size = 32      # scaled down from 256 for the demo

    key = jax.random.PRNGKey(0)
    k_x, k_p = jax.random.split(key)
    x = jax.random.normal(k_x, (B, S, n_words), jnp.float32)
    params = init_params(k_p, n_words, hidden_size, n_words)

    fwd = jax.jit(model_forward)
    out = jax.block_until_ready(fwd(x, params))
    ref = jax.block_until_ready(ref_forward(x, params))

    assert out.shape == (B * S, n_words), out.shape
    max_err = float(jnp.max(jnp.abs(out - ref)))
    assert jnp.allclose(out, ref, atol=1e-4, rtol=1e-4), max_err
    print("KERNEL_OK")
</pallas_src>

<mosaic_0001>
module attributes {stable_mosaic.version = 11 : i64} {
  func.func @gate_proj_kernel(%arg0: i32, %arg1: memref<64x64xf32, #tpu.memory_space<vmem>>, %arg2: memref<64x32xf32, #tpu.memory_space<vmem>>, %arg3: memref<64x32xf32, #tpu.memory_space<vmem>>, %arg4: memref<64x32xf32, #tpu.memory_space<vmem>>, %arg5: memref<1x32xf32, #tpu.memory_space<vmem>>, %arg6: memref<1x32xf32, #tpu.memory_space<vmem>>, %arg7: memref<1x32xf32, #tpu.memory_space<vmem>>, %arg8: memref<64x32xf32, #tpu.memory_space<vmem>>, %arg9: memref<64x32xf32, #tpu.memory_space<vmem>>, %arg10: memref<64x32xf32, #tpu.memory_space<vmem>>) attributes {dimension_semantics = [#tpu.dimension_semantics<parallel>], iteration_bounds = array<i64: 1>, scalar_prefetch = 0 : i64, scratch_operands = 0 : i64, tpu.core_type = #tpu.core_type<tc>, window_params = [{transform_indices = @transform_0, window_bounds = array<i64: 64, 64>}, {pipeline_mode = #tpu.pipeline_mode<synchronous>, transform_indices = @transform_1, window_bounds = array<i64: 64, 32>}, {pipeline_mode = #tpu.pipeline_mode<synchronous>, transform_indices = @transform_2, window_bounds = array<i64: 64, 32>}, {pipeline_mode = #tpu.pipeline_mode<synchronous>, transform_indices = @transform_3, window_bounds = array<i64: 64, 32>}, {pipeline_mode = #tpu.pipeline_mode<synchronous>, transform_indices = @transform_4, window_bounds = array<i64: 1, 32>}, {pipeline_mode = #tpu.pipeline_mode<synchronous>, transform_indices = @transform_5, window_bounds = array<i64: 1, 32>}, {pipeline_mode = #tpu.pipeline_mode<synchronous>, transform_indices = @transform_6, window_bounds = array<i64: 1, 32>}, {transform_indices = @transform_7, window_bounds = array<i64: 64, 32>}, {transform_indices = @transform_8, window_bounds = array<i64: 64, 32>}, {transform_indices = @transform_9, window_bounds = array<i64: 64, 32>}]} {
    %c0 = arith.constant 0 : index
    %c0_0 = arith.constant 0 : index
    %0 = vector.load %arg1[%c0, %c0_0] : memref<64x64xf32, #tpu.memory_space<vmem>>, vector<64x64xf32>
    %c0_1 = arith.constant 0 : index
    %c0_2 = arith.constant 0 : index
    %1 = vector.load %arg2[%c0_1, %c0_2] : memref<64x32xf32, #tpu.memory_space<vmem>>, vector<64x32xf32>
    %cst = arith.constant dense<0.000000e+00> : vector<64x32xf32>
    %2 = tpu.matmul %0, %1, %cst {dimension_numbers = #tpu.dot_dimension_numbers<[1], [0], [0], [1], [0, 0, 1, 1], [], []>} : vector<64x64xf32>, vector<64x32xf32>, vector<64x32xf32> -> vector<64x32xf32>
    %c0_3 = arith.constant 0 : index
    %c0_4 = arith.constant 0 : index
    %3 = vector.load %arg5[%c0_3, %c0_4] : memref<1x32xf32, #tpu.memory_space<vmem>>, vector<1x32xf32>
    %4 = vector.broadcast %3 : vector<1x32xf32> to vector<64x32xf32>
    %5 = arith.addf %2, %4 : vector<64x32xf32>
    %c0_5 = arith.constant 0 : index
    %c0_6 = arith.constant 0 : index
    %6 = vector.load %arg8[%c0_5, %c0_6] : memref<64x32xf32, #tpu.memory_space<vmem>>, vector<64x32xf32>
    tpu.vector_store %arg8[%c0_5, %c0_6], %5 {strides = array<i32>} : memref<64x32xf32, #tpu.memory_space<vmem>>, vector<64x32xf32>,
    %c0_7 = arith.constant 0 : index
    %c0_8 = arith.constant 0 : index
    %7 = vector.load %arg3[%c0_7, %c0_8] : memref<64x32xf32, #tpu.memory_space<vmem>>, vector<64x32xf32>
    %cst_9 = arith.constant dense<0.000000e+00> : vector<64x32xf32>
    %8 = tpu.matmul %0, %7, %cst_9 {dimension_numbers = #tpu.dot_dimension_numbers<[1], [0], [0], [1], [0, 0, 1, 1], [], []>} : vector<64x64xf32>, vector<64x32xf32>, vector<64x32xf32> -> vector<64x32xf32>
    %c0_10 = arith.constant 0 : index
    %c0_11 = arith.constant 0 : index
    %9 = vector.load %arg6[%c0_10, %c0_11] : memref<1x32xf32, #tpu.memory_space<vmem>>, vector<1x32xf32>
    %10 = vector.broadcast %9 : vector<1x32xf32> to vector<64x32xf32>
    %11 = arith.addf %8, %10 : vector<64x32xf32>
    %c0_12 = arith.constant 0 : index
    %c0_13 = arith.constant 0 : index
    %12 = vector.load %arg9[%c0_12, %c0_13] : memref<64x32xf32, #tpu.memory_space<vmem>>, vector<64x32xf32>
    tpu.vector_store %arg9[%c0_12, %c0_13], %11 {strides = array<i32>} : memref<64x32xf32, #tpu.memory_space<vmem>>, vector<64x32xf32>,
    %c0_14 = arith.constant 0 : index
    %c0_15 = arith.constant 0 : index
    %13 = vector.load %arg4[%c0_14, %c0_15] : memref<64x32xf32, #tpu.memory_space<vmem>>, vector<64x32xf32>
    %cst_16 = arith.constant dense<0.000000e+00> : vector<64x32xf32>
    %14 = tpu.matmul %0, %13, %cst_16 {dimension_numbers = #tpu.dot_dimension_numbers<[1], [0], [0], [1], [0, 0, 1, 1], [], []>} : vector<64x64xf32>, vector<64x32xf32>, vector<64x32xf32> -> vector<64x32xf32>
    %c0_17 = arith.constant 0 : index
    %c0_18 = arith.constant 0 : index
    %15 = vector.load %arg7[%c0_17, %c0_18] : memref<1x32xf32, #tpu.memory_space<vmem>>, vector<1x32xf32>
    %16 = vector.broadcast %15 : vector<1x32xf32> to vector<64x32xf32>
    %17 = arith.addf %14, %16 : vector<64x32xf32>
    %c0_19 = arith.constant 0 : index
    %c0_20 = arith.constant 0 : index
    %18 = vector.load %arg10[%c0_19, %c0_20] : memref<64x32xf32, #tpu.memory_space<vmem>>, vector<64x32xf32>
    tpu.vector_store %arg10[%c0_19, %c0_20], %17 {strides = array<i32>} : memref<64x32xf32, #tpu.memory_space<vmem>>, vector<64x32xf32>,
    return
  }
  func.func @transform_0(%arg0: i32) -> (i32, i32) {
    %c0_i32 = arith.constant 0 : i32
    %c0_i32_0 = arith.constant 0 : i32
    return %arg0, %c0_i32 : i32, i32
  }
  func.func @transform_1(%arg0: i32) -> (i32, i32) {
    %c0_i32 = arith.constant 0 : i32
    %c0_i32_0 = arith.constant 0 : i32
    %c0_i32_1 = arith.constant 0 : i32
    return %c0_i32, %c0_i32_0 : i32, i32
  }
  func.func @transform_2(%arg0: i32) -> (i32, i32) {
    %c0_i32 = arith.constant 0 : i32
    %c0_i32_0 = arith.constant 0 : i32
    %c0_i32_1 = arith.constant 0 : i32
    return %c0_i32, %c0_i32_0 : i32, i32
  }
  func.func @transform_3(%arg0: i32) -> (i32, i32) {
    %c0_i32 = arith.constant 0 : i32
    %c0_i32_0 = arith.constant 0 : i32
    %c0_i32_1 = arith.constant 0 : i32
    return %c0_i32, %c0_i32_0 : i32, i32
  }
  func.func @transform_4(%arg0: i32) -> (i32, i32) {
    %c0_i32 = arith.constant 0 : i32
    %c0_i32_0 = arith.constant 0 : i32
    %c0_i32_1 = arith.constant 0 : i32
    return %c0_i32, %c0_i32_0 : i32, i32
  }
  func.func @transform_5(%arg0: i32) -> (i32, i32) {
    %c0_i32 = arith.constant 0 : i32
    %c0_i32_0 = arith.constant 0 : i32
    %c0_i32_1 = arith.constant 0 : i32
    return %c0_i32, %c0_i32_0 : i32, i32
  }
  func.func @transform_6(%arg0: i32) -> (i32, i32) {
    %c0_i32 = arith.constant 0 : i32
    %c0_i32_0 = arith.constant 0 : i32
    %c0_i32_1 = arith.constant 0 : i32
    return %c0_i32, %c0_i32_0 : i32, i32
  }
  func.func @transform_7(%arg0: i32) -> (i32, i32) {
    %c0_i32 = arith.constant 0 : i32
    %c0_i32_0 = arith.constant 0 : i32
    return %arg0, %c0_i32 : i32, i32
  }
  func.func @transform_8(%arg0: i32) -> (i32, i32) {
    %c0_i32 = arith.constant 0 : i32
    %c0_i32_0 = arith.constant 0 : i32
    return %arg0, %c0_i32 : i32, i32
  }
  func.func @transform_9(%arg0: i32) -> (i32, i32) {
    %c0_i32 = arith.constant 0 : i32
    %c0_i32_0 = arith.constant 0 : i32
    return %arg0, %c0_i32 : i32, i32
  }
}

module attributes {stable_mosaic.version = 11 : i64} {
  func.func @gru_recurrence_kernel(%arg0: i32, %arg1: memref<2x16x32xf32, #tpu.memory_space<vmem>>, %arg2: memref<2x16x32xf32, #tpu.memory_space<vmem>>, %arg3: memref<2x16x32xf32, #tpu.memory_space<vmem>>, %arg4: memref<32x32xf32, #tpu.memory_space<vmem>>, %arg5: memref<32x32xf32, #tpu.memory_space<vmem>>, %arg6: memref<32x32xf32, #tpu.memory_space<vmem>>, %arg7: memref<1x32xf32, #tpu.memory_space<vmem>>, %arg8: memref<2x16x32xf32, #tpu.memory_space<vmem>>, %arg9: memref<2x32xf32, #tpu.memory_space<vmem>>) attributes {dimension_semantics = [#tpu.dimension_semantics<arbitrary>], iteration_bounds = array<i64: 2>, scalar_prefetch = 0 : i64, scratch_operands = 1 : i64, tpu.core_type = #tpu.core_type<tc>, window_params = [{transform_indices = @transform_0, window_bounds = array<i64: 2, 16, 32>}, {transform_indices = @transform_1, window_bounds = array<i64: 2, 16, 32>}, {transform_indices = @transform_2, window_bounds = array<i64: 2, 16, 32>}, {pipeline_mode = #tpu.pipeline_mode<synchronous>, transform_indices = @transform_3, window_bounds = array<i64: 32, 32>}, {pipeline_mode = #tpu.pipeline_mode<synchronous>, transform_indices = @transform_4, window_bounds = array<i64: 32, 32>}, {pipeline_mode = #tpu.pipeline_mode<synchronous>, transform_indices = @transform_5, window_bounds = array<i64: 32, 32>}, {pipeline_mode = #tpu.pipeline_mode<synchronous>, transform_indices = @transform_6, window_bounds = array<i64: 1, 32>}, {transform_indices = @transform_7, window_bounds = array<i64: 2, 16, 32>}]} {
    %c0_i32 = arith.constant 0 : i32
    %0 = arith.cmpi eq, %arg0, %c0_i32 : i32
    %1 = arith.extui %0 : i1 to i32
    %c0_i32_0 = arith.constant 0 : i32
    %2 = arith.cmpi ne, %1, %c0_i32_0 : i32
    scf.if %2 {
      %cst_284 = arith.constant 0.000000e+00 : f32
      %553 = vector.broadcast %cst_284 : f32 to vector<2x32xf32>
      %c0_285 = arith.constant 0 : index
      %c0_286 = arith.constant 0 : index
      %554 = vector.load %arg9[%c0_285, %c0_286] : memref<2x32xf32, #tpu.memory_space<vmem>>, vector<2x32xf32>
      tpu.vector_store %arg9[%c0_285, %c0_286], %553 {strides = array<i32>} : memref<2x32xf32, #tpu.memory_space<vmem>>, vector<2x32xf32>,
    } else {
    }
    %c0 = arith.constant 0 : index
    %c0_1 = arith.constant 0 : index
    %3 = vector.load %arg9[%c0, %c0_1] : memref<2x32xf32, #tpu.memory_space<vmem>>, vector<2x32xf32>
    %c0_2 = arith.constant 0 : index
    %c0_3 = arith.constant 0 : index
    %4 = vector.load %arg4[%c0_2, %c0_3] : memref<32x32xf32, #tpu.memory_space<vmem>>, vector<32x32xf32>
    %c0_4 = arith.constant 0 : index
    %c0_5 = arith.constant 0 : index
    %5 = vector.load %arg5[%c0_4, %c0_5] : memref<32x32xf32, #tpu.memory_space<vmem>>, vector<32x32xf32>
    %c0_6 = arith.constant 0 : index
    %c0_7 = arith.constant 0 : index
    %6 = vector.load %arg6[%c0_6, %c0_7] : memref<32x32xf32, #tpu.memory_space<vmem>>, vector<32x32xf32>
    %c0_8 = arith.constant 0 : index
    %c0_9 = arith.constant 0 : index
    %7 = vector.load %arg7[%c0_8, %c0_9] : memref<1x32xf32, #tpu.memory_space<vmem>>, vector<1x32xf32>
    %cst = arith.constant dense<0.000000e+00> : vector<2x32xf32>
    %8 = tpu.matmul %3, %4, %cst {dimension_numbers = #tpu.dot_dimension_numbers<[1], [0], [0], [1], [0, 0, 1, 1], [], []>} : vector<2x32xf32>, vector<32x32xf32>, vector<2x32xf32> -> vector<2x32xf32>
    %cst_10 = arith.constant dense<0.000000e+00> : vector<2x32xf32>
    %9 = tpu.matmul %3, %5, %cst_10 {dimension_numbers = #tpu.dot_dimension_numbers<[1], [0], [0], [1], [0, 0, 1, 1], [], []>} : vector<2x32xf32>, vector<32x32xf32>, vector<2x32xf32> -> vector<2x32xf32>
    %cst_11 = arith.constant dense<0.000000e+00> : vector<2x32xf32>
    %10 = tpu.matmul %3, %6, %cst_11 {dimension_numbers = #tpu.dot_dimension_numbers<[1], [0], [0], [1], [0, 0, 1, 1], [], []>} : vector<2x32xf32>, vector<32x32xf32>, vector<2x32xf32> -> vector<2x32xf32>
    %11 = vector.broadcast %7 : vector<1x32xf32> to vector<2x32xf32>
    %12 = arith.addf %10, %11 : vector<2x32xf32>
    %c0_12 = arith.constant 0 : index
    %c0_13 = arith.constant 0 : index
    %c0_14 = arith.constant 0 : index
    %13 = vector.load %arg1[%c0_12, %c0_13, %c0_14] : memref<2x16x32xf32, #tpu.memory_space<vmem>>, vector<2x1x32xf32>
    %14 = vector.shape_cast %13 : vector<2x1x32xf32> to vector<2x32xf32>
    %15 = arith.addf %14, %8 : vector<2x32xf32>
    %16 = arith.negf %15 : vector<2x32xf32>
    %17 = math.exp %16 : vector<2x32xf32>
    %cst_15 = arith.constant 1.000000e+00 : f32
    %18 = vector.broadcast %cst_15 : f32 to vector<2x32xf32>
    %19 = arith.addf %18, %17 : vector<2x32xf32>
    %20 = arith.divf %18, %19 : vector<2x32xf32>
    %c0_16 = arith.constant 0 : index
    %c0_17 = arith.constant 0 : index
    %c0_18 = arith.constant 0 : index
    %21 = vector.load %arg2[%c0_16, %c0_17, %c0_18] : memref<2x16x32xf32, #tpu.memory_space<vmem>>, vector<2x1x32xf32>
    %22 = vector.shape_cast %21 : vector<2x1x32xf32> to vector<2x32xf32>
    %23 = arith.addf %22, %9 : vector<2x32xf32>
    %24 = arith.negf %23 : vector<2x32xf32>
    %25 = math.exp %24 : vector<2x32xf32>
    %cst_19 = arith.constant 1.000000e+00 : f32
    %26 = vector.broadcast %cst_19 : f32 to vector<2x32xf32>
    %27 = arith.addf %26, %25 : vector<2x32xf32>
    %28 = arith.divf %26, %27 : vector<2x32xf32>
    %c0_20 = arith.constant 0 : index
    %c0_21 = arith.constant 0 : index
    %c0_22 = arith.constant 0 : index
    %29 = vector.load %arg3[%c0_20, %c0_21, %c0_22] : memref<2x16x32xf32, #tpu.memory_space<vmem>>, vector<2x1x32xf32>
    %30 = vector.shape_cast %29 : vector<2x1x32xf32> to vector<2x32xf32>
    %31 = arith.mulf %20, %12 : vector<2x32xf32>
    %32 = arith.addf %30, %31 : vector<2x32xf32>
    %33 = math.tanh %32 : vector<2x32xf32>
    %cst_23 = arith.constant 1.000000e+00 : f32
    %34 = vector.broadcast %cst_23 : f32 to vector<2x32xf32>
    %35 = arith.subf %34, %28 : vector<2x32xf32>
    %36 = arith.mulf %35, %33 : vector<2x32xf32>
    %37 = arith.mulf %28, %3 : vector<2x32xf32>
    %38 = arith.addf %36, %37 : vector<2x32xf32>
    %c0_24 = arith.constant 0 : index
    %c0_25 = arith.constant 0 : index
    %c0_26 = arith.constant 0 : index
    %39 = vector.load %arg8[%c0_24, %c0_25, %c0_26] : memref<2x16x32xf32, #tpu.memory_space<vmem>>, vector<2x1x32xf32>
    %40 = vector.shape_cast %39 : vector<2x1x32xf32> to vector<2x32xf32>
    %41 = vector.shape_cast %38 : vector<2x32xf32> to vector<2x1x32xf32>
    tpu.vector_store %arg8[%c0_24, %c0_25, %c0_26], %41 {strides = array<i32>} : memref<2x16x32xf32, #tpu.memory_space<vmem>>, vector<2x1x32xf32>,
    %cst_27 = arith.constant dense<0.000000e+00> : vector<2x32xf32>
    %42 = tpu.matmul %38, %4, %cst_27 {dimension_numbers = #tpu.dot_dimension_numbers<[1], [0], [0], [1], [0, 0, 1, 1], [], []>} : vector<2x32xf32>, vector<32x32xf32>, vector<2x32xf32> -> vector<2x32xf32>
    %cst_28 = arith.constant dense<0.000000e+00> : vector<2x32xf32>
    %43 = tpu.matmul %38, %5, %cst_28 {dimension_numbers = #tpu.dot_dimension_numbers<[1], [0], [0], [1], [0, 0, 1, 1], [], []>} : vector<2x32xf32>, vector<32x32xf32>, vector<2x32xf32> -> vector<2x32xf32>
    %cst_29 = arith.constant dense<0.000000e+00> : vector<2x32xf32>
    %44 = tpu.matmul %38, %6, %cst_29 {dimension_numbers = #tpu.dot_dimension_numbers<[1], [0], [0], [1], [0, 0, 1, 1], [], []>} : vector<2x32xf32>, vector<32x32xf32>, vector<2x32xf32> -> vector<2x32xf32>
    %45 = vector.broadcast %7 : vector<1x32xf32> to vector<2x32xf32>
    %46 = arith.addf %44, %45 : vector<2x32xf32>
    %c0_30 = arith.constant 0 : index
    %c1 = arith.constant 1 : index
    %c0_31 = arith.constant 0 : index
    %47 = vector.load %arg1[%c0_30, %c1, %c0_31] : memref<2x16x32xf32, #tpu.memory_space<vmem>>, vector<2x1x32xf32>
    %48 = vector.shape_cast %47 : vector<2x1x32xf32> to vector<2x32xf32>
    %49 = arith.addf %48, %42 : vector<2x32xf32>
    %50 = arith.negf %49 : vector<2x32xf32>
    %51 = math.exp %50 : vector<2x32xf32>
    %cst_32 = arith.constant 1.000000e+00 : f32
    %52 = vector.broadcast %cst_32 : f32 to vector<2x32xf32>
    %53 = arith.addf %52, %51 : vector<2x32xf32>
    %54 = arith.divf %52, %53 : vector<2x32xf32>
    %c0_33 = arith.constant 0 : index
    %c1_34 = arith.constant 1 : index
    %c0_35 = arith.constant 0 : index
    %55 = vector.load %arg2[%c0_33, %c1_34, %c0_35] : memref<2x16x32xf32, #tpu.memory_space<vmem>>, vector<2x1x32xf32>
    %56 = vector.shape_cast %55 : vector<2x1x32xf32> to vector<2x32xf32>
    %57 = arith.addf %56, %43 : vector<2x32xf32>
    %58 = arith.negf %57 : vector<2x32xf32>
    %59 = math.exp %58 : vector<2x32xf32>
    %cst_36 = arith.constant 1.000000e+00 : f32
    %60 = vector.broadcast %cst_36 : f32 to vector<2x32xf32>
    %61 = arith.addf %60, %59 : vector<2x32xf32>
    %62 = arith.divf %60, %61 : vector<2x32xf32>
    %c0_37 = arith.constant 0 : index
    %c1_38 = arith.constant 1 : index
    %c0_39 = arith.constant 0 : index
    %63 = vector.load %arg3[%c0_37, %c1_38, %c0_39] : memref<2x16x32xf32, #tpu.memory_space<vmem>>, vector<2x1x32xf32>
    %64 = vector.shape_cast %63 : vector<2x1x32xf32> to vector<2x32xf32>
    %65 = arith.mulf %54, %46 : vector<2x32xf32>
    %66 = arith.addf %64, %65 : vector<2x32xf32>
    %67 = math.tanh %66 : vector<2x32xf32>
    %cst_40 = arith.constant 1.000000e+00 : f32
    %68 = vector.broadcast %cst_40 : f32 to vector<2x32xf32>
    %69 = arith.subf %68, %62 : vector<2x32xf32>
    %70 = arith.mulf %69, %67 : vector<2x32xf32>
    %71 = arith.mulf %62, %38 : vector<2x32xf32>
    %72 = arith.addf %70, %71 : vector<2x32xf32>
    %c0_41 = arith.constant 0 : index
    %c1_42 = arith.constant 1 : index
    %c0_43 = arith.constant 0 : index
    %73 = vector.load %arg8[%c0_41, %c1_42, %c0_43] : memref<2x16x32xf32, #tpu.memory_space<vmem>>, vector<2x1x32xf32>
    %74 = vector.shape_cast %73 : vector<2x1x32xf32> to vector<2x32xf32>
    %75 = vector.shape_cast %72 : vector<2x32xf32> to vector<2x1x32xf32>
    tpu.vector_store %arg8[%c0_41, %c1_42, %c0_43], %75 {strides = array<i32>} : memref<2x16x32xf32, #tpu.memory_space<vmem>>, vector<2x1x32xf32>,
    %cst_44 = arith.constant dense<0.000000e+00> : vector<2x32xf32>
    %76 = tpu.matmul %72, %4, %cst_44 {dimension_numbers = #tpu.dot_dimension_numbers<[1], [0], [0], [1], [0, 0, 1, 1], [], []>} : vector<2x32xf32>, vector<32x32xf32>, vector<2x32xf32> -> vector<2x32xf32>
    %cst_45 = arith.constant dense<0.000000e+00> : vector<2x32xf32>
    %77 = tpu.matmul %72, %5, %cst_45 {dimension_numbers = #tpu.dot_dimension_numbers<[1], [0], [0], [1], [0, 0, 1, 1], [], []>} : vector<2x32xf32>, vector<32x32xf32>, vector<2x32xf32> -> vector<2x32xf32>
    %cst_46 = arith.constant dense<0.000000e+00> : vector<2x32xf32>
    %78 = tpu.matmul %72, %6, %cst_46 {dimension_numbers = #tpu.dot_dimension_numbers<[1], [0], [0], [1], [0, 0, 1, 1], [], []>} : vector<2x32xf32>, vector<32x32xf32>, vector<2x32xf32> -> vector<2x32xf32>
    %79 = vector.broadcast %7 : vector<1x32xf32> to vector<2x32xf32>
    %80 = arith.addf %78, %79 : vector<2x32xf32>
    %c0_47 = arith.constant 0 : index
    %c2 = arith.constant 2 : index
    %c0_48 = arith.constant 0 : index
    %81 = vector.load %arg1[%c0_47, %c2, %c0_48] : memref<2x16x32xf32, #tpu.memory_space<vmem>>, vector<2x1x32xf32>
    %82 = vector.shape_cast %81 : vector<2x1x32xf32> to vector<2x32xf32>
    %83 = arith.addf %82, %76 : vector<2x32xf32>
    %84 = arith.negf %83 : vector<2x32xf32>
    %85 = math.exp %84 : vector<2x32xf32>
    %cst_49 = arith.constant 1.000000e+00 : f32
    %86 = vector.broadcast %cst_49 : f32 to vector<2x32xf32>
    %87 = arith.addf %86, %85 : vector<2x32xf32>
    %88 = arith.divf %86, %87 : vector<2x32xf32>
    %c0_50 = arith.constant 0 : index
    %c2_51 = arith.constant 2 : index
    %c0_52 = arith.constant 0 : index
    %89 = vector.load %arg2[%c0_50, %c2_51, %c0_52] : memref<2x16x32xf32, #tpu.memory_space<vmem>>, vector<2x1x32xf32>
    %90 = vector.shape_cast %89 : vector<2x1x32xf32> to vector<2x32xf32>
    %91 = arith.addf %90, %77 : vector<2x32xf32>
    %92 = arith.negf %91 : vector<2x32xf32>
    %93 = math.exp %92 : vector<2x32xf32>
    %cst_53 = arith.constant 1.000000e+00 : f32
    %94 = vector.broadcast %cst_53 : f32 to vector<2x32xf32>
    %95 = arith.addf %94, %93 : vector<2x32xf32>
    %96 = arith.divf %94, %95 : vector<2x32xf32>
    %c0_54 = arith.constant 0 : index
    %c2_55 = arith.constant 2 : index
    %c0_56 = arith.constant 0 : index
    %97 = vector.load %arg3[%c0_54, %c2_55, %c0_56] : memref<2x16x32xf32, #tpu.memory_space<vmem>>, vector<2x1x32xf32>
    %98 = vector.shape_cast %97 : vector<2x1x32xf32> to vector<2x32xf32>
    %99 = arith.mulf %88, %80 : vector<2x32xf32>
    %100 = arith.addf %98, %99 : vector<2x32xf32>
    %101 = math.tanh %100 : vector<2x32xf32>
    %cst_57 = arith.constant 1.000000e+00 : f32
    %102 = vector.broadcast %cst_57 : f32 to vector<2x32xf32>
    %103 = arith.subf %102, %96 : vector<2x32xf32>
    %104 = arith.mulf %103, %101 : vector<2x32xf32>
    %105 = arith.mulf %96, %72 : vector<2x32xf32>
    %106 = arith.addf %104, %105 : vector<2x32xf32>
    %c0_58 = arith.constant 0 : index
    %c2_59 = arith.constant 2 : index
    %c0_60 = arith.constant 0 : index
    %107 = vector.load %arg8[%c0_58, %c2_59, %c0_60] : memref<2x16x32xf32, #tpu.memory_space<vmem>>, vector<2x1x32xf32>
    %108 = vector.shape_cast %107 : vector<2x1x32xf32> to vector<2x32xf32>
    %109 = vector.shape_cast %106 : vector<2x32xf32> to vector<2x1x32xf32>
    tpu.vector_store %arg8[%c0_58, %c2_59, %c0_60], %109 {strides = array<i32>} : memref<2x16x32xf32, #tpu.memory_space<vmem>>, vector<2x1x32xf32>,
    %cst_61 = arith.constant dense<0.000000e+00> : vector<2x32xf32>
    %110 = tpu.matmul %106, %4, %cst_61 {dimension_numbers = #tpu.dot_dimension_numbers<[1], [0], [0], [1], [0, 0, 1, 1], [], []>} : vector<2x32xf32>, vector<32x32xf32>, vector<2x32xf32> -> vector<2x32xf32>
    %cst_62 = arith.constant dense<0.000000e+00> : vector<2x32xf32>
    %111 = tpu.matmul %106, %5, %cst_62 {dimension_numbers = #tpu.dot_dimension_numbers<[1], [0], [0], [1], [0, 0, 1, 1], [], []>} : vector<2x32xf32>, vector<32x32xf32>, vector<2x32xf32> -> vector<2x32xf32>
    %cst_63 = arith.constant dense<0.000000e+00> : vector<2x32xf32>
    %112 = tpu.matmul %106, %6, %cst_63 {dimension_numbers = #tpu.dot_dimension_numbers<[1], [0], [0], [1], [0, 0, 1, 1], [], []>} : vector<2x32xf32>, vector<32x32xf32>, vector<2x32xf32> -> vector<2x32xf32>
    %113 = vector.broadcast %7 : vector<1x32xf32> to vector<2x32xf32>
    %114 = arith.addf %112, %113 : vector<2x32xf32>
    %c0_64 = arith.constant 0 : index
    %c3 = arith.constant 3 : index
    %c0_65 = arith.constant 0 : index
    %115 = vector.load %arg1[%c0_64, %c3, %c0_65] : memref<2x16x32xf32, #tpu.memory_space<vmem>>, vector<2x1x32xf32>
    %116 = vector.shape_cast %115 : vector<2x1x32xf32> to vector<2x32xf32>
    %117 = arith.addf %116, %110 : vector<2x32xf32>
    %118 = arith.negf %117 : vector<2x32xf32>
    %119 = math.exp %118 : vector<2x32xf32>
    %cst_66 = arith.constant 1.000000e+00 : f32
    %120 = vector.broadcast %cst_66 : f32 to vector<2x32xf32>
    %121 = arith.addf %120, %119 : vector<2x32xf32>
    %122 = arith.divf %120, %121 : vector<2x32xf32>
    %c0_67 = arith.constant 0 : index
    %c3_68 = arith.constant 3 : index
    %c0_69 = arith.constant 0 : index
    %123 = vector.load %arg2[%c0_67, %c3_68, %c0_69] : memref<2x16x32xf32, #tpu.memory_space<vmem>>, vector<2x1x32xf32>
    %124 = vector.shape_cast %123 : vector<2x1x32xf32> to vector<2x32xf32>
    %125 = arith.addf %124, %111 : vector<2x32xf32>
    %126 = arith.negf %125 : vector<2x32xf32>
    %127 = math.exp %126 : vector<2x32xf32>
    %cst_70 = arith.constant 1.000000e+00 : f32
    %128 = vector.broadcast %cst_70 : f32 to vector<2x32xf32>
    %129 = arith.addf %128, %127 : vector<2x32xf32>
    %130 = arith.divf %128, %129 : vector<2x32xf32>
    %c0_71 = arith.constant 0 : index
    %c3_72 = arith.constant 3 : index
    %c0_73 = arith.constant 0 : index
    %131 = vector.load %arg3[%c0_71, %c3_72, %c0_73] : memref<2x16x32xf32, #tpu.memory_space<vmem>>, vector<2x1x32xf32>
    %132 = vector.shape_cast %131 : vector<2x1x32xf32> to vector<2x32xf32>
    %133 = arith.mulf %122, %114 : vector<2x32xf32>
    %134 = arith.addf %132, %133 : vector<2x32xf32>
    %135 = math.tanh %134 : vector<2x32xf32>
    %cst_74 = arith.constant 1.000000e+00 : f32
    %136 = vector.broadcast %cst_74 : f32 to vector<2x32xf32>
    %137 = arith.subf %136, %130 : vector<2x32xf32>
    %138 = arith.mulf %137, %135 : vector<2x32xf32>
    %139 = arith.mulf %130, %106 : vector<2x32xf32>
    %140 = arith.addf %138, %139 : vector<2x32xf32>
    %c0_75 = arith.constant 0 : index
    %c3_76 = arith.constant 3 : index
    %c0_77 = arith.constant 0 : index
    %141 = vector.load %arg8[%c0_75, %c3_76, %c0_77] : memref<2x16x32xf32, #tpu.memory_space<vmem>>, vector<2x1x32xf32>
    %142 = vector.shape_cast %141 : vector<2x1x32xf32> to vector<2x32xf32>
    %143 = vector.shape_cast %140 : vector<2x32xf32> to vector<2x1x32xf32>
    tpu.vector_store %arg8[%c0_75, %c3_76, %c0_77], %143 {strides = array<i32>} : memref<2x16x32xf32, #tpu.memory_space<vmem>>, vector<2x1x32xf32>,
    %cst_78 = arith.constant dense<0.000000e+00> : vector<2x32xf32>
    %144 = tpu.matmul %140, %4, %cst_78 {dimension_numbers = #tpu.dot_dimension_numbers<[1], [0], [0], [1], [0, 0, 1, 1], [], []>} : vector<2x32xf32>, vector<32x32xf32>, vector<2x32xf32> -> vector<2x32xf32>
    %cst_79 = arith.constant dense<0.000000e+00> : vector<2x32xf32>
    %145 = tpu.matmul %140, %5, %cst_79 {dimension_numbers = #tpu.dot_dimension_numbers<[1], [0], [0], [1], [0, 0, 1, 1], [], []>} : vector<2x32xf32>, vector<32x32xf32>, vector<2x32xf32> -> vector<2x32xf32>
    %cst_80 = arith.constant dense<0.000000e+00> : vector<2x32xf32>
    %146 = tpu.matmul %140, %6, %cst_80 {dimension_numbers = #tpu.dot_dimension_numbers<[1], [0], [0], [1], [0, 0, 1, 1], [], []>} : vector<2x32xf32>, vector<32x32xf32>, vector<2x32xf32> -> vector<2x32xf32>
    %147 = vector.broadcast %7 : vector<1x32xf32> to vector<2x32xf32>
    %148 = arith.addf %146, %147 : vector<2x32xf32>
    %c0_81 = arith.constant 0 : index
    %c4 = arith.constant 4 : index
    %c0_82 = arith.constant 0 : index
    %149 = vector.load %arg1[%c0_81, %c4, %c0_82] : memref<2x16x32xf32, #tpu.memory_space<vmem>>, vector<2x1x32xf32>
    %150 = vector.shape_cast %149 : vector<2x1x32xf32> to vector<2x32xf32>
    %151 = arith.addf %150, %144 : vector<2x32xf32>
    %152 = arith.negf %151 : vector<2x32xf32>
    %153 = math.exp %152 : vector<2x32xf32>
    %cst_83 = arith.constant 1.000000e+00 : f32
    %154 = vector.broadcast %cst_83 : f32 to vector<2x32xf32>
    %155 = arith.addf %154, %153 : vector<2x32xf32>
    %156 = arith.divf %154, %155 : vector<2x32xf32>
    %c0_84 = arith.constant 0 : index
    %c4_85 = arith.constant 4 : index
    %c0_86 = arith.constant 0 : index
    %157 = vector.load %arg2[%c0_84, %c4_85, %c0_86] : memref<2x16x32xf32, #tpu.memory_space<vmem>>, vector<2x1x32xf32>
    %158 = vector.shape_cast %157 : vector<2x1x32xf32> to vector<2x32xf32>
    %159 = arith.addf %158, %145 : vector<2x32xf32>
    %160 = arith.negf %159 : vector<2x32xf32>
    %161 = math.exp %160 : vector<2x32xf32>
    %cst_87 = arith.constant 1.000000e+00 : f32
    %162 = vector.broadcast %cst_87 : f32 to vector<2x32xf32>
    %163 = arith.addf %162, %161 : vector<2x32xf32>
    %164 = arith.divf %162, %163 : vector<2x32xf32>
    %c0_88 = arith.constant 0 : index
    %c4_89 = arith.constant 4 : index
    %c0_90 = arith.constant 0 : index
    %165 = vector.load %arg3[%c0_88, %c4_89, %c0_90] : memref<2x16x32xf32, #tpu.memory_space<vmem>>, vector<2x1x32xf32>
    %166 = vector.shape_cast %165 : vector<2x1x32xf32> to vector<2x32xf32>
    %167 = arith.mulf %156, %148 : vector<2x32xf32>
    %168 = arith.addf %166, %167 : vector<2x32xf32>
    %169 = math.tanh %168 : vector<2x32xf32>
    %cst_91 = arith.constant 1.000000e+00 : f32
    %170 = vector.broadcast %cst_91 : f32 to vector<2x32xf32>
    %171 = arith.subf %170, %164 : vector<2x32xf32>
    %172 = arith.mulf %171, %169 : vector<2x32xf32>
    %173 = arith.mulf %164, %140 : vector<2x32xf32>
    %174 = arith.addf %172, %173 : vector<2x32xf32>
    %c0_92 = arith.constant 0 : index
    %c4_93 = arith.constant 4 : index
    %c0_94 = arith.constant 0 : index
    %175 = vector.load %arg8[%c0_92, %c4_93, %c0_94] : memref<2x16x32xf32, #tpu.memory_space<vmem>>, vector<2x1x32xf32>
    %176 = vector.shape_cast %175 : vector<2x1x32xf32> to vector<2x32xf32>
    %177 = vector.shape_cast %174 : vector<2x32xf32> to vector<2x1x32xf32>
    tpu.vector_store %arg8[%c0_92, %c4_93, %c0_94], %177 {strides = array<i32>} : memref<2x16x32xf32, #tpu.memory_space<vmem>>, vector<2x1x32xf32>,
    %cst_95 = arith.constant dense<0.000000e+00> : vector<2x32xf32>
    %178 = tpu.matmul %174, %4, %cst_95 {dimension_numbers = #tpu.dot_dimension_numbers<[1], [0], [0], [1], [0, 0, 1, 1], [], []>} : vector<2x32xf32>, vector<32x32xf32>, vector<2x32xf32> -> vector<2x32xf32>
    %cst_96 = arith.constant dense<0.000000e+00> : vector<2x32xf32>
    %179 = tpu.matmul %174, %5, %cst_96 {dimension_numbers = #tpu.dot_dimension_numbers<[1], [0], [0], [1], [0, 0, 1, 1], [], []>} : vector<2x32xf32>, vector<32x32xf32>, vector<2x32xf32> -> vector<2x32xf32>
    %cst_97 = arith.constant dense<0.000000e+00> : vector<2x32xf32>
    %180 = tpu.matmul %174, %6, %cst_97 {dimension_numbers = #tpu.dot_dimension_numbers<[1], [0], [0], [1], [0, 0, 1, 1], [], []>} : vector<2x32xf32>, vector<32x32xf32>, vector<2x32xf32> -> vector<2x32xf32>
    %181 = vector.broadcast %7 : vector<1x32xf32> to vector<2x32xf32>
    %182 = arith.addf %180, %181 : vector<2x32xf32>
    %c0_98 = arith.constant 0 : index
    %c5 = arith.constant 5 : index
    %c0_99 = arith.constant 0 : index
    %183 = vector.load %arg1[%c0_98, %c5, %c0_99] : memref<2x16x32xf32, #tpu.memory_space<vmem>>, vector<2x1x32xf32>
    %184 = vector.shape_cast %183 : vector<2x1x32xf32> to vector<2x32xf32>
    %185 = arith.addf %184, %178 : vector<2x32xf32>
    %186 = arith.negf %185 : vector<2x32xf32>
    %187 = math.exp %186 : vector<2x32xf32>
    %cst_100 = arith.constant 1.000000e+00 : f32
    %188 = vector.broadcast %cst_100 : f32 to vector<2x32xf32>
    %189 = arith.addf %188, %187 : vector<2x32xf32>
    %190 = arith.divf %188, %189 : vector<2x32xf32>
    %c0_101 = arith.constant 0 : index
    %c5_102 = arith.constant 5 : index
    %c0_103 = arith.constant 0 : index
    %191 = vector.load %arg2[%c0_101, %c5_102, %c0_103] : memref<2x16x32xf32, #tpu.memory_space<vmem>>, vector<2x1x32xf32>
    %192 = vector.shape_cast %191 : vector<2x1x32xf32> to vector<2x32xf32>
    %193 = arith.addf %192, %179 : vector<2x32xf32>
    %194 = arith.negf %193 : vector<2x32xf32>
    %195 = math.exp %194 : vector<2x32xf32>
    %cst_104 = arith.constant 1.000000e+00 : f32
    %196 = vector.broadcast %cst_104 : f32 to vector<2x32xf32>
    %197 = arith.addf %196, %195 : vector<2x32xf32>
    %198 = arith.divf %196, %197 : vector<2x32xf32>
    %c0_105 = arith.constant 0 : index
    %c5_106 = arith.constant 5 : index
    %c0_107 = arith.constant 0 : index
    %199 = vector.load %arg3[%c0_105, %c5_106, %c0_107] : memref<2x16x32xf32, #tpu.memory_space<vmem>>, vector<2x1x32xf32>
    %200 = vector.shape_cast %199 : vector<2x1x32xf32> to vector<2x32xf32>
    %201 = arith.mulf %190, %182 : vector<2x32xf32>
    %202 = arith.addf %200, %201 : vector<2x32xf32>
    %203 = math.tanh %202 : vector<2x32xf32>
    %cst_108 = arith.constant 1.000000e+00 : f32
    %204 = vector.broadcast %cst_108 : f32 to vector<2x32xf32>
    %205 = arith.subf %204, %198 : vector<2x32xf32>
    %206 = arith.mulf %205, %203 : vector<2x32xf32>
    %207 = arith.mulf %198, %174 : vector<2x32xf32>
    %208 = arith.addf %206, %207 : vector<2x32xf32>
    %c0_109 = arith.constant 0 : index
    %c5_110 = arith.constant 5 : index
    %c0_111 = arith.constant 0 : index
    %209 = vector.load %arg8[%c0_109, %c5_110, %c0_111] : memref<2x16x32xf32, #tpu.memory_space<vmem>>, vector<2x1x32xf32>
    %210 = vector.shape_cast %209 : vector<2x1x32xf32> to vector<2x32xf32>
    %211 = vector.shape_cast %208 : vector<2x32xf32> to vector<2x1x32xf32>
    tpu.vector_store %arg8[%c0_109, %c5_110, %c0_111], %211 {strides = array<i32>} : memref<2x16x32xf32, #tpu.memory_space<vmem>>, vector<2x1x32xf32>,
    %cst_112 = arith.constant dense<0.000000e+00> : vector<2x32xf32>
    %212 = tpu.matmul %208, %4, %cst_112 {dimension_numbers = #tpu.dot_dimension_numbers<[1], [0], [0], [1], [0, 0, 1, 1], [], []>} : vector<2x32xf32>, vector<32x32xf32>, vector<2x32xf32> -> vector<2x32xf32>
    %cst_113 = arith.constant dense<0.000000e+00> : vector<2x32xf32>
    %213 = tpu.matmul %208, %5, %cst_113 {dimension_numbers = #tpu.dot_dimension_numbers<[1], [0], [0], [1], [0, 0, 1, 1], [], []>} : vector<2x32xf32>, vector<32x32xf32>, vector<2x32xf32> -> vector<2x32xf32>
    %cst_114 = arith.constant dense<0.000000e+00> : vector<2x32xf32>
    %214 = tpu.matmul %208, %6, %cst_114 {dimension_numbers = #tpu.dot_dimension_numbers<[1], [0], [0], [1], [0, 0, 1, 1], [], []>} : vector<2x32xf32>, vector<32x32xf32>, vector<2x32xf32> -> vector<2x32xf32>
    %215 = vector.broadcast %7 : vector<1x32xf32> to vector<2x32xf32>
    %216 = arith.addf %214, %215 : vector<2x32xf32>
    %c0_115 = arith.constant 0 : index
    %c6 = arith.constant 6 : index
    %c0_116 = arith.constant 0 : index
    %217 = vector.load %arg1[%c0_115, %c6, %c0_116] : memref<2x16x32xf32, #tpu.memory_space<vmem>>, vector<2x1x32xf32>
    %218 = vector.shape_cast %217 : vector<2x1x32xf32> to vector<2x32xf32>
    %219 = arith.addf %218, %212 : vector<2x32xf32>
    %220 = arith.negf %219 : vector<2x32xf32>
    %221 = math.exp %220 : vector<2x32xf32>
    %cst_117 = arith.constant 1.000000e+00 : f32
    %222 = vector.broadcast %cst_117 : f32 to vector<2x32xf32>
    %223 = arith.addf %222, %221 : vector<2x32xf32>
    %224 = arith.divf %222, %223 : vector<2x32xf32>
    %c0_118 = arith.constant 0 : index
    %c6_119 = arith.constant 6 : index
    %c0_120 = arith.constant 0 : index
    %225 = vector.load %arg2[%c0_118, %c6_119, %c0_120] : memref<2x16x32xf32, #tpu.memory_space<vmem>>, vector<2x1x32xf32>
    %226 = vector.shape_cast %225 : vector<2x1x32xf32> to vector<2x32xf32>
    %227 = arith.addf %226, %213 : vector<2x32xf32>
    %228 = arith.negf %227 : vector<2x32xf32>
    %229 = math.exp %228 : vector<2x32xf32>
    %cst_121 = arith.constant 1.000000e+00 : f32
    %230 = vector.broadcast %cst_121 : f32 to vector<2x32xf32>
    %231 = arith.addf %230, %229 : vector<2x32xf32>
    %232 = arith.divf %230, %231 : vector<2x32xf32>
    %c0_122 = arith.constant 0 : index
    %c6_123 = arith.constant 6 : index
    %c0_124 = arith.constant 0 : index
    %233 = vector.load %arg3[%c0_122, %c6_123, %c0_124] : memref<2x16x32xf32, #tpu.memory_space<vmem>>, vector<2x1x32xf32>
    %234 = vector.shape_cast %233 : vector<2x1x32xf32> to vector<2x32xf32>
    %235 = arith.mulf %224, %216 : vector<2x32xf32>
    %236 = arith.addf %234, %235 : vector<2x32xf32>
    %237 = math.tanh %236 : vector<2x32xf32>
    %cst_125 = arith.constant 1.000000e+00 : f32
    %238 = vector.broadcast %cst_125 : f32 to vector<2x32xf32>
    %239 = arith.subf %238, %232 : vector<2x32xf32>
    %240 = arith.mulf %239, %237 : vector<2x32xf32>
    %241 = arith.mulf %232, %208 : vector<2x32xf32>
    %242 = arith.addf %240, %241 : vector<2x32xf32>
    %c0_126 = arith.constant 0 : index
    %c6_127 = arith.constant 6 : index
    %c0_128 = arith.constant 0 : index
    %243 = vector.load %arg8[%c0_126, %c6_127, %c0_128] : memref<2x16x32xf32, #tpu.memory_space<vmem>>, vector<2x1x32xf32>
    %244 = vector.shape_cast %243 : vector<2x1x32xf32> to vector<2x32xf32>
    %245 = vector.shape_cast %242 : vector<2x32xf32> to vector<2x1x32xf32>
    tpu.vector_store %arg8[%c0_126, %c6_127, %c0_128], %245 {strides = array<i32>} : memref<2x16x32xf32, #tpu.memory_space<vmem>>, vector<2x1x32xf32>,
    %cst_129 = arith.constant dense<0.000000e+00> : vector<2x32xf32>
    %246 = tpu.matmul %242, %4, %cst_129 {dimension_numbers = #tpu.dot_dimension_numbers<[1], [0], [0], [1], [0, 0, 1, 1], [], []>} : vector<2x32xf32>, vector<32x32xf32>, vector<2x32xf32> -> vector<2x32xf32>
    %cst_130 = arith.constant dense<0.000000e+00> : vector<2x32xf32>
    %247 = tpu.matmul %242, %5, %cst_130 {dimension_numbers = #tpu.dot_dimension_numbers<[1], [0], [0], [1], [0, 0, 1, 1], [], []>} : vector<2x32xf32>, vector<32x32xf32>, vector<2x32xf32> -> vector<2x32xf32>
    %cst_131 = arith.constant dense<0.000000e+00> : vector<2x32xf32>
    %248 = tpu.matmul %242, %6, %cst_131 {dimension_numbers = #tpu.dot_dimension_numbers<[1], [0], [0], [1], [0, 0, 1, 1], [], []>} : vector<2x32xf32>, vector<32x32xf32>, vector<2x32xf32> -> vector<2x32xf32>
    %249 = vector.broadcast %7 : vector<1x32xf32> to vector<2x32xf32>
    %250 = arith.addf %248, %249 : vector<2x32xf32>
    %c0_132 = arith.constant 0 : index
    %c7 = arith.constant 7 : index
    %c0_133 = arith.constant 0 : index
    %251 = vector.load %arg1[%c0_132, %c7, %c0_133] : memref<2x16x32xf32, #tpu.memory_space<vmem>>, vector<2x1x32xf32>
    %252 = vector.shape_cast %251 : vector<2x1x32xf32> to vector<2x32xf32>
    %253 = arith.addf %252, %246 : vector<2x32xf32>
    %254 = arith.negf %253 : vector<2x32xf32>
    %255 = math.exp %254 : vector<2x32xf32>
    %cst_134 = arith.constant 1.000000e+00 : f32
    %256 = vector.broadcast %cst_134 : f32 to vector<2x32xf32>
    %257 = arith.addf %256, %255 : vector<2x32xf32>
    %258 = arith.divf %256, %257 : vector<2x32xf32>
    %c0_135 = arith.constant 0 : index
    %c7_136 = arith.constant 7 : index
    %c0_137 = arith.constant 0 : index
    %259 = vector.load %arg2[%c0_135, %c7_136, %c0_137] : memref<2x16x32xf32, #tpu.memory_space<vmem>>, vector<2x1x32xf32>
    %260 = vector.shape_cast %259 : vector<2x1x32xf32> to vector<2x32xf32>
    %261 = arith.addf %260, %247 : vector<2x32xf32>
    %262 = arith.negf %261 : vector<2x32xf32>
    %263 = math.exp %262 : vector<2x32xf32>
    %cst_138 = arith.constant 1.000000e+00 : f32
    %264 = vector.broadcast %cst_138 : f32 to vector<2x32xf32>
    %265 = arith.addf %264, %263 : vector<2x32xf32>
    %266 = arith.divf %264, %265 : vector<2x32xf32>
    %c0_139 = arith.constant 0 : index
    %c7_140 = arith.constant 7 : index
    %c0_141 = arith.constant 0 : index
    %267 = vector.load %arg3[%c0_139, %c7_140, %c0_141] : memref<2x16x32xf32, #tpu.memory_space<vmem>>, vector<2x1x32xf32>
    %268 = vector.shape_cast %267 : vector<2x1x32xf32> to vector<2x32xf32>
    %269 = arith.mulf %258, %250 : vector<2x32xf32>
    %270 = arith.addf %268, %269 : vector<2x32xf32>
    %271 = math.tanh %270 : vector<2x32xf32>
    %cst_142 = arith.constant 1.000000e+00 : f32
    %272 = vector.broadcast %cst_142 : f32 to vector<2x32xf32>
    %273 = arith.subf %272, %266 : vector<2x32xf32>
    %274 = arith.mulf %273, %271 : vector<2x32xf32>
    %275 = arith.mulf %266, %242 : vector<2x32xf32>
    %276 = arith.addf %274, %275 : vector<2x32xf32>
    %c0_143 = arith.constant 0 : index
    %c7_144 = arith.constant 7 : index
    %c0_145 = arith.constant 0 : index
    %277 = vector.load %arg8[%c0_143, %c7_144, %c0_145] : memref<2x16x32xf32, #tpu.memory_space<vmem>>, vector<2x1x32xf32>
    %278 = vector.shape_cast %277 : vector<2x1x32xf32> to vector<2x32xf32>
    %279 = vector.shape_cast %276 : vector<2x32xf32> to vector<2x1x32xf32>
    tpu.vector_store %arg8[%c0_143, %c7_144, %c0_145], %279 {strides = array<i32>} : memref<2x16x32xf32, #tpu.memory_space<vmem>>, vector<2x1x32xf32>,
    %cst_146 = arith.constant dense<0.000000e+00> : vector<2x32xf32>
    %280 = tpu.matmul %276, %4, %cst_146 {dimension_numbers = #tpu.dot_dimension_numbers<[1], [0], [0], [1], [0, 0, 1, 1], [], []>} : vector<2x32xf32>, vector<32x32xf32>, vector<2x32xf32> -> vector<2x32xf32>
    %cst_147 = arith.constant dense<0.000000e+00> : vector<2x32xf32>
    %281 = tpu.matmul %276, %5, %cst_147 {dimension_numbers = #tpu.dot_dimension_numbers<[1], [0], [0], [1], [0, 0, 1, 1], [], []>} : vector<2x32xf32>, vector<32x32xf32>, vector<2x32xf32> -> vector<2x32xf32>
    %cst_148 = arith.constant dense<0.000000e+00> : vector<2x32xf32>
    %282 = tpu.matmul %276, %6, %cst_148 {dimension_numbers = #tpu.dot_dimension_numbers<[1], [0], [0], [1], [0, 0, 1, 1], [], []>} : vector<2x32xf32>, vector<32x32xf32>, vector<2x32xf32> -> vector<2x32xf32>
    %283 = vector.broadcast %7 : vector<1x32xf32> to vector<2x32xf32>
    %284 = arith.addf %282, %283 : vector<2x32xf32>
    %c0_149 = arith.constant 0 : index
    %c8 = arith.constant 8 : index
    %c0_150 = arith.constant 0 : index
    %285 = vector.load %arg1[%c0_149, %c8, %c0_150] : memref<2x16x32xf32, #tpu.memory_space<vmem>>, vector<2x1x32xf32>
    %286 = vector.shape_cast %285 : vector<2x1x32xf32> to vector<2x32xf32>
    %287 = arith.addf %286, %280 : vector<2x32xf32>
    %288 = arith.negf %287 : vector<2x32xf32>
    %289 = math.exp %288 : vector<2x32xf32>
    %cst_151 = arith.constant 1.000000e+00 : f32
    %290 = vector.broadcast %cst_151 : f32 to vector<2x32xf32>
    %291 = arith.addf %290, %289 : vector<2x32xf32>
    %292 = arith.divf %290, %291 : vector<2x32xf32>
    %c0_152 = arith.constant 0 : index
    %c8_153 = arith.constant 8 : index
    %c0_154 = arith.constant 0 : index
    %293 = vector.load %arg2[%c0_152, %c8_153, %c0_154] : memref<2x16x32xf32, #tpu.memory_space<vmem>>, vector<2x1x32xf32>
    %294 = vector.shape_cast %293 : vector<2x1x32xf32> to vector<2x32xf32>
    %295 = arith.addf %294, %281 : vector<2x32xf32>
    %296 = arith.negf %295 : vector<2x32xf32>
    %297 = math.exp %296 : vector<2x32xf32>
    %cst_155 = arith.constant 1.000000e+00 : f32
    %298 = vector.broadcast %cst_155 : f32 to vector<2x32xf32>
    %299 = arith.addf %298, %297 : vector<2x32xf32>
    %300 = arith.divf %298, %299 : vector<2x32xf32>
    %c0_156 = arith.constant 0 : index
    %c8_157 = arith.constant 8 : index
    %c0_158 = arith.constant 0 : index
    %301 = vector.load %arg3[%c0_156, %c8_157, %c0_158] : memref<2x16x32xf32, #tpu.memory_space<vmem>>, vector<2x1x32xf32>
    %302 = vector.shape_cast %301 : vector<2x1x32xf32> to vector<2x32xf32>
    %303 = arith.mulf %292, %284 : vector<2x32xf32>
    %304 = arith.addf %302, %303 : vector<2x32xf32>
    %305 = math.tanh %304 : vector<2x32xf32>
    %cst_159 = arith.constant 1.000000e+00 : f32
    %306 = vector.broadcast %cst_159 : f32 to vector<2x32xf32>
    %307 = arith.subf %306, %300 : vector<2x32xf32>
    %308 = arith.mulf %307, %305 : vector<2x32xf32>
    %309 = arith.mulf %300, %276 : vector<2x32xf32>
    %310 = arith.addf %308, %309 : vector<2x32xf32>
    %c0_160 = arith.constant 0 : index
    %c8_161 = arith.constant 8 : index
    %c0_162 = arith.constant 0 : index
    %311 = vector.load %arg8[%c0_160, %c8_161, %c0_162] : memref<2x16x32xf32, #tpu.memory_space<vmem>>, vector<2x1x32xf32>
    %312 = vector.shape_cast %311 : vector<2x1x32xf32> to vector<2x32xf32>
    %313 = vector.shape_cast %310 : vector<2x32xf32> to vector<2x1x32xf32>
    tpu.vector_store %arg8[%c0_160, %c8_161, %c0_162], %313 {strides = array<i32>} : memref<2x16x32xf32, #tpu.memory_space<vmem>>, vector<2x1x32xf32>,
    %cst_163 = arith.constant dense<0.000000e+00> : vector<2x32xf32>
    %314 = tpu.matmul %310, %4, %cst_163 {dimension_numbers = #tpu.dot_dimension_numbers<[1], [0], [0], [1], [0, 0, 1, 1], [], []>} : vector<2x32xf32>, vector<32x32xf32>, vector<2x32xf32> -> vector<2x32xf32>
    %cst_164 = arith.constant dense<0.000000e+00> : vector<2x32xf32>
    %315 = tpu.matmul %310, %5, %cst_164 {dimension_numbers = #tpu.dot_dimension_numbers<[1], [0], [0], [1], [0, 0, 1, 1], [], []>} : vector<2x32xf32>, vector<32x32xf32>, vector<2x32xf32> -> vector<2x32xf32>
    %cst_165 = arith.constant dense<0.000000e+00> : vector<2x32xf32>
    %316 = tpu.matmul %310, %6, %cst_165 {dimension_numbers = #tpu.dot_dimension_numbers<[1], [0], [0], [1], [0, 0, 1, 1], [], []>} : vector<2x32xf32>, vector<32x32xf32>, vector<2x32xf32> -> vector<2x32xf32>
    %317 = vector.broadcast %7 : vector<1x32xf32> to vector<2x32xf32>
    %318 = arith.addf %316, %317 : vector<2x32xf32>
    %c0_166 = arith.constant 0 : index
    %c9 = arith.constant 9 : index
    %c0_167 = arith.constant 0 : index
    %319 = vector.load %arg1[%c0_166, %c9, %c0_167] : memref<2x16x32xf32, #tpu.memory_space<vmem>>, vector<2x1x32xf32>
    %320 = vector.shape_cast %319 : vector<2x1x32xf32> to vector<2x32xf32>
    %321 = arith.addf %320, %314 : vector<2x32xf32>
    %322 = arith.negf %321 : vector<2x32xf32>
    %323 = math.exp %322 : vector<2x32xf32>
    %cst_168 = arith.constant 1.000000e+00 : f32
    %324 = vector.broadcast %cst_168 : f32 to vector<2x32xf32>
    %325 = arith.addf %324, %323 : vector<2x32xf32>
    %326 = arith.divf %324, %325 : vector<2x32xf32>
    %c0_169 = arith.constant 0 : index
    %c9_170 = arith.constant 9 : index
    %c0_171 = arith.constant 0 : index
    %327 = vector.load %arg2[%c0_169, %c9_170, %c0_171] : memref<2x16x32xf32, #tpu.memory_space<vmem>>, vector<2x1x32xf32>
    %328 = vector.shape_cast %327 : vector<2x1x32xf32> to vector<2x32xf32>
    %329 = arith.addf %328, %315 : vector<2x32xf32>
    %330 = arith.negf %329 : vector<2x32xf32>
    %331 = math.exp %330 : vector<2x32xf32>
    %cst_172 = arith.constant 1.000000e+00 : f32
    %332 = vector.broadcast %cst_172 : f32 to vector<2x32xf32>
    %333 = arith.addf %332, %331 : vector<2x32xf32>
    %334 = arith.divf %332, %333 : vector<2x32xf32>
    %c0_173 = arith.constant 0 : index
    %c9_174 = arith.constant 9 : index
    %c0_175 = arith.constant 0 : index
    %335 = vector.load %arg3[%c0_173, %c9_174, %c0_175] : memref<2x16x32xf32, #tpu.memory_space<vmem>>, vector<2x1x32xf32>
    %336 = vector.shape_cast %335 : vector<2x1x32xf32> to vector<2x32xf32>
    %337 = arith.mulf %326, %318 : vector<2x32xf32>
    %338 = arith.addf %336, %337 : vector<2x32xf32>
    %339 = math.tanh %338 : vector<2x32xf32>
    %cst_176 = arith.constant 1.000000e+00 : f32
    %340 = vector.broadcast %cst_176 : f32 to vector<2x32xf32>
    %341 = arith.subf %340, %334 : vector<2x32xf32>
    %342 = arith.mulf %341, %339 : vector<2x32xf32>
    %343 = arith.mulf %334, %310 : vector<2x32xf32>
    %344 = arith.addf %342, %343 : vector<2x32xf32>
    %c0_177 = arith.constant 0 : index
    %c9_178 = arith.constant 9 : index
    %c0_179 = arith.constant 0 : index
    %345 = vector.load %arg8[%c0_177, %c9_178, %c0_179] : memref<2x16x32xf32, #tpu.memory_space<vmem>>, vector<2x1x32xf32>
    %346 = vector.shape_cast %345 : vector<2x1x32xf32> to vector<2x32xf32>
    %347 = vector.shape_cast %344 : vector<2x32xf32> to vector<2x1x32xf32>
    tpu.vector_store %arg8[%c0_177, %c9_178, %c0_179], %347 {strides = array<i32>} : memref<2x16x32xf32, #tpu.memory_space<vmem>>, vector<2x1x32xf32>,
    %cst_180 = arith.constant dense<0.000000e+00> : vector<2x32xf32>
    %348 = tpu.matmul %344, %4, %cst_180 {dimension_numbers = #tpu.dot_dimension_numbers<[1], [0], [0], [1], [0, 0, 1, 1], [], []>} : vector<2x32xf32>, vector<32x32xf32>, vector<2x32xf32> -> vector<2x32xf32>
    %cst_181 = arith.constant dense<0.000000e+00> : vector<2x32xf32>
    %349 = tpu.matmul %344, %5, %cst_181 {dimension_numbers = #tpu.dot_dimension_numbers<[1], [0], [0], [1], [0, 0, 1, 1], [], []>} : vector<2x32xf32>, vector<32x32xf32>, vector<2x32xf32> -> vector<2x32xf32>
    %cst_182 = arith.constant dense<0.000000e+00> : vector<2x32xf32>
    %350 = tpu.matmul %344, %6, %cst_182 {dimension_numbers = #tpu.dot_dimension_numbers<[1], [0], [0], [1], [0, 0, 1, 1], [], []>} : vector<2x32xf32>, vector<32x32xf32>, vector<2x32xf32> -> vector<2x32xf32>
    %351 = vector.broadcast %7 : vector<1x32xf32> to vector<2x32xf32>
    %352 = arith.addf %350, %351 : vector<2x32xf32>
    %c0_183 = arith.constant 0 : index
    %c10 = arith.constant 10 : index
    %c0_184 = arith.constant 0 : index
    %353 = vector.load %arg1[%c0_183, %c10, %c0_184] : memref<2x16x32xf32, #tpu.memory_space<vmem>>, vector<2x1x32xf32>
    %354 = vector.shape_cast %353 : vector<2x1x32xf32> to vector<2x32xf32>
    %355 = arith.addf %354, %348 : vector<2x32xf32>
    %356 = arith.negf %355 : vector<2x32xf32>
    %357 = math.exp %356 : vector<2x32xf32>
    %cst_185 = arith.constant 1.000000e+00 : f32
    %358 = vector.broadcast %cst_185 : f32 to vector<2x32xf32>
    %359 = arith.addf %358, %357 : vector<2x32xf32>
    %360 = arith.divf %358, %359 : vector<2x32xf32>
    %c0_186 = arith.constant 0 : index
    %c10_187 = arith.constant 10 : index
    %c0_188 = arith.constant 0 : index
    %361 = vector.load %arg2[%c0_186, %c10_187, %c0_188] : memref<2x16x32xf32, #tpu.memory_space<vmem>>, vector<2x1x32xf32>
    %362 = vector.shape_cast %361 : vector<2x1x32xf32> to vector<2x32xf32>
    %363 = arith.addf %362, %349 : vector<2x32xf32>
    %364 = arith.negf %363 : vector<2x32xf32>
    %365 = math.exp %364 : vector<2x32xf32>
    %cst_189 = arith.constant 1.000000e+00 : f32
    %366 = vector.broadcast %cst_189 : f32 to vector<2x32xf32>
    %367 = arith.addf %366, %365 : vector<2x32xf32>
    %368 = arith.divf %366, %367 : vector<2x32xf32>
    %c0_190 = arith.constant 0 : index
    %c10_191 = arith.constant 10 : index
    %c0_192 = arith.constant 0 : index
    %369 = vector.load %arg3[%c0_190, %c10_191, %c0_192] : memref<2x16x32xf32, #tpu.memory_space<vmem>>, vector<2x1x32xf32>
    %370 = vector.shape_cast %369 : vector<2x1x32xf32> to vector<2x32xf32>
    %371 = arith.mulf %360, %352 : vector<2x32xf32>
    %372 = arith.addf %370, %371 : vector<2x32xf32>
    %373 = math.tanh %372 : vector<2x32xf32>
    %cst_193 = arith.constant 1.000000e+00 : f32
    %374 = vector.broadcast %cst_193 : f32 to vector<2x32xf32>
    %375 = arith.subf %374, %368 : vector<2x32xf32>
    %376 = arith.mulf %375, %373 : vector<2x32xf32>
    %377 = arith.mulf %368, %344 : vector<2x32xf32>
    %378 = arith.addf %376, %377 : vector<2x32xf32>
    %c0_194 = arith.constant 0 : index
    %c10_195 = arith.constant 10 : index
    %c0_196 = arith.constant 0 : index
    %379 = vector.load %arg8[%c0_194, %c10_195, %c0_196] : memref<2x16x32xf32, #tpu.memory_space<vmem>>, vector<2x1x32xf32>
    %380 = vector.shape_cast %379 : vector<2x1x32xf32> to vector<2x32xf32>
    %381 = vector.shape_cast %378 : vector<2x32xf32> to vector<2x1x32xf32>
    tpu.vector_store %arg8[%c0_194, %c10_195, %c0_196], %381 {strides = array<i32>} : memref<2x16x32xf32, #tpu.memory_space<vmem>>, vector<2x1x32xf32>,
    %cst_197 = arith.constant dense<0.000000e+00> : vector<2x32xf32>
    %382 = tpu.matmul %378, %4, %cst_197 {dimension_numbers = #tpu.dot_dimension_numbers<[1], [0], [0], [1], [0, 0, 1, 1], [], []>} : vector<2x32xf32>, vector<32x32xf32>, vector<2x32xf32> -> vector<2x32xf32>
    %cst_198 = arith.constant dense<0.000000e+00> : vector<2x32xf32>
    %383 = tpu.matmul %378, %5, %cst_198 {dimension_numbers = #tpu.dot_dimension_numbers<[1], [0], [0], [1], [0, 0, 1, 1], [], []>} : vector<2x32xf32>, vector<32x32xf32>, vector<2x32xf32> -> vector<2x32xf32>
    %cst_199 = arith.constant dense<0.000000e+00> : vector<2x32xf32>
    %384 = tpu.matmul %378, %6, %cst_199 {dimension_numbers = #tpu.dot_dimension_numbers<[1], [0], [0], [1], [0, 0, 1, 1], [], []>} : vector<2x32xf32>, vector<32x32xf32>, vector<2x32xf32> -> vector<2x32xf32>
    %385 = vector.broadcast %7 : vector<1x32xf32> to vector<2x32xf32>
    %386 = arith.addf %384, %385 : vector<2x32xf32>
    %c0_200 = arith.constant 0 : index
    %c11 = arith.constant 11 : index
    %c0_201 = arith.constant 0 : index
    %387 = vector.load %arg1[%c0_200, %c11, %c0_201] : memref<2x16x32xf32, #tpu.memory_space<vmem>>, vector<2x1x32xf32>
    %388 = vector.shape_cast %387 : vector<2x1x32xf32> to vector<2x32xf32>
    %389 = arith.addf %388, %382 : vector<2x32xf32>
    %390 = arith.negf %389 : vector<2x32xf32>
    %391 = math.exp %390 : vector<2x32xf32>
    %cst_202 = arith.constant 1.000000e+00 : f32
    %392 = vector.broadcast %cst_202 : f32 to vector<2x32xf32>
    %393 = arith.addf %392, %391 : vector<2x32xf32>
    %394 = arith.divf %392, %393 : vector<2x32xf32>
    %c0_203 = arith.constant 0 : index
    %c11_204 = arith.constant 11 : index
    %c0_205 = arith.constant 0 : index
    %395 = vector.load %arg2[%c0_203, %c11_204, %c0_205] : memref<2x16x32xf32, #tpu.memory_space<vmem>>, vector<2x1x32xf32>
    %396 = vector.shape_cast %395 : vector<2x1x32xf32> to vector<2x32xf32>
    %397 = arith.addf %396, %383 : vector<2x32xf32>
    %398 = arith.negf %397 : vector<2x32xf32>
    %399 = math.exp %398 : vector<2x32xf32>
    %cst_206 = arith.constant 1.000000e+00 : f32
    %400 = vector.broadcast %cst_206 : f32 to vector<2x32xf32>
    %401 = arith.addf %400, %399 : vector<2x32xf32>
    %402 = arith.divf %400, %401 : vector<2x32xf32>
    %c0_207 = arith.constant 0 : index
    %c11_208 = arith.constant 11 : index
    %c0_209 = arith.constant 0 : index
    %403 = vector.load %arg3[%c0_207, %c11_208, %c0_209] : memref<2x16x32xf32, #tpu.memory_space<vmem>>, vector<2x1x32xf32>
    %404 = vector.shape_cast %403 : vector<2x1x32xf32> to vector<2x32xf32>
    %405 = arith.mulf %394, %386 : vector<2x32xf32>
    %406 = arith.addf %404, %405 : vector<2x32xf32>
    %407 = math.tanh %406 : vector<2x32xf32>
    %cst_210 = arith.constant 1.000000e+00 : f32
    %408 = vector.broadcast %cst_210 : f32 to vector<2x32xf32>
    %409 = arith.subf %408, %402 : vector<2x32xf32>
    %410 = arith.mulf %409, %407 : vector<2x32xf32>
    %411 = arith.mulf %402, %378 : vector<2x32xf32>
    %412 = arith.addf %410, %411 : vector<2x32xf32>
    %c0_211 = arith.constant 0 : index
    %c11_212 = arith.constant 11 : index
    %c0_213 = arith.constant 0 : index
    %413 = vector.load %arg8[%c0_211, %c11_212, %c0_213] : memref<2x16x32xf32, #tpu.memory_space<vmem>>, vector<2x1x32xf32>
    %414 = vector.shape_cast %413 : vector<2x1x32xf32> to vector<2x32xf32>
    %415 = vector.shape_cast %412 : vector<2x32xf32> to vector<2x1x32xf32>
    tpu.vector_store %arg8[%c0_211, %c11_212, %c0_213], %415 {strides = array<i32>} : memref<2x16x32xf32, #tpu.memory_space<vmem>>, vector<2x1x32xf32>,
    %cst_214 = arith.constant dense<0.000000e+00> : vector<2x32xf32>
    %416 = tpu.matmul %412, %4, %cst_214 {dimension_numbers = #tpu.dot_dimension_numbers<[1], [0], [0], [1], [0, 0, 1, 1], [], []>} : vector<2x32xf32>, vector<32x32xf32>, vector<2x32xf32> -> vector<2x32xf32>
    %cst_215 = arith.constant dense<0.000000e+00> : vector<2x32xf32>
    %417 = tpu.matmul %412, %5, %cst_215 {dimension_numbers = #tpu.dot_dimension_numbers<[1], [0], [0], [1], [0, 0, 1, 1], [], []>} : vector<2x32xf32>, vector<32x32xf32>, vector<2x32xf32> -> vector<2x32xf32>
    %cst_216 = arith.constant dense<0.000000e+00> : vector<2x32xf32>
    %418 = tpu.matmul %412, %6, %cst_216 {dimension_numbers = #tpu.dot_dimension_numbers<[1], [0], [0], [1], [0, 0, 1, 1], [], []>} : vector<2x32xf32>, vector<32x32xf32>, vector<2x32xf32> -> vector<2x32xf32>
    %419 = vector.broadcast %7 : vector<1x32xf32> to vector<2x32xf32>
    %420 = arith.addf %418, %419 : vector<2x32xf32>
    %c0_217 = arith.constant 0 : index
    %c12 = arith.constant 12 : index
    %c0_218 = arith.constant 0 : index
    %421 = vector.load %arg1[%c0_217, %c12, %c0_218] : memref<2x16x32xf32, #tpu.memory_space<vmem>>, vector<2x1x32xf32>
    %422 = vector.shape_cast %421 : vector<2x1x32xf32> to vector<2x32xf32>
    %423 = arith.addf %422, %416 : vector<2x32xf32>
    %424 = arith.negf %423 : vector<2x32xf32>
    %425 = math.exp %424 : vector<2x32xf32>
    %cst_219 = arith.constant 1.000000e+00 : f32
    %426 = vector.broadcast %cst_219 : f32 to vector<2x32xf32>
    %427 = arith.addf %426, %425 : vector<2x32xf32>
    %428 = arith.divf %426, %427 : vector<2x32xf32>
    %c0_220 = arith.constant 0 : index
    %c12_221 = arith.constant 12 : index
    %c0_222 = arith.constant 0 : index
    %429 = vector.load %arg2[%c0_220, %c12_221, %c0_222] : memref<2x16x32xf32, #tpu.memory_space<vmem>>, vector<2x1x32xf32>
    %430 = vector.shape_cast %429 : vector<2x1x32xf32> to vector<2x32xf32>
    %431 = arith.addf %430, %417 : vector<2x32xf32>
    %432 = arith.negf %431 : vector<2x32xf32>
    %433 = math.exp %432 : vector<2x32xf32>
    %cst_223 = arith.constant 1.000000e+00 : f32
    %434 = vector.broadcast %cst_223 : f32 to vector<2x32xf32>
    %435 = arith.addf %434, %433 : vector<2x32xf32>
    %436 = arith.divf %434, %435 : vector<2x32xf32>
    %c0_224 = arith.constant 0 : index
    %c12_225 = arith.constant 12 : index
    %c0_226 = arith.constant 0 : index
    %437 = vector.load %arg3[%c0_224, %c12_225, %c0_226] : memref<2x16x32xf32, #tpu.memory_space<vmem>>, vector<2x1x32xf32>
    %438 = vector.shape_cast %437 : vector<2x1x32xf32> to vector<2x32xf32>
    %439 = arith.mulf %428, %420 : vector<2x32xf32>
    %440 = arith.addf %438, %439 : vector<2x32xf32>
    %441 = math.tanh %440 : vector<2x32xf32>
    %cst_227 = arith.constant 1.000000e+00 : f32
    %442 = vector.broadcast %cst_227 : f32 to vector<2x32xf32>
    %443 = arith.subf %442, %436 : vector<2x32xf32>
    %444 = arith.mulf %443, %441 : vector<2x32xf32>
    %445 = arith.mulf %436, %412 : vector<2x32xf32>
    %446 = arith.addf %444, %445 : vector<2x32xf32>
    %c0_228 = arith.constant 0 : index
    %c12_229 = arith.constant 12 : index
    %c0_230 = arith.constant 0 : index
    %447 = vector.load %arg8[%c0_228, %c12_229, %c0_230] : memref<2x16x32xf32, #tpu.memory_space<vmem>>, vector<2x1x32xf32>
    %448 = vector.shape_cast %447 : vector<2x1x32xf32> to vector<2x32xf32>
    %449 = vector.shape_cast %446 : vector<2x32xf32> to vector<2x1x32xf32>
    tpu.vector_store %arg8[%c0_228, %c12_229, %c0_230], %449 {strides = array<i32>} : memref<2x16x32xf32, #tpu.memory_space<vmem>>, vector<2x1x32xf32>,
    %cst_231 = arith.constant dense<0.000000e+00> : vector<2x32xf32>
    %450 = tpu.matmul %446, %4, %cst_231 {dimension_numbers = #tpu.dot_dimension_numbers<[1], [0], [0], [1], [0, 0, 1, 1], [], []>} : vector<2x32xf32>, vector<32x32xf32>, vector<2x32xf32> -> vector<2x32xf32>
    %cst_232 = arith.constant dense<0.000000e+00> : vector<2x32xf32>
    %451 = tpu.matmul %446, %5, %cst_232 {dimension_numbers = #tpu.dot_dimension_numbers<[1], [0], [0], [1], [0, 0, 1, 1], [], []>} : vector<2x32xf32>, vector<32x32xf32>, vector<2x32xf32> -> vector<2x32xf32>
    %cst_233 = arith.constant dense<0.000000e+00> : vector<2x32xf32>
    %452 = tpu.matmul %446, %6, %cst_233 {dimension_numbers = #tpu.dot_dimension_numbers<[1], [0], [0], [1], [0, 0, 1, 1], [], []>} : vector<2x32xf32>, vector<32x32xf32>, vector<2x32xf32> -> vector<2x32xf32>
    %453 = vector.broadcast %7 : vector<1x32xf32> to vector<2x32xf32>
    %454 = arith.addf %452, %453 : vector<2x32xf32>
    %c0_234 = arith.constant 0 : index
    %c13 = arith.constant 13 : index
    %c0_235 = arith.constant 0 : index
    %455 = vector.load %arg1[%c0_234, %c13, %c0_235] : memref<2x16x32xf32, #tpu.memory_space<vmem>>, vector<2x1x32xf32>
    %456 = vector.shape_cast %455 : vector<2x1x32xf32> to vector<2x32xf32>
    %457 = arith.addf %456, %450 : vector<2x32xf32>
    %458 = arith.negf %457 : vector<2x32xf32>
    %459 = math.exp %458 : vector<2x32xf32>
    %cst_236 = arith.constant 1.000000e+00 : f32
    %460 = vector.broadcast %cst_236 : f32 to vector<2x32xf32>
    %461 = arith.addf %460, %459 : vector<2x32xf32>
    %462 = arith.divf %460, %461 : vector<2x32xf32>
    %c0_237 = arith.constant 0 : index
    %c13_238 = arith.constant 13 : index
    %c0_239 = arith.constant 0 : index
    %463 = vector.load %arg2[%c0_237, %c13_238, %c0_239] : memref<2x16x32xf32, #tpu.memory_space<vmem>>, vector<2x1x32xf32>
    %464 = vector.shape_cast %463 : vector<2x1x32xf32> to vector<2x32xf32>
    %465 = arith.addf %464, %451 : vector<2x32xf32>
    %466 = arith.negf %465 : vector<2x32xf32>
    %467 = math.exp %466 : vector<2x32xf32>
    %cst_240 = arith.constant 1.000000e+00 : f32
    %468 = vector.broadcast %cst_240 : f32 to vector<2x32xf32>
    %469 = arith.addf %468, %467 : vector<2x32xf32>
    %470 = arith.divf %468, %469 : vector<2x32xf32>
    %c0_241 = arith.constant 0 : index
    %c13_242 = arith.constant 13 : index
    %c0_243 = arith.constant 0 : index
    %471 = vector.load %arg3[%c0_241, %c13_242, %c0_243] : memref<2x16x32xf32, #tpu.memory_space<vmem>>, vector<2x1x32xf32>
    %472 = vector.shape_cast %471 : vector<2x1x32xf32> to vector<2x32xf32>
    %473 = arith.mulf %462, %454 : vector<2x32xf32>
    %474 = arith.addf %472, %473 : vector<2x32xf32>
    %475 = math.tanh %474 : vector<2x32xf32>
    %cst_244 = arith.constant 1.000000e+00 : f32
    %476 = vector.broadcast %cst_244 : f32 to vector<2x32xf32>
    %477 = arith.subf %476, %470 : vector<2x32xf32>
    %478 = arith.mulf %477, %475 : vector<2x32xf32>
    %479 = arith.mulf %470, %446 : vector<2x32xf32>
    %480 = arith.addf %478, %479 : vector<2x32xf32>
    %c0_245 = arith.constant 0 : index
    %c13_246 = arith.constant 13 : index
    %c0_247 = arith.constant 0 : index
    %481 = vector.load %arg8[%c0_245, %c13_246, %c0_247] : memref<2x16x32xf32, #tpu.memory_space<vmem>>, vector<2x1x32xf32>
    %482 = vector.shape_cast %481 : vector<2x1x32xf32> to vector<2x32xf32>
    %483 = vector.shape_cast %480 : vector<2x32xf32> to vector<2x1x32xf32>
    tpu.vector_store %arg8[%c0_245, %c13_246, %c0_247], %483 {strides = array<i32>} : memref<2x16x32xf32, #tpu.memory_space<vmem>>, vector<2x1x32xf32>,
    %cst_248 = arith.constant dense<0.000000e+00> : vector<2x32xf32>
    %484 = tpu.matmul %480, %4, %cst_248 {dimension_numbers = #tpu.dot_dimension_numbers<[1], [0], [0], [1], [0, 0, 1, 1], [], []>} : vector<2x32xf32>, vector<32x32xf32>, vector<2x32xf32> -> vector<2x32xf32>
    %cst_249 = arith.constant dense<0.000000e+00> : vector<2x32xf32>
    %485 = tpu.matmul %480, %5, %cst_249 {dimension_numbers = #tpu.dot_dimension_numbers<[1], [0], [0], [1], [0, 0, 1, 1], [], []>} : vector<2x32xf32>, vector<32x32xf32>, vector<2x32xf32> -> vector<2x32xf32>
    %cst_250 = arith.constant dense<0.000000e+00> : vector<2x32xf32>
    %486 = tpu.matmul %480, %6, %cst_250 {dimension_numbers = #tpu.dot_dimension_numbers<[1], [0], [0], [1], [0, 0, 1, 1], [], []>} : vector<2x32xf32>, vector<32x32xf32>, vector<2x32xf32> -> vector<2x32xf32>
    %487 = vector.broadcast %7 : vector<1x32xf32> to vector<2x32xf32>
    %488 = arith.addf %486, %487 : vector<2x32xf32>
    %c0_251 = arith.constant 0 : index
    %c14 = arith.constant 14 : index
    %c0_252 = arith.constant 0 : index
    %489 = vector.load %arg1[%c0_251, %c14, %c0_252] : memref<2x16x32xf32, #tpu.memory_space<vmem>>, vector<2x1x32xf32>
    %490 = vector.shape_cast %489 : vector<2x1x32xf32> to vector<2x32xf32>
    %491 = arith.addf %490, %484 : vector<2x32xf32>
    %492 = arith.negf %491 : vector<2x32xf32>
    %493 = math.exp %492 : vector<2x32xf32>
    %cst_253 = arith.constant 1.000000e+00 : f32
    %494 = vector.broadcast %cst_253 : f32 to vector<2x32xf32>
    %495 = arith.addf %494, %493 : vector<2x32xf32>
    %496 = arith.divf %494, %495 : vector<2x32xf32>
    %c0_254 = arith.constant 0 : index
    %c14_255 = arith.constant 14 : index
    %c0_256 = arith.constant 0 : index
    %497 = vector.load %arg2[%c0_254, %c14_255, %c0_256] : memref<2x16x32xf32, #tpu.memory_space<vmem>>, vector<2x1x32xf32>
    %498 = vector.shape_cast %497 : vector<2x1x32xf32> to vector<2x32xf32>
    %499 = arith.addf %498, %485 : vector<2x32xf32>
    %500 = arith.negf %499 : vector<2x32xf32>
    %501 = math.exp %500 : vector<2x32xf32>
    %cst_257 = arith.constant 1.000000e+00 : f32
    %502 = vector.broadcast %cst_257 : f32 to vector<2x32xf32>
    %503 = arith.addf %502, %501 : vector<2x32xf32>
    %504 = arith.divf %502, %503 : vector<2x32xf32>
    %c0_258 = arith.constant 0 : index
    %c14_259 = arith.constant 14 : index
    %c0_260 = arith.constant 0 : index
    %505 = vector.load %arg3[%c0_258, %c14_259, %c0_260] : memref<2x16x32xf32, #tpu.memory_space<vmem>>, vector<2x1x32xf32>
    %506 = vector.shape_cast %505 : vector<2x1x32xf32> to vector<2x32xf32>
    %507 = arith.mulf %496, %488 : vector<2x32xf32>
    %508 = arith.addf %506, %507 : vector<2x32xf32>
    %509 = math.tanh %508 : vector<2x32xf32>
    %cst_261 = arith.constant 1.000000e+00 : f32
    %510 = vector.broadcast %cst_261 : f32 to vector<2x32xf32>
    %511 = arith.subf %510, %504 : vector<2x32xf32>
    %512 = arith.mulf %511, %509 : vector<2x32xf32>
    %513 = arith.mulf %504, %480 : vector<2x32xf32>
    %514 = arith.addf %512, %513 : vector<2x32xf32>
    %c0_262 = arith.constant 0 : index
    %c14_263 = arith.constant 14 : index
    %c0_264 = arith.constant 0 : index
    %515 = vector.load %arg8[%c0_262, %c14_263, %c0_264] : memref<2x16x32xf32, #tpu.memory_space<vmem>>, vector<2x1x32xf32>
    %516 = vector.shape_cast %515 : vector<2x1x32xf32> to vector<2x32xf32>
    %517 = vector.shape_cast %514 : vector<2x32xf32> to vector<2x1x32xf32>
    tpu.vector_store %arg8[%c0_262, %c14_263, %c0_264], %517 {strides = array<i32>} : memref<2x16x32xf32, #tpu.memory_space<vmem>>, vector<2x1x32xf32>,
    %cst_265 = arith.constant dense<0.000000e+00> : vector<2x32xf32>
    %518 = tpu.matmul %514, %4, %cst_265 {dimension_numbers = #tpu.dot_dimension_numbers<[1], [0], [0], [1], [0, 0, 1, 1], [], []>} : vector<2x32xf32>, vector<32x32xf32>, vector<2x32xf32> -> vector<2x32xf32>
    %cst_266 = arith.constant dense<0.000000e+00> : vector<2x32xf32>
    %519 = tpu.matmul %514, %5, %cst_266 {dimension_numbers = #tpu.dot_dimension_numbers<[1], [0], [0], [1], [0, 0, 1, 1], [], []>} : vector<2x32xf32>, vector<32x32xf32>, vector<2x32xf32> -> vector<2x32xf32>
    %cst_267 = arith.constant dense<0.000000e+00> : vector<2x32xf32>
    %520 = tpu.matmul %514, %6, %cst_267 {dimension_numbers = #tpu.dot_dimension_numbers<[1], [0], [0], [1], [0, 0, 1, 1], [], []>} : vector<2x32xf32>, vector<32x32xf32>, vector<2x32xf32> -> vector<2x32xf32>
    %521 = vector.broadcast %7 : vector<1x32xf32> to vector<2x32xf32>
    %522 = arith.addf %520, %521 : vector<2x32xf32>
    %c0_268 = arith.constant 0 : index
    %c15 = arith.constant 15 : index
    %c0_269 = arith.constant 0 : index
    %523 = vector.load %arg1[%c0_268, %c15, %c0_269] : memref<2x16x32xf32, #tpu.memory_space<vmem>>, vector<2x1x32xf32>
    %524 = vector.shape_cast %523 : vector<2x1x32xf32> to vector<2x32xf32>
    %525 = arith.addf %524, %518 : vector<2x32xf32>
    %526 = arith.negf %525 : vector<2x32xf32>
    %527 = math.exp %526 : vector<2x32xf32>
    %cst_270 = arith.constant 1.000000e+00 : f32
    %528 = vector.broadcast %cst_270 : f32 to vector<2x32xf32>
    %529 = arith.addf %528, %527 : vector<2x32xf32>
    %530 = arith.divf %528, %529 : vector<2x32xf32>
    %c0_271 = arith.constant 0 : index
    %c15_272 = arith.constant 15 : index
    %c0_273 = arith.constant 0 : index
    %531 = vector.load %arg2[%c0_271, %c15_272, %c0_273] : memref<2x16x32xf32, #tpu.memory_space<vmem>>, vector<2x1x32xf32>
    %532 = vector.shape_cast %531 : vector<2x1x32xf32> to vector<2x32xf32>
    %533 = arith.addf %532, %519 : vector<2x32xf32>
    %534 = arith.negf %533 : vector<2x32xf32>
    %535 = math.exp %534 : vector<2x32xf32>
    %cst_274 = arith.constant 1.000000e+00 : f32
    %536 = vector.broadcast %cst_274 : f32 to vector<2x32xf32>
    %537 = arith.addf %536, %535 : vector<2x32xf32>
    %538 = arith.divf %536, %537 : vector<2x32xf32>
    %c0_275 = arith.constant 0 : index
    %c15_276 = arith.constant 15 : index
    %c0_277 = arith.constant 0 : index
    %539 = vector.load %arg3[%c0_275, %c15_276, %c0_277] : memref<2x16x32xf32, #tpu.memory_space<vmem>>, vector<2x1x32xf32>
    %540 = vector.shape_cast %539 : vector<2x1x32xf32> to vector<2x32xf32>
    %541 = arith.mulf %530, %522 : vector<2x32xf32>
    %542 = arith.addf %540, %541 : vector<2x32xf32>
    %543 = math.tanh %542 : vector<2x32xf32>
    %cst_278 = arith.constant 1.000000e+00 : f32
    %544 = vector.broadcast %cst_278 : f32 to vector<2x32xf32>
    %545 = arith.subf %544, %538 : vector<2x32xf32>
    %546 = arith.mulf %545, %543 : vector<2x32xf32>
    %547 = arith.mulf %538, %514 : vector<2x32xf32>
    %548 = arith.addf %546, %547 : vector<2x32xf32>
    %c0_279 = arith.constant 0 : index
    %c15_280 = arith.constant 15 : index
    %c0_281 = arith.constant 0 : index
    %549 = vector.load %arg8[%c0_279, %c15_280, %c0_281] : memref<2x16x32xf32, #tpu.memory_space<vmem>>, vector<2x1x32xf32>
    %550 = vector.shape_cast %549 : vector<2x1x32xf32> to vector<2x32xf32>
    %551 = vector.shape_cast %548 : vector<2x32xf32> to vector<2x1x32xf32>
    tpu.vector_store %arg8[%c0_279, %c15_280, %c0_281], %551 {strides = array<i32>} : memref<2x16x32xf32, #tpu.memory_space<vmem>>, vector<2x1x32xf32>,
    %c0_282 = arith.constant 0 : index
    %c0_283 = arith.constant 0 : index
    %552 = vector.load %arg9[%c0_282, %c0_283] : memref<2x32xf32, #tpu.memory_space<vmem>>, vector<2x32xf32>
    tpu.vector_store %arg9[%c0_282, %c0_283], %548 {strides = array<i32>} : memref<2x32xf32, #tpu.memory_space<vmem>>, vector<2x32xf32>,
    return
  }
  func.func @transform_0(%arg0: i32) -> (i32, i32, i32) {
    %c0_i32 = arith.constant 0 : i32
    %c0_i32_0 = arith.constant 0 : i32
    %c0_i32_1 = arith.constant 0 : i32
    return %c0_i32, %arg0, %c0_i32_0 : i32, i32, i32
  }
  func.func @transform_1(%arg0: i32) -> (i32, i32, i32) {
    %c0_i32 = arith.constant 0 : i32
    %c0_i32_0 = arith.constant 0 : i32
    %c0_i32_1 = arith.constant 0 : i32
    return %c0_i32, %arg0, %c0_i32_0 : i32, i32, i32
  }
  func.func @transform_2(%arg0: i32) -> (i32, i32, i32) {
    %c0_i32 = arith.constant 0 : i32
    %c0_i32_0 = arith.constant 0 : i32
    %c0_i32_1 = arith.constant 0 : i32
    return %c0_i32, %arg0, %c0_i32_0 : i32, i32, i32
  }
  func.func @transform_3(%arg0: i32) -> (i32, i32) {
    %c0_i32 = arith.constant 0 : i32
    %c0_i32_0 = arith.constant 0 : i32
    %c0_i32_1 = arith.constant 0 : i32
    return %c0_i32, %c0_i32_0 : i32, i32
  }
  func.func @transform_4(%arg0: i32) -> (i32, i32) {
    %c0_i32 = arith.constant 0 : i32
    %c0_i32_0 = arith.constant 0 : i32
    %c0_i32_1 = arith.constant 0 : i32
    return %c0_i32, %c0_i32_0 : i32, i32
  }
  func.func @transform_5(%arg0: i32) -> (i32, i32) {
    %c0_i32 = arith.constant 0 : i32
    %c0_i32_0 = arith.constant 0 : i32
    %c0_i32_1 = arith.constant 0 : i32
    return %c0_i32, %c0_i32_0 : i32, i32
  }
  func.func @transform_6(%arg0: i32) -> (i32, i32) {
    %c0_i32 = arith.constant 0 : i32
    %c0_i32_0 = arith.constant 0 : i32
    %c0_i32_1 = arith.constant 0 : i32
    return %c0_i32, %c0_i32_0 : i32, i32
  }
  func.func @transform_7(%arg0: i32) -> (i32, i32, i32) {
    %c0_i32 = arith.constant 0 : i32
    %c0_i32_0 = arith.constant 0 : i32
    %c0_i32_1 = arith.constant 0 : i32
    return %c0_i32, %arg0, %c0_i32_0 : i32, i32, i32
  }
}

module attributes {stable_mosaic.version = 11 : i64} {
  func.func @dense_kernel(%arg0: i32, %arg1: memref<64x32xf32, #tpu.memory_space<vmem>>, %arg2: memref<32x64xf32, #tpu.memory_space<vmem>>, %arg3: memref<1x64xf32, #tpu.memory_space<vmem>>, %arg4: memref<64x64xf32, #tpu.memory_space<vmem>>) attributes {dimension_semantics = [#tpu.dimension_semantics<parallel>], iteration_bounds = array<i64: 1>, scalar_prefetch = 0 : i64, scratch_operands = 0 : i64, tpu.core_type = #tpu.core_type<tc>, window_params = [{transform_indices = @transform_0, window_bounds = array<i64: 64, 32>}, {pipeline_mode = #tpu.pipeline_mode<synchronous>, transform_indices = @transform_1, window_bounds = array<i64: 32, 64>}, {pipeline_mode = #tpu.pipeline_mode<synchronous>, transform_indices = @transform_2, window_bounds = array<i64: 1, 64>}, {transform_indices = @transform_3, window_bounds = array<i64: 64, 64>}]} {
    %c0 = arith.constant 0 : index
    %c0_0 = arith.constant 0 : index
    %0 = vector.load %arg1[%c0, %c0_0] : memref<64x32xf32, #tpu.memory_space<vmem>>, vector<64x32xf32>
    %c0_1 = arith.constant 0 : index
    %c0_2 = arith.constant 0 : index
    %1 = vector.load %arg2[%c0_1, %c0_2] : memref<32x64xf32, #tpu.memory_space<vmem>>, vector<32x64xf32>
    %cst = arith.constant dense<0.000000e+00> : vector<64x64xf32>
    %2 = tpu.matmul %0, %1, %cst {dimension_numbers = #tpu.dot_dimension_numbers<[1], [0], [0], [1], [0, 0, 1, 1], [], []>} : vector<64x32xf32>, vector<32x64xf32>, vector<64x64xf32> -> vector<64x64xf32>
    %c0_3 = arith.constant 0 : index
    %c0_4 = arith.constant 0 : index
    %3 = vector.load %arg3[%c0_3, %c0_4] : memref<1x64xf32, #tpu.memory_space<vmem>>, vector<1x64xf32>
    %4 = vector.broadcast %3 : vector<1x64xf32> to vector<64x64xf32>
    %5 = arith.addf %2, %4 : vector<64x64xf32>
    %c0_5 = arith.constant 0 : index
    %c0_6 = arith.constant 0 : index
    %6 = vector.load %arg4[%c0_5, %c0_6] : memref<64x64xf32, #tpu.memory_space<vmem>>, vector<64x64xf32>
    tpu.vector_store %arg4[%c0_5, %c0_6], %5 {strides = array<i32>} : memref<64x64xf32, #tpu.memory_space<vmem>>, vector<64x64xf32>,
    return
  }
  func.func @transform_0(%arg0: i32) -> (i32, i32) {
    %c0_i32 = arith.constant 0 : i32
    %c0_i32_0 = arith.constant 0 : i32
    return %arg0, %c0_i32 : i32, i32
  }
  func.func @transform_1(%arg0: i32) -> (i32, i32) {
    %c0_i32 = arith.constant 0 : i32
    %c0_i32_0 = arith.constant 0 : i32
    %c0_i32_1 = arith.constant 0 : i32
    return %c0_i32, %c0_i32_0 : i32, i32
  }
  func.func @transform_2(%arg0: i32) -> (i32, i32) {
    %c0_i32 = arith.constant 0 : i32
    %c0_i32_0 = arith.constant 0 : i32
    %c0_i32_1 = arith.constant 0 : i32
    return %c0_i32, %c0_i32_0 : i32, i32
  }
  func.func @transform_3(%arg0: i32) -> (i32, i32) {
    %c0_i32 = arith.constant 0 : i32
    %c0_i32_0 = arith.constant 0 : i32
    return %arg0, %c0_i32 : i32, i32
  }
}

</mosaic_0001>

<llo_original>
// kernel: model_forward.5
$region0: #{model_forward.5}
  #allocation0 [shape = 'u32[]', space=smem, size = 0x4, offset = 0x4, fixed_abs, tag = 'smem constant byte address 0x4 - core index']
  #allocation1 [shape = 'u32[144,128]{1,0:T(1,128)}', space=vmem, size = 0x12000, scoped, tag = 'internal scratch']
  %s0 = inlined_call_operand.vmem [shape: f32[64,32], index: 0, kind: input, shape index: {}]
  %s1 = inlined_call_operand.vmem [shape: f32[32,64], index: 1, kind: input, shape index: {}]
  %s2 = inlined_call_operand.vmem [shape: f32[1,64], index: 2, kind: input, shape index: {}]
  %s3 = inlined_call_operand.hbm [shape: f32[64,64], index: 3, kind: output, shape index: {}]
  %s4 = sld [smem:[#allocation0]]
  $region22: #{model_forward.5} parent=0
    _
  %s6 = ssub.s32 1, %s4
  %s7 = scalar_select 0, %s6, %s4
  $region1: #{model_forward.5} parent=0
    #allocation2 [shape = 'u8[32768]{0}', space=vmem, size = 0x8000, scoped, tag = 'output window, operand 0, single buffered']
    #allocation3 [shape = 's32[1]{0}', space=sflag, size = 0x4, scoped, tag = 'scoped memory for model_forward.5']
    %8 = vsyncpa [#allocation3], 0
    // Predicated region
    $region2: #{model_forward.5} parent=1 // pred_check
      _
    $region3: #{model_forward.5} parent=1 // pred_check_branch
      %10 = sbr.rel (0) target = $region5
    $region4: #{model_forward.5} parent=1 // pred_region
      _
    $region5: #{model_forward.5} parent=1 // pred_fallthru
      _
    // Predicated region
    $region6: #{model_forward.5} parent=1 // pred_check
      _
    $region7: #{model_forward.5} parent=1 // pred_check_branch
      %12 = sbr.rel (0) target = $region9
    $region8: #{model_forward.5} parent=1 // pred_region
      _
    $region9: #{model_forward.5} parent=1 // pred_fallthru
      _
    // Predicated region
    $region10: #{model_forward.5} parent=1 // pred_check
      _
    $region11: #{model_forward.5} parent=1 // pred_check_branch
      %14 = sbr.rel (0) target = $region13
    $region12: #{model_forward.5} parent=1 // pred_region
      _
    $region13: #{model_forward.5} parent=1 // pred_fallthru
      _
    %v15 = vld [vmem:[%s0] sm:$0xff]
    %v16 = vld [vmem:[%s0 + $0x8] sm:$0xff]
    %v17 = vld [vmem:[%s0 + $0x10] sm:$0xff]
    %v18 = vld [vmem:[%s0 + $0x18] sm:$0xff]
    %v19 = vld [vmem:[%s0 + $0x20] sm:$0xff]
    %v20 = vld [vmem:[%s0 + $0x28] sm:$0xff]
    %v21 = vld [vmem:[%s0 + $0x30] sm:$0xff]
    %v22 = vld [vmem:[%s0 + $0x38] sm:$0xff]
    %v23 = vld [vmem:[%s1] sm:$0xff]
    %v24 = vld [vmem:[%s1 + $0x8] sm:$0xff]
    %v25 = vld [vmem:[%s1 + $0x10] sm:$0xff]
    %v26 = vld [vmem:[%s1 + $0x18] sm:$0xff]
    %v27 = vld [vmem:[%s2] sm:$0x1]
    %v29 = vlaneseq
    %v30 = vshrl.u32 %v29, 7
    %v31 = vsub.s32 0, %v30
    %v32 = vrot.slane %v27, %v31
    %vm34 = vcmask 261120
    %v36 = vsel %vm34, %v15, 0
    %v39 = vsel %vm34, %v16, 0
    %v42 = vsel %vm34, %v17, 0
    %v45 = vsel %vm34, %v18, 0
    %v48 = vsel %vm34, %v19, 0
    %v51 = vsel %vm34, %v20, 0
    %v54 = vsel %vm34, %v21, 0
    %v57 = vsel %vm34, %v22, 0
    %59 = vmatprep.subr.mxu0 0.0
    %60 = vmatpush1.msra.mxu0 %v23
    %61 = vmatprep.subr.mxu0 0.0
    %62 = vmatpush1.msra.mxu0 %v24
    %63 = vmatprep.subr.mxu0 0.0
    %64 = vmatpush1.msra.mxu0 %v25
    %65 = vmatprep.subr.mxu0 0.0
    %66 = vmatpush1.msra.mxu0 %v26
    %67 = vmatprep.subr.mxu0 0.0
    %68 = vmatpush1.msra.mxu0 0.0
    %69 = vmatprep.subr.mxu0 0.0
    %70 = vmatpush1.msra.mxu0 0.0
    %71 = vmatprep.subr.mxu0 0.0
    %72 = vmatpush1.msra.mxu0 0.0
    %73 = vmatprep.subr.mxu0 0.0
    %74 = vmatpush1.msra.mxu0 0.0
    %75 = vmatprep.subr.mxu0 0.0
    %76 = vmatpush1.msra.mxu0 0.0
    %77 = vmatprep.subr.mxu0 0.0
    %78 = vmatpush1.msra.mxu0 0.0
    %79 = vmatprep.subr.mxu0 0.0
    %80 = vmatpush1.msra.mxu0 0.0
    %81 = vmatprep.subr.mxu0 0.0
    %82 = vmatpush1.msra.mxu0 0.0
    %83 = vmatprep.subr.mxu0 0.0
    %84 = vmatpush1.msra.mxu0 0.0
    %85 = vmatprep.subr.mxu0 0.0
    %86 = vmatpush1.msra.mxu0 0.0
    %87 = vmatprep.subr.mxu0 0.0
    %88 = vmatpush1.msra.mxu0 0.0
    %89 = vmatprep.subr.mxu0 0.0
    %90 = vmatpush1.msra.mxu0 0.0
    %91 = vmatprep.subr.mxu0 0.0
    %92 = vmatpush1.msra.mxu0 0.0
    %93 = vmatprep.subr.mxu0 0.0
    %94 = vmatpush1.msra.mxu0 0.0
    %95 = vmatprep.subr.mxu0 0.0
    %96 = vmatpush1.msra.mxu0 0.0
    %97 = vmatprep.subr.mxu0 0.0
    %98 = vmatpush1.msra.mxu0 0.0
    %99 = vmatprep.subr.mxu0 0.0
    %100 = vmatpush1.msra.mxu0 0.0
    %101 = vmatprep.subr.mxu0 0.0
    %102 = vmatpush1.msra.mxu0 0.0
    %103 = vmatprep.subr.mxu0 0.0
    %104 = vmatpush1.msra.mxu0 0.0
    %105 = vmatprep.subr.mxu0 0.0
    %106 = vmatpush1.msra.mxu0 0.0
    %107 = vmatprep.subr.mxu0 0.0
    %108 = vmatpush1.msra.mxu0 0.0
    %109 = vmatprep.subr.mxu0 0.0
    %110 = vmatpush1.msra.mxu0 0.0
    %111 = vmatprep.subr.mxu0 0.0
    %112 = vmatpush1.msra.mxu0 0.0
    %113 = vmatprep.subr.mxu0 0.0
    %114 = vmatpush1.msra.mxu0 0.0
    %115 = vmatprep.subr.mxu0 0.0
    %116 = vmatpush1.msra.mxu0 0.0
    %117 = vmatprep.subr.mxu0 0.0
    %118 = vmatpush1.msra.mxu0 0.0
    %119 = vmatprep.subr.mxu0 0.0
    %120 = vmatpush1.msra.mxu0 0.0
    %121 = vmatprep.subr.mxu0 0.0
    %122 = vmatpush1.msra.mxu0 0.0
    %123 = vmatprep.mubr.f32.mxu0 0.0
    %124 = vmatmul.mubr.f32.gmra.mrb[0].mxu0 %v36
    %v125 = vpop.f32.mrb[0].mxu0
    %v126 = vadd.f32 %v32, %v125
    %v127 = vpop.f32.mrb[0].mxu0
    %128 = vmatprep.mubr.f32.mxu0 0.0
    %129 = vmatmul.mubr.f32.gmra.mrb[0].mxu0 %v39
    %v130 = vpop.f32.mrb[0].mxu0
    %v131 = vadd.f32 %v32, %v130
    %v132 = vpop.f32.mrb[0].mxu0
    %133 = vmatprep.mubr.f32.mxu0 0.0
    %134 = vmatmul.mubr.f32.gmra.mrb[0].mxu0 %v42
    %v135 = vpop.f32.mrb[0].mxu0
    %v136 = vadd.f32 %v32, %v135
    %v137 = vpop.f32.mrb[0].mxu0
    %138 = vmatprep.mubr.f32.mxu0 0.0
    %139 = vmatmul.mubr.f32.gmra.mrb[0].mxu0 %v45
    %v140 = vpop.f32.mrb[0].mxu0
    %v141 = vadd.f32 %v32, %v140
    %v142 = vpop.f32.mrb[0].mxu0
    %143 = vmatprep.mubr.f32.mxu0 0.0
    %144 = vmatmul.mubr.f32.gmra.mrb[0].mxu0 %v48
    %v145 = vpop.f32.mrb[0].mxu0
    %v146 = vadd.f32 %v32, %v145
    %v147 = vpop.f32.mrb[0].mxu0
    %148 = vmatprep.mubr.f32.mxu0 0.0
    %149 = vmatmul.mubr.f32.gmra.mrb[0].mxu0 %v51
    %v150 = vpop.f32.mrb[0].mxu0
    %v151 = vadd.f32 %v32, %v150
    %v152 = vpop.f32.mrb[0].mxu0
    %153 = vmatprep.mubr.f32.mxu0 0.0
    %154 = vmatmul.mubr.f32.gmra.mrb[0].mxu0 %v54
    %v155 = vpop.f32.mrb[0].mxu0
    %v156 = vadd.f32 %v32, %v155
    %v157 = vpop.f32.mrb[0].mxu0
    %158 = vmatprep.mubr.f32.mxu0 0.0
    %159 = vmatmul.mubr.f32.gmra.mrb[0].mxu0 %v57
    %v160 = vpop.f32.mrb[0].mxu0
    %v161 = vadd.f32 %v32, %v160
    %v162 = vpop.f32.mrb[0].mxu0
    %163 = vdwg.mxu0
    %vm164 = vcmask 523264
    %165 = vst.msk [vmem:[#allocation2] sm:$0xff] %vm164, %v126
    %166 = vst.msk [vmem:[#allocation2 + $0x8] sm:$0xff] %vm164, %v131
    %167 = vst.msk [vmem:[#allocation2 + $0x10] sm:$0xff] %vm164, %v136
    %168 = vst.msk [vmem:[#allocation2 + $0x18] sm:$0xff] %vm164, %v141
    %169 = vst.msk [vmem:[#allocation2 + $0x20] sm:$0xff] %vm164, %v146
    %170 = vst.msk [vmem:[#allocation2 + $0x28] sm:$0xff] %vm164, %v151
    %171 = vst.msk [vmem:[#allocation2 + $0x30] sm:$0xff] %vm164, %v156
    %172 = vst.msk [vmem:[#allocation2 + $0x38] sm:$0xff] %vm164, %v161
    // Predicated region
    $region14: #{model_forward.5} parent=1 // pred_check
      _
    $region15: #{model_forward.5} parent=1 // pred_check_branch
      %174 = sbr.rel (0) target = $region17
    $region16: #{model_forward.5} parent=1 // pred_region
      %s176 = ssub.s32 1024, 1024
      %177 = vsyncadd [#allocation3], %s176
      %s178 = sshll.u32 [#allocation2], 4
      %s179 = int_to_ptr.vmem [resolvable:$true] %s178
      %184 = dma.vmem_to_hbm [thread:$0]  %s179, 1024, %s3, [#allocation3], 128, 128, 8
    $region17: #{model_forward.5} parent=1 // pred_fallthru
      _
    // Predicated region
    $region18: #{model_forward.5} parent=1 // pred_check
      _
    $region19: #{model_forward.5} parent=1 // pred_check_branch
      %186 = sbr.rel (0) target = $region21
    $region20: #{model_forward.5} parent=1 // pred_region
      %187 = dma.done [#allocation3], 1024
    $region21: #{model_forward.5} parent=1 // pred_fallthru
      _
    %188 = vsyncpa [#allocation3], 1

// kernel: model_forward.3
$region0: #{model_forward.3}
  #allocation0 [shape = 'u32[]', space=smem, size = 0x4, offset = 0x4, fixed_abs, tag = 'smem constant byte address 0x4 - core index']
  #allocation1 [shape = 'u32[144,128]{1,0:T(1,128)}', space=vmem, size = 0x12000, scoped, tag = 'internal scratch']
  %s0 = inlined_call_operand.vmem [shape: f32[64,64], index: 0, kind: input, shape index: {}]
  %s1 = inlined_call_operand.vmem [shape: f32[64,32], index: 1, kind: input, shape index: {}]
  %s2 = inlined_call_operand.vmem [shape: f32[64,32], index: 2, kind: input, shape index: {}]
  %s3 = inlined_call_operand.vmem [shape: f32[64,32], index: 3, kind: input, shape index: {}]
  %s4 = inlined_call_operand.vmem [shape: f32[1,32], index: 4, kind: input, shape index: {}]
  %s5 = inlined_call_operand.vmem [shape: f32[1,32], index: 5, kind: input, shape index: {}]
  %s6 = inlined_call_operand.vmem [shape: f32[1,32], index: 6, kind: input, shape index: {}]
  %s7 = inlined_call_operand.vmem [shape: f32[64,32], index: 7, kind: output, shape index: {0}]
  %s8 = inlined_call_operand.vmem [shape: f32[64,32], index: 8, kind: output, shape index: {1}]
  %s9 = inlined_call_operand.vmem [shape: f32[64,32], index: 9, kind: output, shape index: {2}]
  %10 = xla_tuple %s7, %s8, %s9
  %s11 = sld [smem:[#allocation0]]
  $region54: #{model_forward.3} parent=0
    _
  %s13 = ssub.s32 1, %s11
  %s14 = scalar_select 0, %s13, %s11
  // Predicated region
  $region2: #{model_forward.3} parent=0 // pred_check
    _
  $region3: #{model_forward.3} parent=0 // pred_check_branch
    %16 = sbr.rel (0) target = $region5
  $region4: #{model_forward.3} parent=0 // pred_region
    _
  $region5: #{model_forward.3} parent=0 // pred_fallthru
    _
  // Predicated region
  $region6: #{model_forward.3} parent=0 // pred_check
    _
  $region7: #{model_forward.3} parent=0 // pred_check_branch
    %18 = sbr.rel (0) target = $region9
  $region8: #{model_forward.3} parent=0 // pred_region
    _
  $region9: #{model_forward.3} parent=0 // pred_fallthru
    _
  // Predicated region
  $region10: #{model_forward.3} parent=0 // pred_check
    _
  $region11: #{model_forward.3} parent=0 // pred_check_branch
    %20 = sbr.rel (0) target = $region13
  $region12: #{model_forward.3} parent=0 // pred_region
    _
  $region13: #{model_forward.3} parent=0 // pred_fallthru
    _
  // Predicated region
  $region14: #{model_forward.3} parent=0 // pred_check
    _
  $region15: #{model_forward.3} parent=0 // pred_check_branch
    %22 = sbr.rel (0) target = $region17
  $region16: #{model_forward.3} parent=0 // pred_region
    _
  $region17: #{model_forward.3} parent=0 // pred_fallthru
    _
  // Predicated region
  $region18: #{model_forward.3} parent=0 // pred_check
    _
  $region19: #{model_forward.3} parent=0 // pred_check_branch
    %24 = sbr.rel (0) target = $region21
  $region20: #{model_forward.3} parent=0 // pred_region
    _
  $region21: #{model_forward.3} parent=0 // pred_fallthru
    _
  // Predicated region
  $region22: #{model_forward.3} parent=0 // pred_check
    _
  $region23: #{model_forward.3} parent=0 // pred_check_branch
    %26 = sbr.rel (0) target = $region25
  $region24: #{model_forward.3} parent=0 // pred_region
    _
  $region25: #{model_forward.3} parent=0 // pred_fallthru
    _
  // Predicated region
  $region26: #{model_forward.3} parent=0 // pred_check
    _
  $region27: #{model_forward.3} parent=0 // pred_check_branch
    %28 = sbr.rel (0) target = $region29
  $region28: #{model_forward.3} parent=0 // pred_region
    _
  $region29: #{model_forward.3} parent=0 // pred_fallthru
    _
  %v29 = vld [vmem:[%s0] sm:$0xff]
  %v30 = vld [vmem:[%s0 + $0x8] sm:$0xff]
  %v31 = vld [vmem:[%s0 + $0x10] sm:$0xff]
  %v32 = vld [vmem:[%s0 + $0x18] sm:$0xff]
  %v33 = vld [vmem:[%s0 + $0x20] sm:$0xff]
  %v34 = vld [vmem:[%s0 + $0x28] sm:$0xff]
  %v35 = vld [vmem:[%s0 + $0x30] sm:$0xff]
  %v36 = vld [vmem:[%s0 + $0x38] sm:$0xff]
  %v37 = vld [vmem:[%s1] sm:$0xff]
  %v38 = vld [vmem:[%s1 + $0x8] sm:$0xff]
  %v39 = vld [vmem:[%s1 + $0x10] sm:$0xff]
  %v40 = vld [vmem:[%s1 + $0x18] sm:$0xff]
  %v41 = vld [vmem:[%s1 + $0x20] sm:$0xff]
  %v42 = vld [vmem:[%s1 + $0x28] sm:$0xff]
  %v43 = vld [vmem:[%s1 + $0x30] sm:$0xff]
  %v44 = vld [vmem:[%s1 + $0x38] sm:$0xff]
  %v45 = vld [vmem:[%s4] sm:$0x1]
  %v47 = vlaneseq
  %v48 = vshrl.u32 %v47, 7
  %v49 = vsub.s32 0, %v48
  %v50 = vrot.slane %v45, %v49
  %vm52 = vcmask 523264
  %v54 = vsel %vm52, %v29, 0
  %v57 = vsel %vm52, %v30, 0
  %v60 = vsel %vm52, %v31, 0
  %v63 = vsel %vm52, %v32, 0
  %v66 = vsel %vm52, %v33, 0
  %v69 = vsel %vm52, %v34, 0
  %v72 = vsel %vm52, %v35, 0
  %v75 = vsel %vm52, %v36, 0
  %77 = vmatprep.subr.mxu0 0.0
  %78 = vmatpush1.msra.mxu0 %v37
  %79 = vmatprep.subr.mxu0 0.0
  %80 = vmatpush1.msra.mxu0 %v38
  %81 = vmatprep.subr.mxu0 0.0
  %82 = vmatpush1.msra.mxu0 %v39
  %83 = vmatprep.subr.mxu0 0.0
  %84 = vmatpush1.msra.mxu0 %v40
  %85 = vmatprep.subr.mxu0 0.0
  %86 = vmatpush1.msra.mxu0 %v41
  %87 = vmatprep.subr.mxu0 0.0
  %88 = vmatpush1.msra.mxu0 %v42
  %89 = vmatprep.subr.mxu0 0.0
  %90 = vmatpush1.msra.mxu0 %v43
  %91 = vmatprep.subr.mxu0 0.0
  %92 = vmatpush1.msra.mxu0 %v44
  %93 = vmatprep.subr.mxu0 0.0
  %94 = vmatpush1.msra.mxu0 0.0
  %95 = vmatprep.subr.mxu0 0.0
  %96 = vmatpush1.msra.mxu0 0.0
  %97 = vmatprep.subr.mxu0 0.0
  %98 = vmatpush1.msra.mxu0 0.0
  %99 = vmatprep.subr.mxu0 0.0
  %100 = vmatpush1.msra.mxu0 0.0
  %101 = vmatprep.subr.mxu0 0.0
  %102 = vmatpush1.msra.mxu0 0.0
  %103 = vmatprep.subr.mxu0 0.0
  %104 = vmatpush1.msra.mxu0 0.0
  %105 = vmatprep.subr.mxu0 0.0
  %106 = vmatpush1.msra.mxu0 0.0
  %107 = vmatprep.subr.mxu0 0.0
  %108 = vmatpush1.msra.mxu0 0.0
  %109 = vmatprep.subr.mxu0 0.0
  %110 = vmatpush1.msra.mxu0 0.0
  %111 = vmatprep.subr.mxu0 0.0
  %112 = vmatpush1.msra.mxu0 0.0
  %113 = vmatprep.subr.mxu0 0.0
  %114 = vmatpush1.msra.mxu0 0.0
  %115 = vmatprep.subr.mxu0 0.0
  %116 = vmatpush1.msra.mxu0 0.0
  %117 = vmatprep.subr.mxu0 0.0
  %118 = vmatpush1.msra.mxu0 0.0
  %119 = vmatprep.subr.mxu0 0.0
  %120 = vmatpush1.msra.mxu0 0.0
  %121 = vmatprep.subr.mxu0 0.0
  %122 = vmatpush1.msra.mxu0 0.0
  %123 = vmatprep.subr.mxu0 0.0
  %124 = vmatpush1.msra.mxu0 0.0
  %125 = vmatprep.subr.mxu0 0.0
  %126 = vmatpush1.msra.mxu0 0.0
  %127 = vmatprep.subr.mxu0 0.0
  %128 = vmatpush1.msra.mxu0 0.0
  %129 = vmatprep.subr.mxu0 0.0
  %130 = vmatpush1.msra.mxu0 0.0
  %131 = vmatprep.subr.mxu0 0.0
  %132 = vmatpush1.msra.mxu0 0.0
  %133 = vmatprep.subr.mxu0 0.0
  %134 = vmatpush1.msra.mxu0 0.0
  %135 = vmatprep.subr.mxu0 0.0
  %136 = vmatpush1.msra.mxu0 0.0
  %137 = vmatprep.subr.mxu0 0.0
  %138 = vmatpush1.msra.mxu0 0.0
  %139 = vmatprep.subr.mxu0 0.0
  %140 = vmatpush1.msra.mxu0 0.0
  %141 = vmatprep.mubr.f32.mxu0 0.0
  %142 = vmatmul.mubr.f32.gmra.mrb[0].mxu0 %v54
  %v143 = vpop.f32.mrb[0].mxu0
  %v144 = vadd.f32 %v50, %v143
  %v145 = vpop.f32.mrb[0].mxu0
  %146 = vmatprep.mubr.f32.mxu0 0.0
  %147 = vmatmul.mubr.f32.gmra.mrb[0].mxu0 %v57
  %v148 = vpop.f32.mrb[0].mxu0
  %v149 = vadd.f32 %v50, %v148
  %v150 = vpop.f32.mrb[0].mxu0
  %151 = vmatprep.mubr.f32.mxu0 0.0
  %152 = vmatmul.mubr.f32.gmra.mrb[0].mxu0 %v60
  %v153 = vpop.f32.mrb[0].mxu0
  %v154 = vadd.f32 %v50, %v153
  %v155 = vpop.f32.mrb[0].mxu0
  %156 = vmatprep.mubr.f32.mxu0 0.0
  %157 = vmatmul.mubr.f32.gmra.mrb[0].mxu0 %v63
  %v158 = vpop.f32.mrb[0].mxu0
  %v159 = vadd.f32 %v50, %v158
  %v160 = vpop.f32.mrb[0].mxu0
  %161 = vmatprep.mubr.f32.mxu0 0.0
  %162 = vmatmul.mubr.f32.gmra.mrb[0].mxu0 %v66
  %v163 = vpop.f32.mrb[0].mxu0
  %v164 = vadd.f32 %v50, %v163
  %v165 = vpop.f32.mrb[0].mxu0
  %166 = vmatprep.mubr.f32.mxu0 0.0
  %167 = vmatmul.mubr.f32.gmra.mrb[0].mxu0 %v69
  %v168 = vpop.f32.mrb[0].mxu0
  %v169 = vadd.f32 %v50, %v168
  %v170 = vpop.f32.mrb[0].mxu0
  %171 = vmatprep.mubr.f32.mxu0 0.0
  %172 = vmatmul.mubr.f32.gmra.mrb[0].mxu0 %v72
  %v173 = vpop.f32.mrb[0].mxu0
  %v174 = vadd.f32 %v50, %v173
  %v175 = vpop.f32.mrb[0].mxu0
  %176 = vmatprep.mubr.f32.mxu0 0.0
  %177 = vmatmul.mubr.f32.gmra.mrb[0].mxu0 %v75
  %v178 = vpop.f32.mrb[0].mxu0
  %v179 = vadd.f32 %v50, %v178
  %v180 = vpop.f32.mrb[0].mxu0
  %181 = vdwg.mxu0
  %vm182 = vcmask 261120
  %183 = vst.msk [vmem:[%s7] sm:$0xff] %vm182, %v144
  %184 = vst.msk [vmem:[%s7 + $0x8] sm:$0xff] %vm182, %v149
  %185 = vst.msk [vmem:[%s7 + $0x10] sm:$0xff] %vm182, %v154
  %186 = vst.msk [vmem:[%s7 + $0x18] sm:$0xff] %vm182, %v159
  %187 = vst.msk [vmem:[%s7 + $0x20] sm:$0xff] %vm182, %v164
  %188 = vst.msk [vmem:[%s7 + $0x28] sm:$0xff] %vm182, %v169
  %189 = vst.msk [vmem:[%s7 + $0x30] sm:$0xff] %vm182, %v174
  %190 = vst.msk [vmem:[%s7 + $0x38] sm:$0xff] %vm182, %v179
  %v191 = vld [vmem:[%s2] sm:$0xff]
  %v192 = vld [vmem:[%s2 + $0x8] sm:$0xff]
  %v193 = vld [vmem:[%s2 + $0x10] sm:$0xff]
  %v194 = vld [vmem:[%s2 + $0x18] sm:$0xff]
  %v195 = vld [vmem:[%s2 + $0x20] sm:$0xff]
  %v196 = vld [vmem:[%s2 + $0x28] sm:$0xff]
  %v197 = vld [vmem:[%s2 + $0x30] sm:$0xff]
  %v198 = vld [vmem:[%s2 + $0x38] sm:$0xff]
  %v199 = vld [vmem:[%s5] sm:$0x1]
  %v201 = vlaneseq
  %v202 = vshrl.u32 %v201, 7
  %v203 = vsub.s32 0, %v202
  %v204 = vrot.slane %v199, %v203
  %206 = vmatprep.subr.mxu0 0.0
  %207 = vmatpush1.msra.mxu0 %v191
  %208 = vmatprep.subr.mxu0 0.0
  %209 = vmatpush1.msra.mxu0 %v192
  %210 = vmatprep.subr.mxu0 0.0
  %211 = vmatpush1.msra.mxu0 %v193
  %212 = vmatprep.subr.mxu0 0.0
  %213 = vmatpush1.msra.mxu0 %v194
  %214 = vmatprep.subr.mxu0 0.0
  %215 = vmatpush1.msra.mxu0 %v195
  %216 = vmatprep.subr.mxu0 0.0
  %217 = vmatpush1.msra.mxu0 %v196
  %218 = vmatprep.subr.mxu0 0.0
  %219 = vmatpush1.msra.mxu0 %v197
  %220 = vmatprep.subr.mxu0 0.0
  %221 = vmatpush1.msra.mxu0 %v198
  %222 = vmatprep.subr.mxu0 0.0
  %223 = vmatpush1.msra.mxu0 0.0
  %224 = vmatprep.subr.mxu0 0.0
  %225 = vmatpush1.msra.mxu0 0.0
  %226 = vmatprep.subr.mxu0 0.0
  %227 = vmatpush1.msra.mxu0 0.0
  %228 = vmatprep.subr.mxu0 0.0
  %229 = vmatpush1.msra.mxu0 0.0
  %230 = vmatprep.subr.mxu0 0.0
  %231 = vmatpush1.msra.mxu0 0.0
  %232 = vmatprep.subr.mxu0 0.0
  %233 = vmatpush1.msra.mxu0 0.0
  %234 = vmatprep.subr.mxu0 0.0
  %235 = vmatpush1.msra.mxu0 0.0
  %236 = vmatprep.subr.mxu0 0.0
  %237 = vmatpush1.msra.mxu0 0.0
  %238 = vmatprep.subr.mxu0 0.0
  %239 = vmatpush1.msra.mxu0 0.0
  %240 = vmatprep.subr.mxu0 0.0
  %241 = vmatpush1.msra.mxu0 0.0
  %242 = vmatprep.subr.mxu0 0.0
  %243 = vmatpush1.msra.mxu0 0.0
  %244 = vmatprep.subr.mxu0 0.0
  %245 = vmatpush1.msra.mxu0 0.0
  %246 = vmatprep.subr.mxu0 0.0
  %247 = vmatpush1.msra.mxu0 0.0
  %248 = vmatprep.subr.mxu0 0.0
  %249 = vmatpush1.msra.mxu0 0.0
  %250 = vmatprep.subr.mxu0 0.0
  %251 = vmatpush1.msra.mxu0 0.0
  %252 = vmatprep.subr.mxu0 0.0
  %253 = vmatpush1.msra.mxu0 0.0
  %254 = vmatprep.subr.mxu0 0.0
  %255 = vmatpush1.msra.mxu0 0.0
  %256 = vmatprep.subr.mxu0 0.0
  %257 = vmatpush1.msra.mxu0 0.0
  %258 = vmatprep.subr.mxu0 0.0
  %259 = vmatpush1.msra.mxu0 0.0
  %260 = vmatprep.subr.mxu0 0.0
  %261 = vmatpush1.msra.mxu0 0.0
  %262 = vmatprep.subr.mxu0 0.0
  %263 = vmatpush1.msra.mxu0 0.0
  %264 = vmatprep.subr.mxu0 0.0
  %265 = vmatpush1.msra.mxu0 0.0
  %266 = vmatprep.subr.mxu0 0.0
  %267 = vmatpush1.msra.mxu0 0.0
  %268 = vmatprep.subr.mxu0 0.0
  %269 = vmatpush1.msra.mxu0 0.0
  %270 = vmatprep.mubr.f32.mxu0 0.0
  %271 = vmatmul.mubr.f32.gmra.mrb[0].mxu0 %v54
  %v272 = vpop.f32.mrb[0].mxu0
  %v273 = vadd.f32 %v204, %v272
  %v274 = vpop.f32.mrb[0].mxu0
  %275 = vmatprep.mubr.f32.mxu0 0.0
  %276 = vmatmul.mubr.f32.gmra.mrb[0].mxu0 %v57
  %v277 = vpop.f32.mrb[0].mxu0
  %v278 = vadd.f32 %v204, %v277
  %v279 = vpop.f32.mrb[0].mxu0
  %280 = vmatprep.mubr.f32.mxu0 0.0
  %281 = vmatmul.mubr.f32.gmra.mrb[0].mxu0 %v60
  %v282 = vpop.f32.mrb[0].mxu0
  %v283 = vadd.f32 %v204, %v282
  %v284 = vpop.f32.mrb[0].mxu0
  %285 = vmatprep.mubr.f32.mxu0 0.0
  %286 = vmatmul.mubr.f32.gmra.mrb[0].mxu0 %v63
  %v287 = vpop.f32.mrb[0].mxu0
  %v288 = vadd.f32 %v204, %v287
  %v289 = vpop.f32.mrb[0].mxu0
  %290 = vmatprep.mubr.f32.mxu0 0.0
  %291 = vmatmul.mubr.f32.gmra.mrb[0].mxu0 %v66
  %v292 = vpop.f32.mrb[0].mxu0
  %v293 = vadd.f32 %v204, %v292
  %v294 = vpop.f32.mrb[0].mxu0
  %295 = vmatprep.mubr.f32.mxu0 0.0
  %296 = vmatmul.mubr.f32.gmra.mrb[0].mxu0 %v69
  %v297 = vpop.f32.mrb[0].mxu0
  %v298 = vadd.f32 %v204, %v297
  %v299 = vpop.f32.mrb[0].mxu0
  %300 = vmatprep.mubr.f32.mxu0 0.0
  %301 = vmatmul.mubr.f32.gmra.mrb[0].mxu0 %v72
  %v302 = vpop.f32.mrb[0].mxu0
  %v303 = vadd.f32 %v204, %v302
  %v304 = vpop.f32.mrb[0].mxu0
  %305 = vmatprep.mubr.f32.mxu0 0.0
  %306 = vmatmul.mubr.f32.gmra.mrb[0].mxu0 %v75
  %v307 = vpop.f32.mrb[0].mxu0
  %v308 = vadd.f32 %v204, %v307
  %v309 = vpop.f32.mrb[0].mxu0
  %310 = vdwg.mxu0
  %311 = vst.msk [vmem:[%s8] sm:$0xff] %vm182, %v273
  %312 = vst.msk [vmem:[%s8 + $0x8] sm:$0xff] %vm182, %v278
  %313 = vst.msk [vmem:[%s8 + $0x10] sm:$0xff] %vm182, %v283
  %314 = vst.msk [vmem:[%s8 + $0x18] sm:$0xff] %vm182, %v288
  %315 = vst.msk [vmem:[%s8 + $0x20] sm:$0xff] %vm182, %v293
  %316 = vst.msk [vmem:[%s8 + $0x28] sm:$0xff] %vm182, %v298
  %317 = vst.msk [vmem:[%s8 + $0x30] sm:$0xff] %vm182, %v303
  %318 = vst.msk [vmem:[%s8 + $0x38] sm:$0xff] %vm182, %v308
  %v319 = vld [vmem:[%s3] sm:$0xff]
  %v320 = vld [vmem:[%s3 + $0x8] sm:$0xff]
  %v321 = vld [vmem:[%s3 + $0x10] sm:$0xff]
  %v322 = vld [vmem:[%s3 + $0x18] sm:$0xff]
  %v323 = vld [vmem:[%s3 + $0x20] sm:$0xff]
  %v324 = vld [vmem:[%s3 + $0x28] sm:$0xff]
  %v325 = vld [vmem:[%s3 + $0x30] sm:$0xff]
  %v326 = vld [vmem:[%s3 + $0x38] sm:$0xff]
  %v327 = vld [vmem:[%s6] sm:$0x1]
  %v329 = vlaneseq
  %v330 = vshrl.u32 %v329, 7
  %v331 = vsub.s32 0, %v330
  %v332 = vrot.slane %v327, %v331
  %334 = vmatprep.subr.mxu0 0.0
  %335 = vmatpush1.msra.mxu0 %v319
  %336 = vmatprep.subr.mxu0 0.0
  %337 = vmatpush1.msra.mxu0 %v320
  %338 = vmatprep.subr.mxu0 0.0
  %339 = vmatpush1.msra.mxu0 %v321
  %340 = vmatprep.subr.mxu0 0.0
  %341 = vmatpush1.msra.mxu0 %v322
  %342 = vmatprep.subr.mxu0 0.0
  %343 = vmatpush1.msra.mxu0 %v323
  %344 = vmatprep.subr.mxu0 0.0
  %345 = vmatpush1.msra.mxu0 %v324
  %346 = vmatprep.subr.mxu0 0.0
  %347 = vmatpush1.msra.mxu0 %v325
  %348 = vmatprep.subr.mxu0 0.0
  %349 = vmatpush1.msra.mxu0 %v326
  %350 = vmatprep.subr.mxu0 0.0
  %351 = vmatpush1.msra.mxu0 0.0
  %352 = vmatprep.subr.mxu0 0.0
  %353 = vmatpush1.msra.mxu0 0.0
  %354 = vmatprep.subr.mxu0 0.0
  %355 = vmatpush1.msra.mxu0 0.0
  %356 = vmatprep.subr.mxu0 0.0
  %357 = vmatpush1.msra.mxu0 0.0
  %358 = vmatprep.subr.mxu0 0.0
  %359 = vmatpush1.msra.mxu0 0.0
  %360 = vmatprep.subr.mxu0 0.0
  %361 = vmatpush1.msra.mxu0 0.0
  %362 = vmatprep.subr.mxu0 0.0
  %363 = vmatpush1.msra.mxu0 0.0
  %364 = vmatprep.subr.mxu0 0.0
  %365 = vmatpush1.msra.mxu0 0.0
  %366 = vmatprep.subr.mxu0 0.0
  %367 = vmatpush1.msra.mxu0 0.0
  %368 = vmatprep.subr.mxu0 0.0
  %369 = vmatpush1.msra.mxu0 0.0
  %370 = vmatprep.subr.mxu0 0.0
  %371 = vmatpush1.msra.mxu0 0.0
  %372 = vmatprep.subr.mxu0 0.0
  %373 = vmatpush1.msra.mxu0 0.0
  %374 = vmatprep.subr.mxu0 0.0
  %375 = vmatpush1.msra.mxu0 0.0
  %376 = vmatprep.subr.mxu0 0.0
  %377 = vmatpush1.msra.mxu0 0.0
  %378 = vmatprep.subr.mxu0 0.0
  %379 = vmatpush1.msra.mxu0 0.0
  %380 = vmatprep.subr.mxu0 0.0
  %381 = vmatpush1.msra.mxu0 0.0
  %382 = vmatprep.subr.mxu0 0.0
  %383 = vmatpush1.msra.mxu0 0.0
  %384 = vmatprep.subr.mxu0 0.0
  %385 = vmatpush1.msra.mxu0 0.0
  %386 = vmatprep.subr.mxu0 0.0
  %387 = vmatpush1.msra.mxu0 0.0
  %388 = vmatprep.subr.mxu0 0.0
  %389 = vmatpush1.msra.mxu0 0.0
  %390 = vmatprep.subr.mxu0 0.0
  %391 = vmatpush1.msra.mxu0 0.0
  %392 = vmatprep.subr.mxu0 0.0
  %393 = vmatpush1.msra.mxu0 0.0
  %394 = vmatprep.subr.mxu0 0.0
  %395 = vmatpush1.msra.mxu0 0.0
  %396 = vmatprep.subr.mxu0 0.0
  %397 = vmatpush1.msra.mxu0 0.0
  %398 = vmatprep.mubr.f32.mxu0 0.0
  %399 = vmatmul.mubr.f32.gmra.mrb[0].mxu0 %v54
  %v400 = vpop.f32.mrb[0].mxu0
  %v401 = vadd.f32 %v332, %v400
  %v402 = vpop.f32.mrb[0].mxu0
  %403 = vmatprep.mubr.f32.mxu0 0.0
  %404 = vmatmul.mubr.f32.gmra.mrb[0].mxu0 %v57
  %v405 = vpop.f32.mrb[0].mxu0
  %v406 = vadd.f32 %v332, %v405
  %v407 = vpop.f32.mrb[0].mxu0
  %408 = vmatprep.mubr.f32.mxu0 0.0
  %409 = vmatmul.mubr.f32.gmra.mrb[0].mxu0 %v60
  %v410 = vpop.f32.mrb[0].mxu0
  %v411 = vadd.f32 %v332, %v410
  %v412 = vpop.f32.mrb[0].mxu0
  %413 = vmatprep.mubr.f32.mxu0 0.0
  %414 = vmatmul.mubr.f32.gmra.mrb[0].mxu0 %v63
  %v415 = vpop.f32.mrb[0].mxu0
  %v416 = vadd.f32 %v332, %v415
  %v417 = vpop.f32.mrb[0].mxu0
  %418 = vmatprep.mubr.f32.mxu0 0.0
  %419 = vmatmul.mubr.f32.gmra.mrb[0].mxu0 %v66
  %v420 = vpop.f32.mrb[0].mxu0
  %v421 = vadd.f32 %v332, %v420
  %v422 = vpop.f32.mrb[0].mxu0
  %423 = vmatprep.mubr.f32.mxu0 0.0
  %424 = vmatmul.mubr.f32.gmra.mrb[0].mxu0 %v69
  %v425 = vpop.f32.mrb[0].mxu0
  %v426 = vadd.f32 %v332, %v425
  %v427 = vpop.f32.mrb[0].mxu0
  %428 = vmatprep.mubr.f32.mxu0 0.0
  %429 = vmatmul.mubr.f32.gmra.mrb[0].mxu0 %v72
  %v430 = vpop.f32.mrb[0].mxu0
  %v431 = vadd.f32 %v332, %v430
  %v432 = vpop.f32.mrb[0].mxu0
  %433 = vmatprep.mubr.f32.mxu0 0.0
  %434 = vmatmul.mubr.f32.gmra.mrb[0].mxu0 %v75
  %v435 = vpop.f32.mrb[0].mxu0
  %v436 = vadd.f32 %v332, %v435
  %v437 = vpop.f32.mrb[0].mxu0
  %438 = vdwg.mxu0
  %439 = vst.msk [vmem:[%s9] sm:$0xff] %vm182, %v401
  %440 = vst.msk [vmem:[%s9 + $0x8] sm:$0xff] %vm182, %v406
  %441 = vst.msk [vmem:[%s9 + $0x10] sm:$0xff] %vm182, %v411
  %442 = vst.msk [vmem:[%s9 + $0x18] sm:$0xff] %vm182, %v416
  %443 = vst.msk [vmem:[%s9 + $0x20] sm:$0xff] %vm182, %v421
  %444 = vst.msk [vmem:[%s9 + $0x28] sm:$0xff] %vm182, %v426
  %445 = vst.msk [vmem:[%s9 + $0x30] sm:$0xff] %vm182, %v431
  %446 = vst.msk [vmem:[%s9 + $0x38] sm:$0xff] %vm182, %v436
  // Predicated region
  $region30: #{model_forward.3} parent=0 // pred_check
    _
  $region31: #{model_forward.3} parent=0 // pred_check_branch
    %448 = sbr.rel (0) target = $region33
  $region32: #{model_forward.3} parent=0 // pred_region
    _
  $region33: #{model_forward.3} parent=0 // pred_fallthru
    _
  // Predicated region
  $region34: #{model_forward.3} parent=0 // pred_check
    _
  $region35: #{model_forward.3} parent=0 // pred_check_branch
    %450 = sbr.rel (0) target = $region37
  $region36: #{model_forward.3} parent=0 // pred_region
    _
  $region37: #{model_forward.3} parent=0 // pred_fallthru
    _
  // Predicated region
  $region38: #{model_forward.3} parent=0 // pred_check
    _
  $region39: #{model_forward.3} parent=0 // pred_check_branch
    %452 = sbr.rel (0) target = $region41
  $region40: #{model_forward.3} parent=0 // pred_region
    _
  $region41: #{model_forward.3} parent=0 // pred_fallthru
    _
  // Predicated region
  $region42: #{model_forward.3} parent=0 // pred_check
    _
  $region43: #{model_forward.3} parent=0 // pred_check_branch
    %454 = sbr.rel (0) target = $region45
  $region44: #{model_forward.3} parent=0 // pred_region
    _
  $region45: #{model_forward.3} parent=0 // pred_fallthru
    _
  // Predicated region
  $region46: #{model_forward.3} parent=0 // pred_check
    _
  $region47: #{model_forward.3} parent=0 // pred_check_branch
    %456 = sbr.rel (0) target = $region49
  $region48: #{model_forward.3} parent=0 // pred_region
    _
  $region49: #{model_forward.3} parent=0 // pred_fallthru
    _
  // Predicated region
  $region50: #{model_forward.3} parent=0 // pred_check
    _
  $region51: #{model_forward.3} parent=0 // pred_check_branch
    %458 = sbr.rel (0) target = $region53
  $region52: #{model_forward.3} parent=0 // pred_region
    _
  $region53: #{model_forward.3} parent=0 // pred_fallthru
    _

// kernel: model_forward.4
$region0: #{model_forward.4}
  #allocation0 [shape = 'u32[]', space=smem, size = 0x4, offset = 0x4, fixed_abs, tag = 'smem constant byte address 0x4 - core index']
  #allocation1 [shape = 'u32[144,128]{1,0:T(1,128)}', space=vmem, size = 0x12000, scoped, tag = 'internal scratch']
  #allocation2 [shape = 'f32[2,32]{1,0:T(2,128)}', space=vmem, size = 0x400, scoped, tag = 'scratch operand']
  %s0 = inlined_call_operand.vmem [shape: f32[2,32,32], index: 0, kind: input, shape index: {}]
  %s1 = inlined_call_operand.vmem [shape: f32[2,32,32], index: 1, kind: input, shape index: {}]
  %s2 = inlined_call_operand.vmem [shape: f32[2,32,32], index: 2, kind: input, shape index: {}]
  %s3 = inlined_call_operand.vmem [shape: f32[32,32], index: 3, kind: input, shape index: {}]
  %s4 = inlined_call_operand.vmem [shape: f32[32,32], index: 4, kind: input, shape index: {}]
  %s5 = inlined_call_operand.vmem [shape: f32[32,32], index: 5, kind: input, shape index: {}]
  %s6 = inlined_call_operand.vmem [shape: f32[1,32], index: 6, kind: input, shape index: {}]
  %s7 = inlined_call_operand.vmem [shape: f32[2,32,32], index: 7, kind: output, shape index: {}]
  %s8 = sld [smem:[#allocation0]]
  $region213: #{model_forward.4} parent=0
    _
  %s10 = ssub.s32 1, %s8
  %s11 = scalar_select 0, %s10, %s8
  $region1: #{model_forward.4} parent=0
    #allocation3 [shape = 'u8[32768]{0}', space=vmem, size = 0x8000, scoped, tag = 'input window, operand 0']
    #allocation4 [shape = 'u8[32768]{0}', space=vmem, size = 0x8000, scoped, tag = 'input window, operand 1']
    #allocation5 [shape = 'u8[32768]{0}', space=vmem, size = 0x8000, scoped, tag = 'input window, operand 2']
    #allocation6 [shape = 'u8[32768]{0}', space=vmem, size = 0x8000, scoped, tag = 'output window, operand 0']
    loop: start=0, step=1, limit=4
    $region2: #{model_forward.4} parent=1 // loop_pre_header
      _
    $region3: #{model_forward.4} parent=1 // loop_header
      %s13 = sphi 0, %s17
      %p14 = scmp.ge.s32.totalorder %s13, 4
      %s23 = sphi 0, %s25
      %s26 = sphi 0, %s23
      %s27 = sphi 0, %s26
      %s43 = sphi 0, %s27
      %s49 = sphi 0, %s51
      %s52 = sphi 0, %s49
      %s53 = sphi 0, %s52
      %s69 = sphi 0, %s53
      %s75 = sphi 0, %s77
      %s78 = sphi 0, %s75
      %s79 = sphi 0, %s78
      %s95 = sphi 0, %s79
      %s99 = sphi 0, %s99
      %s101 = sphi 0, %s99
      %s102 = sphi 0, %s101
      %s116 = sphi 0, %s102
      %s120 = sphi 0, %s120
      %s122 = sphi 0, %s120
      %s123 = sphi 0, %s122
      %s137 = sphi 0, %s123
      %s141 = sphi 0, %s141
      %s143 = sphi 0, %s141
      %s144 = sphi 0, %s143
      %s158 = sphi 0, %s144
      %s162 = sphi 0, %s162
      %s164 = sphi 0, %s162
      %s165 = sphi 0, %s164
      %s179 = sphi 0, %s165
      %s185 = sphi 0, %s187
      %s188 = sphi 0, %s185
      %s189 = sphi 0, %s188
      %s205 = sphi 0, %s189
    $region4: #{model_forward.4} parent=1 // loop_header_branch
      %16 = sbr.rel (%p14) target = $region8
    $region5: #{model_forward.4} parent=1 // loop_body
      %s18 = ssub.s32 %s13, 1
      %s19 = ssub.s32 %s13, 2
      %s20 = sadd.s32 %s13, 1
      %s21 = ssub.s32 %s13, %s20
      %p22 = scmp.eq.s32.totalorder %s21, 0
      %s24 = sadd.s32 %s23, 1
      %s25 = scalar_select %p22, %s23, %s24
      %p28 = pneg %p22
      %p29 = scmp.eq.s32.totalorder %s13, 1
      %p30 = por %p28, %p29
      %p31 = scmp.ne.s32.totalorder %s23, %s26
      %p32 = scmp.eq.s32.totalorder %s13, 0
      %p33 = por %p31, %p32
      %p34 = scmp.ne.s32.totalorder %s23, %s26
      %p35 = scmp.eq.s32.totalorder %s18, 1
      %p36 = por %p34, %p35
      %p37 = scmp.ne.s32.totalorder %s26, %s27
      %p38 = scmp.eq.s32.totalorder %s18, 0
      %p39 = por %p37, %p38
      %p40 = scmp.ne.s32.totalorder %s26, %s27
      %p41 = scmp.eq.s32.totalorder %s19, 1
      %p42 = por %p40, %p41
      %p44 = scmp.ne.s32.totalorder %s27, %s43
      %p45 = scmp.eq.s32.totalorder %s19, 0
      %p46 = por %p44, %p45
      %s47 = ssub.s32 %s13, %s20
      %p48 = scmp.eq.s32.totalorder %s47, 0
      %s50 = sadd.s32 %s49, 1
      %s51 = scalar_select %p48, %s49, %s50
      %p54 = pneg %p48
      %p55 = scmp.eq.s32.totalorder %s13, 1
      %p56 = por %p54, %p55
      %p57 = scmp.ne.s32.totalorder %s49, %s52
      %p58 = scmp.eq.s32.totalorder %s13, 0
      %p59 = por %p57, %p58
      %p60 = scmp.ne.s32.totalorder %s49, %s52
      %p61 = scmp.eq.s32.totalorder %s18, 1
      %p62 = por %p60, %p61
      %p63 = scmp.ne.s32.totalorder %s52, %s53
      %p64 = scmp.eq.s32.totalorder %s18, 0
      %p65 = por %p63, %p64
      %p66 = scmp.ne.s32.totalorder %s52, %s53
      %p67 = scmp.eq.s32.totalorder %s19, 1
      %p68 = por %p66, %p67
      %p70 = scmp.ne.s32.totalorder %s53, %s69
      %p71 = scmp.eq.s32.totalorder %s19, 0
      %p72 = por %p70, %p71
      %s73 = ssub.s32 %s13, %s20
      %p74 = scmp.eq.s32.totalorder %s73, 0
      %s76 = sadd.s32 %s75, 1
      %s77 = scalar_select %p74, %s75, %s76
      %p80 = pneg %p74
      %p81 = scmp.eq.s32.totalorder %s13, 1
      %p82 = por %p80, %p81
      %p83 = scmp.ne.s32.totalorder %s75, %s78
      %p84 = scmp.eq.s32.totalorder %s13, 0
      %p85 = por %p83, %p84
      %p86 = scmp.ne.s32.totalorder %s75, %s78
      %p87 = scmp.eq.s32.totalorder %s18, 1
      %p88 = por %p86, %p87
      %p89 = scmp.ne.s32.totalorder %s78, %s79
      %p90 = scmp.eq.s32.totalorder %s18, 0
      %p91 = por %p89, %p90
      %p92 = scmp.ne.s32.totalorder %s78, %s79
      %p93 = scmp.eq.s32.totalorder %s19, 1
      %p94 = por %p92, %p93
      %p96 = scmp.ne.s32.totalorder %s79, %s95
      %p97 = scmp.eq.s32.totalorder %s19, 0
      %p98 = por %p96, %p97
      %s100 = sadd.s32 %s99, 1
      %p103 = scmp.eq.s32.totalorder %s13, 1
      %p104 = scmp.ne.s32.totalorder %s99, %s101
      %p105 = scmp.eq.s32.totalorder %s13, 0
      %p106 = por %p104, %p105
      %p107 = scmp.ne.s32.totalorder %s99, %s101
      %p108 = scmp.eq.s32.totalorder %s18, 1
      %p109 = por %p107, %p108
      %p110 = scmp.ne.s32.totalorder %s101, %s102
      %p111 = scmp.eq.s32.totalorder %s18, 0
      %p112 = por %p110, %p111
      %p113 = scmp.ne.s32.totalorder %s101, %s102
      %p114 = scmp.eq.s32.totalorder %s19, 1
      %p115 = por %p113, %p114
      %p117 = scmp.ne.s32.totalorder %s102, %s116
      %p118 = scmp.eq.s32.totalorder %s19, 0
      %p119 = por %p117, %p118
      %s121 = sadd.s32 %s120, 1
      %p124 = scmp.eq.s32.totalorder %s13, 1
      %p125 = scmp.ne.s32.totalorder %s120, %s122
      %p126 = scmp.eq.s32.totalorder %s13, 0
      %p127 = por %p125, %p126
      %p128 = scmp.ne.s32.totalorder %s120, %s122
      %p129 = scmp.eq.s32.totalorder %s18, 1
      %p130 = por %p128, %p129
      %p131 = scmp.ne.s32.totalorder %s122, %s123
      %p132 = scmp.eq.s32.totalorder %s18, 0
      %p133 = por %p131, %p132
      %p134 = scmp.ne.s32.totalorder %s122, %s123
      %p135 = scmp.eq.s32.totalorder %s19, 1
      %p136 = por %p134, %p135
      %p138 = scmp.ne.s32.totalorder %s123, %s137
      %p139 = scmp.eq.s32.totalorder %s19, 0
      %p140 = por %p138, %p139
      %s142 = sadd.s32 %s141, 1
      %p145 = scmp.eq.s32.totalorder %s13, 1
      %p146 = scmp.ne.s32.totalorder %s141, %s143
      %p147 = scmp.eq.s32.totalorder %s13, 0
      %p148 = por %p146, %p147
      %p149 = scmp.ne.s32.totalorder %s141, %s143
      %p150 = scmp.eq.s32.totalorder %s18, 1
      %p151 = por %p149, %p150
      %p152 = scmp.ne.s32.totalorder %s143, %s144
      %p153 = scmp.eq.s32.totalorder %s18, 0
      %p154 = por %p152, %p153
      %p155 = scmp.ne.s32.totalorder %s143, %s144
      %p156 = scmp.eq.s32.totalorder %s19, 1
      %p157 = por %p155, %p156
      %p159 = scmp.ne.s32.totalorder %s144, %s158
      %p160 = scmp.eq.s32.totalorder %s19, 0
      %p161 = por %p159, %p160
      %s163 = sadd.s32 %s162, 1
      %p166 = scmp.eq.s32.totalorder %s13, 1
      %p167 = scmp.ne.s32.totalorder %s162, %s164
      %p168 = scmp.eq.s32.totalorder %s13, 0
      %p169 = por %p167, %p168
      %p170 = scmp.ne.s32.totalorder %s162, %s164
      %p171 = scmp.eq.s32.totalorder %s18, 1
      %p172 = por %p170, %p171
      %p173 = scmp.ne.s32.totalorder %s164, %s165
      %p174 = scmp.eq.s32.totalorder %s18, 0
      %p175 = por %p173, %p174
      %p176 = scmp.ne.s32.totalorder %s164, %s165
      %p177 = scmp.eq.s32.totalorder %s19, 1
      %p178 = por %p176, %p177
      %p180 = scmp.ne.s32.totalorder %s165, %s179
      %p181 = scmp.eq.s32.totalorder %s19, 0
      %p182 = por %p180, %p181
      %s183 = ssub.s32 %s13, %s20
      %p184 = scmp.eq.s32.totalorder %s183, 0
      %s186 = sadd.s32 %s185, 1
      %s187 = scalar_select %p184, %s185, %s186
      %p190 = pneg %p184
      %p191 = scmp.eq.s32.totalorder %s13, 1
      %p192 = por %p190, %p191
      %p193 = scmp.ne.s32.totalorder %s185, %s188
      %p194 = scmp.eq.s32.totalorder %s13, 0
      %p195 = por %p193, %p194
      %p196 = scmp.ne.s32.totalorder %s185, %s188
      %p197 = scmp.eq.s32.totalorder %s18, 1
      %p198 = por %p196, %p197
      %p199 = scmp.ne.s32.totalorder %s188, %s189
      %p200 = scmp.eq.s32.totalorder %s18, 0
      %p201 = por %p199, %p200
      %p202 = scmp.ne.s32.totalorder %s188, %s189
      %p203 = scmp.eq.s32.totalorder %s19, 1
      %p204 = por %p202, %p203
      %p206 = scmp.ne.s32.totalorder %s189, %s205
      %p207 = scmp.eq.s32.totalorder %s19, 0
      %p208 = por %p206, %p207
      %p209 = scmp.le.s32.totalorder 1, %s13
      %p210 = scmp.lt.s32.totalorder %s13, 3
      %p211 = pnand %p209, %p210
      %p212 = pneg %p211
      // Predicated region
      $region9: #{model_forward.4} parent=5 // pred_check
        _
      $region10: #{model_forward.4} parent=5 // pred_check_branch
        %214 = sbr.rel (%p211) target = $region12
      $region11: #{model_forward.4} parent=5 // pred_region
        %s215 = ssub.s32 %s13, 1
        // Predicated region
        $region13: #{model_forward.4} parent=11 // pred_check
          %p216 = pneg %p112
        $region14: #{model_forward.4} parent=11 // pred_check_branch
          %218 = sbr.rel (%p216) target = $region16
        $region15: #{model_forward.4} parent=11 // pred_region
          _
        $region16: #{model_forward.4} parent=11 // pred_fallthru
          _
        // Predicated region
        $region17: #{model_forward.4} parent=11 // pred_check
          %p219 = pneg %p133
        $region18: #{model_forward.4} parent=11 // pred_check_branch
          %221 = sbr.rel (%p219) target = $region20
        $region19: #{model_forward.4} parent=11 // pred_region
          _
        $region20: #{model_forward.4} parent=11 // pred_fallthru
          _
        // Predicated region
        $region21: #{model_forward.4} parent=11 // pred_check
          %p222 = pneg %p154
        $region22: #{model_forward.4} parent=11 // pred_check_branch
          %224 = sbr.rel (%p222) target = $region24
        $region23: #{model_forward.4} parent=11 // pred_region
          _
        $region24: #{model_forward.4} parent=11 // pred_fallthru
          _
        // Predicated region
        $region25: #{model_forward.4} parent=11 // pred_check
          %p225 = pneg %p175
        $region26: #{model_forward.4} parent=11 // pred_check_branch
          %227 = sbr.rel (%p225) target = $region28
        $region27: #{model_forward.4} parent=11 // pred_region
          _
        $region28: #{model_forward.4} parent=11 // pred_fallthru
          _
      $region12: #{model_forward.4} parent=5 // pred_fallthru
        _
      %p228 = scmp.lt.s32.totalorder %s13, 2
      // Predicated region
      $region29: #{model_forward.4} parent=5 // pred_check
        %p229 = pneg %p228
      $region30: #{model_forward.4} parent=5 // pred_check_branch
        %231 = sbr.rel (%p229) target = $region32
      $region31: #{model_forward.4} parent=5 // pred_region
        // Predicated region
        $region33: #{model_forward.4} parent=31 // pred_check
          %p232 = pneg %p33
        $region34: #{model_forward.4} parent=31 // pred_check_branch
          %234 = sbr.rel (%p232) target = $region36
        $region35: #{model_forward.4} parent=31 // pred_region
          %s235 = sand.u32 %s23, 1
          %s236 = sand.u32 %s23, 1
          %s237 = smul.addr %s236, 32
          %s238 = scalar_lea.vmem [#allocation3], %s237
          %s239 = smul.u32 2, %s13
          %s240 = smul.addr %s239, 8
          %s241 = scalar_lea.vmem %s0, %s240
          // Predicated region
          $region37: #{model_forward.4} parent=35 // pred_check
            _
          $region38: #{model_forward.4} parent=35 // pred_check_branch
            %243 = sbr.rel (0) target = $region40
          $region39: #{model_forward.4} parent=35 // pred_region
            // Predicated region
            $region41: #{model_forward.4} parent=39 // pred_check
              _
            $region42: #{model_forward.4} parent=39 // pred_check_branch
              %245 = sbr.rel (0) target = $region44
            $region43: #{model_forward.4} parent=39 // pred_region
              // Predicated region
              $region56: #{model_forward.4} parent=43 // pred_check
                _
              $region57: #{model_forward.4} parent=43 // pred_check_branch
                %266 = sbr.rel (0) target = $region59
              $region58: #{model_forward.4} parent=43 // pred_region
                loop: start=0, step=1, limit=1
                $region60: #{model_forward.4} parent=58 // loop_pre_header
                  _
                $region61: #{model_forward.4} parent=58 // loop_header
                  %s268 = sphi 0, %s272
                  %p269 = scmp.ge.s32.totalorder %s268, 1
                  %s273 = sphi %s241, %s241
                  %s274 = sphi %s238, %s238
                $region62: #{model_forward.4} parent=58 // loop_header_branch
                  %271 = sbr.rel (%p269) target = $region66
                $region63: #{model_forward.4} parent=58 // loop_body
                  %v275 = vld [vmem:[%s273] sm:$0xff]
                  %276 = vst [vmem:[%s274] sm:$0xff] %v275
                  %v277 = vld [vmem:[%s273 + $0x8] sm:$0xff]
                  %278 = vst [vmem:[%s274 + $0x8] sm:$0xff] %v277
                  %v279 = vld [vmem:[%s273 + $0x20] sm:$0xff]
                  %280 = vst [vmem:[%s274 + $0x10] sm:$0xff] %v279
                  %v281 = vld [vmem:[%s273 + $0x28] sm:$0xff]
                  %282 = vst [vmem:[%s274 + $0x18] sm:$0xff] %v281
                $region64: #{model_forward.4} parent=58 // loop_footer
                  %s272 = sadd.s32 1, %s268
                $region65: #{model_forward.4} parent=58 // loop_footer_branch
                  %267 = sbr.rel target = $region61
                $region66: #{model_forward.4} parent=58 // loop_exit
                  _
              $region59: #{model_forward.4} parent=43 // pred_fallthru
                _
              // Predicated region
              $region67: #{model_forward.4} parent=43 // pred_check
                _
              $region68: #{model_forward.4} parent=43 // pred_check_branch
                %284 = sbr.rel target = $region70
              $region69: #{model_forward.4} parent=43 // pred_region
                _
              $region70: #{model_forward.4} parent=43 // pred_fallthru
                _
            $region44: #{model_forward.4} parent=39 // pred_fallthru
              _
            // Predicated region
            $region45: #{model_forward.4} parent=39 // pred_check
              _
            $region46: #{model_forward.4} parent=39 // pred_check_branch
              %247 = sbr.rel target = $region48
            $region47: #{model_forward.4} parent=39 // pred_region
              loop: start=0, step=1, limit=1
              $region49: #{model_forward.4} parent=47 // loop_pre_header
                _
              $region50: #{model_forward.4} parent=47 // loop_header
                %s250 = sphi 0, %s254
                %p251 = scmp.ge.s32.totalorder %s250, 1
                %s255 = sphi %s241, %s241
                %s256 = sphi %s238, %s238
              $region51: #{model_forward.4} parent=47 // loop_header_branch
                %253 = sbr.rel (%p251) target = $region55
              $region52: #{model_forward.4} parent=47 // loop_body
                %v257 = vld [vmem:[%s255] sm:$0xff]
                %258 = vst [vmem:[%s256] sm:$0xff] %v257
                %v259 = vld [vmem:[%s255 + $0x8] sm:$0xff]
                %260 = vst [vmem:[%s256 + $0x8] sm:$0xff] %v259
                %v261 = vld [vmem:[%s255 + $0x20] sm:$0xff]
                %262 = vst [vmem:[%s256 + $0x10] sm:$0xff] %v261
                %v263 = vld [vmem:[%s255 + $0x28] sm:$0xff]
                %264 = vst [vmem:[%s256 + $0x18] sm:$0xff] %v263
              $region53: #{model_forward.4} parent=47 // loop_footer
                %s254 = sadd.s32 1, %s250
              $region54: #{model_forward.4} parent=47 // loop_footer_branch
                %249 = sbr.rel target = $region50
              $region55: #{model_forward.4} parent=47 // loop_exit
                _
            $region48: #{model_forward.4} parent=39 // pred_fallthru
              _
          $region40: #{model_forward.4} parent=35 // pred_fallthru
            _
          %285 = vnop
        $region36: #{model_forward.4} parent=31 // pred_fallthru
          _
        // Predicated region
        $region71: #{model_forward.4} parent=31 // pred_check
          %p286 = pneg %p59
        $region72: #{model_forward.4} parent=31 // pred_check_branch
          %288 = sbr.rel (%p286) target = $region74
        $region73: #{model_forward.4} parent=31 // pred_region
          %s289 = sand.u32 %s49, 1
          %s290 = sand.u32 %s49, 1
          %s291 = smul.addr %s290, 32
          %s292 = scalar_lea.vmem [#allocation4], %s291
          %s293 = smul.u32 2, %s13
          %s294 = smul.addr %s293, 8
          %s295 = scalar_lea.vmem %s1, %s294
          // Predicated region
          $region75: #{model_forward.4} parent=73 // pred_check
            _
          $region76: #{model_forward.4} parent=73 // pred_check_branch
            %297 = sbr.rel (0) target = $region78
          $region77: #{model_forward.4} parent=73 // pred_region
            // Predicated region
            $region79: #{model_forward.4} parent=77 // pred_check
              _
            $region80: #{model_forward.4} parent=77 // pred_check_branch
              %299 = sbr.rel (0) target = $region82
            $region81: #{model_forward.4} parent=77 // pred_region
              // Predicated region
              $region94: #{model_forward.4} parent=81 // pred_check
                _
              $region95: #{model_forward.4} parent=81 // pred_check_branch
                %320 = sbr.rel (0) target = $region97
              $region96: #{model_forward.4} parent=81 // pred_region
                loop: start=0, step=1, limit=1
                $region98: #{model_forward.4} parent=96 // loop_pre_header
                  _
                $region99: #{model_forward.4} parent=96 // loop_header
                  %s322 = sphi 0, %s326
                  %p323 = scmp.ge.s32.totalorder %s322, 1
                  %s327 = sphi %s295, %s295
                  %s328 = sphi %s292, %s292
                $region100: #{model_forward.4} parent=96 // loop_header_branch
                  %325 = sbr.rel (%p323) target = $region104
                $region101: #{model_forward.4} parent=96 // loop_body
                  %v329 = vld [vmem:[%s327] sm:$0xff]
                  %330 = vst [vmem:[%s328] sm:$0xff] %v329
                  %v331 = vld [vmem:[%s327 + $0x8] sm:$0xff]
                  %332 = vst [vmem:[%s328 + $0x8] sm:$0xff] %v331
                  %v333 = vld [vmem:[%s327 + $0x20] sm:$0xff]
                  %334 = vst [vmem:[%s328 + $0x10] sm:$0xff] %v333
                  %v335 = vld [vmem:[%s327 + $0x28] sm:$0xff]
                  %336 = vst [vmem:[%s328 + $0x18] sm:$0xff] %v335
                $region102: #{model_forward.4} parent=96 // loop_footer
                  %s326 = sadd.s32 1, %s322
                $region103: #{model_forward.4} parent=96 // loop_footer_branch
                  %321 = sbr.rel target = $region99
                $region104: #{model_forward.4} parent=96 // loop_exit
                  _
              $region97: #{model_forward.4} parent=81 // pred_fallthru
                _
              // Predicated region
              $region105: #{model_forward.4} parent=81 // pred_check
                _
              $region106: #{model_forward.4} parent=81 // pred_check_branch
                %338 = sbr.rel target = $region108
              $region107: #{model_forward.4} parent=81 // pred_region
                _
              $region108: #{model_forward.4} parent=81 // pred_fallthru
                _
            $region82: #{model_forward.4} parent=77 // pred_fallthru
              _
            // Predicated region
            $region83: #{model_forward.4} parent=77 // pred_check
              _
            $region84: #{model_forward.4} parent=77 // pred_check_branch
              %301 = sbr.rel target = $region86
            $region85: #{model_forward.4} parent=77 // pred_region
              loop: start=0, step=1, limit=1
              $region87: #{model_forward.4} parent=85 // loop_pre_header
                _
              $region88: #{model_forward.4} parent=85 // loop_header
                %s304 = sphi 0, %s308
                %p305 = scmp.ge.s32.totalorder %s304, 1
                %s309 = sphi %s295, %s295
                %s310 = sphi %s292, %s292
              $region89: #{model_forward.4} parent=85 // loop_header_branch
                %307 = sbr.rel (%p305) target = $region93
              $region90: #{model_forward.4} parent=85 // loop_body
                %v311 = vld [vmem:[%s309] sm:$0xff]
                %312 = vst [vmem:[%s310] sm:$0xff] %v311
                %v313 = vld [vmem:[%s309 + $0x8] sm:$0xff]
                %314 = vst [vmem:[%s310 + $0x8] sm:$0xff] %v313
                %v315 = vld [vmem:[%s309 + $0x20] sm:$0xff]
                %316 = vst [vmem:[%s310 + $0x10] sm:$0xff] %v315
                %v317 = vld [vmem:[%s309 + $0x28] sm:$0xff]
                %318 = vst [vmem:[%s310 + $0x18] sm:$0xff] %v317
              $region91: #{model_forward.4} parent=85 // loop_footer
                %s308 = sadd.s32 1, %s304
              $region92: #{model_forward.4} parent=85 // loop_footer_branch
                %303 = sbr.rel target = $region88
              $region93: #{model_forward.4} parent=85 // loop_exit
                _
            $region86: #{model_forward.4} parent=77 // pred_fallthru
              _
          $region78: #{model_forward.4} parent=73 // pred_fallthru
            _
          %339 = vnop
        $region74: #{model_forward.4} parent=31 // pred_fallthru
          _
        // Predicated region
        $region109: #{model_forward.4} parent=31 // pred_check
          %p340 = pneg %p85
        $region110: #{model_forward.4} parent=31 // pred_check_branch
          %342 = sbr.rel (%p340) target = $region112
        $region111: #{model_forward.4} parent=31 // pred_region
          %s343 = sand.u32 %s75, 1
          %s344 = sand.u32 %s75, 1
          %s345 = smul.addr %s344, 32
          %s346 = scalar_lea.vmem [#allocation5], %s345
          %s347 = smul.u32 2, %s13
          %s348 = smul.addr %s347, 8
          %s349 = scalar_lea.vmem %s2, %s348
          // Predicated region
          $region113: #{model_forward.4} parent=111 // pred_check
            _
          $region114: #{model_forward.4} parent=111 // pred_check_branch
            %351 = sbr.rel (0) target = $region116
          $region115: #{model_forward.4} parent=111 // pred_region
            // Predicated region
            $region117: #{model_forward.4} parent=115 // pred_check
              _
            $region118: #{model_forward.4} parent=115 // pred_check_branch
              %353 = sbr.rel (0) target = $region120
            $region119: #{model_forward.4} parent=115 // pred_region
              // Predicated region
              $region132: #{model_forward.4} parent=119 // pred_check
                _
              $region133: #{model_forward.4} parent=119 // pred_check_branch
                %374 = sbr.rel (0) target = $region135
              $region134: #{model_forward.4} parent=119 // pred_region
                loop: start=0, step=1, limit=1
                $region136: #{model_forward.4} parent=134 // loop_pre_header
                  _
                $region137: #{model_forward.4} parent=134 // loop_header
                  %s376 = sphi 0, %s380
                  %p377 = scmp.ge.s32.totalorder %s376, 1
                  %s381 = sphi %s349, %s349
                  %s382 = sphi %s346, %s346
                $region138: #{model_forward.4} parent=134 // loop_header_branch
                  %379 = sbr.rel (%p377) target = $region142
                $region139: #{model_forward.4} parent=134 // loop_body
                  %v383 = vld [vmem:[%s381] sm:$0xff]
                  %384 = vst [vmem:[%s382] sm:$0xff] %v383
                  %v385 = vld [vmem:[%s381 + $0x8] sm:$0xff]
                  %386 = vst [vmem:[%s382 + $0x8] sm:$0xff] %v385
                  %v387 = vld [vmem:[%s381 + $0x20] sm:$0xff]
                  %388 = vst [vmem:[%s382 + $0x10] sm:$0xff] %v387
                  %v389 = vld [vmem:[%s381 + $0x28] sm:$0xff]
                  %390 = vst [vmem:[%s382 + $0x18] sm:$0xff] %v389
                $region140: #{model_forward.4} parent=134 // loop_footer
                  %s380 = sadd.s32 1, %s376
                $region141: #{model_forward.4} parent=134 // loop_footer_branch
                  %375 = sbr.rel target = $region137
                $region142: #{model_forward.4} parent=134 // loop_exit
                  _
              $region135: #{model_forward.4} parent=119 // pred_fallthru
                _
              // Predicated region
              $region143: #{model_forward.4} parent=119 // pred_check
                _
              $region144: #{model_forward.4} parent=119 // pred_check_branch
                %392 = sbr.rel target = $region146
              $region145: #{model_forward.4} parent=119 // pred_region
                _
              $region146: #{model_forward.4} parent=119 // pred_fallthru
                _
            $region120: #{model_forward.4} parent=115 // pred_fallthru
              _
            // Predicated region
            $region121: #{model_forward.4} parent=115 // pred_check
              _
            $region122: #{model_forward.4} parent=115 // pred_check_branch
              %355 = sbr.rel target = $region124
            $region123: #{model_forward.4} parent=115 // pred_region
              loop: start=0, step=1, limit=1
              $region125: #{model_forward.4} parent=123 // loop_pre_header
                _
              $region126: #{model_forward.4} parent=123 // loop_header
                %s358 = sphi 0, %s362
                %p359 = scmp.ge.s32.totalorder %s358, 1
                %s363 = sphi %s349, %s349
                %s364 = sphi %s346, %s346
              $region127: #{model_forward.4} parent=123 // loop_header_branch
                %361 = sbr.rel (%p359) target = $region131
              $region128: #{model_forward.4} parent=123 // loop_body
                %v365 = vld [vmem:[%s363] sm:$0xff]
                %366 = vst [vmem:[%s364] sm:$0xff] %v365
                %v367 = vld [vmem:[%s363 + $0x8] sm:$0xff]
                %368 = vst [vmem:[%s364 + $0x8] sm:$0xff] %v367
                %v369 = vld [vmem:[%s363 + $0x20] sm:$0xff]
                %370 = vst [vmem:[%s364 + $0x10] sm:$0xff] %v369
                %v371 = vld [vmem:[%s363 + $0x28] sm:$0xff]
                %372 = vst [vmem:[%s364 + $0x18] sm:$0xff] %v371
              $region129: #{model_forward.4} parent=123 // loop_footer
                %s362 = sadd.s32 1, %s358
              $region130: #{model_forward.4} parent=123 // loop_footer_branch
                %357 = sbr.rel target = $region126
              $region131: #{model_forward.4} parent=123 // loop_exit
                _
            $region124: #{model_forward.4} parent=115 // pred_fallthru
              _
          $region116: #{model_forward.4} parent=111 // pred_fallthru
            _
          %393 = vnop
        $region112: #{model_forward.4} parent=31 // pred_fallthru
          _
      $region32: #{model_forward.4} parent=5 // pred_fallthru
        _
      %p394 = scmp.le.s32.totalorder 1, %s13
      %p395 = scmp.lt.s32.totalorder %s13, 3
      %p396 = pnand %p394, %p395
      %p397 = pneg %p396
      // Predicated region
      $region147: #{model_forward.4} parent=5 // pred_check
        _
      $region148: #{model_forward.4} parent=5 // pred_check_branch
        %399 = sbr.rel (%p396) target = $region150
      $region149: #{model_forward.4} parent=5 // pred_region
        %s400 = ssub.s32 %s13, 1
        %s401 = sand.u32 %s26, 1
        %s402 = sand.u32 %s26, 1
        %s403 = smul.addr %s402, 32
        %s404 = scalar_lea.vmem [#allocation3], %s403
        // Predicated region
        $region151: #{model_forward.4} parent=149 // pred_check
          %p405 = pneg %p39
        $region152: #{model_forward.4} parent=149 // pred_check_branch
          %407 = sbr.rel (%p405) target = $region154
        $region153: #{model_forward.4} parent=149 // pred_region
          _
        $region154: #{model_forward.4} parent=149 // pred_fallthru
          _
        %s408 = sand.u32 %s52, 1
        %s409 = sand.u32 %s52, 1
        %s410 = smul.addr %s409, 32
        %s411 = scalar_lea.vmem [#allocation4], %s410
        // Predicated region
        $region155: #{model_forward.4} parent=149 // pred_check
          %p412 = pneg %p65
        $region156: #{model_forward.4} parent=149 // pred_check_branch
          %414 = sbr.rel (%p412) target = $region158
        $region157: #{model_forward.4} parent=149 // pred_region
          _
        $region158: #{model_forward.4} parent=149 // pred_fallthru
          _
        %s415 = sand.u32 %s78, 1
        %s416 = sand.u32 %s78, 1
        %s417 = smul.addr %s416, 32
        %s418 = scalar_lea.vmem [#allocation5], %s417
        // Predicated region
        $region159: #{model_forward.4} parent=149 // pred_check
          %p419 = pneg %p91
        $region160: #{model_forward.4} parent=149 // pred_check_branch
          %421 = sbr.rel (%p419) target = $region162
        $region161: #{model_forward.4} parent=149 // pred_region
          _
        $region162: #{model_forward.4} parent=149 // pred_fallthru
          _
        %s422 = sand.u32 %s26, 1
        %s423 = sand.u32 %s26, 1
        %s424 = smul.addr %s423, 32
        %s425 = scalar_lea.vmem [#allocation3], %s424
        %p426 = pneg %p39
        %p427 = pneg %p36
        %s428 = sand.u32 %s52, 1
        %s429 = sand.u32 %s52, 1
        %s430 = smul.addr %s429, 32
        %s431 = scalar_lea.vmem [#allocation4], %s430
        %p432 = pneg %p65
        %p433 = pneg %p62
        %s434 = sand.u32 %s78, 1
        %s435 = sand.u32 %s78, 1
        %s436 = smul.addr %s435, 32
        %s437 = scalar_lea.vmem [#allocation5], %s436
        %p438 = pneg %p91
        %p439 = pneg %p88
        %p440 = pneg %p112
        %p441 = pneg %p109
        %p442 = pneg %p133
        %p443 = pneg %p130
        %p444 = pneg %p154
        %p445 = pneg %p151
        %p446 = pneg %p175
        %p447 = pneg %p172
        %p448 = pneg %p201
        %p449 = pneg %p198
        %s450 = sand.u32 %s188, 1
        %s451 = sand.u32 %s188, 1
        %s452 = smul.addr %s451, 32
        %s453 = scalar_lea.vmem [#allocation6], %s452
        %s454 = smul.u32 2, %s18
        %s455 = smul.u32 2, %s18
        %s456 = smul.u32 2, %s18
        %s457 = smul.u32 2, %s18
        %p458 = scmp.eq.s32.totalorder %s18, 0
        // Predicated region
        $region163: #{model_forward.4} parent=149 // pred_check
          %p459 = pneg %p458
        $region164: #{model_forward.4} parent=149 // pred_check_branch
          %461 = sbr.rel (%p459) target = $region166
        $region165: #{model_forward.4} parent=149 // pred_region
          %vm462 = vcmask 254976
          %463 = vst.msk [vmem:[#allocation2] sm:$0x3] %vm462, 0.0
        $region166: #{model_forward.4} parent=149 // pred_fallthru
          _
        %v464 = vld [vmem:[#allocation2] sm:$0x3]
        %v465 = vld [vmem:[%s3] sm:$0xff]
        %v466 = vld [vmem:[%s3 + $0x8] sm:$0xff]
        %v467 = vld [vmem:[%s3 + $0x10] sm:$0xff]
        %v468 = vld [vmem:[%s3 + $0x18] sm:$0xff]
        %v469 = vld [vmem:[%s4] sm:$0xff]
        %v470 = vld [vmem:[%s4 + $0x8] sm:$0xff]
        %v471 = vld [vmem:[%s4 + $0x10] sm:$0xff]
        %v472 = vld [vmem:[%s4 + $0x18] sm:$0xff]
        %v473 = vld [vmem:[%s5] sm:$0xff]
        %v474 = vld [vmem:[%s5 + $0x8] sm:$0xff]
        %v475 = vld [vmem:[%s5 + $0x10] sm:$0xff]
        %v476 = vld [vmem:[%s5 + $0x18] sm:$0xff]
        %v477 = vld [vmem:[%s6] sm:$0x1]
        %vm478 = vcmask 261120
        %v480 = vsel %vm478, %v464, 0
        %482 = vmatprep.subr.mxu0 0.0
        %483 = vmatpush1.msra.mxu0 %v465
        %484 = vmatprep.subr.mxu0 0.0
        %485 = vmatpush1.msra.mxu0 %v466
        %486 = vmatprep.subr.mxu0 0.0
        %487 = vmatpush1.msra.mxu0 %v467
        %488 = vmatprep.subr.mxu0 0.0
        %489 = vmatpush1.msra.mxu0 %v468
        %490 = vmatprep.subr.mxu0 0.0
        %491 = vmatpush1.msra.mxu0 0.0
        %492 = vmatprep.subr.mxu0 0.0
        %493 = vmatpush1.msra.mxu0 0.0
        %494 = vmatprep.subr.mxu0 0.0
        %495 = vmatpush1.msra.mxu0 0.0
        %496 = vmatprep.subr.mxu0 0.0
        %497 = vmatpush1.msra.mxu0 0.0
        %498 = vmatprep.subr.mxu0 0.0
        %499 = vmatpush1.msra.mxu0 0.0
        %500 = vmatprep.subr.mxu0 0.0
        %501 = vmatpush1.msra.mxu0 0.0
        %502 = vmatprep.subr.mxu0 0.0
        %503 = vmatpush1.msra.mxu0 0.0
        %504 = vmatprep.subr.mxu0 0.0
        %505 = vmatpush1.msra.mxu0 0.0
        %506 = vmatprep.subr.mxu0 0.0
        %507 = vmatpush1.msra.mxu0 0.0
        %508 = vmatprep.subr.mxu0 0.0
        %509 = vmatpush1.msra.mxu0 0.0
        %510 = vmatprep.subr.mxu0 0.0
        %511 = vmatpush1.msra.mxu0 0.0
        %512 = vmatprep.subr.mxu0 0.0
        %513 = vmatpush1.msra.mxu0 0.0
        %514 = vmatprep.subr.mxu0 0.0
        %515 = vmatpush1.msra.mxu0 0.0
        %516 = vmatprep.subr.mxu0 0.0
        %517 = vmatpush1.msra.mxu0 0.0
        %518 = vmatprep.subr.mxu0 0.0
        %519 = vmatpush1.msra.mxu0 0.0
        %520 = vmatprep.subr.mxu0 0.0
        %521 = vmatpush1.msra.mxu0 0.0
        %522 = vmatprep.subr.mxu0 0.0
        %523 = vmatpush1.msra.mxu0 0.0
        %524 = vmatprep.subr.mxu0 0.0
        %525 = vmatpush1.msra.mxu0 0.0
        %526 = vmatprep.subr.mxu0 0.0
        %527 = vmatpush1.msra.mxu0 0.0
        %528 = vmatprep.subr.mxu0 0.0
        %529 = vmatpush1.msra.mxu0 0.0
        %530 = vmatprep.subr.mxu0 0.0
        %531 = vmatpush1.msra.mxu0 0.0
        %532 = vmatprep.subr.mxu0 0.0
        %533 = vmatpush1.msra.mxu0 0.0
        %534 = vmatprep.subr.mxu0 0.0
        %535 = vmatpush1.msra.mxu0 0.0
        %536 = vmatprep.subr.mxu0 0.0
        %537 = vmatpush1.msra.mxu0 0.0
        %538 = vmatprep.subr.mxu0 0.0
        %539 = vmatpush1.msra.mxu0 0.0
        %540 = vmatprep.subr.mxu0 0.0
        %541 = vmatpush1.msra.mxu0 0.0
        %542 = vmatprep.subr.mxu0 0.0
        %543 = vmatpush1.msra.mxu0 0.0
        %544 = vmatprep.subr.mxu0 0.0
        %545 = vmatpush1.msra.mxu0 0.0
        %546 = vmatprep.mubr.f32.mxu0 0.0
        %547 = vmatmul.mubr.f32.gmra.mrb[0].mxu0 %v480
        %v548 = vpop.f32.mrb[0].mxu0
        %v549 = vadd.f32 0.0, %v548
        %v550 = vpop.f32.mrb[0].mxu0
        %551 = vdwg.mxu0
        %552 = vmatprep.subr.mxu0 0.0
        %553 = vmatpush1.msra.mxu0 %v469
        %554 = vmatprep.subr.mxu0 0.0
        %555 = vmatpush1.msra.mxu0 %v470
        %556 = vmatprep.subr.mxu0 0.0
        %557 = vmatpush1.msra.mxu0 %v471
        %558 = vmatprep.subr.mxu0 0.0
        %559 = vmatpush1.msra.mxu0 %v472
        %560 = vmatprep.subr.mxu0 0.0
        %561 = vmatpush1.msra.mxu0 0.0
        %562 = vmatprep.subr.mxu0 0.0
        %563 = vmatpush1.msra.mxu0 0.0
        %564 = vmatprep.subr.mxu0 0.0
        %565 = vmatpush1.msra.mxu0 0.0
        %566 = vmatprep.subr.mxu0 0.0
        %567 = vmatpush1.msra.mxu0 0.0
        %568 = vmatprep.subr.mxu0 0.0
        %569 = vmatpush1.msra.mxu0 0.0
        %570 = vmatprep.subr.mxu0 0.0
        %571 = vmatpush1.msra.mxu0 0.0
        %572 = vmatprep.subr.mxu0 0.0
        %573 = vmatpush1.msra.mxu0 0.0
        %574 = vmatprep.subr.mxu0 0.0
        %575 = vmatpush1.msra.mxu0 0.0
        %576 = vmatprep.subr.mxu0 0.0
        %577 = vmatpush1.msra.mxu0 0.0
        %578 = vmatprep.subr.mxu0 0.0
        %579 = vmatpush1.msra.mxu0 0.0
        %580 = vmatprep.subr.mxu0 0.0
        %581 = vmatpush1.msra.mxu0 0.0
        %582 = vmatprep.subr.mxu0 0.0
        %583 = vmatpush1.msra.mxu0 0.0
        %584 = vmatprep.subr.mxu0 0.0
        %585 = vmatpush1.msra.mxu0 0.0
        %586 = vmatprep.subr.mxu0 0.0
        %587 = vmatpush1.msra.mxu0 0.0
        %588 = vmatprep.subr.mxu0 0.0
        %589 = vmatpush1.msra.mxu0 0.0
        %590 = vmatprep.subr.mxu0 0.0
        %591 = vmatpush1.msra.mxu0 0.0
        %592 = vmatprep.subr.mxu0 0.0
        %593 = vmatpush1.msra.mxu0 0.0
        %594 = vmatprep.subr.mxu0 0.0
        %595 = vmatpush1.msra.mxu0 0.0
        %596 = vmatprep.subr.mxu0 0.0
        %597 = vmatpush1.msra.mxu0 0.0
        %598 = vmatprep.subr.mxu0 0.0
        %599 = vmatpush1.msra.mxu0 0.0
        %600 = vmatprep.subr.mxu0 0.0
        %601 = vmatpush1.msra.mxu0 0.0
        %602 = vmatprep.subr.mxu0 0.0
        %603 = vmatpush1.msra.mxu0 0.0
        %604 = vmatprep.subr.mxu0 0.0
        %605 = vmatpush1.msra.mxu0 0.0
        %606 = vmatprep.subr.mxu0 0.0
        %607 = vmatpush1.msra.mxu0 0.0
        %608 = vmatprep.subr.mxu0 0.0
        %609 = vmatpush1.msra.mxu0 0.0
        %610 = vmatprep.subr.mxu0 0.0
        %611 = vmatpush1.msra.mxu0 0.0
        %612 = vmatprep.subr.mxu0 0.0
        %613 = vmatpush1.msra.mxu0 0.0
        %614 = vmatprep.subr.mxu0 0.0
        %615 = vmatpush1.msra.mxu0 0.0
        %616 = vmatprep.mubr.f32.mxu0 0.0
        %617 = vmatmul.mubr.f32.gmra.mrb[0].mxu0 %v480
        %v618 = vpop.f32.mrb[0].mxu0
        %v619 = vadd.f32 0.0, %v618
        %v620 = vpop.f32.mrb[0].mxu0
        %621 = vdwg.mxu0
        %v623 = vlaneseq
        %v624 = vshrl.u32 %v623, 7
        %v625 = vsub.s32 0, %v624
        %v626 = vrot.slane %v477, %v625
        %628 = vmatprep.subr.mxu0 0.0
        %629 = vmatpush1.msra.mxu0 %v473
        %630 = vmatprep.subr.mxu0 0.0
        %631 = vmatpush1.msra.mxu0 %v474
        %632 = vmatprep.subr.mxu0 0.0
        %633 = vmatpush1.msra.mxu0 %v475
        %634 = vmatprep.subr.mxu0 0.0
        %635 = vmatpush1.msra.mxu0 %v476
        %636 = vmatprep.subr.mxu0 0.0
        %637 = vmatpush1.msra.mxu0 0.0
        %638 = vmatprep.subr.mxu0 0.0
        %639 = vmatpush1.msra.mxu0 0.0
        %640 = vmatprep.subr.mxu0 0.0
        %641 = vmatpush1.msra.mxu0 0.0
        %642 = vmatprep.subr.mxu0 0.0
        %643 = vmatpush1.msra.mxu0 0.0
        %644 = vmatprep.subr.mxu0 0.0
        %645 = vmatpush1.msra.mxu0 0.0
        %646 = vmatprep.subr.mxu0 0.0
        %647 = vmatpush1.msra.mxu0 0.0
        %648 = vmatprep.subr.mxu0 0.0
        %649 = vmatpush1.msra.mxu0 0.0
        %650 = vmatprep.subr.mxu0 0.0
        %651 = vmatpush1.msra.mxu0 0.0
        %652 = vmatprep.subr.mxu0 0.0
        %653 = vmatpush1.msra.mxu0 0.0
        %654 = vmatprep.subr.mxu0 0.0
        %655 = vmatpush1.msra.mxu0 0.0
        %656 = vmatprep.subr.mxu0 0.0
        %657 = vmatpush1.msra.mxu0 0.0
        %658 = vmatprep.subr.mxu0 0.0
        %659 = vmatpush1.msra.mxu0 0.0
        %660 = vmatprep.subr.mxu0 0.0
        %661 = vmatpush1.msra.mxu0 0.0
        %662 = vmatprep.subr.mxu0 0.0
        %663 = vmatpush1.msra.mxu0 0.0
        %664 = vmatprep.subr.mxu0 0.0
        %665 = vmatpush1.msra.mxu0 0.0
        %666 = vmatprep.subr.mxu0 0.0
        %667 = vmatpush1.msra.mxu0 0.0
        %668 = vmatprep.subr.mxu0 0.0
        %669 = vmatpush1.msra.mxu0 0.0
        %670 = vmatprep.subr.mxu0 0.0
        %671 = vmatpush1.msra.mxu0 0.0
        %672 = vmatprep.subr.mxu0 0.0
        %673 = vmatpush1.msra.mxu0 0.0
        %674 = vmatprep.subr.mxu0 0.0
        %675 = vmatpush1.msra.mxu0 0.0
        %676 = vmatprep.subr.mxu0 0.0
        %677 = vmatpush1.msra.mxu0 0.0
        %678 = vmatprep.subr.mxu0 0.0
        %679 = vmatpush1.msra.mxu0 0.0
        %680 = vmatprep.subr.mxu0 0.0
        %681 = vmatpush1.msra.mxu0 0.0
        %682 = vmatprep.subr.mxu0 0.0
        %683 = vmatpush1.msra.mxu0 0.0
        %684 = vmatprep.subr.mxu0 0.0
        %685 = vmatpush1.msra.mxu0 0.0
        %686 = vmatprep.subr.mxu0 0.0
        %687 = vmatpush1.msra.mxu0 0.0
        %688 = vmatprep.subr.mxu0 0.0
        %689 = vmatpush1.msra.mxu0 0.0
        %690 = vmatprep.subr.mxu0 0.0
        %691 = vmatpush1.msra.mxu0 0.0
        %692 = vmatprep.mubr.f32.mxu0 0.0
        %693 = vmatmul.mubr.f32.gmra.mrb[0].mxu0 %v480
        %v694 = vpop.f32.mrb[0].mxu0
        %v695 = vadd.f32 %v626, %v694
        %v696 = vpop.f32.mrb[0].mxu0
        %697 = vdwg.mxu0
        %v698 = vld [vmem:[%s404] sm:$0x1]
        %v699 = vld [vmem:[%s404 + $0x10] sm:$0x1]
        %v701 = vrot.slane %v549, 1
        %v704 = vadd.f32 %v698, %v549
        %v705 = vadd.f32 %v699, %v701
        %v706 = vxor.u32 %v704, 2147483648
        %v707 = vxor.u32 %v705, 2147483648
        %v708 = vmul.f32 %v706, 1.442695
        %v709 = vpow.pop %v708
        %v710 = vmul.f32 %v707, 1.442695
        %v711 = vpow.pop %v710
        %v712 = vadd.f32 %v709, 1.0
        %v713 = vadd.f32 %v711, 1.0
        %v714 = vrcp.pop %v712
        %v715 = vmul.f32 1.0, %v714
        %v716 = vrcp.pop %v713
        %v717 = vmul.f32 1.0, %v716
        %v718 = vld [vmem:[%s411] sm:$0x1]
        %v719 = vld [vmem:[%s411 + $0x10] sm:$0x1]
        %v721 = vrot.slane %v619, 1
        %v724 = vadd.f32 %v718, %v619
        %v725 = vadd.f32 %v719, %v721
        %v726 = vxor.u32 %v724, 2147483648
        %v727 = vxor.u32 %v725, 2147483648
        %v728 = vmul.f32 %v726, 1.442695
        %v729 = vpow.pop %v728
        %v730 = vmul.f32 %v727, 1.442695
        %v731 = vpow.pop %v730
        %v732 = vadd.f32 %v729, 1.0
        %v733 = vadd.f32 %v731, 1.0
        %v734 = vrcp.pop %v732
        %v735 = vmul.f32 1.0, %v734
        %v736 = vrcp.pop %v733
        %v737 = vmul.f32 1.0, %v736
        %v738 = vld [vmem:[%s418] sm:$0x1]
        %v739 = vld [vmem:[%s418 + $0x10] sm:$0x1]
        %v741 = vrot.slane %v695, 1
        %v744 = vmul.f32 %v715, %v695
        %v745 = vmul.f32 %v717, %v741
        %v746 = vadd.f32 %v738, %v744
        %v747 = vadd.f32 %v739, %v745
        %v748 = vtanh.pop %v746
        %v749 = vtanh.pop %v747
        %v750 = vsub.f32 1.0, %v735
        %v751 = vsub.f32 1.0, %v737
        %v752 = vmul.f32 %v750, %v748
        %v753 = vmul.f32 %v751, %v749
        %v754 = vrot.slane %v464, 1
        %v757 = vmul.f32 %v735, %v464
        %v758 = vmul.f32 %v737, %v754
        %v759 = vadd.f32 %v752, %v757
        %v760 = vadd.f32 %v753, %v758
        %vm761 = vcmask 253952
        %762 = vst.msk [vmem:[%s453] sm:$0x1] %vm761, %v759
        %763 = vst.msk [vmem:[%s453 + $0x10] sm:$0x1] %vm761, %v760
        %v766 = vrot.slane %v760, 7
        %vm767 = vcmask 1041409
        %v768 = vsel %vm767, %v766, %v759
        %v769 = vsel %vm478, %v768, 0
        %771 = vmatprep.subr.mxu0 0.0
        %772 = vmatpush1.msra.mxu0 %v465
        %773 = vmatprep.subr.mxu0 0.0
        %774 = vmatpush1.msra.mxu0 %v466
        %775 = vmatprep.subr.mxu0 0.0
        %776 = vmatpush1.msra.mxu0 %v467
        %777 = vmatprep.subr.mxu0 0.0
        %778 = vmatpush1.msra.mxu0 %v468
        %779 = vmatprep.subr.mxu0 0.0
        %780 = vmatpush1.msra.mxu0 0.0
        %781 = vmatprep.subr.mxu0 0.0
        %782 = vmatpush1.msra.mxu0 0.0
        %783 = vmatprep.subr.mxu0 0.0
        %784 = vmatpush1.msra.mxu0 0.0
        %785 = vmatprep.subr.mxu0 0.0
        %786 = vmatpush1.msra.mxu0 0.0
        %787 = vmatprep.subr.mxu0 0.0
        %788 = vmatpush1.msra.mxu0 0.0
        %789 = vmatprep.subr.mxu0 0.0
        %790 = vmatpush1.msra.mxu0 0.0
        %791 = vmatprep.subr.mxu0 0.0
        %792 = vmatpush1.msra.mxu0 0.0
        %793 = vmatprep.subr.mxu0 0.0
        %794 = vmatpush1.msra.mxu0 0.0
        %795 = vmatprep.subr.mxu0 0.0
        %796 = vmatpush1.msra.mxu0 0.0
        %797 = vmatprep.subr.mxu0 0.0
        %798 = vmatpush1.msra.mxu0 0.0
        %799 = vmatprep.subr.mxu0 0.0
        %800 = vmatpush1.msra.mxu0 0.0
        %801 = vmatprep.subr.mxu0 0.0
        %802 = vmatpush1.msra.mxu0 0.0
        %803 = vmatprep.subr.mxu0 0.0
        %804 = vmatpush1.msra.mxu0 0.0
        %805 = vmatprep.subr.mxu0 0.0
        %806 = vmatpush1.msra.mxu0 0.0
        %807 = vmatprep.subr.mxu0 0.0
        %808 = vmatpush1.msra.mxu0 0.0
        %809 = vmatprep.subr.mxu0 0.0
        %810 = vmatpush1.msra.mxu0 0.0
        %811 = vmatprep.subr.mxu0 0.0
        %812 = vmatpush1.msra.mxu0 0.0
        %813 = vmatprep.subr.mxu0 0.0
        %814 = vmatpush1.msra.mxu0 0.0
        %815 = vmatprep.subr.mxu0 0.0
        %816 = vmatpush1.msra.mxu0 0.0
        %817 = vmatprep.subr.mxu0 0.0
        %818 = vmatpush1.msra.mxu0 0.0
        %819 = vmatprep.subr.mxu0 0.0
        %820 = vmatpush1.msra.mxu0 0.0
        %821 = vmatprep.subr.mxu0 0.0
        %822 = vmatpush1.msra.mxu0 0.0
        %823 = vmatprep.subr.mxu0 0.0
        %824 = vmatpush1.msra.mxu0 0.0
        %825 = vmatprep.subr.mxu0 0.0
        %826 = vmatpush1.msra.mxu0 0.0
        %827 = vmatprep.subr.mxu0 0.0
        %828 = vmatpush1.msra.mxu0 0.0
        %829 = vmatprep.subr.mxu0 0.0
        %830 = vmatpush1.msra.mxu0 0.0
        %831 = vmatprep.subr.mxu0 0.0
        %832 = vmatpush1.msra.mxu0 0.0
        %833 = vmatprep.subr.mxu0 0.0
        %834 = vmatpush1.msra.mxu0 0.0
        %835 = vmatprep.mubr.f32.mxu0 0.0
        %836 = vmatmul.mubr.f32.gmra.mrb[0].mxu0 %v769
        %v837 = vpop.f32.mrb[0].mxu0
        %v838 = vadd.f32 0.0, %v837
        %v839 = vpop.f32.mrb[0].mxu0
        %840 = vdwg.mxu0
        %841 = vmatprep.subr.mxu0 0.0
        %842 = vmatpush1.msra.mxu0 %v469
        %843 = vmatprep.subr.mxu0 0.0
        %844 = vmatpush1.msra.mxu0 %v470
        %845 = vmatprep.subr.mxu0 0.0
        %846 = vmatpush1.msra.mxu0 %v471
        %847 = vmatprep.subr.mxu0 0.0
        %848 = vmatpush1.msra.mxu0 %v472
        %849 = vmatprep.subr.mxu0 0.0
        %850 = vmatpush1.msra.mxu0 0.0
        %851 = vmatprep.subr.mxu0 0.0
        %852 = vmatpush1.msra.mxu0 0.0
        %853 = vmatprep.subr.mxu0 0.0
        %854 = vmatpush1.msra.mxu0 0.0
        %855 = vmatprep.subr.mxu0 0.0
        %856 = vmatpush1.msra.mxu0 0.0
        %857 = vmatprep.subr.mxu0 0.0
        %858 = vmatpush1.msra.mxu0 0.0
        %859 = vmatprep.subr.mxu0 0.0
        %860 = vmatpush1.msra.mxu0 0.0
        %861 = vmatprep.subr.mxu0 0.0
        %862 = vmatpush1.msra.mxu0 0.0
        %863 = vmatprep.subr.mxu0 0.0
        %864 = vmatpush1.msra.mxu0 0.0
        %865 = vmatprep.subr.mxu0 0.0
        %866 = vmatpush1.msra.mxu0 0.0
        %867 = vmatprep.subr.mxu0 0.0
        %868 = vmatpush1.msra.mxu0 0.0
        %869 = vmatprep.subr.mxu0 0.0
        %870 = vmatpush1.msra.mxu0 0.0
        %871 = vmatprep.subr.mxu0 0.0
        %872 = vmatpush1.msra.mxu0 0.0
        %873 = vmatprep.subr.mxu0 0.0
        %874 = vmatpush1.msra.mxu0 0.0
        %875 = vmatprep.subr.mxu0 0.0
        %876 = vmatpush1.msra.mxu0 0.0
        %877 = vmatprep.subr.mxu0 0.0
        %878 = vmatpush1.msra.mxu0 0.0
        %879 = vmatprep.subr.mxu0 0.0
        %880 = vmatpush1.msra.mxu0 0.0
        %881 = vmatprep.subr.mxu0 0.0
        %882 = vmatpush1.msra.mxu0 0.0
        %883 = vmatprep.subr.mxu0 0.0
        %884 = vmatpush1.msra.mxu0 0.0
        %885 = vmatprep.subr.mxu0 0.0
        %886 = vmatpush1.msra.mxu0 0.0
        %887 = vmatprep.subr.mxu0 0.0
        %888 = vmatpush1.msra.mxu0 0.0
        %889 = vmatprep.subr.mxu0 0.0
        %890 = vmatpush1.msra.mxu0 0.0
        %891 = vmatprep.subr.mxu0 0.0
        %892 = vmatpush1.msra.mxu0 0.0
        %893 = vmatprep.subr.mxu0 0.0
        %894 = vmatpush1.msra.mxu0 0.0
        %895 = vmatprep.subr.mxu0 0.0
        %896 = vmatpush1.msra.mxu0 0.0
        %897 = vmatprep.subr.mxu0 0.0
        %898 = vmatpush1.msra.mxu0 0.0
        %899 = vmatprep.subr.mxu0 0.0
        %900 = vmatpush1.msra.mxu0 0.0
        %901 = vmatprep.subr.mxu0 0.0
        %902 = vmatpush1.msra.mxu0 0.0
        %903 = vmatprep.subr.mxu0 0.0
        %904 = vmatpush1.msra.mxu0 0.0
        %905 = vmatprep.mubr.f32.mxu0 0.0
        %906 = vmatmul.mubr.f32.gmra.mrb[0].mxu0 %v769
        %v907 = vpop.f32.mrb[0].mxu0
        %v908 = vadd.f32 0.0, %v907
        %v909 = vpop.f32.mrb[0].mxu0
        %910 = vdwg.mxu0
        %911 = vmatprep.subr.mxu0 0.0
        %912 = vmatpush1.msra.mxu0 %v473
        %913 = vmatprep.subr.mxu0 0.0
        %914 = vmatpush1.msra.mxu0 %v474
        %915 = vmatprep.subr.mxu0 0.0
        %916 = vmatpush1.msra.mxu0 %v475
        %917 = vmatprep.subr.mxu0 0.0
        %918 = vmatpush1.msra.mxu0 %v476
        %919 = vmatprep.subr.mxu0 0.0
        %920 = vmatpush1.msra.mxu0 0.0
        %921 = vmatprep.subr.mxu0 0.0
        %922 = vmatpush1.msra.mxu0 0.0
        %923 = vmatprep.subr.mxu0 0.0
        %924 = vmatpush1.msra.mxu0 0.0
        %925 = vmatprep.subr.mxu0 0.0
        %926 = vmatpush1.msra.mxu0 0.0
        %927 = vmatprep.subr.mxu0 0.0
        %928 = vmatpush1.msra.mxu0 0.0
        %929 = vmatprep.subr.mxu0 0.0
        %930 = vmatpush1.msra.mxu0 0.0
        %931 = vmatprep.subr.mxu0 0.0
        %932 = vmatpush1.msra.mxu0 0.0
        %933 = vmatprep.subr.mxu0 0.0
        %934 = vmatpush1.msra.mxu0 0.0
        %935 = vmatprep.subr.mxu0 0.0
        %936 = vmatpush1.msra.mxu0 0.0
        %937 = vmatprep.subr.mxu0 0.0
        %938 = vmatpush1.msra.mxu0 0.0
        %939 = vmatprep.subr.mxu0 0.0
        %940 = vmatpush1.msra.mxu0 0.0
        %941 = vmatprep.subr.mxu0 0.0
        %942 = vmatpush1.msra.mxu0 0.0
        %943 = vmatprep.subr.mxu0 0.0
        %944 = vmatpush1.msra.mxu0 0.0
        %945 = vmatprep.subr.mxu0 0.0
        %946 = vmatpush1.msra.mxu0 0.0
        %947 = vmatprep.subr.mxu0 0.0
        %948 = vmatpush1.msra.mxu0 0.0
        %949 = vmatprep.subr.mxu0 0.0
        %950 = vmatpush1.msra.mxu0 0.0
        %951 = vmatprep.subr.mxu0 0.0
        %952 = vmatpush1.msra.mxu0 0.0
        %953 = vmatprep.subr.mxu0 0.0
        %954 = vmatpush1.msra.mxu0 0.0
        %955 = vmatprep.subr.mxu0 0.0
        %956 = vmatpush1.msra.mxu0 0.0
        %957 = vmatprep.subr.mxu0 0.0
        %958 = vmatpush1.msra.mxu0 0.0
        %959 = vmatprep.subr.mxu0 0.0
        %960 = vmatpush1.msra.mxu0 0.0
        %961 = vmatprep.subr.mxu0 0.0
        %962 = vmatpush1.msra.mxu0 0.0
        %963 = vmatprep.subr.mxu0 0.0
        %964 = vmatpush1.msra.mxu0 0.0
        %965 = vmatprep.subr.mxu0 0.0
        %966 = vmatpush1.msra.mxu0 0.0
        %967 = vmatprep.subr.mxu0 0.0
        %968 = vmatpush1.msra.mxu0 0.0
        %969 = vmatprep.subr.mxu0 0.0
        %970 = vmatpush1.msra.mxu0 0.0
        %971 = vmatprep.subr.mxu0 0.0
        %972 = vmatpush1.msra.mxu0 0.0
        %973 = vmatprep.subr.mxu0 0.0
        %974 = vmatpush1.msra.mxu0 0.0
        %975 = vmatprep.mubr.f32.mxu0 0.0
        %976 = vmatmul.mubr.f32.gmra.mrb[0].mxu0 %v769
        %v977 = vpop.f32.mrb[0].mxu0
        %v978 = vadd.f32 %v626, %v977
        %v979 = vpop.f32.mrb[0].mxu0
        %980 = vdwg.mxu0
        %v981 = vld [vmem:[%s404 + $0x1] sm:$0x1]
        %v982 = vld [vmem:[%s404 + $0x11] sm:$0x1]
        %v984 = vrot.slane %v838, 1
        %v987 = vadd.f32 %v981, %v838
        %v988 = vadd.f32 %v982, %v984
        %v989 = vxor.u32 %v987, 2147483648
        %v990 = vxor.u32 %v988, 2147483648
        %v991 = vmul.f32 %v989, 1.442695
        %v992 = vpow.pop %v991
        %v993 = vmul.f32 %v990, 1.442695
        %v994 = vpow.pop %v993
        %v995 = vadd.f32 %v992, 1.0
        %v996 = vadd.f32 %v994, 1.0
        %v997 = vrcp.pop %v995
        %v998 = vmul.f32 1.0, %v997
        %v999 = vrcp.pop %v996
        %v1000 = vmul.f32 1.0, %v999
        %v1001 = vld [vmem:[%s411 + $0x1] sm:$0x1]
        %v1002 = vld [vmem:[%s411 + $0x11] sm:$0x1]
        %v1004 = vrot.slane %v908, 1
        %v1007 = vadd.f32 %v1001, %v908
        %v1008 = vadd.f32 %v1002, %v1004
        %v1009 = vxor.u32 %v1007, 2147483648
        %v1010 = vxor.u32 %v1008, 2147483648
        %v1011 = vmul.f32 %v1009, 1.442695
        %v1012 = vpow.pop %v1011
        %v1013 = vmul.f32 %v1010, 1.442695
        %v1014 = vpow.pop %v1013
        %v1015 = vadd.f32 %v1012, 1.0
        %v1016 = vadd.f32 %v1014, 1.0
        %v1017 = vrcp.pop %v1015
        %v1018 = vmul.f32 1.0, %v1017
        %v1019 = vrcp.pop %v1016
        %v1020 = vmul.f32 1.0, %v1019
        %v1021 = vld [vmem:[%s418 + $0x1] sm:$0x1]
        %v1022 = vld [vmem:[%s418 + $0x11] sm:$0x1]
        %v1024 = vrot.slane %v978, 1
        %v1027 = vmul.f32 %v998, %v978
        %v1028 = vmul.f32 %v1000, %v1024
        %v1029 = vadd.f32 %v1021, %v1027
        %v1030 = vadd.f32 %v1022, %v1028
        %v1031 = vtanh.pop %v1029
        %v1032 = vtanh.pop %v1030
        %v1033 = vsub.f32 1.0, %v1018
        %v1034 = vsub.f32 1.0, %v1020
        %v1035 = vmul.f32 %v1033, %v1031
        %v1036 = vmul.f32 %v1034, %v1032
        %v1037 = vmul.f32 %v1018, %v759
        %v1038 = vmul.f32 %v1020, %v760
        %v1039 = vadd.f32 %v1035, %v1037
        %v1040 = vadd.f32 %v1036, %v1038
        %1041 = vst.msk [vmem:[%s453 + $0x1] sm:$0x1] %vm761, %v1039
        %1042 = vst.msk [vmem:[%s453 + $0x11] sm:$0x1] %vm761, %v1040
        %v1045 = vrot.slane %v1040, 7
        %v1046 = vsel %vm767, %v1045, %v1039
        %v1047 = vsel %vm478, %v1046, 0
        %1049 = vmatprep.subr.mxu0 0.0
        %1050 = vmatpush1.msra.mxu0 %v465
        %1051 = vmatprep.subr.mxu0 0.0
        %1052 = vmatpush1.msra.mxu0 %v466
        %1053 = vmatprep.subr.mxu0 0.0
        %1054 = vmatpush1.msra.mxu0 %v467
        %1055 = vmatprep.subr.mxu0 0.0
        %1056 = vmatpush1.msra.mxu0 %v468
        %1057 = vmatprep.subr.mxu0 0.0
        %1058 = vmatpush1.msra.mxu0 0.0
        %1059 = vmatprep.subr.mxu0 0.0
        %1060 = vmatpush1.msra.mxu0 0.0
        %1061 = vmatprep.subr.mxu0 0.0
        %1062 = vmatpush1.msra.mxu0 0.0
        %1063 = vmatprep.subr.mxu0 0.0
        %1064 = vmatpush1.msra.mxu0 0.0
        %1065 = vmatprep.subr.mxu0 0.0
        %1066 = vmatpush1.msra.mxu0 0.0
        %1067 = vmatprep.subr.mxu0 0.0
        %1068 = vmatpush1.msra.mxu0 0.0
        %1069 = vmatprep.subr.mxu0 0.0
        %1070 = vmatpush1.msra.mxu0 0.0
        %1071 = vmatprep.subr.mxu0 0.0
        %1072 = vmatpush1.msra.mxu0 0.0
        %1073 = vmatprep.subr.mxu0 0.0
        %1074 = vmatpush1.msra.mxu0 0.0
        %1075 = vmatprep.subr.mxu0 0.0
        %1076 = vmatpush1.msra.mxu0 0.0
        %1077 = vmatprep.subr.mxu0 0.0
        %1078 = vmatpush1.msra.mxu0 0.0
        %1079 = vmatprep.subr.mxu0 0.0
        %1080 = vmatpush1.msra.mxu0 0.0
        %1081 = vmatprep.subr.mxu0 0.0
        %1082 = vmatpush1.msra.mxu0 0.0
        %1083 = vmatprep.subr.mxu0 0.0
        %1084 = vmatpush1.msra.mxu0 0.0
        %1085 = vmatprep.subr.mxu0 0.0
        %1086 = vmatpush1.msra.mxu0 0.0
        %1087 = vmatprep.subr.mxu0 0.0
        %1088 = vmatpush1.msra.mxu0 0.0
        %1089 = vmatprep.subr.mxu0 0.0
        %1090 = vmatpush1.msra.mxu0 0.0
        %1091 = vmatprep.subr.mxu0 0.0
        %1092 = vmatpush1.msra.mxu0 0.0
        %1093 = vmatprep.subr.mxu0 0.0
        %1094 = vmatpush1.msra.mxu0 0.0
        %1095 = vmatprep.subr.mxu0 0.0
        %1096 = vmatpush1.msra.mxu0 0.0
        %1097 = vmatprep.subr.mxu0 0.0
        %1098 = vmatpush1.msra.mxu0 0.0
        %1099 = vmatprep.subr.mxu0 0.0
        %1100 = vmatpush1.msra.mxu0 0.0
        %1101 = vmatprep.subr.mxu0 0.0
        %1102 = vmatpush1.msra.mxu0 0.0
        %1103 = vmatprep.subr.mxu0 0.0
        %1104 = vmatpush1.msra.mxu0 0.0
        %1105 = vmatprep.subr.mxu0 0.0
        %1106 = vmatpush1.msra.mxu0 0.0
        %1107 = vmatprep.subr.mxu0 0.0
        %1108 = vmatpush1.msra.mxu0 0.0
        %1109 = vmatprep.subr.mxu0 0.0
        %1110 = vmatpush1.msra.mxu0 0.0
        %1111 = vmatprep.subr.mxu0 0.0
        %1112 = vmatpush1.msra.mxu0 0.0
        %1113 = vmatprep.mubr.f32.mxu0 0.0
        %1114 = vmatmul.mubr.f32.gmra.mrb[0].mxu0 %v1047
        %v1115 = vpop.f32.mrb[0].mxu0
        %v1116 = vadd.f32 0.0, %v1115
        %v1117 = vpop.f32.mrb[0].mxu0
        %1118 = vdwg.mxu0
        %1119 = vmatprep.subr.mxu0 0.0
        %1120 = vmatpush1.msra.mxu0 %v469
        %1121 = vmatprep.subr.mxu0 0.0
        %1122 = vmatpush1.msra.mxu0 %v470
        %1123 = vmatprep.subr.mxu0 0.0
        %1124 = vmatpush1.msra.mxu0 %v471
        %1125 = vmatprep.subr.mxu0 0.0
        %1126 = vmatpush1.msra.mxu0 %v472
        %1127 = vmatprep.subr.mxu0 0.0
        %1128 = vmatpush1.msra.mxu0 0.0
        %1129 = vmatprep.subr.mxu0 0.0
        %1130 = vmatpush1.msra.mxu0 0.0
        %1131 = vmatprep.subr.mxu0 0.0
        %1132 = vmatpush1.msra.mxu0 0.0
        %1133 = vmatprep.subr.mxu0 0.0
        %1134 = vmatpush1.msra.mxu0 0.0
        %1135 = vmatprep.subr.mxu0 0.0
        %1136 = vmatpush1.msra.mxu0 0.0
        %1137 = vmatprep.subr.mxu0 0.0
        %1138 = vmatpush1.msra.mxu0 0.0
        %1139 = vmatprep.subr.mxu0 0.0
        %1140 = vmatpush1.msra.mxu0 0.0
        %1141 = vmatprep.subr.mxu0 0.0
        %1142 = vmatpush1.msra.mxu0 0.0
        %1143 = vmatprep.subr.mxu0 0.0
        %1144 = vmatpush1.msra.mxu0 0.0
        %1145 = vmatprep.subr.mxu0 0.0
        %1146 = vmatpush1.msra.mxu0 0.0
        %1147 = vmatprep.subr.mxu0 0.0
        %1148 = vmatpush1.msra.mxu0 0.0
        %1149 = vmatprep.subr.mxu0 0.0
        %1150 = vmatpush1.msra.mxu0 0.0
        %1151 = vmatprep.subr.mxu0 0.0
        %1152 = vmatpush1.msra.mxu0 0.0
        %1153 = vmatprep.subr.mxu0 0.0
        %1154 = vmatpush1.msra.mxu0 0.0
        %1155 = vmatprep.subr.mxu0 0.0
        %1156 = vmatpush1.msra.mxu0 0.0
        %1157 = vmatprep.subr.mxu0 0.0
        %1158 = vmatpush1.msra.mxu0 0.0
        %1159 = vmatprep.subr.mxu0 0.0
        %1160 = vmatpush1.msra.mxu0 0.0
        %1161 = vmatprep.subr.mxu0 0.0
        %1162 = vmatpush1.msra.mxu0 0.0
        %1163 = vmatprep.subr.mxu0 0.0
        %1164 = vmatpush1.msra.mxu0 0.0
        %1165 = vmatprep.subr.mxu0 0.0
        %1166 = vmatpush1.msra.mxu0 0.0
        %1167 = vmatprep.subr.mxu0 0.0
        %1168 = vmatpush1.msra.mxu0 0.0
        %1169 = vmatprep.subr.mxu0 0.0
        %1170 = vmatpush1.msra.mxu0 0.0
        %1171 = vmatprep.subr.mxu0 0.0
        %1172 = vmatpush1.msra.mxu0 0.0
        %1173 = vmatprep.subr.mxu0 0.0
        %1174 = vmatpush1.msra.mxu0 0.0
        %1175 = vmatprep.subr.mxu0 0.0
        %1176 = vmatpush1.msra.mxu0 0.0
        %1177 = vmatprep.subr.mxu0 0.0
        %1178 = vmatpush1.msra.mxu0 0.0
        %1179 = vmatprep.subr.mxu0 0.0
        %1180 = vmatpush1.msra.mxu0 0.0
        %1181 = vmatprep.subr.mxu0 0.0
        %1182 = vmatpush1.msra.mxu0 0.0
        %1183 = vmatprep.mubr.f32.mxu0 0.0
        %1184 = vmatmul.mubr.f32.gmra.mrb[0].mxu0 %v1047
        %v1185 = vpop.f32.mrb[0].mxu0
        %v1186 = vadd.f32 0.0, %v1185
        %v1187 = vpop.f32.mrb[0].mxu0
        %1188 = vdwg.mxu0
        %1189 = vmatprep.subr.mxu0 0.0
        %1190 = vmatpush1.msra.mxu0 %v473
        %1191 = vmatprep.subr.mxu0 0.0
        %1192 = vmatpush1.msra.mxu0 %v474
        %1193 = vmatprep.subr.mxu0 0.0
        %1194 = vmatpush1.msra.mxu0 %v475
        %1195 = vmatprep.subr.mxu0 0.0
        %1196 = vmatpush1.msra.mxu0 %v476
        %1197 = vmatprep.subr.mxu0 0.0
        %1198 = vmatpush1.msra.mxu0 0.0
        %1199 = vmatprep.subr.mxu0 0.0
        %1200 = vmatpush1.msra.mxu0 0.0
        %1201 = vmatprep.subr.mxu0 0.0
        %1202 = vmatpush1.msra.mxu0 0.0
        %1203 = vmatprep.subr.mxu0 0.0
        %1204 = vmatpush1.msra.mxu0 0.0
        %1205 = vmatprep.subr.mxu0 0.0
        %1206 = vmatpush1.msra.mxu0 0.0
        %1207 = vmatprep.subr.mxu0 0.0
        %1208 = vmatpush1.msra.mxu0 0.0
        %1209 = vmatprep.subr.mxu0 0.0
        %1210 = vmatpush1.msra.mxu0 0.0
        %1211 = vmatprep.subr.mxu0 0.0
        %1212 = vmatpush1.msra.mxu0 0.0
        %1213 = vmatprep.subr.mxu0 0.0
        %1214 = vmatpush1.msra.mxu0 0.0
        %1215 = vmatprep.subr.mxu0 0.0
        %1216 = vmatpush1.msra.mxu0 0.0
        %1217 = vmatprep.subr.mxu0 0.0
        %1218 = vmatpush1.msra.mxu0 0.0
        %1219 = vmatprep.subr.mxu0 0.0
        %1220 = vmatpush1.msra.mxu0 0.0
        %1221 = vmatprep.subr.mxu0 0.0
        %1222 = vmatpush1.msra.mxu0 0.0
        %1223 = vmatprep.subr.mxu0 0.0
        %1224 = vmatpush1.msra.mxu0 0.0
        %1225 = vmatprep.subr.mxu0 0.0
        %1226 = vmatpush1.msra.mxu0 0.0
        %1227 = vmatprep.subr.mxu0 0.0
        %1228 = vmatpush1.msra.mxu0 0.0
        %1229 = vmatprep.subr.mxu0 0.0
        %1230 = vmatpush1.msra.mxu0 0.0
        %1231 = vmatprep.subr.mxu0 0.0
        %1232 = vmatpush1.msra.mxu0 0.0
        %1233 = vmatprep.subr.mxu0 0.0
        %1234 = vmatpush1.msra.mxu0 0.0
        %1235 = vmatprep.subr.mxu0 0.0
        %1236 = vmatpush1.msra.mxu0 0.0
        %1237 = vmatprep.subr.mxu0 0.0
        %1238 = vmatpush1.msra.mxu0 0.0
        %1239 = vmatprep.subr.mxu0 0.0
        %1240 = vmatpush1.msra.mxu0 0.0
        %1241 = vmatprep.subr.mxu0 0.0
        %1242 = vmatpush1.msra.mxu0 0.0
        %1243 = vmatprep.subr.mxu0 0.0
        %1244 = vmatpush1.msra.mxu0 0.0
        %1245 = vmatprep.subr.mxu0 0.0
        %1246 = vmatpush1.msra.mxu0 0.0
        %1247 = vmatprep.subr.mxu0 0.0
        %1248 = vmatpush1.msra.mxu0 0.0
        %1249 = vmatprep.subr.mxu0 0.0
        %1250 = vmatpush1.msra.mxu0 0.0
        %1251 = vmatprep.subr.mxu0 0.0
        %1252 = vmatpush1.msra.mxu0 0.0
        %1253 = vmatprep.mubr.f32.mxu0 0.0
        %1254 = vmatmul.mubr.f32.gmra.mrb[0].mxu0 %v1047
        %v1255 = vpop.f32.mrb[0].mxu0
        %v1256 = vadd.f32 %v626, %v1255
        %v1257 = vpop.f32.mrb[0].mxu0
        %1258 = vdwg.mxu0
        %v1259 = vld [vmem:[%s404 + $0x2] sm:$0x1]
        %v1260 = vld [vmem:[%s404 + $0x12] sm:$0x1]
        %v1262 = vrot.slane %v1116, 1
        %v1265 = vadd.f32 %v1259, %v1116
        %v1266 = vadd.f32 %v1260, %v1262
        %v1267 = vxor.u32 %v1265, 2147483648
        %v1268 = vxor.u32 %v1266, 2147483648
        %v1269 = vmul.f32 %v1267, 1.442695
        %v1270 = vpow.pop %v1269
        %v1271 = vmul.f32 %v1268, 1.442695
        %v1272 = vpow.pop %v1271
        %v1273 = vadd.f32 %v1270, 1.0
        %v1274 = vadd.f32 %v1272, 1.0
        %v1275 = vrcp.pop %v1273
        %v1276 = vmul.f32 1.0, %v1275
        %v1277 = vrcp.pop %v1274
        %v1278 = vmul.f32 1.0, %v1277
        %v1279 = vld [vmem:[%s411 + $0x2] sm:$0x1]
        %v1280 = vld [vmem:[%s411 + $0x12] sm:$0x1]
        %v1282 = vrot.slane %v1186, 1
        %v1285 = vadd.f32 %v1279, %v1186
        %v1286 = vadd.f32 %v1280, %v1282
        %v1287 = vxor.u32 %v1285, 2147483648
        %v1288 = vxor.u32 %v1286, 2147483648
        %v1289 = vmul.f32 %v1287, 1.442695
        %v1290 = vpow.pop %v1289
        %v1291 = vmul.f32 %v1288, 1.442695
        %v1292 = vpow.pop %v1291
        %v1293 = vadd.f32 %v1290, 1.0
        %v1294 = vadd.f32 %v1292, 1.0
        %v1295 = vrcp.pop %v1293
        %v1296 = vmul.f32 1.0, %v1295
        %v1297 = vrcp.pop %v1294
        %v1298 = vmul.f32 1.0, %v1297
        %v1299 = vld [vmem:[%s418 + $0x2] sm:$0x1]
        %v1300 = vld [vmem:[%s418 + $0x12] sm:$0x1]
        %v1302 = vrot.slane %v1256, 1
        %v1305 = vmul.f32 %v1276, %v1256
        %v1306 = vmul.f32 %v1278, %v1302
        %v1307 = vadd.f32 %v1299, %v1305
        %v1308 = vadd.f32 %v1300, %v1306
        %v1309 = vtanh.pop %v1307
        %v1310 = vtanh.pop %v1308
        %v1311 = vsub.f32 1.0, %v1296
        %v1312 = vsub.f32 1.0, %v1298
        %v1313 = vmul.f32 %v1311, %v1309
        %v1314 = vmul.f32 %v1312, %v1310
        %v1315 = vmul.f32 %v1296, %v1039
        %v1316 = vmul.f32 %v1298, %v1040
        %v1317 = vadd.f32 %v1313, %v1315
        %v1318 = vadd.f32 %v1314, %v1316
        %1319 = vst.msk [vmem:[%s453 + $0x2] sm:$0x1] %vm761, %v1317
        %1320 = vst.msk [vmem:[%s453 + $0x12] sm:$0x1] %vm761, %v1318
        %v1323 = vrot.slane %v1318, 7
        %v1324 = vsel %vm767, %v1323, %v1317
        %v1325 = vsel %vm478, %v1324, 0
        %1327 = vmatprep.subr.mxu0 0.0
        %1328 = vmatpush1.msra.mxu0 %v465
        %1329 = vmatprep.subr.mxu0 0.0
        %1330 = vmatpush1.msra.mxu0 %v466
        %1331 = vmatprep.subr.mxu0 0.0
        %1332 = vmatpush1.msra.mxu0 %v467
        %1333 = vmatprep.subr.mxu0 0.0
        %1334 = vmatpush1.msra.mxu0 %v468
        %1335 = vmatprep.subr.mxu0 0.0
        %1336 = vmatpush1.msra.mxu0 0.0
        %1337 = vmatprep.subr.mxu0 0.0
        %1338 = vmatpush1.msra.mxu0 0.0
        %1339 = vmatprep.subr.mxu0 0.0
        %1340 = vmatpush1.msra.mxu0 0.0
        %1341 = vmatprep.subr.mxu0 0.0
        %1342 = vmatpush1.msra.mxu0 0.0
        %1343 = vmatprep.subr.mxu0 0.0
        %1344 = vmatpush1.msra.mxu0 0.0
        %1345 = vmatprep.subr.mxu0 0.0
        %1346 = vmatpush1.msra.mxu0 0.0
        %1347 = vmatprep.subr.mxu0 0.0
        %1348 = vmatpush1.msra.mxu0 0.0
        %1349 = vmatprep.subr.mxu0 0.0
        %1350 = vmatpush1.msra.mxu0 0.0
        %1351 = vmatprep.subr.mxu0 0.0
        %1352 = vmatpush1.msra.mxu0 0.0
        %1353 = vmatprep.subr.mxu0 0.0
        %1354 = vmatpush1.msra.mxu0 0.0
        %1355 = vmatprep.subr.mxu0 0.0
        %1356 = vmatpush1.msra.mxu0 0.0
        %1357 = vmatprep.subr.mxu0 0.0
        %1358 = vmatpush1.msra.mxu0 0.0
        %1359 = vmatprep.subr.mxu0 0.0
        %1360 = vmatpush1.msra.mxu0 0.0
        %1361 = vmatprep.subr.mxu0 0.0
        %1362 = vmatpush1.msra.mxu0 0.0
        %1363 = vmatprep.subr.mxu0 0.0
        %1364 = vmatpush1.msra.mxu0 0.0
        %1365 = vmatprep.subr.mxu0 0.0
        %1366 = vmatpush1.msra.mxu0 0.0
        %1367 = vmatprep.subr.mxu0 0.0
        %1368 = vmatpush1.msra.mxu0 0.0
        %1369 = vmatprep.subr.mxu0 0.0
        %1370 = vmatpush1.msra.mxu0 0.0
        %1371 = vmatprep.subr.mxu0 0.0
        %1372 = vmatpush1.msra.mxu0 0.0
        %1373 = vmatprep.subr.mxu0 0.0
        %1374 = vmatpush1.msra.mxu0 0.0
        %1375 = vmatprep.subr.mxu0 0.0
        %1376 = vmatpush1.msra.mxu0 0.0
        %1377 = vmatprep.subr.mxu0 0.0
        %1378 = vmatpush1.msra.mxu0 0.0
        %1379 = vmatprep.subr.mxu0 0.0
        %1380 = vmatpush1.msra.mxu0 0.0
        %1381 = vmatprep.subr.mxu0 0.0
        %1382 = vmatpush1.msra.mxu0 0.0
        %1383 = vmatprep.subr.mxu0 0.0
        %1384 = vmatpush1.msra.mxu0 0.0
        %1385 = vmatprep.subr.mxu0 0.0
        %1386 = vmatpush1.msra.mxu0 0.0
        %1387 = vmatprep.subr.mxu0 0.0
        %1388 = vmatpush1.msra.mxu0 0.0
        %1389 = vmatprep.subr.mxu0 0.0
        %1390 = vmatpush1.msra.mxu0 0.0
        %1391 = vmatprep.mubr.f32.mxu0 0.0
        %1392 = vmatmul.mubr.f32.gmra.mrb[0].mxu0 %v1325
        %v1393 = vpop.f32.mrb[0].mxu0
        %v1394 = vadd.f32 0.0, %v1393
        %v1395 = vpop.f32.mrb[0].mxu0
        %1396 = vdwg.mxu0
        %1397 = vmatprep.subr.mxu0 0.0
        %1398 = vmatpush1.msra.mxu0 %v469
        %1399 = vmatprep.subr.mxu0 0.0
        %1400 = vmatpush1.msra.mxu0 %v470
        %1401 = vmatprep.subr.mxu0 0.0
        %1402 = vmatpush1.msra.mxu0 %v471
        %1403 = vmatprep.subr.mxu0 0.0
        %1404 = vmatpush1.msra.mxu0 %v472
        %1405 = vmatprep.subr.mxu0 0.0
        %1406 = vmatpush1.msra.mxu0 0.0
        %1407 = vmatprep.subr.mxu0 0.0
        %1408 = vmatpush1.msra.mxu0 0.0
        %1409 = vmatprep.subr.mxu0 0.0
        %1410 = vmatpush1.msra.mxu0 0.0
        %1411 = vmatprep.subr.mxu0 0.0
        %1412 = vmatpush1.msra.mxu0 0.0
        %1413 = vmatprep.subr.mxu0 0.0
        %1414 = vmatpush1.msra.mxu0 0.0
        %1415 = vmatprep.subr.mxu0 0.0
        %1416 = vmatpush1.msra.mxu0 0.0
        %1417 = vmatprep.subr.mxu0 0.0
        %1418 = vmatpush1.msra.mxu0 0.0
        %1419 = vmatprep.subr.mxu0 0.0
        %1420 = vmatpush1.msra.mxu0 0.0
        %1421 = vmatprep.subr.mxu0 0.0
        %1422 = vmatpush1.msra.mxu0 0.0
        %1423 = vmatprep.subr.mxu0 0.0
        %1424 = vmatpush1.msra.mxu0 0.0
        %1425 = vmatprep.subr.mxu0 0.0
        %1426 = vmatpush1.msra.mxu0 0.0
        %1427 = vmatprep.subr.mxu0 0.0
        %1428 = vmatpush1.msra.mxu0 0.0
        %1429 = vmatprep.subr.mxu0 0.0
        %1430 = vmatpush1.msra.mxu0 0.0
        %1431 = vmatprep.subr.mxu0 0.0
        %1432 = vmatpush1.msra.mxu0 0.0
        %1433 = vmatprep.subr.mxu0 0.0
        %1434 = vmatpush1.msra.mxu0 0.0
        %1435 = vmatprep.subr.mxu0 0.0
        %1436 = vmatpush1.msra.mxu0 0.0
        %1437 = vmatprep.subr.mxu0 0.0
        %1438 = vmatpush1.msra.mxu0 0.0
        %1439 = vmatprep.subr.mxu0 0.0
        %1440 = vmatpush1.msra.mxu0 0.0
        %1441 = vmatprep.subr.mxu0 0.0
        %1442 = vmatpush1.msra.mxu0 0.0
        %1443 = vmatprep.subr.mxu0 0.0
        %1444 = vmatpush1.msra.mxu0 0.0
        %1445 = vmatprep.subr.mxu0 0.0
        %1446 = vmatpush1.msra.mxu0 0.0
        %1447 = vmatprep.subr.mxu0 0.0
        %1448 = vmatpush1.msra.mxu0 0.0
        %1449 = vmatprep.subr.mxu0 0.0
        %1450 = vmatpush1.msra.mxu0 0.0
        %1451 = vmatprep.subr.mxu0 0.0
        %1452 = vmatpush1.msra.mxu0 0.0
        %1453 = vmatprep.subr.mxu0 0.0
        %1454 = vmatpush1.msra.mxu0 0.0
        %1455 = vmatprep.subr.mxu0 0.0
        %1456 = vmatpush1.msra.mxu0 0.0
        %1457 = vmatprep.subr.mxu0 0.0
        %1458 = vmatpush1.msra.mxu0 0.0
        %1459 = vmatprep.subr.mxu0 0.0
        %1460 = vmatpush1.msra.mxu0 0.0
        %1461 = vmatprep.mubr.f32.mxu0 0.0
        %1462 = vmatmul.mubr.f32.gmra.mrb[0].mxu0 %v1325
        %v1463 = vpop.f32.mrb[0].mxu0
        %v1464 = vadd.f32 0.0, %v1463
        %v1465 = vpop.f32.mrb[0].mxu0
        %1466 = vdwg.mxu0
        %1467 = vmatprep.subr.mxu0 0.0
        %1468 = vmatpush1.msra.mxu0 %v473
        %1469 = vmatprep.subr.mxu0 0.0
        %1470 = vmatpush1.msra.mxu0 %v474
        %1471 = vmatprep.subr.mxu0 0.0
        %1472 = vmatpush1.msra.mxu0 %v475
        %1473 = vmatprep.subr.mxu0 0.0
        %1474 = vmatpush1.msra.mxu0 %v476
        %1475 = vmatprep.subr.mxu0 0.0
        %1476 = vmatpush1.msra.mxu0 0.0
        %1477 = vmatprep.subr.mxu0 0.0
        %1478 = vmatpush1.msra.mxu0 0.0
        %1479 = vmatprep.subr.mxu0 0.0
        %1480 = vmatpush1.msra.mxu0 0.0
        %1481 = vmatprep.subr.mxu0 0.0
        %1482 = vmatpush1.msra.mxu0 0.0
        %1483 = vmatprep.subr.mxu0 0.0
        %1484 = vmatpush1.msra.mxu0 0.0
        %1485 = vmatprep.subr.mxu0 0.0
        %1486 = vmatpush1.msra.mxu0 0.0
        %1487 = vmatprep.subr.mxu0 0.0
        %1488 = vmatpush1.msra.mxu0 0.0
        %1489 = vmatprep.subr.mxu0 0.0
        %1490 = vmatpush1.msra.mxu0 0.0
        %1491 = vmatprep.subr.mxu0 0.0
        %1492 = vmatpush1.msra.mxu0 0.0
        %1493 = vmatprep.subr.mxu0 0.0
        %1494 = vmatpush1.msra.mxu0 0.0
        %1495 = vmatprep.subr.mxu0 0.0
        %1496 = vmatpush1.msra.mxu0 0.0
        %1497 = vmatprep.subr.mxu0 0.0
        %1498 = vmatpush1.msra.mxu0 0.0
        %1499 = vmatprep.subr.mxu0 0.0
        %1500 = vmatpush1.msra.mxu0 0.0
        %1501 = vmatprep.subr.mxu0 0.0
        %1502 = vmatpush1.msra.mxu0 0.0
        %1503 = vmatprep.subr.mxu0 0.0
        %1504 = vmatpush1.msra.mxu0 0.0
        %1505 = vmatprep.subr.mxu0 0.0
        %1506 = vmatpush1.msra.mxu0 0.0
        %1507 = vmatprep.subr.mxu0 0.0
        %1508 = vmatpush1.msra.mxu0 0.0
        %1509 = vmatprep.subr.mxu0 0.0
        %1510 = vmatpush1.msra.mxu0 0.0
        %1511 = vmatprep.subr.mxu0 0.0
        %1512 = vmatpush1.msra.mxu0 0.0
        %1513 = vmatprep.subr.mxu0 0.0
        %1514 = vmatpush1.msra.mxu0 0.0
        %1515 = vmatprep.subr.mxu0 0.0
        %1516 = vmatpush1.msra.mxu0 0.0
        %1517 = vmatprep.subr.mxu0 0.0
        %1518 = vmatpush1.msra.mxu0 0.0
        %1519 = vmatprep.subr.mxu0 0.0
        %1520 = vmatpush1.msra.mxu0 0.0
        %1521 = vmatprep.subr.mxu0 0.0
        %1522 = vmatpush1.msra.mxu0 0.0
        %1523 = vmatprep.subr.mxu0 0.0
        %1524 = vmatpush1.msra.mxu0 0.0
        %1525 = vmatprep.subr.mxu0 0.0
        %1526 = vmatpush1.msra.mxu0 0.0
        %1527 = vmatprep.subr.mxu0 0.0
        %1528 = vmatpush1.msra.mxu0 0.0
        %1529 = vmatprep.subr.mxu0 0.0
        %1530 = vmatpush1.msra.mxu0 0.0
        %1531 = vmatprep.mubr.f32.mxu0 0.0
        %1532 = vmatmul.mubr.f32.gmra.mrb[0].mxu0 %v1325
        %v1533 = vpop.f32.mrb[0].mxu0
        %v1534 = vadd.f32 %v626, %v1533
        %v1535 = vpop.f32.mrb[0].mxu0
        %1536 = vdwg.mxu0
        %v1537 = vld [vmem:[%s404 + $0x3] sm:$0x1]
        %v1538 = vld [vmem:[%s404 + $0x13] sm:$0x1]
        %v1540 = vrot.slane %v1394, 1
        %v1543 = vadd.f32 %v1537, %v1394
        %v1544 = vadd.f32 %v1538, %v1540
        %v1545 = vxor.u32 %v1543, 2147483648
        %v1546 = vxor.u32 %v1544, 2147483648
        %v1547 = vmul.f32 %v1545, 1.442695
        %v1548 = vpow.pop %v1547
        %v1549 = vmul.f32 %v1546, 1.442695
        %v1550 = vpow.pop %v1549
        %v1551 = vadd.f32 %v1548, 1.0
        %v1552 = vadd.f32 %v1550, 1.0
        %v1553 = vrcp.pop %v1551
        %v1554 = vmul.f32 1.0, %v1553
        %v1555 = vrcp.pop %v1552
        %v1556 = vmul.f32 1.0, %v1555
        %v1557 = vld [vmem:[%s411 + $0x3] sm:$0x1]
        %v1558 = vld [vmem:[%s411 + $0x13] sm:$0x1]
        %v1560 = vrot.slane %v1464, 1
        %v1563 = vadd.f32 %v1557, %v1464
        %v1564 = vadd.f32 %v1558, %v1560
        %v1565 = vxor.u32 %v1563, 2147483648
        %v1566 = vxor.u32 %v1564, 2147483648
        %v1567 = vmul.f32 %v1565, 1.442695
        %v1568 = vpow.pop %v1567
        %v1569 = vmul.f32 %v1566, 1.442695
        %v1570 = vpow.pop %v1569
        %v1571 = vadd.f32 %v1568, 1.0
        %v1572 = vadd.f32 %v1570, 1.0
        %v1573 = vrcp.pop %v1571
        %v1574 = vmul.f32 1.0, %v1573
        %v1575 = vrcp.pop %v1572
        %v1576 = vmul.f32 1.0, %v1575
        %v1577 = vld [vmem:[%s418 + $0x3] sm:$0x1]
        %v1578 = vld [vmem:[%s418 + $0x13] sm:$0x1]
        %v1580 = vrot.slane %v1534, 1
        %v1583 = vmul.f32 %v1554, %v1534
        %v1584 = vmul.f32 %v1556, %v1580
        %v1585 = vadd.f32 %v1577, %v1583
        %v1586 = vadd.f32 %v1578, %v1584
        %v1587 = vtanh.pop %v1585
        %v1588 = vtanh.pop %v1586
        %v1589 = vsub.f32 1.0, %v1574
        %v1590 = vsub.f32 1.0, %v1576
        %v1591 = vmul.f32 %v1589, %v1587
        %v1592 = vmul.f32 %v1590, %v1588
        %v1593 = vmul.f32 %v1574, %v1317
        %v1594 = vmul.f32 %v1576, %v1318
        %v1595 = vadd.f32 %v1591, %v1593
        %v1596 = vadd.f32 %v1592, %v1594
        %1597 = vst.msk [vmem:[%s453 + $0x3] sm:$0x1] %vm761, %v1595
        %1598 = vst.msk [vmem:[%s453 + $0x13] sm:$0x1] %vm761, %v1596
        %v1601 = vrot.slane %v1596, 7
        %v1602 = vsel %vm767, %v1601, %v1595
        %v1603 = vsel %vm478, %v1602, 0
        %1605 = vmatprep.subr.mxu0 0.0
        %1606 = vmatpush1.msra.mxu0 %v465
        %1607 = vmatprep.subr.mxu0 0.0
        %1608 = vmatpush1.msra.mxu0 %v466
        %1609 = vmatprep.subr.mxu0 0.0
        %1610 = vmatpush1.msra.mxu0 %v467
        %1611 = vmatprep.subr.mxu0 0.0
        %1612 = vmatpush1.msra.mxu0 %v468
        %1613 = vmatprep.subr.mxu0 0.0
        %1614 = vmatpush1.msra.mxu0 0.0
        %1615 = vmatprep.subr.mxu0 0.0
        %1616 = vmatpush1.msra.mxu0 0.0
        %1617 = vmatprep.subr.mxu0 0.0
        %1618 = vmatpush1.msra.mxu0 0.0
        %1619 = vmatprep.subr.mxu0 0.0
        %1620 = vmatpush1.msra.mxu0 0.0
        %1621 = vmatprep.subr.mxu0 0.0
        %1622 = vmatpush1.msra.mxu0 0.0
        %1623 = vmatprep.subr.mxu0 0.0
        %1624 = vmatpush1.msra.mxu0 0.0
        %1625 = vmatprep.subr.mxu0 0.0
        %1626 = vmatpush1.msra.mxu0 0.0
        %1627 = vmatprep.subr.mxu0 0.0
        %1628 = vmatpush1.msra.mxu0 0.0
        %1629 = vmatprep.subr.mxu0 0.0
        %1630 = vmatpush1.msra.mxu0 0.0
        %1631 = vmatprep.subr.mxu0 0.0
        %1632 = vmatpush1.msra.mxu0 0.0
        %1633 = vmatprep.subr.mxu0 0.0
        %1634 = vmatpush1.msra.mxu0 0.0
        %1635 = vmatprep.subr.mxu0 0.0
        %1636 = vmatpush1.msra.mxu0 0.0
        %1637 = vmatprep.subr.mxu0 0.0
        %1638 = vmatpush1.msra.mxu0 0.0
        %1639 = vmatprep.subr.mxu0 0.0
        %1640 = vmatpush1.msra.mxu0 0.0
        %1641 = vmatprep.subr.mxu0 0.0
        %1642 = vmatpush1.msra.mxu0 0.0
        %1643 = vmatprep.subr.mxu0 0.0
        %1644 = vmatpush1.msra.mxu0 0.0
        %1645 = vmatprep.subr.mxu0 0.0
        %1646 = vmatpush1.msra.mxu0 0.0
        %1647 = vmatprep.subr.mxu0 0.0
        %1648 = vmatpush1.msra.mxu0 0.0
        %1649 = vmatprep.subr.mxu0 0.0
        %1650 = vmatpush1.msra.mxu0 0.0
        %1651 = vmatprep.subr.mxu0 0.0
        %1652 = vmatpush1.msra.mxu0 0.0
        %1653 = vmatprep.subr.mxu0 0.0
        %1654 = vmatpush1.msra.mxu0 0.0
        %1655 = vmatprep.subr.mxu0 0.0
        %1656 = vmatpush1.msra.mxu0 0.0
        %1657 = vmatprep.subr.mxu0 0.0
        %1658 = vmatpush1.msra.mxu0 0.0
        %1659 = vmatprep.subr.mxu0 0.0
        %1660 = vmatpush1.msra.mxu0 0.0
        %1661 = vmatprep.subr.mxu0 0.0
        %1662 = vmatpush1.msra.mxu0 0.0
        %1663 = vmatprep.subr.mxu0 0.0
        %1664 = vmatpush1.msra.mxu0 0.0
        %1665 = vmatprep.subr.mxu0 0.0
        %1666 = vmatpush1.msra.mxu0 0.0
        %1667 = vmatprep.subr.mxu0 0.0
        %1668 = vmatpush1.msra.mxu0 0.0
        %1669 = vmatprep.mubr.f32.mxu0 0.0
        %1670 = vmatmul.mubr.f32.gmra.mrb[0].mxu0 %v1603
        %v1671 = vpop.f32.mrb[0].mxu0
        %v1672 = vadd.f32 0.0, %v1671
        %v1673 = vpop.f32.mrb[0].mxu0
        %1674 = vdwg.mxu0
        %1675 = vmatprep.subr.mxu0 0.0
        %1676 = vmatpush1.msra.mxu0 %v469
        %1677 = vmatprep.subr.mxu0 0.0
        %1678 = vmatpush1.msra.mxu0 %v470
        %1679 = vmatprep.subr.mxu0 0.0
        %1680 = vmatpush1.msra.mxu0 %v471
        %1681 = vmatprep.subr.mxu0 0.0
        %1682 = vmatpush1.msra.mxu0 %v472
        %1683 = vmatprep.subr.mxu0 0.0
        %1684 = vmatpush1.msra.mxu0 0.0
        %1685 = vmatprep.subr.mxu0 0.0
        %1686 = vmatpush1.msra.mxu0 0.0
        %1687 = vmatprep.subr.mxu0 0.0
        %1688 = vmatpush1.msra.mxu0 0.0
        %1689 = vmatprep.subr.mxu0 0.0
        %1690 = vmatpush1.msra.mxu0 0.0
        %1691 = vmatprep.subr.mxu0 0.0
        %1692 = vmatpush1.msra.mxu0 0.0
        %1693 = vmatprep.subr.mxu0 0.0
        %1694 = vmatpush1.msra.mxu0 0.0
        %1695 = vmatprep.subr.mxu0 0.0
        %1696 = vmatpush1.msra.mxu0 0.0
        %1697 = vmatprep.subr.mxu0 0.0
        %1698 = vmatpush1.msra.mxu0 0.0
        %1699 = vmatprep.subr.mxu0 0.0
        %1700 = vmatpush1.msra.mxu0 0.0
        %1701 = vmatprep.subr.mxu0 0.0
        %1702 = vmatpush1.msra.mxu0 0.0
        %1703 = vmatprep.subr.mxu0 0.0
        %1704 = vmatpush1.msra.mxu0 0.0
        %1705 = vmatprep.subr.mxu0 0.0
        %1706 = vmatpush1.msra.mxu0 0.0
        %1707 = vmatprep.subr.mxu0 0.0
        %1708 = vmatpush1.msra.mxu0 0.0
        %1709 = vmatprep.subr.mxu0 0.0
        %1710 = vmatpush1.msra.mxu0 0.0
        %1711 = vmatprep.subr.mxu0 0.0
        %1712 = vmatpush1.msra.mxu0 0.0
        %1713 = vmatprep.subr.mxu0 0.0
        %1714 = vmatpush1.msra.mxu0 0.0
        %1715 = vmatprep.subr.mxu0 0.0
        %1716 = vmatpush1.msra.mxu0 0.0
        %1717 = vmatprep.subr.mxu0 0.0
        %1718 = vmatpush1.msra.mxu0 0.0
        %1719 = vmatprep.subr.mxu0 0.0
        %1720 = vmatpush1.msra.mxu0 0.0
        %1721 = vmatprep.subr.mxu0 0.0
        %1722 = vmatpush1.msra.mxu0 0.0
        %1723 = vmatprep.subr.mxu0 0.0
        %1724 = vmatpush1.msra.mxu0 0.0
        %1725 = vmatprep.subr.mxu0 0.0
        %1726 = vmatpush1.msra.mxu0 0.0
        %1727 = vmatprep.subr.mxu0 0.0
        %1728 = vmatpush1.msra.mxu0 0.0
        %1729 = vmatprep.subr.mxu0 0.0
        %1730 = vmatpush1.msra.mxu0 0.0
        %1731 = vmatprep.subr.mxu0 0.0
        %1732 = vmatpush1.msra.mxu0 0.0
        %1733 = vmatprep.subr.mxu0 0.0
        %1734 = vmatpush1.msra.mxu0 0.0
        %1735 = vmatprep.subr.mxu0 0.0
        %1736 = vmatpush1.msra.mxu0 0.0
        %1737 = vmatprep.subr.mxu0 0.0
        %1738 = vmatpush1.msra.mxu0 0.0
        %1739 = vmatprep.mubr.f32.mxu0 0.0
        %1740 = vmatmul.mubr.f32.gmra.mrb[0].mxu0 %v1603
        %v1741 = vpop.f32.mrb[0].mxu0
        %v1742 = vadd.f32 0.0, %v1741
        %v1743 = vpop.f32.mrb[0].mxu0
        %1744 = vdwg.mxu0
        %1745 = vmatprep.subr.mxu0 0.0
        %1746 = vmatpush1.msra.mxu0 %v473
        %1747 = vmatprep.subr.mxu0 0.0
        %1748 = vmatpush1.msra.mxu0 %v474
        %1749 = vmatprep.subr.mxu0 0.0
        %1750 = vmatpush1.msra.mxu0 %v475
        %1751 = vmatprep.subr.mxu0 0.0
        %1752 = vmatpush1.msra.mxu0 %v476
        %1753 = vmatprep.subr.mxu0 0.0
        %1754 = vmatpush1.msra.mxu0 0.0
        %1755 = vmatprep.subr.mxu0 0.0
        %1756 = vmatpush1.msra.mxu0 0.0
        %1757 = vmatprep.subr.mxu0 0.0
        %1758 = vmatpush1.msra.mxu0 0.0
        %1759 = vmatprep.subr.mxu0 0.0
        %1760 = vmatpush1.msra.mxu0 0.0
        %1761 = vmatprep.subr.mxu0 0.0
        %1762 = vmatpush1.msra.mxu0 0.0
        %1763 = vmatprep.subr.mxu0 0.0
        %1764 = vmatpush1.msra.mxu0 0.0
        %1765 = vmatprep.subr.mxu0 0.0
        %1766 = vmatpush1.msra.mxu0 0.0
        %1767 = vmatprep.subr.mxu0 0.0
        %1768 = vmatpush1.msra.mxu0 0.0
        %1769 = vmatprep.subr.mxu0 0.0
        %1770 = vmatpush1.msra.mxu0 0.0
        %1771 = vmatprep.subr.mxu0 0.0
        %1772 = vmatpush1.msra.mxu0 0.0
        %1773 = vmatprep.subr.mxu0 0.0
        %1774 = vmatpush1.msra.mxu0 0.0
        %1775 = vmatprep.subr.mxu0 0.0
        %1776 = vmatpush1.msra.mxu0 0.0
        %1777 = vmatprep.subr.mxu0 0.0
        %1778 = vmatpush1.msra.mxu0 0.0
        %1779 = vmatprep.subr.mxu0 0.0
        %1780 = vmatpush1.msra.mxu0 0.0
        %1781 = vmatprep.subr.mxu0 0.0
        %1782 = vmatpush1.msra.mxu0 0.0
        %1783 = vmatprep.subr.mxu0 0.0
        %1784 = vmatpush1.msra.mxu0 0.0
        %1785 = vmatprep.subr.mxu0 0.0
        %1786 = vmatpush1.msra.mxu0 0.0
        %1787 = vmatprep.subr.mxu0 0.0
        %1788 = vmatpush1.msra.mxu0 0.0
        %1789 = vmatprep.subr.mxu0 0.0
        %1790 = vmatpush1.msra.mxu0 0.0
        %1791 = vmatprep.subr.mxu0 0.0
        %1792 = vmatpush1.msra.mxu0 0.0
        %1793 = vmatprep.subr.mxu0 0.0
        %1794 = vmatpush1.msra.mxu0 0.0
        %1795 = vmatprep.subr.mxu0 0.0
        %1796 = vmatpush1.msra.mxu0 0.0
        %1797 = vmatprep.subr.mxu0 0.0
        %1798 = vmatpush1.msra.mxu0 0.0
        %1799 = vmatprep.subr.mxu0 0.0
        %1800 = vmatpush1.msra.mxu0 0.0
        %1801 = vmatprep.subr.mxu0 0.0
        %1802 = vmatpush1.msra.mxu0 0.0
        %1803 = vmatprep.subr.mxu0 0.0
        %1804 = vmatpush1.msra.mxu0 0.0
        %1805 = vmatprep.subr.mxu0 0.0
        %1806 = vmatpush1.msra.mxu0 0.0
        %1807 = vmatprep.subr.mxu0 0.0
        %1808 = vmatpush1.msra.mxu0 0.0
        %1809 = vmatprep.mubr.f32.mxu0 0.0
        %1810 = vmatmul.mubr.f32.gmra.mrb[0].mxu0 %v1603
        %v1811 = vpop.f32.mrb[0].mxu0
        %v1812 = vadd.f32 %v626, %v1811
        %v1813 = vpop.f32.mrb[0].mxu0
        %1814 = vdwg.mxu0
        %v1815 = vld [vmem:[%s404 + $0x4] sm:$0x1]
        %v1816 = vld [vmem:[%s404 + $0x14] sm:$0x1]
        %v1818 = vrot.slane %v1672, 1
        %v1821 = vadd.f32 %v1815, %v1672
        %v1822 = vadd.f32 %v1816, %v1818
        %v1823 = vxor.u32 %v1821, 2147483648
        %v1824 = vxor.u32 %v1822, 2147483648
        %v1825 = vmul.f32 %v1823, 1.442695
        %v1826 = vpow.pop %v1825
        %v1827 = vmul.f32 %v1824, 1.442695
        %v1828 = vpow.pop %v1827
        %v1829 = vadd.f32 %v1826, 1.0
        %v1830 = vadd.f32 %v1828, 1.0
        %v1831 = vrcp.pop %v1829
        %v1832 = vmul.f32 1.0, %v1831
        %v1833 = vrcp.pop %v1830
        %v1834 = vmul.f32 1.0, %v1833
        %v1835 = vld [vmem:[%s411 + $0x4] sm:$0x1]
        %v1836 = vld [vmem:[%s411 + $0x14] sm:$0x1]
        %v1838 = vrot.slane %v1742, 1
        %v1841 = vadd.f32 %v1835, %v1742
        %v1842 = vadd.f32 %v1836, %v1838
        %v1843 = vxor.u32 %v1841, 2147483648
        %v1844 = vxor.u32 %v1842, 2147483648
        %v1845 = vmul.f32 %v1843, 1.442695
        %v1846 = vpow.pop %v1845
        %v1847 = vmul.f32 %v1844, 1.442695
        %v1848 = vpow.pop %v1847
        %v1849 = vadd.f32 %v1846, 1.0
        %v1850 = vadd.f32 %v1848, 1.0
        %v1851 = vrcp.pop %v1849
        %v1852 = vmul.f32 1.0, %v1851
        %v1853 = vrcp.pop %v1850
        %v1854 = vmul.f32 1.0, %v1853
        %v1855 = vld [vmem:[%s418 + $0x4] sm:$0x1]
        %v1856 = vld [vmem:[%s418 + $0x14] sm:$0x1]
        %v1858 = vrot.slane %v1812, 1
        %v1861 = vmul.f32 %v1832, %v1812
        %v1862 = vmul.f32 %v1834, %v1858
        %v1863 = vadd.f32 %v1855, %v1861
        %v1864 = vadd.f32 %v1856, %v1862
        %v1865 = vtanh.pop %v1863
        %v1866 = vtanh.pop %v1864
        %v1867 = vsub.f32 1.0, %v1852
        %v1868 = vsub.f32 1.0, %v1854
        %v1869 = vmul.f32 %v1867, %v1865
        %v1870 = vmul.f32 %v1868, %v1866
        %v1871 = vmul.f32 %v1852, %v1595
        %v1872 = vmul.f32 %v1854, %v1596
        %v1873 = vadd.f32 %v1869, %v1871
        %v1874 = vadd.f32 %v1870, %v1872
        %1875 = vst.msk [vmem:[%s453 + $0x4] sm:$0x1] %vm761, %v1873
        %1876 = vst.msk [vmem:[%s453 + $0x14] sm:$0x1] %vm761, %v1874
        %v1879 = vrot.slane %v1874, 7
        %v1880 = vsel %vm767, %v1879, %v1873
        %v1881 = vsel %vm478, %v1880, 0
        %1883 = vmatprep.subr.mxu0 0.0
        %1884 = vmatpush1.msra.mxu0 %v465
        %1885 = vmatprep.subr.mxu0 0.0
        %1886 = vmatpush1.msra.mxu0 %v466
        %1887 = vmatprep.subr.mxu0 0.0
        %1888 = vmatpush1.msra.mxu0 %v467
        %1889 = vmatprep.subr.mxu0 0.0
        %1890 = vmatpush1.msra.mxu0 %v468
        %1891 = vmatprep.subr.mxu0 0.0
        %1892 = vmatpush1.msra.mxu0 0.0
        %1893 = vmatprep.subr.mxu0 0.0
        %1894 = vmatpush1.msra.mxu0 0.0
        %1895 = vmatprep.subr.mxu0 0.0
        %1896 = vmatpush1.msra.mxu0 0.0
        %1897 = vmatprep.subr.mxu0 0.0
        %1898 = vmatpush1.msra.mxu0 0.0
        %1899 = vmatprep.subr.mxu0 0.0
        %1900 = vmatpush1.msra.mxu0 0.0
        %1901 = vmatprep.subr.mxu0 0.0
        %1902 = vmatpush1.msra.mxu0 0.0
        %1903 = vmatprep.subr.mxu0 0.0
        %1904 = vmatpush1.msra.mxu0 0.0
        %1905 = vmatprep.subr.mxu0 0.0
        %1906 = vmatpush1.msra.mxu0 0.0
        %1907 = vmatprep.subr.mxu0 0.0
        %1908 = vmatpush1.msra.mxu0 0.0
        %1909 = vmatprep.subr.mxu0 0.0
        %1910 = vmatpush1.msra.mxu0 0.0
        %1911 = vmatprep.subr.mxu0 0.0
        %1912 = vmatpush1.msra.mxu0 0.0
        %1913 = vmatprep.subr.mxu0 0.0
        %1914 = vmatpush1.msra.mxu0 0.0
        %1915 = vmatprep.subr.mxu0 0.0
        %1916 = vmatpush1.msra.mxu0 0.0
        %1917 = vmatprep.subr.mxu0 0.0
        %1918 = vmatpush1.msra.mxu0 0.0
        %1919 = vmatprep.subr.mxu0 0.0
        %1920 = vmatpush1.msra.mxu0 0.0
        %1921 = vmatprep.subr.mxu0 0.0
        %1922 = vmatpush1.msra.mxu0 0.0
        %1923 = vmatprep.subr.mxu0 0.0
        %1924 = vmatpush1.msra.mxu0 0.0
        %1925 = vmatprep.subr.mxu0 0.0
        %1926 = vmatpush1.msra.mxu0 0.0
        %1927 = vmatprep.subr.mxu0 0.0
        %1928 = vmatpush1.msra.mxu0 0.0
        %1929 = vmatprep.subr.mxu0 0.0
        %1930 = vmatpush1.msra.mxu0 0.0
        %1931 = vmatprep.subr.mxu0 0.0
        %1932 = vmatpush1.msra.mxu0 0.0
        %1933 = vmatprep.subr.mxu0 0.0
        %1934 = vmatpush1.msra.mxu0 0.0
        %1935 = vmatprep.subr.mxu0 0.0
        %1936 = vmatpush1.msra.mxu0 0.0
        %1937 = vmatprep.subr.mxu0 0.0
        %1938 = vmatpush1.msra.mxu0 0.0
        %1939 = vmatprep.subr.mxu0 0.0
        %1940 = vmatpush1.msra.mxu0 0.0
        %1941 = vmatprep.subr.mxu0 0.0
        %1942 = vmatpush1.msra.mxu0 0.0
        %1943 = vmatprep.subr.mxu0 0.0
        %1944 = vmatpush1.msra.mxu0 0.0
        %1945 = vmatprep.subr.mxu0 0.0
        %1946 = vmatpush1.msra.mxu0 0.0
        %1947 = vmatprep.mubr.f32.mxu0 0.0
        %1948 = vmatmul.mubr.f32.gmra.mrb[0].mxu0 %v1881
        %v1949 = vpop.f32.mrb[0].mxu0
        %v1950 = vadd.f32 0.0, %v1949
        %v1951 = vpop.f32.mrb[0].mxu0
        %1952 = vdwg.mxu0
        %1953 = vmatprep.subr.mxu0 0.0
        %1954 = vmatpush1.msra.mxu0 %v469
        %1955 = vmatprep.subr.mxu0 0.0
        %1956 = vmatpush1.msra.mxu0 %v470
        %1957 = vmatprep.subr.mxu0 0.0
        %1958 = vmatpush1.msra.mxu0 %v471
        %1959 = vmatprep.subr.mxu0 0.0
        %1960 = vmatpush1.msra.mxu0 %v472
        %1961 = vmatprep.subr.mxu0 0.0
        %1962 = vmatpush1.msra.mxu0 0.0
        %1963 = vmatprep.subr.mxu0 0.0
        %1964 = vmatpush1.msra.mxu0 0.0
        %1965 = vmatprep.subr.mxu0 0.0
        %1966 = vmatpush1.msra.mxu0 0.0
        %1967 = vmatprep.subr.mxu0 0.0
        %1968 = vmatpush1.msra.mxu0 0.0
        %1969 = vmatprep.subr.mxu0 0.0
        %1970 = vmatpush1.msra.mxu0 0.0
        %1971 = vmatprep.subr.mxu0 0.0
        %1972 = vmatpush1.msra.mxu0 0.0
        %1973 = vmatprep.subr.mxu0 0.0
        %1974 = vmatpush1.msra.mxu0 0.0
        %1975 = vmatprep.subr.mxu0 0.0
        %1976 = vmatpush1.msra.mxu0 0.0
        %1977 = vmatprep.subr.mxu0 0.0
        %1978 = vmatpush1.msra.mxu0 0.0
        %1979 = vmatprep.subr.mxu0 0.0
        %1980 = vmatpush1.msra.mxu0 0.0
        %1981 = vmatprep.subr.mxu0 0.0
        %1982 = vmatpush1.msra.mxu0 0.0
        %1983 = vmatprep.subr.mxu0 0.0
        %1984 = vmatpush1.msra.mxu0 0.0
        %1985 = vmatprep.subr.mxu0 0.0
        %1986 = vmatpush1.msra.mxu0 0.0
        %1987 = vmatprep.subr.mxu0 0.0
        %1988 = vmatpush1.msra.mxu0 0.0
        %1989 = vmatprep.subr.mxu0 0.0
        %1990 = vmatpush1.msra.mxu0 0.0
        %1991 = vmatprep.subr.mxu0 0.0
        %1992 = vmatpush1.msra.mxu0 0.0
        %1993 = vmatprep.subr.mxu0 0.0
        %1994 = vmatpush1.msra.mxu0 0.0
        %1995 = vmatprep.subr.mxu0 0.0
        %1996 = vmatpush1.msra.mxu0 0.0
        %1997 = vmatprep.subr.mxu0 0.0
        %1998 = vmatpush1.msra.mxu0 0.0
        %1999 = vmatprep.subr.mxu0 0.0
        %2000 = vmatpush1.msra.mxu0 0.0
        %2001 = vmatprep.subr.mxu0 0.0
        %2002 = vmatpush1.msra.mxu0 0.0
        %2003 = vmatprep.subr.mxu0 0.0
        %2004 = vmatpush1.msra.mxu0 0.0
        %2005 = vmatprep.subr.mxu0 0.0
        %2006 = vmatpush1.msra.mxu0 0.0
        %2007 = vmatprep.subr.mxu0 0.0
        %2008 = vmatpush1.msra.mxu0 0.0
        %2009 = vmatprep.subr.mxu0 0.0
        %2010 = vmatpush1.msra.mxu0 0.0
        %2011 = vmatprep.subr.mxu0 0.0
        %2012 = vmatpush1.msra.mxu0 0.0
        %2013 = vmatprep.subr.mxu0 0.0
        %2014 = vmatpush1.msra.mxu0 0.0
        %2015 = vmatprep.subr.mxu0 0.0
        %2016 = vmatpush1.msra.mxu0 0.0
        %2017 = vmatprep.mubr.f32.mxu0 0.0
        %2018 = vmatmul.mubr.f32.gmra.mrb[0].mxu0 %v1881
        %v2019 = vpop.f32.mrb[0].mxu0
        %v2020 = vadd.f32 0.0, %v2019
        %v2021 = vpop.f32.mrb[0].mxu0
        %2022 = vdwg.mxu0
        %2023 = vmatprep.subr.mxu0 0.0
        %2024 = vmatpush1.msra.mxu0 %v473
        %2025 = vmatprep.subr.mxu0 0.0
        %2026 = vmatpush1.msra.mxu0 %v474
        %2027 = vmatprep.subr.mxu0 0.0
        %2028 = vmatpush1.msra.mxu0 %v475
        %2029 = vmatprep.subr.mxu0 0.0
        %2030 = vmatpush1.msra.mxu0 %v476
        %2031 = vmatprep.subr.mxu0 0.0
        %2032 = vmatpush1.msra.mxu0 0.0
        %2033 = vmatprep.subr.mxu0 0.0
        %2034 = vmatpush1.msra.mxu0 0.0
        %2035 = vmatprep.subr.mxu0 0.0
        %2036 = vmatpush1.msra.mxu0 0.0
        %2037 = vmatprep.subr.mxu0 0.0
        %2038 = vmatpush1.msra.mxu0 0.0
        %2039 = vmatprep.subr.mxu0 0.0
        %2040 = vmatpush1.msra.mxu0 0.0
        %2041 = vmatprep.subr.mxu0 0.0
        %2042 = vmatpush1.msra.mxu0 0.0
        %2043 = vmatprep.subr.mxu0 0.0
        %2044 = vmatpush1.msra.mxu0 0.0
        %2045 = vmatprep.subr.mxu0 0.0
        %2046 = vmatpush1.msra.mxu0 0.0
        %2047 = vmatprep.subr.mxu0 0.0
        %2048 = vmatpush1.msra.mxu0 0.0
        %2049 = vmatprep.subr.mxu0 0.0
        %2050 = vmatpush1.msra.mxu0 0.0
        %2051 = vmatprep.subr.mxu0 0.0
        %2052 = vmatpush1.msra.mxu0 0.0
        %2053 = vmatprep.subr.mxu0 0.0
        %2054 = vmatpush1.msra.mxu0 0.0
        %2055 = vmatprep.subr.mxu0 0.0
        %2056 = vmatpush1.msra.mxu0 0.0
        %2057 = vmatprep.subr.mxu0 0.0
        %2058 = vmatpush1.msra.mxu0 0.0
        %2059 = vmatprep.subr.mxu0 0.0
        %2060 = vmatpush1.msra.mxu0 0.0
        %2061 = vmatprep.subr.mxu0 0.0
        %2062 = vmatpush1.msra.mxu0 0.0
        %2063 = vmatprep.subr.mxu0 0.0
        %2064 = vmatpush1.msra.mxu0 0.0
        %2065 = vmatprep.subr.mxu0 0.0
        %2066 = vmatpush1.msra.mxu0 0.0
        %2067 = vmatprep.subr.mxu0 0.0
        %2068 = vmatpush1.msra.mxu0 0.0
        %2069 = vmatprep.subr.mxu0 0.0
        %2070 = vmatpush1.msra.mxu0 0.0
        %2071 = vmatprep.subr.mxu0 0.0
        %2072 = vmatpush1.msra.mxu0 0.0
        %2073 = vmatprep.subr.mxu0 0.0
        %2074 = vmatpush1.msra.mxu0 0.0
        %2075 = vmatprep.subr.mxu0 0.0
        %2076 = vmatpush1.msra.mxu0 0.0
        %2077 = vmatprep.subr.mxu0 0.0
        %2078 = vmatpush1.msra.mxu0 0.0
        %2079 = vmatprep.subr.mxu0 0.0
        %2080 = vmatpush1.msra.mxu0 0.0
        %2081 = vmatprep.subr.mxu0 0.0
        %2082 = vmatpush1.msra.mxu0 0.0
        %2083 = vmatprep.subr.mxu0 0.0
        %2084 = vmatpush1.msra.mxu0 0.0
        %2085 = vmatprep.subr.mxu0 0.0
        %2086 = vmatpush1.msra.mxu0 0.0
        %2087 = vmatprep.mubr.f32.mxu0 0.0
        %2088 = vmatmul.mubr.f32.gmra.mrb[0].mxu0 %v1881
        %v2089 = vpop.f32.mrb[0].mxu0
        %v2090 = vadd.f32 %v626, %v2089
        %v2091 = vpop.f32.mrb[0].mxu0
        %2092 = vdwg.mxu0
        %v2093 = vld [vmem:[%s404 + $0x5] sm:$0x1]
        %v2094 = vld [vmem:[%s404 + $0x15] sm:$0x1]
        %v2096 = vrot.slane %v1950, 1
        %v2099 = vadd.f32 %v2093, %v1950
        %v2100 = vadd.f32 %v2094, %v2096
        %v2101 = vxor.u32 %v2099, 2147483648
        %v2102 = vxor.u32 %v2100, 2147483648
        %v2103 = vmul.f32 %v2101, 1.442695
        %v2104 = vpow.pop %v2103
        %v2105 = vmul.f32 %v2102, 1.442695
        %v2106 = vpow.pop %v2105
        %v2107 = vadd.f32 %v2104, 1.0
        %v2108 = vadd.f32 %v2106, 1.0
        %v2109 = vrcp.pop %v2107
        %v2110 = vmul.f32 1.0, %v2109
        %v2111 = vrcp.pop %v2108
        %v2112 = vmul.f32 1.0, %v2111
        %v2113 = vld [vmem:[%s411 + $0x5] sm:$0x1]
        %v2114 = vld [vmem:[%s411 + $0x15] sm:$0x1]
        %v2116 = vrot.slane %v2020, 1
        %v2119 = vadd.f32 %v2113, %v2020
        %v2120 = vadd.f32 %v2114, %v2116
        %v2121 = vxor.u32 %v2119, 2147483648
        %v2122 = vxor.u32 %v2120, 2147483648
        %v2123 = vmul.f32 %v2121, 1.442695
        %v2124 = vpow.pop %v2123
        %v2125 = vmul.f32 %v2122, 1.442695
        %v2126 = vpow.pop %v2125
        %v2127 = vadd.f32 %v2124, 1.0
        %v2128 = vadd.f32 %v2126, 1.0
        %v2129 = vrcp.pop %v2127
        %v2130 = vmul.f32 1.0, %v2129
        %v2131 = vrcp.pop %v2128
        %v2132 = vmul.f32 1.0, %v2131
        %v2133 = vld [vmem:[%s418 + $0x5] sm:$0x1]
        %v2134 = vld [vmem:[%s418 + $0x15] sm:$0x1]
        %v2136 = vrot.slane %v2090, 1
        %v2139 = vmul.f32 %v2110, %v2090
        %v2140 = vmul.f32 %v2112, %v2136
        %v2141 = vadd.f32 %v2133, %v2139
        %v2142 = vadd.f32 %v2134, %v2140
        %v2143 = vtanh.pop %v2141
        %v2144 = vtanh.pop %v2142
        %v2145 = vsub.f32 1.0, %v2130
        %v2146 = vsub.f32 1.0, %v2132
        %v2147 = vmul.f32 %v2145, %v2143
        %v2148 = vmul.f32 %v2146, %v2144
        %v2149 = vmul.f32 %v2130, %v1873
        %v2150 = vmul.f32 %v2132, %v1874
        %v2151 = vadd.f32 %v2147, %v2149
        %v2152 = vadd.f32 %v2148, %v2150
        %2153 = vst.msk [vmem:[%s453 + $0x5] sm:$0x1] %vm761, %v2151
        %2154 = vst.msk [vmem:[%s453 + $0x15] sm:$0x1] %vm761, %v2152
        %v2157 = vrot.slane %v2152, 7
        %v2158 = vsel %vm767, %v2157, %v2151
        %v2159 = vsel %vm478, %v2158, 0
        %2161 = vmatprep.subr.mxu0 0.0
        %2162 = vmatpush1.msra.mxu0 %v465
        %2163 = vmatprep.subr.mxu0 0.0
        %2164 = vmatpush1.msra.mxu0 %v466
        %2165 = vmatprep.subr.mxu0 0.0
        %2166 = vmatpush1.msra.mxu0 %v467
        %2167 = vmatprep.subr.mxu0 0.0
        %2168 = vmatpush1.msra.mxu0 %v468
        %2169 = vmatprep.subr.mxu0 0.0
        %2170 = vmatpush1.msra.mxu0 0.0
        %2171 = vmatprep.subr.mxu0 0.0
        %2172 = vmatpush1.msra.mxu0 0.0
        %2173 = vmatprep.subr.mxu0 0.0
        %2174 = vmatpush1.msra.mxu0 0.0
        %2175 = vmatprep.subr.mxu0 0.0
        %2176 = vmatpush1.msra.mxu0 0.0
        %2177 = vmatprep.subr.mxu0 0.0
        %2178 = vmatpush1.msra.mxu0 0.0
        %2179 = vmatprep.subr.mxu0 0.0
        %2180 = vmatpush1.msra.mxu0 0.0
        %2181 = vmatprep.subr.mxu0 0.0
        %2182 = vmatpush1.msra.mxu0 0.0
        %2183 = vmatprep.subr.mxu0 0.0
        %2184 = vmatpush1.msra.mxu0 0.0
        %2185 = vmatprep.subr.mxu0 0.0
        %2186 = vmatpush1.msra.mxu0 0.0
        %2187 = vmatprep.subr.mxu0 0.0
        %2188 = vmatpush1.msra.mxu0 0.0
        %2189 = vmatprep.subr.mxu0 0.0
        %2190 = vmatpush1.msra.mxu0 0.0
        %2191 = vmatprep.subr.mxu0 0.0
        %2192 = vmatpush1.msra.mxu0 0.0
        %2193 = vmatprep.subr.mxu0 0.0
        %2194 = vmatpush1.msra.mxu0 0.0
        %2195 = vmatprep.subr.mxu0 0.0
        %2196 = vmatpush1.msra.mxu0 0.0
        %2197 = vmatprep.subr.mxu0 0.0
        %2198 = vmatpush1.msra.mxu0 0.0
        %2199 = vmatprep.subr.mxu0 0.0
        %2200 = vmatpush1.msra.mxu0 0.0
        %2201 = vmatprep.subr.mxu0 0.0
        %2202 = vmatpush1.msra.mxu0 0.0
        %2203 = vmatprep.subr.mxu0 0.0
        %2204 = vmatpush1.msra.mxu0 0.0
        %2205 = vmatprep.subr.mxu0 0.0
        %2206 = vmatpush1.msra.mxu0 0.0
        %2207 = vmatprep.subr.mxu0 0.0
        %2208 = vmatpush1.msra.mxu0 0.0
        %2209 = vmatprep.subr.mxu0 0.0
        %2210 = vmatpush1.msra.mxu0 0.0
        %2211 = vmatprep.subr.mxu0 0.0
        %2212 = vmatpush1.msra.mxu0 0.0
        %2213 = vmatprep.subr.mxu0 0.0
        %2214 = vmatpush1.msra.mxu0 0.0
        %2215 = vmatprep.subr.mxu0 0.0
        %2216 = vmatpush1.msra.mxu0 0.0
        %2217 = vmatprep.subr.mxu0 0.0
        %2218 = vmatpush1.msra.mxu0 0.0
        %2219 = vmatprep.subr.mxu0 0.0
        %2220 = vmatpush1.msra.mxu0 0.0
        %2221 = vmatprep.subr.mxu0 0.0
        %2222 = vmatpush1.msra.mxu0 0.0
        %2223 = vmatprep.subr.mxu0 0.0
        %2224 = vmatpush1.msra.mxu0 0.0
        %2225 = vmatprep.mubr.f32.mxu0 0.0
        %2226 = vmatmul.mubr.f32.gmra.mrb[0].mxu0 %v2159
        %v2227 = vpop.f32.mrb[0].mxu0
        %v2228 = vadd.f32 0.0, %v2227
        %v2229 = vpop.f32.mrb[0].mxu0
        %2230 = vdwg.mxu0
        %2231 = vmatprep.subr.mxu0 0.0
        %2232 = vmatpush1.msra.mxu0 %v469
        %2233 = vmatprep.subr.mxu0 0.0
        %2234 = vmatpush1.msra.mxu0 %v470
        %2235 = vmatprep.subr.mxu0 0.0
        %2236 = vmatpush1.msra.mxu0 %v471
        %2237 = vmatprep.subr.mxu0 0.0
        %2238 = vmatpush1.msra.mxu0 %v472
        %2239 = vmatprep.subr.mxu0 0.0
        %2240 = vmatpush1.msra.mxu0 0.0
        %2241 = vmatprep.subr.mxu0 0.0
        %2242 = vmatpush1.msra.mxu0 0.0
        %2243 = vmatprep.subr.mxu0 0.0
        %2244 = vmatpush1.msra.mxu0 0.0
        %2245 = vmatprep.subr.mxu0 0.0
        %2246 = vmatpush1.msra.mxu0 0.0
        %2247 = vmatprep.subr.mxu0 0.0
        %2248 = vmatpush1.msra.mxu0 0.0
        %2249 = vmatprep.subr.mxu0 0.0
        %2250 = vmatpush1.msra.mxu0 0.0
        %2251 = vmatprep.subr.mxu0 0.0
        %2252 = vmatpush1.msra.mxu0 0.0
        %2253 = vmatprep.subr.mxu0 0.0
        %2254 = vmatpush1.msra.mxu0 0.0
        %2255 = vmatprep.subr.mxu0 0.0
        %2256 = vmatpush1.msra.mxu0 0.0
        %2257 = vmatprep.subr.mxu0 0.0
        %2258 = vmatpush1.msra.mxu0 0.0
        %2259 = vmatprep.subr.mxu0 0.0
        %2260 = vmatpush1.msra.mxu0 0.0
        %2261 = vmatprep.subr.mxu0 0.0
        %2262 = vmatpush1.msra.mxu0 0.0
        %2263 = vmatprep.subr.mxu0 0.0
        %2264 = vmatpush1.msra.mxu0 0.0
        %2265 = vmatprep.subr.mxu0 0.0
        %2266 = vmatpush1.msra.mxu0 0.0
        %2267 = vmatprep.subr.mxu0 0.0
        %2268 = vmatpush1.msra.mxu0 0.0
        %2269 = vmatprep.subr.mxu0 0.0
        %2270 = vmatpush1.msra.mxu0 0.0
        %2271 = vmatprep.subr.mxu0 0.0
        %2272 = vmatpush1.msra.mxu0 0.0
        %2273 = vmatprep.subr.mxu0 0.0
        %2274 = vmatpush1.msra.mxu0 0.0
        %2275 = vmatprep.subr.mxu0 0.0
        %2276 = vmatpush1.msra.mxu0 0.0
        %2277 = vmatprep.subr.mxu0 0.0
        %2278 = vmatpush1.msra.mxu0 0.0
        %2279 = vmatprep.subr.mxu0 0.0
        %2280 = vmatpush1.msra.mxu0 0.0
        %2281 = vmatprep.subr.mxu0 0.0
        %2282 = vmatpush1.msra.mxu0 0.0
        %2283 = vmatprep.subr.mxu0 0.0
        %2284 = vmatpush1.msra.mxu0 0.0
        %2285 = vmatprep.subr.mxu0 0.0
        %2286 = vmatpush1.msra.mxu0 0.0
        %2287 = vmatprep.subr.mxu0 0.0
        %2288 = vmatpush1.msra.mxu0 0.0
        %2289 = vmatprep.subr.mxu0 0.0
        %2290 = vmatpush1.msra.mxu0 0.0
        %2291 = vmatprep.subr.mxu0 0.0
        %2292 = vmatpush1.msra.mxu0 0.0
        %2293 = vmatprep.subr.mxu0 0.0
        %2294 = vmatpush1.msra.mxu0 0.0
        %2295 = vmatprep.mubr.f32.mxu0 0.0
        %2296 = vmatmul.mubr.f32.gmra.mrb[0].mxu0 %v2159
        %v2297 = vpop.f32.mrb[0].mxu0
        %v2298 = vadd.f32 0.0, %v2297
        %v2299 = vpop.f32.mrb[0].mxu0
        %2300 = vdwg.mxu0
        %2301 = vmatprep.subr.mxu0 0.0
        %2302 = vmatpush1.msra.mxu0 %v473
        %2303 = vmatprep.subr.mxu0 0.0
        %2304 = vmatpush1.msra.mxu0 %v474
        %2305 = vmatprep.subr.mxu0 0.0
        %2306 = vmatpush1.msra.mxu0 %v475
        %2307 = vmatprep.subr.mxu0 0.0
        %2308 = vmatpush1.msra.mxu0 %v476
        %2309 = vmatprep.subr.mxu0 0.0
        %2310 = vmatpush1.msra.mxu0 0.0
        %2311 = vmatprep.subr.mxu0 0.0
        %2312 = vmatpush1.msra.mxu0 0.0
        %2313 = vmatprep.subr.mxu0 0.0
        %2314 = vmatpush1.msra.mxu0 0.0
        %2315 = vmatprep.subr.mxu0 0.0
        %2316 = vmatpush1.msra.mxu0 0.0
        %2317 = vmatprep.subr.mxu0 0.0
        %2318 = vmatpush1.msra.mxu0 0.0
        %2319 = vmatprep.subr.mxu0 0.0
        %2320 = vmatpush1.msra.mxu0 0.0
        %2321 = vmatprep.subr.mxu0 0.0
        %2322 = vmatpush1.msra.mxu0 0.0
        %2323 = vmatprep.subr.mxu0 0.0
        %2324 = vmatpush1.msra.mxu0 0.0
        %2325 = vmatprep.subr.mxu0 0.0
        %2326 = vmatpush1.msra.mxu0 0.0
        %2327 = vmatprep.subr.mxu0 0.0
        %2328 = vmatpush1.msra.mxu0 0.0
        %2329 = vmatprep.subr.mxu0 0.0
        %2330 = vmatpush1.msra.mxu0 0.0
        %2331 = vmatprep.subr.mxu0 0.0
        %2332 = vmatpush1.msra.mxu0 0.0
        %2333 = vmatprep.subr.mxu0 0.0
        %2334 = vmatpush1.msra.mxu0 0.0
        %2335 = vmatprep.subr.mxu0 0.0
        %2336 = vmatpush1.msra.mxu0 0.0
        %2337 = vmatprep.subr.mxu0 0.0
        %2338 = vmatpush1.msra.mxu0 0.0
        %2339 = vmatprep.subr.mxu0 0.0
        %2340 = vmatpush1.msra.mxu0 0.0
        %2341 = vmatprep.subr.mxu0 0.0
        %2342 = vmatpush1.msra.mxu0 0.0
        %2343 = vmatprep.subr.mxu0 0.0
        %2344 = vmatpush1.msra.mxu0 0.0
        %2345 = vmatprep.subr.mxu0 0.0
        %2346 = vmatpush1.msra.mxu0 0.0
        %2347 = vmatprep.subr.mxu0 0.0
        %2348 = vmatpush1.msra.mxu0 0.0
        %2349 = vmatprep.subr.mxu0 0.0
        %2350 = vmatpush1.msra.mxu0 0.0
        %2351 = vmatprep.subr.mxu0 0.0
        %2352 = vmatpush1.msra.mxu0 0.0
        %2353 = vmatprep.subr.mxu0 0.0
        %2354 = vmatpush1.msra.mxu0 0.0
        %2355 = vmatprep.subr.mxu0 0.0
        %2356 = vmatpush1.msra.mxu0 0.0
        %2357 = vmatprep.subr.mxu0 0.0
        %2358 = vmatpush1.msra.mxu0 0.0
        %2359 = vmatprep.subr.mxu0 0.0
        %2360 = vmatpush1.msra.mxu0 0.0
        %2361 = vmatprep.subr.mxu0 0.0
        %2362 = vmatpush1.msra.mxu0 0.0
        %2363 = vmatprep.subr.mxu0 0.0
        %2364 = vmatpush1.msra.mxu0 0.0
        %2365 = vmatprep.mubr.f32.mxu0 0.0
        %2366 = vmatmul.mubr.f32.gmra.mrb[0].mxu0 %v2159
        %v2367 = vpop.f32.mrb[0].mxu0
        %v2368 = vadd.f32 %v626, %v2367
        %v2369 = vpop.f32.mrb[0].mxu0
        %2370 = vdwg.mxu0
        %v2371 = vld [vmem:[%s404 + $0x6] sm:$0x1]
        %v2372 = vld [vmem:[%s404 + $0x16] sm:$0x1]
        %v2374 = vrot.slane %v2228, 1
        %v2377 = vadd.f32 %v2371, %v2228
        %v2378 = vadd.f32 %v2372, %v2374
        %v2379 = vxor.u32 %v2377, 2147483648
        %v2380 = vxor.u32 %v2378, 2147483648
        %v2381 = vmul.f32 %v2379, 1.442695
        %v2382 = vpow.pop %v2381
        %v2383 = vmul.f32 %v2380, 1.442695
        %v2384 = vpow.pop %v2383
        %v2385 = vadd.f32 %v2382, 1.0
        %v2386 = vadd.f32 %v2384, 1.0
        %v2387 = vrcp.pop %v2385
        %v2388 = vmul.f32 1.0, %v2387
        %v2389 = vrcp.pop %v2386
        %v2390 = vmul.f32 1.0, %v2389
        %v2391 = vld [vmem:[%s411 + $0x6] sm:$0x1]
        %v2392 = vld [vmem:[%s411 + $0x16] sm:$0x1]
        %v2394 = vrot.slane %v2298, 1
        %v2397 = vadd.f32 %v2391, %v2298
        %v2398 = vadd.f32 %v2392, %v2394
        %v2399 = vxor.u32 %v2397, 2147483648
        %v2400 = vxor.u32 %v2398, 2147483648
        %v2401 = vmul.f32 %v2399, 1.442695
        %v2402 = vpow.pop %v2401
        %v2403 = vmul.f32 %v2400, 1.442695
        %v2404 = vpow.pop %v2403
        %v2405 = vadd.f32 %v2402, 1.0
        %v2406 = vadd.f32 %v2404, 1.0
        %v2407 = vrcp.pop %v2405
        %v2408 = vmul.f32 1.0, %v2407
        %v2409 = vrcp.pop %v2406
        %v2410 = vmul.f32 1.0, %v2409
        %v2411 = vld [vmem:[%s418 + $0x6] sm:$0x1]
        %v2412 = vld [vmem:[%s418 + $0x16] sm:$0x1]
        %v2414 = vrot.slane %v2368, 1
        %v2417 = vmul.f32 %v2388, %v2368
        %v2418 = vmul.f32 %v2390, %v2414
        %v2419 = vadd.f32 %v2411, %v2417
        %v2420 = vadd.f32 %v2412, %v2418
        %v2421 = vtanh.pop %v2419
        %v2422 = vtanh.pop %v2420
        %v2423 = vsub.f32 1.0, %v2408
        %v2424 = vsub.f32 1.0, %v2410
        %v2425 = vmul.f32 %v2423, %v2421
        %v2426 = vmul.f32 %v2424, %v2422
        %v2427 = vmul.f32 %v2408, %v2151
        %v2428 = vmul.f32 %v2410, %v2152
        %v2429 = vadd.f32 %v2425, %v2427
        %v2430 = vadd.f32 %v2426, %v2428
        %2431 = vst.msk [vmem:[%s453 + $0x6] sm:$0x1] %vm761, %v2429
        %2432 = vst.msk [vmem:[%s453 + $0x16] sm:$0x1] %vm761, %v2430
        %v2435 = vrot.slane %v2430, 7
        %v2436 = vsel %vm767, %v2435, %v2429
        %v2437 = vsel %vm478, %v2436, 0
        %2439 = vmatprep.subr.mxu0 0.0
        %2440 = vmatpush1.msra.mxu0 %v465
        %2441 = vmatprep.subr.mxu0 0.0
        %2442 = vmatpush1.msra.mxu0 %v466
        %2443 = vmatprep.subr.mxu0 0.0
        %2444 = vmatpush1.msra.mxu0 %v467
        %2445 = vmatprep.subr.mxu0 0.0
        %2446 = vmatpush1.msra.mxu0 %v468
        %2447 = vmatprep.subr.mxu0 0.0
        %2448 = vmatpush1.msra.mxu0 0.0
        %2449 = vmatprep.subr.mxu0 0.0
        %2450 = vmatpush1.msra.mxu0 0.0
        %2451 = vmatprep.subr.mxu0 0.0
        %2452 = vmatpush1.msra.mxu0 0.0
        %2453 = vmatprep.subr.mxu0 0.0
        %2454 = vmatpush1.msra.mxu0 0.0
        %2455 = vmatprep.subr.mxu0 0.0
        %2456 = vmatpush1.msra.mxu0 0.0
        %2457 = vmatprep.subr.mxu0 0.0
        %2458 = vmatpush1.msra.mxu0 0.0
        %2459 = vmatprep.subr.mxu0 0.0
        %2460 = vmatpush1.msra.mxu0 0.0
        %2461 = vmatprep.subr.mxu0 0.0
        %2462 = vmatpush1.msra.mxu0 0.0
        %2463 = vmatprep.subr.mxu0 0.0
        %2464 = vmatpush1.msra.mxu0 0.0
        %2465 = vmatprep.subr.mxu0 0.0
        %2466 = vmatpush1.msra.mxu0 0.0
        %2467 = vmatprep.subr.mxu0 0.0
        %2468 = vmatpush1.msra.mxu0 0.0
        %2469 = vmatprep.subr.mxu0 0.0
        %2470 = vmatpush1.msra.mxu0 0.0
        %2471 = vmatprep.subr.mxu0 0.0
        %2472 = vmatpush1.msra.mxu0 0.0
        %2473 = vmatprep.subr.mxu0 0.0
        %2474 = vmatpush1.msra.mxu0 0.0
        %2475 = vmatprep.subr.mxu0 0.0
        %2476 = vmatpush1.msra.mxu0 0.0
        %2477 = vmatprep.subr.mxu0 0.0
        %2478 = vmatpush1.msra.mxu0 0.0
        %2479 = vmatprep.subr.mxu0 0.0
        %2480 = vmatpush1.msra.mxu0 0.0
        %2481 = vmatprep.subr.mxu0 0.0
        %2482 = vmatpush1.msra.mxu0 0.0
        %2483 = vmatprep.subr.mxu0 0.0
        %2484 = vmatpush1.msra.mxu0 0.0
        %2485 = vmatprep.subr.mxu0 0.0
        %2486 = vmatpush1.msra.mxu0 0.0
        %2487 = vmatprep.subr.mxu0 0.0
        %2488 = vmatpush1.msra.mxu0 0.0
        %2489 = vmatprep.subr.mxu0 0.0
        %2490 = vmatpush1.msra.mxu0 0.0
        %2491 = vmatprep.subr.mxu0 0.0
        %2492 = vmatpush1.msra.mxu0 0.0
        %2493 = vmatprep.subr.mxu0 0.0
        %2494 = vmatpush1.msra.mxu0 0.0
        %2495 = vmatprep.subr.mxu0 0.0
        %2496 = vmatpush1.msra.mxu0 0.0
        %2497 = vmatprep.subr.mxu0 0.0
        %2498 = vmatpush1.msra.mxu0 0.0
        %2499 = vmatprep.subr.mxu0 0.0
        %2500 = vmatpush1.msra.mxu0 0.0
        %2501 = vmatprep.subr.mxu0 0.0
        %2502 = vmatpush1.msra.mxu0 0.0
        %2503 = vmatprep.mubr.f32.mxu0 0.0
        %2504 = vmatmul.mubr.f32.gmra.mrb[0].mxu0 %v2437
        %v2505 = vpop.f32.mrb[0].mxu0
        %v2506 = vadd.f32 0.0, %v2505
        %v2507 = vpop.f32.mrb[0].mxu0
        %2508 = vdwg.mxu0
        %2509 = vmatprep.subr.mxu0 0.0
        %2510 = vmatpush1.msra.mxu0 %v469
        %2511 = vmatprep.subr.mxu0 0.0
        %2512 = vmatpush1.msra.mxu0 %v470
        %2513 = vmatprep.subr.mxu0 0.0
        %2514 = vmatpush1.msra.mxu0 %v471
        %2515 = vmatprep.subr.mxu0 0.0
        %2516 = vmatpush1.msra.mxu0 %v472
        %2517 = vmatprep.subr.mxu0 0.0
        %2518 = vmatpush1.msra.mxu0 0.0
        %2519 = vmatprep.subr.mxu0 0.0
        %2520 = vmatpush1.msra.mxu0 0.0
        %2521 = vmatprep.subr.mxu0 0.0
        %2522 = vmatpush1.msra.mxu0 0.0
        %2523 = vmatprep.subr.mxu0 0.0
        %2524 = vmatpush1.msra.mxu0 0.0
        %2525 = vmatprep.subr.mxu0 0.0
        %2526 = vmatpush1.msra.mxu0 0.0
        %2527 = vmatprep.subr.mxu0 0.0
        %2528 = vmatpush1.msra.mxu0 0.0
        %2529 = vmatprep.subr.mxu0 0.0
        %2530 = vmatpush1.msra.mxu0 0.0
        %2531 = vmatprep.subr.mxu0 0.0
        %2532 = vmatpush1.msra.mxu0 0.0
        %2533 = vmatprep.subr.mxu0 0.0
        %2534 = vmatpush1.msra.mxu0 0.0
        %2535 = vmatprep.subr.mxu0 0.0
        %2536 = vmatpush1.msra.mxu0 0.0
        %2537 = vmatprep.subr.mxu0 0.0
        %2538 = vmatpush1.msra.mxu0 0.0
        %2539 = vmatprep.subr.mxu0 0.0
        %2540 = vmatpush1.msra.mxu0 0.0
        %2541 = vmatprep.subr.mxu0 0.0
        %2542 = vmatpush1.msra.mxu0 0.0
        %2543 = vmatprep.subr.mxu0 0.0
        %2544 = vmatpush1.msra.mxu0 0.0
        %2545 = vmatprep.subr.mxu0 0.0
        %2546 = vmatpush1.msra.mxu0 0.0
        %2547 = vmatprep.subr.mxu0 0.0
        %2548 = vmatpush1.msra.mxu0 0.0
        %2549 = vmatprep.subr.mxu0 0.0
        %2550 = vmatpush1.msra.mxu0 0.0
        %2551 = vmatprep.subr.mxu0 0.0
        %2552 = vmatpush1.msra.mxu0 0.0
        %2553 = vmatprep.subr.mxu0 0.0
        %2554 = vmatpush1.msra.mxu0 0.0
        %2555 = vmatprep.subr.mxu0 0.0
        %2556 = vmatpush1.msra.mxu0 0.0
        %2557 = vmatprep.subr.mxu0 0.0
        %2558 = vmatpush1.msra.mxu0 0.0
        %2559 = vmatprep.subr.mxu0 0.0
        %2560 = vmatpush1.msra.mxu0 0.0
        %2561 = vmatprep.subr.mxu0 0.0
        %2562 = vmatpush1.msra.mxu0 0.0
        %2563 = vmatprep.subr.mxu0 0.0
        %2564 = vmatpush1.msra.mxu0 0.0
        %2565 = vmatprep.subr.mxu0 0.0
        %2566 = vmatpush1.msra.mxu0 0.0
        %2567 = vmatprep.subr.mxu0 0.0
        %2568 = vmatpush1.msra.mxu0 0.0
        %2569 = vmatprep.subr.mxu0 0.0
        %2570 = vmatpush1.msra.mxu0 0.0
        %2571 = vmatprep.subr.mxu0 0.0
        %2572 = vmatpush1.msra.mxu0 0.0
        %2573 = vmatprep.mubr.f32.mxu0 0.0
        %2574 = vmatmul.mubr.f32.gmra.mrb[0].mxu0 %v2437
        %v2575 = vpop.f32.mrb[0].mxu0
        %v2576 = vadd.f32 0.0, %v2575
        %v2577 = vpop.f32.mrb[0].mxu0
        %2578 = vdwg.mxu0
        %2579 = vmatprep.subr.mxu0 0.0
        %2580 = vmatpush1.msra.mxu0 %v473
        %2581 = vmatprep.subr.mxu0 0.0
        %2582 = vmatpush1.msra.mxu0 %v474
        %2583 = vmatprep.subr.mxu0 0.0
        %2584 = vmatpush1.msra.mxu0 %v475
        %2585 = vmatprep.subr.mxu0 0.0
        %2586 = vmatpush1.msra.mxu0 %v476
        %2587 = vmatprep.subr.mxu0 0.0
        %2588 = vmatpush1.msra.mxu0 0.0
        %2589 = vmatprep.subr.mxu0 0.0
        %2590 = vmatpush1.msra.mxu0 0.0
        %2591 = vmatprep.subr.mxu0 0.0
        %2592 = vmatpush1.msra.mxu0 0.0
        %2593 = vmatprep.subr.mxu0 0.0
        %2594 = vmatpush1.msra.mxu0 0.0
        %2595 = vmatprep.subr.mxu0 0.0
        %2596 = vmatpush1.msra.mxu0 0.0
        %2597 = vmatprep.subr.mxu0 0.0
        %2598 = vmatpush1.msra.mxu0 0.0
        %2599 = vmatprep.subr.mxu0 0.0
        %2600 = vmatpush1.msra.mxu0 0.0
        %2601 = vmatprep.subr.mxu0 0.0
        %2602 = vmatpush1.msra.mxu0 0.0
        %2603 = vmatprep.subr.mxu0 0.0
        %2604 = vmatpush1.msra.mxu0 0.0
        %2605 = vmatprep.subr.mxu0 0.0
        %2606 = vmatpush1.msra.mxu0 0.0
        %2607 = vmatprep.subr.mxu0 0.0
        %2608 = vmatpush1.msra.mxu0 0.0
        %2609 = vmatprep.subr.mxu0 0.0
        %2610 = vmatpush1.msra.mxu0 0.0
        %2611 = vmatprep.subr.mxu0 0.0
        %2612 = vmatpush1.msra.mxu0 0.0
        %2613 = vmatprep.subr.mxu0 0.0
        %2614 = vmatpush1.msra.mxu0 0.0
        %2615 = vmatprep.subr.mxu0 0.0
        %2616 = vmatpush1.msra.mxu0 0.0
        %2617 = vmatprep.subr.mxu0 0.0
        %2618 = vmatpush1.msra.mxu0 0.0
        %2619 = vmatprep.subr.mxu0 0.0
        %2620 = vmatpush1.msra.mxu0 0.0
        %2621 = vmatprep.subr.mxu0 0.0
        %2622 = vmatpush1.msra.mxu0 0.0
        %2623 = vmatprep.subr.mxu0 0.0
        %2624 = vmatpush1.msra.mxu0 0.0
        %2625 = vmatprep.subr.mxu0 0.0
        %2626 = vmatpush1.msra.mxu0 0.0
        %2627 = vmatprep.subr.mxu0 0.0
        %2628 = vmatpush1.msra.mxu0 0.0
        %2629 = vmatprep.subr.mxu0 0.0
        %2630 = vmatpush1.msra.mxu0 0.0
        %2631 = vmatprep.subr.mxu0 0.0
        %2632 = vmatpush1.msra.mxu0 0.0
        %2633 = vmatprep.subr.mxu0 0.0
        %2634 = vmatpush1.msra.mxu0 0.0
        %2635 = vmatprep.subr.mxu0 0.0
        %2636 = vmatpush1.msra.mxu0 0.0
        %2637 = vmatprep.subr.mxu0 0.0
        %2638 = vmatpush1.msra.mxu0 0.0
        %2639 = vmatprep.subr.mxu0 0.0
        %2640 = vmatpush1.msra.mxu0 0.0
        %2641 = vmatprep.subr.mxu0 0.0
        %2642 = vmatpush1.msra.mxu0 0.0
        %2643 = vmatprep.mubr.f32.mxu0 0.0
        %2644 = vmatmul.mubr.f32.gmra.mrb[0].mxu0 %v2437
        %v2645 = vpop.f32.mrb[0].mxu0
        %v2646 = vadd.f32 %v626, %v2645
        %v2647 = vpop.f32.mrb[0].mxu0
        %2648 = vdwg.mxu0
        %v2649 = vld [vmem:[%s404 + $0x7] sm:$0x1]
        %v2650 = vld [vmem:[%s404 + $0x17] sm:$0x1]
        %v2652 = vrot.slane %v2506, 1
        %v2655 = vadd.f32 %v2649, %v2506
        %v2656 = vadd.f32 %v2650, %v2652
        %v2657 = vxor.u32 %v2655, 2147483648
        %v2658 = vxor.u32 %v2656, 2147483648
        %v2659 = vmul.f32 %v2657, 1.442695
        %v2660 = vpow.pop %v2659
        %v2661 = vmul.f32 %v2658, 1.442695
        %v2662 = vpow.pop %v2661
        %v2663 = vadd.f32 %v2660, 1.0
        %v2664 = vadd.f32 %v2662, 1.0
        %v2665 = vrcp.pop %v2663
        %v2666 = vmul.f32 1.0, %v2665
        %v2667 = vrcp.pop %v2664
        %v2668 = vmul.f32 1.0, %v2667
        %v2669 = vld [vmem:[%s411 + $0x7] sm:$0x1]
        %v2670 = vld [vmem:[%s411 + $0x17] sm:$0x1]
        %v2672 = vrot.slane %v2576, 1
        %v2675 = vadd.f32 %v2669, %v2576
        %v2676 = vadd.f32 %v2670, %v2672
        %v2677 = vxor.u32 %v2675, 2147483648
        %v2678 = vxor.u32 %v2676, 2147483648
        %v2679 = vmul.f32 %v2677, 1.442695
        %v2680 = vpow.pop %v2679
        %v2681 = vmul.f32 %v2678, 1.442695
        %v2682 = vpow.pop %v2681
        %v2683 = vadd.f32 %v2680, 1.0
        %v2684 = vadd.f32 %v2682, 1.0
        %v2685 = vrcp.pop %v2683
        %v2686 = vmul.f32 1.0, %v2685
        %v2687 = vrcp.pop %v2684
        %v2688 = vmul.f32 1.0, %v2687
        %v2689 = vld [vmem:[%s418 + $0x7] sm:$0x1]
        %v2690 = vld [vmem:[%s418 + $0x17] sm:$0x1]
        %v2692 = vrot.slane %v2646, 1
        %v2695 = vmul.f32 %v2666, %v2646
        %v2696 = vmul.f32 %v2668, %v2692
        %v2697 = vadd.f32 %v2689, %v2695
        %v2698 = vadd.f32 %v2690, %v2696
        %v2699 = vtanh.pop %v2697
        %v2700 = vtanh.pop %v2698
        %v2701 = vsub.f32 1.0, %v2686
        %v2702 = vsub.f32 1.0, %v2688
        %v2703 = vmul.f32 %v2701, %v2699
        %v2704 = vmul.f32 %v2702, %v2700
        %v2705 = vmul.f32 %v2686, %v2429
        %v2706 = vmul.f32 %v2688, %v2430
        %v2707 = vadd.f32 %v2703, %v2705
        %v2708 = vadd.f32 %v2704, %v2706
        %2709 = vst.msk [vmem:[%s453 + $0x7] sm:$0x1] %vm761, %v2707
        %2710 = vst.msk [vmem:[%s453 + $0x17] sm:$0x1] %vm761, %v2708
        %v2713 = vrot.slane %v2708, 7
        %v2714 = vsel %vm767, %v2713, %v2707
        %v2715 = vsel %vm478, %v2714, 0
        %2717 = vmatprep.subr.mxu0 0.0
        %2718 = vmatpush1.msra.mxu0 %v465
        %2719 = vmatprep.subr.mxu0 0.0
        %2720 = vmatpush1.msra.mxu0 %v466
        %2721 = vmatprep.subr.mxu0 0.0
        %2722 = vmatpush1.msra.mxu0 %v467
        %2723 = vmatprep.subr.mxu0 0.0
        %2724 = vmatpush1.msra.mxu0 %v468
        %2725 = vmatprep.subr.mxu0 0.0
        %2726 = vmatpush1.msra.mxu0 0.0
        %2727 = vmatprep.subr.mxu0 0.0
        %2728 = vmatpush1.msra.mxu0 0.0
        %2729 = vmatprep.subr.mxu0 0.0
        %2730 = vmatpush1.msra.mxu0 0.0
        %2731 = vmatprep.subr.mxu0 0.0
        %2732 = vmatpush1.msra.mxu0 0.0
        %2733 = vmatprep.subr.mxu0 0.0
        %2734 = vmatpush1.msra.mxu0 0.0
        %2735 = vmatprep.subr.mxu0 0.0
        %2736 = vmatpush1.msra.mxu0 0.0
        %2737 = vmatprep.subr.mxu0 0.0
        %2738 = vmatpush1.msra.mxu0 0.0
        %2739 = vmatprep.subr.mxu0 0.0
        %2740 = vmatpush1.msra.mxu0 0.0
        %2741 = vmatprep.subr.mxu0 0.0
        %2742 = vmatpush1.msra.mxu0 0.0
        %2743 = vmatprep.subr.mxu0 0.0
        %2744 = vmatpush1.msra.mxu0 0.0
        %2745 = vmatprep.subr.mxu0 0.0
        %2746 = vmatpush1.msra.mxu0 0.0
        %2747 = vmatprep.subr.mxu0 0.0
        %2748 = vmatpush1.msra.mxu0 0.0
        %2749 = vmatprep.subr.mxu0 0.0
        %2750 = vmatpush1.msra.mxu0 0.0
        %2751 = vmatprep.subr.mxu0 0.0
        %2752 = vmatpush1.msra.mxu0 0.0
        %2753 = vmatprep.subr.mxu0 0.0
        %2754 = vmatpush1.msra.mxu0 0.0
        %2755 = vmatprep.subr.mxu0 0.0
        %2756 = vmatpush1.msra.mxu0 0.0
        %2757 = vmatprep.subr.mxu0 0.0
        %2758 = vmatpush1.msra.mxu0 0.0
        %2759 = vmatprep.subr.mxu0 0.0
        %2760 = vmatpush1.msra.mxu0 0.0
        %2761 = vmatprep.subr.mxu0 0.0
        %2762 = vmatpush1.msra.mxu0 0.0
        %2763 = vmatprep.subr.mxu0 0.0
        %2764 = vmatpush1.msra.mxu0 0.0
        %2765 = vmatprep.subr.mxu0 0.0
        %2766 = vmatpush1.msra.mxu0 0.0
        %2767 = vmatprep.subr.mxu0 0.0
        %2768 = vmatpush1.msra.mxu0 0.0
        %2769 = vmatprep.subr.mxu0 0.0
        %2770 = vmatpush1.msra.mxu0 0.0
        %2771 = vmatprep.subr.mxu0 0.0
        %2772 = vmatpush1.msra.mxu0 0.0
        %2773 = vmatprep.subr.mxu0 0.0
        %2774 = vmatpush1.msra.mxu0 0.0
        %2775 = vmatprep.subr.mxu0 0.0
        %2776 = vmatpush1.msra.mxu0 0.0
        %2777 = vmatprep.subr.mxu0 0.0
        %2778 = vmatpush1.msra.mxu0 0.0
        %2779 = vmatprep.subr.mxu0 0.0
        %2780 = vmatpush1.msra.mxu0 0.0
        %2781 = vmatprep.mubr.f32.mxu0 0.0
        %2782 = vmatmul.mubr.f32.gmra.mrb[0].mxu0 %v2715
        %v2783 = vpop.f32.mrb[0].mxu0
        %v2784 = vadd.f32 0.0, %v2783
        %v2785 = vpop.f32.mrb[0].mxu0
        %2786 = vdwg.mxu0
        %2787 = vmatprep.subr.mxu0 0.0
        %2788 = vmatpush1.msra.mxu0 %v469
        %2789 = vmatprep.subr.mxu0 0.0
        %2790 = vmatpush1.msra.mxu0 %v470
        %2791 = vmatprep.subr.mxu0 0.0
        %2792 = vmatpush1.msra.mxu0 %v471
        %2793 = vmatprep.subr.mxu0 0.0
        %2794 = vmatpush1.msra.mxu0 %v472
        %2795 = vmatprep.subr.mxu0 0.0
        %2796 = vmatpush1.msra.mxu0 0.0
        %2797 = vmatprep.subr.mxu0 0.0
        %2798 = vmatpush1.msra.mxu0 0.0
        %2799 = vmatprep.subr.mxu0 0.0
        %2800 = vmatpush1.msra.mxu0 0.0
        %2801 = vmatprep.subr.mxu0 0.0
        %2802 = vmatpush1.msra.mxu0 0.0
        %2803 = vmatprep.subr.mxu0 0.0
        %2804 = vmatpush1.msra.mxu0 0.0
        %2805 = vmatprep.subr.mxu0 0.0
        %2806 = vmatpush1.msra.mxu0 0.0
        %2807 = vmatprep.subr.mxu0 0.0
        %2808 = vmatpush1.msra.mxu0 0.0
        %2809 = vmatprep.subr.mxu0 0.0
        %2810 = vmatpush1.msra.mxu0 0.0
        %2811 = vmatprep.subr.mxu0 0.0
        %2812 = vmatpush1.msra.mxu0 0.0
        %2813 = vmatprep.subr.mxu0 0.0
        %2814 = vmatpush1.msra.mxu0 0.0
        %2815 = vmatprep.subr.mxu0 0.0
        %2816 = vmatpush1.msra.mxu0 0.0
        %2817 = vmatprep.subr.mxu0 0.0
        %2818 = vmatpush1.msra.mxu0 0.0
        %2819 = vmatprep.subr.mxu0 0.0
        %2820 = vmatpush1.msra.mxu0 0.0
        %2821 = vmatprep.subr.mxu0 0.0
        %2822 = vmatpush1.msra.mxu0 0.0
        %2823 = vmatprep.subr.mxu0 0.0
        %2824 = vmatpush1.msra.mxu0 0.0
        %2825 = vmatprep.subr.mxu0 0.0
        %2826 = vmatpush1.msra.mxu0 0.0
        %2827 = vmatprep.subr.mxu0 0.0
        %2828 = vmatpush1.msra.mxu0 0.0
        %2829 = vmatprep.subr.mxu0 0.0
        %2830 = vmatpush1.msra.mxu0 0.0
        %2831 = vmatprep.subr.mxu0 0.0
        %2832 = vmatpush1.msra.mxu0 0.0
        %2833 = vmatprep.subr.mxu0 0.0
        %2834 = vmatpush1.msra.mxu0 0.0
        %2835 = vmatprep.subr.mxu0 0.0
        %2836 = vmatpush1.msra.mxu0 0.0
        %2837 = vmatprep.subr.mxu0 0.0
        %2838 = vmatpush1.msra.mxu0 0.0
        %2839 = vmatprep.subr.mxu0 0.0
        %2840 = vmatpush1.msra.mxu0 0.0
        %2841 = vmatprep.subr.mxu0 0.0
        %2842 = vmatpush1.msra.mxu0 0.0
        %2843 = vmatprep.subr.mxu0 0.0
        %2844 = vmatpush1.msra.mxu0 0.0
        %2845 = vmatprep.subr.mxu0 0.0
        %2846 = vmatpush1.msra.mxu0 0.0
        %2847 = vmatprep.subr.mxu0 0.0
        %2848 = vmatpush1.msra.mxu0 0.0
        %2849 = vmatprep.subr.mxu0 0.0
        %2850 = vmatpush1.msra.mxu0 0.0
        %2851 = vmatprep.mubr.f32.mxu0 0.0
        %2852 = vmatmul.mubr.f32.gmra.mrb[0].mxu0 %v2715
        %v2853 = vpop.f32.mrb[0].mxu0
        %v2854 = vadd.f32 0.0, %v2853
        %v2855 = vpop.f32.mrb[0].mxu0
        %2856 = vdwg.mxu0
        %2857 = vmatprep.subr.mxu0 0.0
        %2858 = vmatpush1.msra.mxu0 %v473
        %2859 = vmatprep.subr.mxu0 0.0
        %2860 = vmatpush1.msra.mxu0 %v474
        %2861 = vmatprep.subr.mxu0 0.0
        %2862 = vmatpush1.msra.mxu0 %v475
        %2863 = vmatprep.subr.mxu0 0.0
        %2864 = vmatpush1.msra.mxu0 %v476
        %2865 = vmatprep.subr.mxu0 0.0
        %2866 = vmatpush1.msra.mxu0 0.0
        %2867 = vmatprep.subr.mxu0 0.0
        %2868 = vmatpush1.msra.mxu0 0.0
        %2869 = vmatprep.subr.mxu0 0.0
        %2870 = vmatpush1.msra.mxu0 0.0
        %2871 = vmatprep.subr.mxu0 0.0
        %2872 = vmatpush1.msra.mxu0 0.0
        %2873 = vmatprep.subr.mxu0 0.0
        %2874 = vmatpush1.msra.mxu0 0.0
        %2875 = vmatprep.subr.mxu0 0.0
        %2876 = vmatpush1.msra.mxu0 0.0
        %2877 = vmatprep.subr.mxu0 0.0
        %2878 = vmatpush1.msra.mxu0 0.0
        %2879 = vmatprep.subr.mxu0 0.0
        %2880 = vmatpush1.msra.mxu0 0.0
        %2881 = vmatprep.subr.mxu0 0.0
        %2882 = vmatpush1.msra.mxu0 0.0
        %2883 = vmatprep.subr.mxu0 0.0
        %2884 = vmatpush1.msra.mxu0 0.0
        %2885 = vmatprep.subr.mxu0 0.0
        %2886 = vmatpush1.msra.mxu0 0.0
        %2887 = vmatprep.subr.mxu0 0.0
        %2888 = vmatpush1.msra.mxu0 0.0
        %2889 = vmatprep.subr.mxu0 0.0
        %2890 = vmatpush1.msra.mxu0 0.0
        %2891 = vmatprep.subr.mxu0 0.0
        %2892 = vmatpush1.msra.mxu0 0.0
        %2893 = vmatprep.subr.mxu0 0.0
        %2894 = vmatpush1.msra.mxu0 0.0
        %2895 = vmatprep.subr.mxu0 0.0
        %2896 = vmatpush1.msra.mxu0 0.0
        %2897 = vmatprep.subr.mxu0 0.0
        %2898 = vmatpush1.msra.mxu0 0.0
        %2899 = vmatprep.subr.mxu0 0.0
        %2900 = vmatpush1.msra.mxu0 0.0
        %2901 = vmatprep.subr.mxu0 0.0
        %2902 = vmatpush1.msra.mxu0 0.0
        %2903 = vmatprep.subr.mxu0 0.0
        %2904 = vmatpush1.msra.mxu0 0.0
        %2905 = vmatprep.subr.mxu0 0.0
        %2906 = vmatpush1.msra.mxu0 0.0
        %2907 = vmatprep.subr.mxu0 0.0
        %2908 = vmatpush1.msra.mxu0 0.0
        %2909 = vmatprep.subr.mxu0 0.0
        %2910 = vmatpush1.msra.mxu0 0.0
        %2911 = vmatprep.subr.mxu0 0.0
        %2912 = vmatpush1.msra.mxu0 0.0
        %2913 = vmatprep.subr.mxu0 0.0
        %2914 = vmatpush1.msra.mxu0 0.0
        %2915 = vmatprep.subr.mxu0 0.0
        %2916 = vmatpush1.msra.mxu0 0.0
        %2917 = vmatprep.subr.mxu0 0.0
        %2918 = vmatpush1.msra.mxu0 0.0
        %2919 = vmatprep.subr.mxu0 0.0
        %2920 = vmatpush1.msra.mxu0 0.0
        %2921 = vmatprep.mubr.f32.mxu0 0.0
        %2922 = vmatmul.mubr.f32.gmra.mrb[0].mxu0 %v2715
        %v2923 = vpop.f32.mrb[0].mxu0
        %v2924 = vadd.f32 %v626, %v2923
        %v2925 = vpop.f32.mrb[0].mxu0
        %2926 = vdwg.mxu0
        %v2927 = vld [vmem:[%s404 + $0x8] sm:$0x1]
        %v2928 = vld [vmem:[%s404 + $0x18] sm:$0x1]
        %v2930 = vrot.slane %v2784, 1
        %v2933 = vadd.f32 %v2927, %v2784
        %v2934 = vadd.f32 %v2928, %v2930
        %v2935 = vxor.u32 %v2933, 2147483648
        %v2936 = vxor.u32 %v2934, 2147483648
        %v2937 = vmul.f32 %v2935, 1.442695
        %v2938 = vpow.pop %v2937
        %v2939 = vmul.f32 %v2936, 1.442695
        %v2940 = vpow.pop %v2939
        %v2941 = vadd.f32 %v2938, 1.0
        %v2942 = vadd.f32 %v2940, 1.0
        %v2943 = vrcp.pop %v2941
        %v2944 = vmul.f32 1.0, %v2943
        %v2945 = vrcp.pop %v2942
        %v2946 = vmul.f32 1.0, %v2945
        %v2947 = vld [vmem:[%s411 + $0x8] sm:$0x1]
        %v2948 = vld [vmem:[%s411 + $0x18] sm:$0x1]
        %v2950 = vrot.slane %v2854, 1
        %v2953 = vadd.f32 %v2947, %v2854
        %v2954 = vadd.f32 %v2948, %v2950
        %v2955 = vxor.u32 %v2953, 2147483648
        %v2956 = vxor.u32 %v2954, 2147483648
        %v2957 = vmul.f32 %v2955, 1.442695
        %v2958 = vpow.pop %v2957
        %v2959 = vmul.f32 %v2956, 1.442695
        %v2960 = vpow.pop %v2959
        %v2961 = vadd.f32 %v2958, 1.0
        %v2962 = vadd.f32 %v2960, 1.0
        %v2963 = vrcp.pop %v2961
        %v2964 = vmul.f32 1.0, %v2963
        %v2965 = vrcp.pop %v2962
        %v2966 = vmul.f32 1.0, %v2965
        %v2967 = vld [vmem:[%s418 + $0x8] sm:$0x1]
        %v2968 = vld [vmem:[%s418 + $0x18] sm:$0x1]
        %v2970 = vrot.slane %v2924, 1
        %v2973 = vmul.f32 %v2944, %v2924
        %v2974 = vmul.f32 %v2946, %v2970
        %v2975 = vadd.f32 %v2967, %v2973
        %v2976 = vadd.f32 %v2968, %v2974
        %v2977 = vtanh.pop %v2975
        %v2978 = vtanh.pop %v2976
        %v2979 = vsub.f32 1.0, %v2964
        %v2980 = vsub.f32 1.0, %v2966
        %v2981 = vmul.f32 %v2979, %v2977
        %v2982 = vmul.f32 %v2980, %v2978
        %v2983 = vmul.f32 %v2964, %v2707
        %v2984 = vmul.f32 %v2966, %v2708
        %v2985 = vadd.f32 %v2981, %v2983
        %v2986 = vadd.f32 %v2982, %v2984
        %2987 = vst.msk [vmem:[%s453 + $0x8] sm:$0x1] %vm761, %v2985
        %2988 = vst.msk [vmem:[%s453 + $0x18] sm:$0x1] %vm761, %v2986
        %v2991 = vrot.slane %v2986, 7
        %v2992 = vsel %vm767, %v2991, %v2985
        %v2993 = vsel %vm478, %v2992, 0
        %2995 = vmatprep.subr.mxu0 0.0
        %2996 = vmatpush1.msra.mxu0 %v465
        %2997 = vmatprep.subr.mxu0 0.0
        %2998 = vmatpush1.msra.mxu0 %v466
        %2999 = vmatprep.subr.mxu0 0.0
        %3000 = vmatpush1.msra.mxu0 %v467
        %3001 = vmatprep.subr.mxu0 0.0
        %3002 = vmatpush1.msra.mxu0 %v468
        %3003 = vmatprep.subr.mxu0 0.0
        %3004 = vmatpush1.msra.mxu0 0.0
        %3005 = vmatprep.subr.mxu0 0.0
        %3006 = vmatpush1.msra.mxu0 0.0
        %3007 = vmatprep.subr.mxu0 0.0
        %3008 = vmatpush1.msra.mxu0 0.0
        %3009 = vmatprep.subr.mxu0 0.0
        %3010 = vmatpush1.msra.mxu0 0.0
        %3011 = vmatprep.subr.mxu0 0.0
        %3012 = vmatpush1.msra.mxu0 0.0
        %3013 = vmatprep.subr.mxu0 0.0
        %3014 = vmatpush1.msra.mxu0 0.0
        %3015 = vmatprep.subr.mxu0 0.0
        %3016 = vmatpush1.msra.mxu0 0.0
        %3017 = vmatprep.subr.mxu0 0.0
        %3018 = vmatpush1.msra.mxu0 0.0
        %3019 = vmatprep.subr.mxu0 0.0
        %3020 = vmatpush1.msra.mxu0 0.0
        %3021 = vmatprep.subr.mxu0 0.0
        %3022 = vmatpush1.msra.mxu0 0.0
        %3023 = vmatprep.subr.mxu0 0.0
        %3024 = vmatpush1.msra.mxu0 0.0
        %3025 = vmatprep.subr.mxu0 0.0
        %3026 = vmatpush1.msra.mxu0 0.0
        %3027 = vmatprep.subr.mxu0 0.0
        %3028 = vmatpush1.msra.mxu0 0.0
        %3029 = vmatprep.subr.mxu0 0.0
        %3030 = vmatpush1.msra.mxu0 0.0
        %3031 = vmatprep.subr.mxu0 0.0
        %3032 = vmatpush1.msra.mxu0 0.0
        %3033 = vmatprep.subr.mxu0 0.0
        %3034 = vmatpush1.msra.mxu0 0.0
        %3035 = vmatprep.subr.mxu0 0.0
        %3036 = vmatpush1.msra.mxu0 0.0
        %3037 = vmatprep.subr.mxu0 0.0
        %3038 = vmatpush1.msra.mxu0 0.0
        %3039 = vmatprep.subr.mxu0 0.0
        %3040 = vmatpush1.msra.mxu0 0.0
        %3041 = vmatprep.subr.mxu0 0.0
        %3042 = vmatpush1.msra.mxu0 0.0
        %3043 = vmatprep.subr.mxu0 0.0
        %3044 = vmatpush1.msra.mxu0 0.0
        %3045 = vmatprep.subr.mxu0 0.0
        %3046 = vmatpush1.msra.mxu0 0.0
        %3047 = vmatprep.subr.mxu0 0.0
        %3048 = vmatpush1.msra.mxu0 0.0
        %3049 = vmatprep.subr.mxu0 0.0
        %3050 = vmatpush1.msra.mxu0 0.0
        %3051 = vmatprep.subr.mxu0 0.0
        %3052 = vmatpush1.msra.mxu0 0.0
        %3053 = vmatprep.subr.mxu0 0.0
        %3054 = vmatpush1.msra.mxu0 0.0
        %3055 = vmatprep.subr.mxu0 0.0
        %3056 = vmatpush1.msra.mxu0 0.0
        %3057 = vmatprep.subr.mxu0 0.0
        %3058 = vmatpush1.msra.mxu0 0.0
        %3059 = vmatprep.mubr.f32.mxu0 0.0
        %3060 = vmatmul.mubr.f32.gmra.mrb[0].mxu0 %v2993
        %v3061 = vpop.f32.mrb[0].mxu0
        %v3062 = vadd.f32 0.0, %v3061
        %v3063 = vpop.f32.mrb[0].mxu0
        %3064 = vdwg.mxu0
        %3065 = vmatprep.subr.mxu0 0.0
        %3066 = vmatpush1.msra.mxu0 %v469
        %3067 = vmatprep.subr.mxu0 0.0
        %3068 = vmatpush1.msra.mxu0 %v470
        %3069 = vmatprep.subr.mxu0 0.0
        %3070 = vmatpush1.msra.mxu0 %v471
        %3071 = vmatprep.subr.mxu0 0.0
        %3072 = vmatpush1.msra.mxu0 %v472
        %3073 = vmatprep.subr.mxu0 0.0
        %3074 = vmatpush1.msra.mxu0 0.0
        %3075 = vmatprep.subr.mxu0 0.0
        %3076 = vmatpush1.msra.mxu0 0.0
        %3077 = vmatprep.subr.mxu0 0.0
        %3078 = vmatpush1.msra.mxu0 0.0
        %3079 = vmatprep.subr.mxu0 0.0
        %3080 = vmatpush1.msra.mxu0 0.0
        %3081 = vmatprep.subr.mxu0 0.0
        %3082 = vmatpush1.msra.mxu0 0.0
        %3083 = vmatprep.subr.mxu0 0.0
        %3084 = vmatpush1.msra.mxu0 0.0
        %3085 = vmatprep.subr.mxu0 0.0
        %3086 = vmatpush1.msra.mxu0 0.0
        %3087 = vmatprep.subr.mxu0 0.0
        %3088 = vmatpush1.msra.mxu0 0.0
        %3089 = vmatprep.subr.mxu0 0.0
        %3090 = vmatpush1.msra.mxu0 0.0
        %3091 = vmatprep.subr.mxu0 0.0
        %3092 = vmatpush1.msra.mxu0 0.0
        %3093 = vmatprep.subr.mxu0 0.0
        %3094 = vmatpush1.msra.mxu0 0.0
        %3095 = vmatprep.subr.mxu0 0.0
        %3096 = vmatpush1.msra.mxu0 0.0
        %3097 = vmatprep.subr.mxu0 0.0
        %3098 = vmatpush1.msra.mxu0 0.0
        %3099 = vmatprep.subr.mxu0 0.0
        %3100 = vmatpush1.msra.mxu0 0.0
        %3101 = vmatprep.subr.mxu0 0.0
        %3102 = vmatpush1.msra.mxu0 0.0
        %3103 = vmatprep.subr.mxu0 0.0
        %3104 = vmatpush1.msra.mxu0 0.0
        %3105 = vmatprep.subr.mxu0 0.0
        %3106 = vmatpush1.msra.mxu0 0.0
        %3107 = vmatprep.subr.mxu0 0.0
        %3108 = vmatpush1.msra.mxu0 0.0
        %3109 = vmatprep.subr.mxu0 0.0
        %3110 = vmatpush1.msra.mxu0 0.0
        %3111 = vmatprep.subr.mxu0 0.0
        %3112 = vmatpush1.msra.mxu0 0.0
        %3113 = vmatprep.subr.mxu0 0.0
        %3114 = vmatpush1.msra.mxu0 0.0
        %3115 = vmatprep.subr.mxu0 0.0
        %3116 = vmatpush1.msra.mxu0 0.0
        %3117 = vmatprep.subr.mxu0 0.0
        %3118 = vmatpush1.msra.mxu0 0.0
        %3119 = vmatprep.subr.mxu0 0.0
        %3120 = vmatpush1.msra.mxu0 0.0
        %3121 = vmatprep.subr.mxu0 0.0
        %3122 = vmatpush1.msra.mxu0 0.0
        %3123 = vmatprep.subr.mxu0 0.0
        %3124 = vmatpush1.msra.mxu0 0.0
        %3125 = vmatprep.subr.mxu0 0.0
        %3126 = vmatpush1.msra.mxu0 0.0
        %3127 = vmatprep.subr.mxu0 0.0
        %3128 = vmatpush1.msra.mxu0 0.0
        %3129 = vmatprep.mubr.f32.mxu0 0.0
        %3130 = vmatmul.mubr.f32.gmra.mrb[0].mxu0 %v2993
        %v3131 = vpop.f32.mrb[0].mxu0
        %v3132 = vadd.f32 0.0, %v3131
        %v3133 = vpop.f32.mrb[0].mxu0
        %3134 = vdwg.mxu0
        %3135 = vmatprep.subr.mxu0 0.0
        %3136 = vmatpush1.msra.mxu0 %v473
        %3137 = vmatprep.subr.mxu0 0.0
        %3138 = vmatpush1.msra.mxu0 %v474
        %3139 = vmatprep.subr.mxu0 0.0
        %3140 = vmatpush1.msra.mxu0 %v475
        %3141 = vmatprep.subr.mxu0 0.0
        %3142 = vmatpush1.msra.mxu0 %v476
        %3143 = vmatprep.subr.mxu0 0.0
        %3144 = vmatpush1.msra.mxu0 0.0
        %3145 = vmatprep.subr.mxu0 0.0
        %3146 = vmatpush1.msra.mxu0 0.0
        %3147 = vmatprep.subr.mxu0 0.0
        %3148 = vmatpush1.msra.mxu0 0.0
        %3149 = vmatprep.subr.mxu0 0.0
        %3150 = vmatpush1.msra.mxu0 0.0
        %3151 = vmatprep.subr.mxu0 0.0
        %3152 = vmatpush1.msra.mxu0 0.0
        %3153 = vmatprep.subr.mxu0 0.0
        %3154 = vmatpush1.msra.mxu0 0.0
        %3155 = vmatprep.subr.mxu0 0.0
        %3156 = vmatpush1.msra.mxu0 0.0
        %3157 = vmatprep.subr.mxu0 0.0
        %3158 = vmatpush1.msra.mxu0 0.0
        %3159 = vmatprep.subr.mxu0 0.0
        %3160 = vmatpush1.msra.mxu0 0.0
        %3161 = vmatprep.subr.mxu0 0.0
        %3162 = vmatpush1.msra.mxu0 0.0
        %3163 = vmatprep.subr.mxu0 0.0
        %3164 = vmatpush1.msra.mxu0 0.0
        %3165 = vmatprep.subr.mxu0 0.0
        %3166 = vmatpush1.msra.mxu0 0.0
        %3167 = vmatprep.subr.mxu0 0.0
        %3168 = vmatpush1.msra.mxu0 0.0
        %3169 = vmatprep.subr.mxu0 0.0
        %3170 = vmatpush1.msra.mxu0 0.0
        %3171 = vmatprep.subr.mxu0 0.0
        %3172 = vmatpush1.msra.mxu0 0.0
        %3173 = vmatprep.subr.mxu0 0.0
        %3174 = vmatpush1.msra.mxu0 0.0
        %3175 = vmatprep.subr.mxu0 0.0
        %3176 = vmatpush1.msra.mxu0 0.0
        %3177 = vmatprep.subr.mxu0 0.0
        %3178 = vmatpush1.msra.mxu0 0.0
        %3179 = vmatprep.subr.mxu0 0.0
        %3180 = vmatpush1.msra.mxu0 0.0
        %3181 = vmatprep.subr.mxu0 0.0
        %3182 = vmatpush1.msra.mxu0 0.0
        %3183 = vmatprep.subr.mxu0 0.0
        %3184 = vmatpush1.msra.mxu0 0.0
        %3185 = vmatprep.subr.mxu0 0.0
        %3186 = vmatpush1.msra.mxu0 0.0
        %3187 = vmatprep.subr.mxu0 0.0
        %3188 = vmatpush1.msra.mxu0 0.0
        %3189 = vmatprep.subr.mxu0 0.0
        %3190 = vmatpush1.msra.mxu0 0.0
        %3191 = vmatprep.subr.mxu0 0.0
        %3192 = vmatpush1.msra.mxu0 0.0
        %3193 = vmatprep.subr.mxu0 0.0
        %3194 = vmatpush1.msra.mxu0 0.0
        %3195 = vmatprep.subr.mxu0 0.0
        %3196 = vmatpush1.msra.mxu0 0.0
        %3197 = vmatprep.subr.mxu0 0.0
        %3198 = vmatpush1.msra.mxu0 0.0
        %3199 = vmatprep.mubr.f32.mxu0 0.0
        %3200 = vmatmul.mubr.f32.gmra.mrb[0].mxu0 %v2993
        %v3201 = vpop.f32.mrb[0].mxu0
        %v3202 = vadd.f32 %v626, %v3201
        %v3203 = vpop.f32.mrb[0].mxu0
        %3204 = vdwg.mxu0
        %v3205 = vld [vmem:[%s404 + $0x9] sm:$0x1]
        %v3206 = vld [vmem:[%s404 + $0x19] sm:$0x1]
        %v3208 = vrot.slane %v3062, 1
        %v3211 = vadd.f32 %v3205, %v3062
        %v3212 = vadd.f32 %v3206, %v3208
        %v3213 = vxor.u32 %v3211, 2147483648
        %v3214 = vxor.u32 %v3212, 2147483648
        %v3215 = vmul.f32 %v3213, 1.442695
        %v3216 = vpow.pop %v3215
        %v3217 = vmul.f32 %v3214, 1.442695
        %v3218 = vpow.pop %v3217
        %v3219 = vadd.f32 %v3216, 1.0
        %v3220 = vadd.f32 %v3218, 1.0
        %v3221 = vrcp.pop %v3219
        %v3222 = vmul.f32 1.0, %v3221
        %v3223 = vrcp.pop %v3220
        %v3224 = vmul.f32 1.0, %v3223
        %v3225 = vld [vmem:[%s411 + $0x9] sm:$0x1]
        %v3226 = vld [vmem:[%s411 + $0x19] sm:$0x1]
        %v3228 = vrot.slane %v3132, 1
        %v3231 = vadd.f32 %v3225, %v3132
        %v3232 = vadd.f32 %v3226, %v3228
        %v3233 = vxor.u32 %v3231, 2147483648
        %v3234 = vxor.u32 %v3232, 2147483648
        %v3235 = vmul.f32 %v3233, 1.442695
        %v3236 = vpow.pop %v3235
        %v3237 = vmul.f32 %v3234, 1.442695
        %v3238 = vpow.pop %v3237
        %v3239 = vadd.f32 %v3236, 1.0
        %v3240 = vadd.f32 %v3238, 1.0
        %v3241 = vrcp.pop %v3239
        %v3242 = vmul.f32 1.0, %v3241
        %v3243 = vrcp.pop %v3240
        %v3244 = vmul.f32 1.0, %v3243
        %v3245 = vld [vmem:[%s418 + $0x9] sm:$0x1]
        %v3246 = vld [vmem:[%s418 + $0x19] sm:$0x1]
        %v3248 = vrot.slane %v3202, 1
        %v3251 = vmul.f32 %v3222, %v3202
        %v3252 = vmul.f32 %v3224, %v3248
        %v3253 = vadd.f32 %v3245, %v3251
        %v3254 = vadd.f32 %v3246, %v3252
        %v3255 = vtanh.pop %v3253
        %v3256 = vtanh.pop %v3254
        %v3257 = vsub.f32 1.0, %v3242
        %v3258 = vsub.f32 1.0, %v3244
        %v3259 = vmul.f32 %v3257, %v3255
        %v3260 = vmul.f32 %v3258, %v3256
        %v3261 = vmul.f32 %v3242, %v2985
        %v3262 = vmul.f32 %v3244, %v2986
        %v3263 = vadd.f32 %v3259, %v3261
        %v3264 = vadd.f32 %v3260, %v3262
        %3265 = vst.msk [vmem:[%s453 + $0x9] sm:$0x1] %vm761, %v3263
        %3266 = vst.msk [vmem:[%s453 + $0x19] sm:$0x1] %vm761, %v3264
        %v3269 = vrot.slane %v3264, 7
        %v3270 = vsel %vm767, %v3269, %v3263
        %v3271 = vsel %vm478, %v3270, 0
        %3273 = vmatprep.subr.mxu0 0.0
        %3274 = vmatpush1.msra.mxu0 %v465
        %3275 = vmatprep.subr.mxu0 0.0
        %3276 = vmatpush1.msra.mxu0 %v466
        %3277 = vmatprep.subr.mxu0 0.0
        %3278 = vmatpush1.msra.mxu0 %v467
        %3279 = vmatprep.subr.mxu0 0.0
        %3280 = vmatpush1.msra.mxu0 %v468
        %3281 = vmatprep.subr.mxu0 0.0
        %3282 = vmatpush1.msra.mxu0 0.0
        %3283 = vmatprep.subr.mxu0 0.0
        %3284 = vmatpush1.msra.mxu0 0.0
        %3285 = vmatprep.subr.mxu0 0.0
        %3286 = vmatpush1.msra.mxu0 0.0
        %3287 = vmatprep.subr.mxu0 0.0
        %3288 = vmatpush1.msra.mxu0 0.0
        %3289 = vmatprep.subr.mxu0 0.0
        %3290 = vmatpush1.msra.mxu0 0.0
        %3291 = vmatprep.subr.mxu0 0.0
        %3292 = vmatpush1.msra.mxu0 0.0
        %3293 = vmatprep.subr.mxu0 0.0
        %3294 = vmatpush1.msra.mxu0 0.0
        %3295 = vmatprep.subr.mxu0 0.0
        %3296 = vmatpush1.msra.mxu0 0.0
        %3297 = vmatprep.subr.mxu0 0.0
        %3298 = vmatpush1.msra.mxu0 0.0
        %3299 = vmatprep.subr.mxu0 0.0
        %3300 = vmatpush1.msra.mxu0 0.0
        %3301 = vmatprep.subr.mxu0 0.0
        %3302 = vmatpush1.msra.mxu0 0.0
        %3303 = vmatprep.subr.mxu0 0.0
        %3304 = vmatpush1.msra.mxu0 0.0
        %3305 = vmatprep.subr.mxu0 0.0
        %3306 = vmatpush1.msra.mxu0 0.0
        %3307 = vmatprep.subr.mxu0 0.0
        %3308 = vmatpush1.msra.mxu0 0.0
        %3309 = vmatprep.subr.mxu0 0.0
        %3310 = vmatpush1.msra.mxu0 0.0
        %3311 = vmatprep.subr.mxu0 0.0
        %3312 = vmatpush1.msra.mxu0 0.0
        %3313 = vmatprep.subr.mxu0 0.0
        %3314 = vmatpush1.msra.mxu0 0.0
        %3315 = vmatprep.subr.mxu0 0.0
        %3316 = vmatpush1.msra.mxu0 0.0
        %3317 = vmatprep.subr.mxu0 0.0
        %3318 = vmatpush1.msra.mxu0 0.0
        %3319 = vmatprep.subr.mxu0 0.0
        %3320 = vmatpush1.msra.mxu0 0.0
        %3321 = vmatprep.subr.mxu0 0.0
        %3322 = vmatpush1.msra.mxu0 0.0
        %3323 = vmatprep.subr.mxu0 0.0
        %3324 = vmatpush1.msra.mxu0 0.0
        %3325 = vmatprep.subr.mxu0 0.0
        %3326 = vmatpush1.msra.mxu0 0.0
        %3327 = vmatprep.subr.mxu0 0.0
        %3328 = vmatpush1.msra.mxu0 0.0
        %3329 = vmatprep.subr.mxu0 0.0
        %3330 = vmatpush1.msra.mxu0 0.0
        %3331 = vmatprep.subr.mxu0 0.0
        %3332 = vmatpush1.msra.mxu0 0.0
        %3333 = vmatprep.subr.mxu0 0.0
        %3334 = vmatpush1.msra.mxu0 0.0
        %3335 = vmatprep.subr.mxu0 0.0
        %3336 = vmatpush1.msra.mxu0 0.0
        %3337 = vmatprep.mubr.f32.mxu0 0.0
        %3338 = vmatmul.mubr.f32.gmra.mrb[0].mxu0 %v3271
        %v3339 = vpop.f32.mrb[0].mxu0
        %v3340 = vadd.f32 0.0, %v3339
        %v3341 = vpop.f32.mrb[0].mxu0
        %3342 = vdwg.mxu0
        %3343 = vmatprep.subr.mxu0 0.0
        %3344 = vmatpush1.msra.mxu0 %v469
        %3345 = vmatprep.subr.mxu0 0.0
        %3346 = vmatpush1.msra.mxu0 %v470
        %3347 = vmatprep.subr.mxu0 0.0
        %3348 = vmatpush1.msra.mxu0 %v471
        %3349 = vmatprep.subr.mxu0 0.0
        %3350 = vmatpush1.msra.mxu0 %v472
        %3351 = vmatprep.subr.mxu0 0.0
        %3352 = vmatpush1.msra.mxu0 0.0
        %3353 = vmatprep.subr.mxu0 0.0
        %3354 = vmatpush1.msra.mxu0 0.0
        %3355 = vmatprep.subr.mxu0 0.0
        %3356 = vmatpush1.msra.mxu0 0.0
        %3357 = vmatprep.subr.mxu0 0.0
        %3358 = vmatpush1.msra.mxu0 0.0
        %3359 = vmatprep.subr.mxu0 0.0
        %3360 = vmatpush1.msra.mxu0 0.0
        %3361 = vmatprep.subr.mxu0 0.0
        %3362 = vmatpush1.msra.mxu0 0.0
        %3363 = vmatprep.subr.mxu0 0.0
        %3364 = vmatpush1.msra.mxu0 0.0
        %3365 = vmatprep.subr.mxu0 0.0
        %3366 = vmatpush1.msra.mxu0 0.0
        %3367 = vmatprep.subr.mxu0 0.0
        %3368 = vmatpush1.msra.mxu0 0.0
        %3369 = vmatprep.subr.mxu0 0.0
        %3370 = vmatpush1.msra.mxu0 0.0
        %3371 = vmatprep.subr.mxu0 0.0
        %3372 = vmatpush1.msra.mxu0 0.0
        %3373 = vmatprep.subr.mxu0 0.0
        %3374 = vmatpush1.msra.mxu0 0.0
        %3375 = vmatprep.subr.mxu0 0.0
        %3376 = vmatpush1.msra.mxu0 0.0
        %3377 = vmatprep.subr.mxu0 0.0
        %3378 = vmatpush1.msra.mxu0 0.0
        %3379 = vmatprep.subr.mxu0 0.0
        %3380 = vmatpush1.msra.mxu0 0.0
        %3381 = vmatprep.subr.mxu0 0.0
        %3382 = vmatpush1.msra.mxu0 0.0
        %3383 = vmatprep.subr.mxu0 0.0
        %3384 = vmatpush1.msra.mxu0 0.0
        %3385 = vmatprep.subr.mxu0 0.0
        %3386 = vmatpush1.msra.mxu0 0.0
        %3387 = vmatprep.subr.mxu0 0.0
        %3388 = vmatpush1.msra.mxu0 0.0
        %3389 = vmatprep.subr.mxu0 0.0
        %3390 = vmatpush1.msra.mxu0 0.0
        %3391 = vmatprep.subr.mxu0 0.0
        %3392 = vmatpush1.msra.mxu0 0.0
        %3393 = vmatprep.subr.mxu0 0.0
        %3394 = vmatpush1.msra.mxu0 0.0
        %3395 = vmatprep.subr.mxu0 0.0
        %3396 = vmatpush1.msra.mxu0 0.0
        %3397 = vmatprep.subr.mxu0 0.0
        %3398 = vmatpush1.msra.mxu0 0.0
        %3399 = vmatprep.subr.mxu0 0.0
        %3400 = vmatpush1.msra.mxu0 0.0
        %3401 = vmatprep.subr.mxu0 0.0
        %3402 = vmatpush1.msra.mxu0 0.0
        %3403 = vmatprep.subr.mxu0 0.0
        %3404 = vmatpush1.msra.mxu0 0.0
        %3405 = vmatprep.subr.mxu0 0.0
        %3406 = vmatpush1.msra.mxu0 0.0
        %3407 = vmatprep.mubr.f32.mxu0 0.0
        %3408 = vmatmul.mubr.f32.gmra.mrb[0].mxu0 %v3271
        %v3409 = vpop.f32.mrb[0].mxu0
        %v3410 = vadd.f32 0.0, %v3409
        %v3411 = vpop.f32.mrb[0].mxu0
        %3412 = vdwg.mxu0
        %3413 = vmatprep.subr.mxu0 0.0
        %3414 = vmatpush1.msra.mxu0 %v473
        %3415 = vmatprep.subr.mxu0 0.0
        %3416 = vmatpush1.msra.mxu0 %v474
        %3417 = vmatprep.subr.mxu0 0.0
        %3418 = vmatpush1.msra.mxu0 %v475
        %3419 = vmatprep.subr.mxu0 0.0
        %3420 = vmatpush1.msra.mxu0 %v476
        %3421 = vmatprep.subr.mxu0 0.0
        %3422 = vmatpush1.msra.mxu0 0.0
        %3423 = vmatprep.subr.mxu0 0.0
        %3424 = vmatpush1.msra.mxu0 0.0
        %3425 = vmatprep.subr.mxu0 0.0
        %3426 = vmatpush1.msra.mxu0 0.0
        %3427 = vmatprep.subr.mxu0 0.0
        %3428 = vmatpush1.msra.mxu0 0.0
        %3429 = vmatprep.subr.mxu0 0.0
        %3430 = vmatpush1.msra.mxu0 0.0
        %3431 = vmatprep.subr.mxu0 0.0
        %3432 = vmatpush1.msra.mxu0 0.0
        %3433 = vmatprep.subr.mxu0 0.0
        %3434 = vmatpush1.msra.mxu0 0.0
        %3435 = vmatprep.subr.mxu0 0.0
        %3436 = vmatpush1.msra.mxu0 0.0
        %3437 = vmatprep.subr.mxu0 0.0
        %3438 = vmatpush1.msra.mxu0 0.0
        %3439 = vmatprep.subr.mxu0 0.0
        %3440 = vmatpush1.msra.mxu0 0.0
        %3441 = vmatprep.subr.mxu0 0.0
        %3442 = vmatpush1.msra.mxu0 0.0
        %3443 = vmatprep.subr.mxu0 0.0
        %3444 = vmatpush1.msra.mxu0 0.0
        %3445 = vmatprep.subr.mxu0 0.0
        %3446 = vmatpush1.msra.mxu0 0.0
        %3447 = vmatprep.subr.mxu0 0.0
        %3448 = vmatpush1.msra.mxu0 0.0
        %3449 = vmatprep.subr.mxu0 0.0
        %3450 = vmatpush1.msra.mxu0 0.0
        %3451 = vmatprep.subr.mxu0 0.0
        %3452 = vmatpush1.msra.mxu0 0.0
        %3453 = vmatprep.subr.mxu0 0.0
        %3454 = vmatpush1.msra.mxu0 0.0
        %3455 = vmatprep.subr.mxu0 0.0
        %3456 = vmatpush1.msra.mxu0 0.0
        %3457 = vmatprep.subr.mxu0 0.0
        %3458 = vmatpush1.msra.mxu0 0.0
        %3459 = vmatprep.subr.mxu0 0.0
        %3460 = vmatpush1.msra.mxu0 0.0
        %3461 = vmatprep.subr.mxu0 0.0
        %3462 = vmatpush1.msra.mxu0 0.0
        %3463 = vmatprep.subr.mxu0 0.0
        %3464 = vmatpush1.msra.mxu0 0.0
        %3465 = vmatprep.subr.mxu0 0.0
        %3466 = vmatpush1.msra.mxu0 0.0
        %3467 = vmatprep.subr.mxu0 0.0
        %3468 = vmatpush1.msra.mxu0 0.0
        %3469 = vmatprep.subr.mxu0 0.0
        %3470 = vmatpush1.msra.mxu0 0.0
        %3471 = vmatprep.subr.mxu0 0.0
        %3472 = vmatpush1.msra.mxu0 0.0
        %3473 = vmatprep.subr.mxu0 0.0
        %3474 = vmatpush1.msra.mxu0 0.0
        %3475 = vmatprep.subr.mxu0 0.0
        %3476 = vmatpush1.msra.mxu0 0.0
        %3477 = vmatprep.mubr.f32.mxu0 0.0
        %3478 = vmatmul.mubr.f32.gmra.mrb[0].mxu0 %v3271
        %v3479 = vpop.f32.mrb[0].mxu0
        %v3480 = vadd.f32 %v626, %v3479
        %v3481 = vpop.f32.mrb[0].mxu0
        %3482 = vdwg.mxu0
        %v3483 = vld [vmem:[%s404 + $0xa] sm:$0x1]
        %v3484 = vld [vmem:[%s404 + $0x1a] sm:$0x1]
        %v3486 = vrot.slane %v3340, 1
        %v3489 = vadd.f32 %v3483, %v3340
        %v3490 = vadd.f32 %v3484, %v3486
        %v3491 = vxor.u32 %v3489, 2147483648
        %v3492 = vxor.u32 %v3490, 2147483648
        %v3493 = vmul.f32 %v3491, 1.442695
        %v3494 = vpow.pop %v3493
        %v3495 = vmul.f32 %v3492, 1.442695
        %v3496 = vpow.pop %v3495
        %v3497 = vadd.f32 %v3494, 1.0
        %v3498 = vadd.f32 %v3496, 1.0
        %v3499 = vrcp.pop %v3497
        %v3500 = vmul.f32 1.0, %v3499
        %v3501 = vrcp.pop %v3498
        %v3502 = vmul.f32 1.0, %v3501
        %v3503 = vld [vmem:[%s411 + $0xa] sm:$0x1]
        %v3504 = vld [vmem:[%s411 + $0x1a] sm:$0x1]
        %v3506 = vrot.slane %v3410, 1
        %v3509 = vadd.f32 %v3503, %v3410
        %v3510 = vadd.f32 %v3504, %v3506
        %v3511 = vxor.u32 %v3509, 2147483648
        %v3512 = vxor.u32 %v3510, 2147483648
        %v3513 = vmul.f32 %v3511, 1.442695
        %v3514 = vpow.pop %v3513
        %v3515 = vmul.f32 %v3512, 1.442695
        %v3516 = vpow.pop %v3515
        %v3517 = vadd.f32 %v3514, 1.0
        %v3518 = vadd.f32 %v3516, 1.0
        %v3519 = vrcp.pop %v3517
        %v3520 = vmul.f32 1.0, %v3519
        %v3521 = vrcp.pop %v3518
        %v3522 = vmul.f32 1.0, %v3521
        %v3523 = vld [vmem:[%s418 + $0xa] sm:$0x1]
        %v3524 = vld [vmem:[%s418 + $0x1a] sm:$0x1]
        %v3526 = vrot.slane %v3480, 1
        %v3529 = vmul.f32 %v3500, %v3480
        %v3530 = vmul.f32 %v3502, %v3526
        %v3531 = vadd.f32 %v3523, %v3529
        %v3532 = vadd.f32 %v3524, %v3530
        %v3533 = vtanh.pop %v3531
        %v3534 = vtanh.pop %v3532
        %v3535 = vsub.f32 1.0, %v3520
        %v3536 = vsub.f32 1.0, %v3522
        %v3537 = vmul.f32 %v3535, %v3533
        %v3538 = vmul.f32 %v3536, %v3534
        %v3539 = vmul.f32 %v3520, %v3263
        %v3540 = vmul.f32 %v3522, %v3264
        %v3541 = vadd.f32 %v3537, %v3539
        %v3542 = vadd.f32 %v3538, %v3540
        %3543 = vst.msk [vmem:[%s453 + $0xa] sm:$0x1] %vm761, %v3541
        %3544 = vst.msk [vmem:[%s453 + $0x1a] sm:$0x1] %vm761, %v3542
        %v3547 = vrot.slane %v3542, 7
        %v3548 = vsel %vm767, %v3547, %v3541
        %v3549 = vsel %vm478, %v3548, 0
        %3551 = vmatprep.subr.mxu0 0.0
        %3552 = vmatpush1.msra.mxu0 %v465
        %3553 = vmatprep.subr.mxu0 0.0
        %3554 = vmatpush1.msra.mxu0 %v466
        %3555 = vmatprep.subr.mxu0 0.0
        %3556 = vmatpush1.msra.mxu0 %v467
        %3557 = vmatprep.subr.mxu0 0.0
        %3558 = vmatpush1.msra.mxu0 %v468
        %3559 = vmatprep.subr.mxu0 0.0
        %3560 = vmatpush1.msra.mxu0 0.0
        %3561 = vmatprep.subr.mxu0 0.0
        %3562 = vmatpush1.msra.mxu0 0.0
        %3563 = vmatprep.subr.mxu0 0.0
        %3564 = vmatpush1.msra.mxu0 0.0
        %3565 = vmatprep.subr.mxu0 0.0
        %3566 = vmatpush1.msra.mxu0 0.0
        %3567 = vmatprep.subr.mxu0 0.0
        %3568 = vmatpush1.msra.mxu0 0.0
        %3569 = vmatprep.subr.mxu0 0.0
        %3570 = vmatpush1.msra.mxu0 0.0
        %3571 = vmatprep.subr.mxu0 0.0
        %3572 = vmatpush1.msra.mxu0 0.0
        %3573 = vmatprep.subr.mxu0 0.0
        %3574 = vmatpush1.msra.mxu0 0.0
        %3575 = vmatprep.subr.mxu0 0.0
        %3576 = vmatpush1.msra.mxu0 0.0
        %3577 = vmatprep.subr.mxu0 0.0
        %3578 = vmatpush1.msra.mxu0 0.0
        %3579 = vmatprep.subr.mxu0 0.0
        %3580 = vmatpush1.msra.mxu0 0.0
        %3581 = vmatprep.subr.mxu0 0.0
        %3582 = vmatpush1.msra.mxu0 0.0
        %3583 = vmatprep.subr.mxu0 0.0
        %3584 = vmatpush1.msra.mxu0 0.0
        %3585 = vmatprep.subr.mxu0 0.0
        %3586 = vmatpush1.msra.mxu0 0.0
        %3587 = vmatprep.subr.mxu0 0.0
        %3588 = vmatpush1.msra.mxu0 0.0
        %3589 = vmatprep.subr.mxu0 0.0
        %3590 = vmatpush1.msra.mxu0 0.0
        %3591 = vmatprep.subr.mxu0 0.0
        %3592 = vmatpush1.msra.mxu0 0.0
        %3593 = vmatprep.subr.mxu0 0.0
        %3594 = vmatpush1.msra.mxu0 0.0
        %3595 = vmatprep.subr.mxu0 0.0
        %3596 = vmatpush1.msra.mxu0 0.0
        %3597 = vmatprep.subr.mxu0 0.0
        %3598 = vmatpush1.msra.mxu0 0.0
        %3599 = vmatprep.subr.mxu0 0.0
        %3600 = vmatpush1.msra.mxu0 0.0
        %3601 = vmatprep.subr.mxu0 0.0
        %3602 = vmatpush1.msra.mxu0 0.0
        %3603 = vmatprep.subr.mxu0 0.0
        %3604 = vmatpush1.msra.mxu0 0.0
        %3605 = vmatprep.subr.mxu0 0.0
        %3606 = vmatpush1.msra.mxu0 0.0
        %3607 = vmatprep.subr.mxu0 0.0
        %3608 = vmatpush1.msra.mxu0 0.0
        %3609 = vmatprep.subr.mxu0 0.0
        %3610 = vmatpush1.msra.mxu0 0.0
        %3611 = vmatprep.subr.mxu0 0.0
        %3612 = vmatpush1.msra.mxu0 0.0
        %3613 = vmatprep.subr.mxu0 0.0
        %3614 = vmatpush1.msra.mxu0 0.0
        %3615 = vmatprep.mubr.f32.mxu0 0.0
        %3616 = vmatmul.mubr.f32.gmra.mrb[0].mxu0 %v3549
        %v3617 = vpop.f32.mrb[0].mxu0
        %v3618 = vadd.f32 0.0, %v3617
        %v3619 = vpop.f32.mrb[0].mxu0
        %3620 = vdwg.mxu0
        %3621 = vmatprep.subr.mxu0 0.0
        %3622 = vmatpush1.msra.mxu0 %v469
        %3623 = vmatprep.subr.mxu0 0.0
        %3624 = vmatpush1.msra.mxu0 %v470
        %3625 = vmatprep.subr.mxu0 0.0
        %3626 = vmatpush1.msra.mxu0 %v471
        %3627 = vmatprep.subr.mxu0 0.0
        %3628 = vmatpush1.msra.mxu0 %v472
        %3629 = vmatprep.subr.mxu0 0.0
        %3630 = vmatpush1.msra.mxu0 0.0
        %3631 = vmatprep.subr.mxu0 0.0
        %3632 = vmatpush1.msra.mxu0 0.0
        %3633 = vmatprep.subr.mxu0 0.0
        %3634 = vmatpush1.msra.mxu0 0.0
        %3635 = vmatprep.subr.mxu0 0.0
        %3636 = vmatpush1.msra.mxu0 0.0
        %3637 = vmatprep.subr.mxu0 0.0
        %3638 = vmatpush1.msra.mxu0 0.0
        %3639 = vmatprep.subr.mxu0 0.0
        %3640 = vmatpush1.msra.mxu0 0.0
        %3641 = vmatprep.subr.mxu0 0.0
        %3642 = vmatpush1.msra.mxu0 0.0
        %3643 = vmatprep.subr.mxu0 0.0
        %3644 = vmatpush1.msra.mxu0 0.0
        %3645 = vmatprep.subr.mxu0 0.0
        %3646 = vmatpush1.msra.mxu0 0.0
        %3647 = vmatprep.subr.mxu0 0.0
        %3648 = vmatpush1.msra.mxu0 0.0
        %3649 = vmatprep.subr.mxu0 0.0
        %3650 = vmatpush1.msra.mxu0 0.0
        %3651 = vmatprep.subr.mxu0 0.0
        %3652 = vmatpush1.msra.mxu0 0.0
        %3653 = vmatprep.subr.mxu0 0.0
        %3654 = vmatpush1.msra.mxu0 0.0
        %3655 = vmatprep.subr.mxu0 0.0
        %3656 = vmatpush1.msra.mxu0 0.0
        %3657 = vmatprep.subr.mxu0 0.0
        %3658 = vmatpush1.msra.mxu0 0.0
        %3659 = vmatprep.subr.mxu0 0.0
        %3660 = vmatpush1.msra.mxu0 0.0
        %3661 = vmatprep.subr.mxu0 0.0
        %3662 = vmatpush1.msra.mxu0 0.0
        %3663 = vmatprep.subr.mxu0 0.0
        %3664 = vmatpush1.msra.mxu0 0.0
        %3665 = vmatprep.subr.mxu0 0.0
        %3666 = vmatpush1.msra.mxu0 0.0
        %3667 = vmatprep.subr.mxu0 0.0
        %3668 = vmatpush1.msra.mxu0 0.0
        %3669 = vmatprep.subr.mxu0 0.0
        %3670 = vmatpush1.msra.mxu0 0.0
        %3671 = vmatprep.subr.mxu0 0.0
        %3672 = vmatpush1.msra.mxu0 0.0
        %3673 = vmatprep.subr.mxu0 0.0
        %3674 = vmatpush1.msra.mxu0 0.0
        %3675 = vmatprep.subr.mxu0 0.0
        %3676 = vmatpush1.msra.mxu0 0.0
        %3677 = vmatprep.subr.mxu0 0.0
        %3678 = vmatpush1.msra.mxu0 0.0
        %3679 = vmatprep.subr.mxu0 0.0
        %3680 = vmatpush1.msra.mxu0 0.0
        %3681 = vmatprep.subr.mxu0 0.0
        %3682 = vmatpush1.msra.mxu0 0.0
        %3683 = vmatprep.subr.mxu0 0.0
        %3684 = vmatpush1.msra.mxu0 0.0
        %3685 = vmatprep.mubr.f32.mxu0 0.0
        %3686 = vmatmul.mubr.f32.gmra.mrb[0].mxu0 %v3549
        %v3687 = vpop.f32.mrb[0].mxu0
        %v3688 = vadd.f32 0.0, %v3687
        %v3689 = vpop.f32.mrb[0].mxu0
        %3690 = vdwg.mxu0
        %3691 = vmatprep.subr.mxu0 0.0
        %3692 = vmatpush1.msra.mxu0 %v473
        %3693 = vmatprep.subr.mxu0 0.0
        %3694 = vmatpush1.msra.mxu0 %v474
        %3695 = vmatprep.subr.mxu0 0.0
        %3696 = vmatpush1.msra.mxu0 %v475
        %3697 = vmatprep.subr.mxu0 0.0
        %3698 = vmatpush1.msra.mxu0 %v476
        %3699 = vmatprep.subr.mxu0 0.0
        %3700 = vmatpush1.msra.mxu0 0.0
        %3701 = vmatprep.subr.mxu0 0.0
        %3702 = vmatpush1.msra.mxu0 0.0
        %3703 = vmatprep.subr.mxu0 0.0
        %3704 = vmatpush1.msra.mxu0 0.0
        %3705 = vmatprep.subr.mxu0 0.0
        %3706 = vmatpush1.msra.mxu0 0.0
        %3707 = vmatprep.subr.mxu0 0.0
        %3708 = vmatpush1.msra.mxu0 0.0
        %3709 = vmatprep.subr.mxu0 0.0
        %3710 = vmatpush1.msra.mxu0 0.0
        %3711 = vmatprep.subr.mxu0 0.0
        %3712 = vmatpush1.msra.mxu0 0.0
        %3713 = vmatprep.subr.mxu0 0.0
        %3714 = vmatpush1.msra.mxu0 0.0
        %3715 = vmatprep.subr.mxu0 0.0
        %3716 = vmatpush1.msra.mxu0 0.0
        %3717 = vmatprep.subr.mxu0 0.0
        %3718 = vmatpush1.msra.mxu0 0.0
        %3719 = vmatprep.subr.mxu0 0.0
        %3720 = vmatpush1.msra.mxu0 0.0
        %3721 = vmatprep.subr.mxu0 0.0
        %3722 = vmatpush1.msra.mxu0 0.0
        %3723 = vmatprep.subr.mxu0 0.0
        %3724 = vmatpush1.msra.mxu0 0.0
        %3725 = vmatprep.subr.mxu0 0.0
        %3726 = vmatpush1.msra.mxu0 0.0
        %3727 = vmatprep.subr.mxu0 0.0
        %3728 = vmatpush1.msra.mxu0 0.0
        %3729 = vmatprep.subr.mxu0 0.0
        %3730 = vmatpush1.msra.mxu0 0.0
        %3731 = vmatprep.subr.mxu0 0.0
        %3732 = vmatpush1.msra.mxu0 0.0
        %3733 = vmatprep.subr.mxu0 0.0
        %3734 = vmatpush1.msra.mxu0 0.0
        %3735 = vmatprep.subr.mxu0 0.0
        %3736 = vmatpush1.msra.mxu0 0.0
        %3737 = vmatprep.subr.mxu0 0.0
        %3738 = vmatpush1.msra.mxu0 0.0
        %3739 = vmatprep.subr.mxu0 0.0
        %3740 = vmatpush1.msra.mxu0 0.0
        %3741 = vmatprep.subr.mxu0 0.0
        %3742 = vmatpush1.msra.mxu0 0.0
        %3743 = vmatprep.subr.mxu0 0.0
        %3744 = vmatpush1.msra.mxu0 0.0
        %3745 = vmatprep.subr.mxu0 0.0
        %3746 = vmatpush1.msra.mxu0 0.0
        %3747 = vmatprep.subr.mxu0 0.0
        %3748 = vmatpush1.msra.mxu0 0.0
        %3749 = vmatprep.subr.mxu0 0.0
        %3750 = vmatpush1.msra.mxu0 0.0
        %3751 = vmatprep.subr.mxu0 0.0
        %3752 = vmatpush1.msra.mxu0 0.0
        %3753 = vmatprep.subr.mxu0 0.0
        %3754 = vmatpush1.msra.mxu0 0.0
        %3755 = vmatprep.mubr.f32.mxu0 0.0
        %3756 = vmatmul.mubr.f32.gmra.mrb[0].mxu0 %v3549
        %v3757 = vpop.f32.mrb[0].mxu0
        %v3758 = vadd.f32 %v626, %v3757
        %v3759 = vpop.f32.mrb[0].mxu0
        %3760 = vdwg.mxu0
        %v3761 = vld [vmem:[%s404 + $0xb] sm:$0x1]
        %v3762 = vld [vmem:[%s404 + $0x1b] sm:$0x1]
        %v3764 = vrot.slane %v3618, 1
        %v3767 = vadd.f32 %v3761, %v3618
        %v3768 = vadd.f32 %v3762, %v3764
        %v3769 = vxor.u32 %v3767, 2147483648
        %v3770 = vxor.u32 %v3768, 2147483648
        %v3771 = vmul.f32 %v3769, 1.442695
        %v3772 = vpow.pop %v3771
        %v3773 = vmul.f32 %v3770, 1.442695
        %v3774 = vpow.pop %v3773
        %v3775 = vadd.f32 %v3772, 1.0
        %v3776 = vadd.f32 %v3774, 1.0
        %v3777 = vrcp.pop %v3775
        %v3778 = vmul.f32 1.0, %v3777
        %v3779 = vrcp.pop %v3776
        %v3780 = vmul.f32 1.0, %v3779
        %v3781 = vld [vmem:[%s411 + $0xb] sm:$0x1]
        %v3782 = vld [vmem:[%s411 + $0x1b] sm:$0x1]
        %v3784 = vrot.slane %v3688, 1
        %v3787 = vadd.f32 %v3781, %v3688
        %v3788 = vadd.f32 %v3782, %v3784
        %v3789 = vxor.u32 %v3787, 2147483648
        %v3790 = vxor.u32 %v3788, 2147483648
        %v3791 = vmul.f32 %v3789, 1.442695
        %v3792 = vpow.pop %v3791
        %v3793 = vmul.f32 %v3790, 1.442695
        %v3794 = vpow.pop %v3793
        %v3795 = vadd.f32 %v3792, 1.0
        %v3796 = vadd.f32 %v3794, 1.0
        %v3797 = vrcp.pop %v3795
        %v3798 = vmul.f32 1.0, %v3797
        %v3799 = vrcp.pop %v3796
        %v3800 = vmul.f32 1.0, %v3799
        %v3801 = vld [vmem:[%s418 + $0xb] sm:$0x1]
        %v3802 = vld [vmem:[%s418 + $0x1b] sm:$0x1]
        %v3804 = vrot.slane %v3758, 1
        %v3807 = vmul.f32 %v3778, %v3758
        %v3808 = vmul.f32 %v3780, %v3804
        %v3809 = vadd.f32 %v3801, %v3807
        %v3810 = vadd.f32 %v3802, %v3808
        %v3811 = vtanh.pop %v3809
        %v3812 = vtanh.pop %v3810
        %v3813 = vsub.f32 1.0, %v3798
        %v3814 = vsub.f32 1.0, %v3800
        %v3815 = vmul.f32 %v3813, %v3811
        %v3816 = vmul.f32 %v3814, %v3812
        %v3817 = vmul.f32 %v3798, %v3541
        %v3818 = vmul.f32 %v3800, %v3542
        %v3819 = vadd.f32 %v3815, %v3817
        %v3820 = vadd.f32 %v3816, %v3818
        %3821 = vst.msk [vmem:[%s453 + $0xb] sm:$0x1] %vm761, %v3819
        %3822 = vst.msk [vmem:[%s453 + $0x1b] sm:$0x1] %vm761, %v3820
        %v3825 = vrot.slane %v3820, 7
        %v3826 = vsel %vm767, %v3825, %v3819
        %v3827 = vsel %vm478, %v3826, 0
        %3829 = vmatprep.subr.mxu0 0.0
        %3830 = vmatpush1.msra.mxu0 %v465
        %3831 = vmatprep.subr.mxu0 0.0
        %3832 = vmatpush1.msra.mxu0 %v466
        %3833 = vmatprep.subr.mxu0 0.0
        %3834 = vmatpush1.msra.mxu0 %v467
        %3835 = vmatprep.subr.mxu0 0.0
        %3836 = vmatpush1.msra.mxu0 %v468
        %3837 = vmatprep.subr.mxu0 0.0
        %3838 = vmatpush1.msra.mxu0 0.0
        %3839 = vmatprep.subr.mxu0 0.0
        %3840 = vmatpush1.msra.mxu0 0.0
        %3841 = vmatprep.subr.mxu0 0.0
        %3842 = vmatpush1.msra.mxu0 0.0
        %3843 = vmatprep.subr.mxu0 0.0
        %3844 = vmatpush1.msra.mxu0 0.0
        %3845 = vmatprep.subr.mxu0 0.0
        %3846 = vmatpush1.msra.mxu0 0.0
        %3847 = vmatprep.subr.mxu0 0.0
        %3848 = vmatpush1.msra.mxu0 0.0
        %3849 = vmatprep.subr.mxu0 0.0
        %3850 = vmatpush1.msra.mxu0 0.0
        %3851 = vmatprep.subr.mxu0 0.0
        %3852 = vmatpush1.msra.mxu0 0.0
        %3853 = vmatprep.subr.mxu0 0.0
        %3854 = vmatpush1.msra.mxu0 0.0
        %3855 = vmatprep.subr.mxu0 0.0
        %3856 = vmatpush1.msra.mxu0 0.0
        %3857 = vmatprep.subr.mxu0 0.0
        %3858 = vmatpush1.msra.mxu0 0.0
        %3859 = vmatprep.subr.mxu0 0.0
        %3860 = vmatpush1.msra.mxu0 0.0
        %3861 = vmatprep.subr.mxu0 0.0
        %3862 = vmatpush1.msra.mxu0 0.0
        %3863 = vmatprep.subr.mxu0 0.0
        %3864 = vmatpush1.msra.mxu0 0.0
        %3865 = vmatprep.subr.mxu0 0.0
        %3866 = vmatpush1.msra.mxu0 0.0
        %3867 = vmatprep.subr.mxu0 0.0
        %3868 = vmatpush1.msra.mxu0 0.0
        %3869 = vmatprep.subr.mxu0 0.0
        %3870 = vmatpush1.msra.mxu0 0.0
        %3871 = vmatprep.subr.mxu0 0.0
        %3872 = vmatpush1.msra.mxu0 0.0
        %3873 = vmatprep.subr.mxu0 0.0
        %3874 = vmatpush1.msra.mxu0 0.0
        %3875 = vmatprep.subr.mxu0 0.0
        %3876 = vmatpush1.msra.mxu0 0.0
        %3877 = vmatprep.subr.mxu0 0.0
        %3878 = vmatpush1.msra.mxu0 0.0
        %3879 = vmatprep.subr.mxu0 0.0
        %3880 = vmatpush1.msra.mxu0 0.0
        %3881 = vmatprep.subr.mxu0 0.0
        %3882 = vmatpush1.msra.mxu0 0.0
        %3883 = vmatprep.subr.mxu0 0.0
        %3884 = vmatpush1.msra.mxu0 0.0
        %3885 = vmatprep.subr.mxu0 0.0
        %3886 = vmatpush1.msra.mxu0 0.0
        %3887 = vmatprep.subr.mxu0 0.0
        %3888 = vmatpush1.msra.mxu0 0.0
        %3889 = vmatprep.subr.mxu0 0.0
        %3890 = vmatpush1.msra.mxu0 0.0
        %3891 = vmatprep.subr.mxu0 0.0
        %3892 = vmatpush1.msra.mxu0 0.0
        %3893 = vmatprep.mubr.f32.mxu0 0.0
        %3894 = vmatmul.mubr.f32.gmra.mrb[0].mxu0 %v3827
        %v3895 = vpop.f32.mrb[0].mxu0
        %v3896 = vadd.f32 0.0, %v3895
        %v3897 = vpop.f32.mrb[0].mxu0
        %3898 = vdwg.mxu0
        %3899 = vmatprep.subr.mxu0 0.0
        %3900 = vmatpush1.msra.mxu0 %v469
        %3901 = vmatprep.subr.mxu0 0.0
        %3902 = vmatpush1.msra.mxu0 %v470
        %3903 = vmatprep.subr.mxu0 0.0
        %3904 = vmatpush1.msra.mxu0 %v471
        %3905 = vmatprep.subr.mxu0 0.0
        %3906 = vmatpush1.msra.mxu0 %v472
        %3907 = vmatprep.subr.mxu0 0.0
        %3908 = vmatpush1.msra.mxu0 0.0
        %3909 = vmatprep.subr.mxu0 0.0
        %3910 = vmatpush1.msra.mxu0 0.0
        %3911 = vmatprep.subr.mxu0 0.0
        %3912 = vmatpush1.msra.mxu0 0.0
        %3913 = vmatprep.subr.mxu0 0.0
        %3914 = vmatpush1.msra.mxu0 0.0
        %3915 = vmatprep.subr.mxu0 0.0
        %3916 = vmatpush1.msra.mxu0 0.0
        %3917 = vmatprep.subr.mxu0 0.0
        %3918 = vmatpush1.msra.mxu0 0.0
        %3919 = vmatprep.subr.mxu0 0.0
        %3920 = vmatpush1.msra.mxu0 0.0
        %3921 = vmatprep.subr.mxu0 0.0
        %3922 = vmatpush1.msra.mxu0 0.0
        %3923 = vmatprep.subr.mxu0 0.0
        %3924 = vmatpush1.msra.mxu0 0.0
        %3925 = vmatprep.subr.mxu0 0.0
        %3926 = vmatpush1.msra.mxu0 0.0
        %3927 = vmatprep.subr.mxu0 0.0
        %3928 = vmatpush1.msra.mxu0 0.0
        %3929 = vmatprep.subr.mxu0 0.0
        %3930 = vmatpush1.msra.mxu0 0.0
        %3931 = vmatprep.subr.mxu0 0.0
        %3932 = vmatpush1.msra.mxu0 0.0
        %3933 = vmatprep.subr.mxu0 0.0
        %3934 = vmatpush1.msra.mxu0 0.0
        %3935 = vmatprep.subr.mxu0 0.0
        %3936 = vmatpush1.msra.mxu0 0.0
        %3937 = vmatprep.subr.mxu0 0.0
        %3938 = vmatpush1.msra.mxu0 0.0
        %3939 = vmatprep.subr.mxu0 0.0
        %3940 = vmatpush1.msra.mxu0 0.0
        %3941 = vmatprep.subr.mxu0 0.0
        %3942 = vmatpush1.msra.mxu0 0.0
        %3943 = vmatprep.subr.mxu0 0.0
        %3944 = vmatpush1.msra.mxu0 0.0
        %3945 = vmatprep.subr.mxu0 0.0
        %3946 = vmatpush1.msra.mxu0 0.0
        %3947 = vmatprep.subr.mxu0 0.0
        %3948 = vmatpush1.msra.mxu0 0.0
        %3949 = vmatprep.subr.mxu0 0.0
        %3950 = vmatpush1.msra.mxu0 0.0
        %3951 = vmatprep.subr.mxu0 0.0
        %3952 = vmatpush1.msra.mxu0 0.0
        %3953 = vmatprep.subr.mxu0 0.0
        %3954 = vmatpush1.msra.mxu0 0.0
        %3955 = vmatprep.subr.mxu0 0.0
        %3956 = vmatpush1.msra.mxu0 0.0
        %3957 = vmatprep.subr.mxu0 0.0
        %3958 = vmatpush1.msra.mxu0 0.0
        %3959 = vmatprep.subr.mxu0 0.0
        %3960 = vmatpush1.msra.mxu0 0.0
        %3961 = vmatprep.subr.mxu0 0.0
        %3962 = vmatpush1.msra.mxu0 0.0
        %3963 = vmatprep.mubr.f32.mxu0 0.0
        %3964 = vmatmul.mubr.f32.gmra.mrb[0].mxu0 %v3827
        %v3965 = vpop.f32.mrb[0].mxu0
        %v3966 = vadd.f32 0.0, %v3965
        %v3967 = vpop.f32.mrb[0].mxu0
        %3968 = vdwg.mxu0
        %3969 = vmatprep.subr.mxu0 0.0
        %3970 = vmatpush1.msra.mxu0 %v473
        %3971 = vmatprep.subr.mxu0 0.0
        %3972 = vmatpush1.msra.mxu0 %v474
        %3973 = vmatprep.subr.mxu0 0.0
        %3974 = vmatpush1.msra.mxu0 %v475
        %3975 = vmatprep.subr.mxu0 0.0
        %3976 = vmatpush1.msra.mxu0 %v476
        %3977 = vmatprep.subr.mxu0 0.0
        %3978 = vmatpush1.msra.mxu0 0.0
        %3979 = vmatprep.subr.mxu0 0.0
        %3980 = vmatpush1.msra.mxu0 0.0
        %3981 = vmatprep.subr.mxu0 0.0
        %3982 = vmatpush1.msra.mxu0 0.0
        %3983 = vmatprep.subr.mxu0 0.0
        %3984 = vmatpush1.msra.mxu0 0.0
        %3985 = vmatprep.subr.mxu0 0.0
        %3986 = vmatpush1.msra.mxu0 0.0
        %3987 = vmatprep.subr.mxu0 0.0
        %3988 = vmatpush1.msra.mxu0 0.0
        %3989 = vmatprep.subr.mxu0 0.0
        %3990 = vmatpush1.msra.mxu0 0.0
        %3991 = vmatprep.subr.mxu0 0.0
        %3992 = vmatpush1.msra.mxu0 0.0
        %3993 = vmatprep.subr.mxu0 0.0
        %3994 = vmatpush1.msra.mxu0 0.0
        %3995 = vmatprep.subr.mxu0 0.0
        %3996 = vmatpush1.msra.mxu0 0.0
        %3997 = vmatprep.subr.mxu0 0.0
        %3998 = vmatpush1.msra.mxu0 0.0
        %3999 = vmatprep.subr.mxu0 0.0
        %4000 = vmatpush1.msra.mxu0 0.0
        %4001 = vmatprep.subr.mxu0 0.0
        %4002 = vmatpush1.msra.mxu0 0.0
        %4003 = vmatprep.subr.mxu0 0.0
        %4004 = vmatpush1.msra.mxu0 0.0
        %4005 = vmatprep.subr.mxu0 0.0
        %4006 = vmatpush1.msra.mxu0 0.0
        %4007 = vmatprep.subr.mxu0 0.0
        %4008 = vmatpush1.msra.mxu0 0.0
        %4009 = vmatprep.subr.mxu0 0.0
        %4010 = vmatpush1.msra.mxu0 0.0
        %4011 = vmatprep.subr.mxu0 0.0
        %4012 = vmatpush1.msra.mxu0 0.0
        %4013 = vmatprep.subr.mxu0 0.0
        %4014 = vmatpush1.msra.mxu0 0.0
        %4015 = vmatprep.subr.mxu0 0.0
        %4016 = vmatpush1.msra.mxu0 0.0
        %4017 = vmatprep.subr.mxu0 0.0
        %4018 = vmatpush1.msra.mxu0 0.0
        %4019 = vmatprep.subr.mxu0 0.0
        %4020 = vmatpush1.msra.mxu0 0.0
        %4021 = vmatprep.subr.mxu0 0.0
        %4022 = vmatpush1.msra.mxu0 0.0
        %4023 = vmatprep.subr.mxu0 0.0
        %4024 = vmatpush1.msra.mxu0 0.0
        %4025 = vmatprep.subr.mxu0 0.0
        %4026 = vmatpush1.msra.mxu0 0.0
        %4027 = vmatprep.subr.mxu0 0.0
        %4028 = vmatpush1.msra.mxu0 0.0
        %4029 = vmatprep.subr.mxu0 0.0
        %4030 = vmatpush1.msra.mxu0 0.0
        %4031 = vmatprep.subr.mxu0 0.0
        %4032 = vmatpush1.msra.mxu0 0.0
        %4033 = vmatprep.mubr.f32.mxu0 0.0
        %4034 = vmatmul.mubr.f32.gmra.mrb[0].mxu0 %v3827
        %v4035 = vpop.f32.mrb[0].mxu0
        %v4036 = vadd.f32 %v626, %v4035
        %v4037 = vpop.f32.mrb[0].mxu0
        %4038 = vdwg.mxu0
        %v4039 = vld [vmem:[%s404 + $0xc] sm:$0x1]
        %v4040 = vld [vmem:[%s404 + $0x1c] sm:$0x1]
        %v4042 = vrot.slane %v3896, 1
        %v4045 = vadd.f32 %v4039, %v3896
        %v4046 = vadd.f32 %v4040, %v4042
        %v4047 = vxor.u32 %v4045, 2147483648
        %v4048 = vxor.u32 %v4046, 2147483648
        %v4049 = vmul.f32 %v4047, 1.442695
        %v4050 = vpow.pop %v4049
        %v4051 = vmul.f32 %v4048, 1.442695
        %v4052 = vpow.pop %v4051
        %v4053 = vadd.f32 %v4050, 1.0
        %v4054 = vadd.f32 %v4052, 1.0
        %v4055 = vrcp.pop %v4053
        %v4056 = vmul.f32 1.0, %v4055
        %v4057 = vrcp.pop %v4054
        %v4058 = vmul.f32 1.0, %v4057
        %v4059 = vld [vmem:[%s411 + $0xc] sm:$0x1]
        %v4060 = vld [vmem:[%s411 + $0x1c] sm:$0x1]
        %v4062 = vrot.slane %v3966, 1
        %v4065 = vadd.f32 %v4059, %v3966
        %v4066 = vadd.f32 %v4060, %v4062
        %v4067 = vxor.u32 %v4065, 2147483648
        %v4068 = vxor.u32 %v4066, 2147483648
        %v4069 = vmul.f32 %v4067, 1.442695
        %v4070 = vpow.pop %v4069
        %v4071 = vmul.f32 %v4068, 1.442695
        %v4072 = vpow.pop %v4071
        %v4073 = vadd.f32 %v4070, 1.0
        %v4074 = vadd.f32 %v4072, 1.0
        %v4075 = vrcp.pop %v4073
        %v4076 = vmul.f32 1.0, %v4075
        %v4077 = vrcp.pop %v4074
        %v4078 = vmul.f32 1.0, %v4077
        %v4079 = vld [vmem:[%s418 + $0xc] sm:$0x1]
        %v4080 = vld [vmem:[%s418 + $0x1c] sm:$0x1]
        %v4082 = vrot.slane %v4036, 1
        %v4085 = vmul.f32 %v4056, %v4036
        %v4086 = vmul.f32 %v4058, %v4082
        %v4087 = vadd.f32 %v4079, %v4085
        %v4088 = vadd.f32 %v4080, %v4086
        %v4089 = vtanh.pop %v4087
        %v4090 = vtanh.pop %v4088
        %v4091 = vsub.f32 1.0, %v4076
        %v4092 = vsub.f32 1.0, %v4078
        %v4093 = vmul.f32 %v4091, %v4089
        %v4094 = vmul.f32 %v4092, %v4090
        %v4095 = vmul.f32 %v4076, %v3819
        %v4096 = vmul.f32 %v4078, %v3820
        %v4097 = vadd.f32 %v4093, %v4095
        %v4098 = vadd.f32 %v4094, %v4096
        %4099 = vst.msk [vmem:[%s453 + $0xc] sm:$0x1] %vm761, %v4097
        %4100 = vst.msk [vmem:[%s453 + $0x1c] sm:$0x1] %vm761, %v4098
        %v4103 = vrot.slane %v4098, 7
        %v4104 = vsel %vm767, %v4103, %v4097
        %v4105 = vsel %vm478, %v4104, 0
        %4107 = vmatprep.subr.mxu0 0.0
        %4108 = vmatpush1.msra.mxu0 %v465
        %4109 = vmatprep.subr.mxu0 0.0
        %4110 = vmatpush1.msra.mxu0 %v466
        %4111 = vmatprep.subr.mxu0 0.0
        %4112 = vmatpush1.msra.mxu0 %v467
        %4113 = vmatprep.subr.mxu0 0.0
        %4114 = vmatpush1.msra.mxu0 %v468
        %4115 = vmatprep.subr.mxu0 0.0
        %4116 = vmatpush1.msra.mxu0 0.0
        %4117 = vmatprep.subr.mxu0 0.0
        %4118 = vmatpush1.msra.mxu0 0.0
        %4119 = vmatprep.subr.mxu0 0.0
        %4120 = vmatpush1.msra.mxu0 0.0
        %4121 = vmatprep.subr.mxu0 0.0
        %4122 = vmatpush1.msra.mxu0 0.0
        %4123 = vmatprep.subr.mxu0 0.0
        %4124 = vmatpush1.msra.mxu0 0.0
        %4125 = vmatprep.subr.mxu0 0.0
        %4126 = vmatpush1.msra.mxu0 0.0
        %4127 = vmatprep.subr.mxu0 0.0
        %4128 = vmatpush1.msra.mxu0 0.0
        %4129 = vmatprep.subr.mxu0 0.0
        %4130 = vmatpush1.msra.mxu0 0.0
        %4131 = vmatprep.subr.mxu0 0.0
        %4132 = vmatpush1.msra.mxu0 0.0
        %4133 = vmatprep.subr.mxu0 0.0
        %4134 = vmatpush1.msra.mxu0 0.0
        %4135 = vmatprep.subr.mxu0 0.0
        %4136 = vmatpush1.msra.mxu0 0.0
        %4137 = vmatprep.subr.mxu0 0.0
        %4138 = vmatpush1.msra.mxu0 0.0
        %4139 = vmatprep.subr.mxu0 0.0
        %4140 = vmatpush1.msra.mxu0 0.0
        %4141 = vmatprep.subr.mxu0 0.0
        %4142 = vmatpush1.msra.mxu0 0.0
        %4143 = vmatprep.subr.mxu0 0.0
        %4144 = vmatpush1.msra.mxu0 0.0
        %4145 = vmatprep.subr.mxu0 0.0
        %4146 = vmatpush1.msra.mxu0 0.0
        %4147 = vmatprep.subr.mxu0 0.0
        %4148 = vmatpush1.msra.mxu0 0.0
        %4149 = vmatprep.subr.mxu0 0.0
        %4150 = vmatpush1.msra.mxu0 0.0
        %4151 = vmatprep.subr.mxu0 0.0
        %4152 = vmatpush1.msra.mxu0 0.0
        %4153 = vmatprep.subr.mxu0 0.0
        %4154 = vmatpush1.msra.mxu0 0.0
        %4155 = vmatprep.subr.mxu0 0.0
        %4156 = vmatpush1.msra.mxu0 0.0
        %4157 = vmatprep.subr.mxu0 0.0
        %4158 = vmatpush1.msra.mxu0 0.0
        %4159 = vmatprep.subr.mxu0 0.0
        %4160 = vmatpush1.msra.mxu0 0.0
        %4161 = vmatprep.subr.mxu0 0.0
        %4162 = vmatpush1.msra.mxu0 0.0
        %4163 = vmatprep.subr.mxu0 0.0
        %4164 = vmatpush1.msra.mxu0 0.0
        %4165 = vmatprep.subr.mxu0 0.0
        %4166 = vmatpush1.msra.mxu0 0.0
        %4167 = vmatprep.subr.mxu0 0.0
        %4168 = vmatpush1.msra.mxu0 0.0
        %4169 = vmatprep.subr.mxu0 0.0
        %4170 = vmatpush1.msra.mxu0 0.0
        %4171 = vmatprep.mubr.f32.mxu0 0.0
        %4172 = vmatmul.mubr.f32.gmra.mrb[0].mxu0 %v4105
        %v4173 = vpop.f32.mrb[0].mxu0
        %v4174 = vadd.f32 0.0, %v4173
        %v4175 = vpop.f32.mrb[0].mxu0
        %4176 = vdwg.mxu0
        %4177 = vmatprep.subr.mxu0 0.0
        %4178 = vmatpush1.msra.mxu0 %v469
        %4179 = vmatprep.subr.mxu0 0.0
        %4180 = vmatpush1.msra.mxu0 %v470
        %4181 = vmatprep.subr.mxu0 0.0
        %4182 = vmatpush1.msra.mxu0 %v471
        %4183 = vmatprep.subr.mxu0 0.0
        %4184 = vmatpush1.msra.mxu0 %v472
        %4185 = vmatprep.subr.mxu0 0.0
        %4186 = vmatpush1.msra.mxu0 0.0
        %4187 = vmatprep.subr.mxu0 0.0
        %4188 = vmatpush1.msra.mxu0 0.0
        %4189 = vmatprep.subr.mxu0 0.0
        %4190 = vmatpush1.msra.mxu0 0.0
        %4191 = vmatprep.subr.mxu0 0.0
        %4192 = vmatpush1.msra.mxu0 0.0
        %4193 = vmatprep.subr.mxu0 0.0
        %4194 = vmatpush1.msra.mxu0 0.0
        %4195 = vmatprep.subr.mxu0 0.0
        %4196 = vmatpush1.msra.mxu0 0.0
        %4197 = vmatprep.subr.mxu0 0.0
        %4198 = vmatpush1.msra.mxu0 0.0
        %4199 = vmatprep.subr.mxu0 0.0
        %4200 = vmatpush1.msra.mxu0 0.0
        %4201 = vmatprep.subr.mxu0 0.0
        %4202 = vmatpush1.msra.mxu0 0.0
        %4203 = vmatprep.subr.mxu0 0.0
        %4204 = vmatpush1.msra.mxu0 0.0
        %4205 = vmatprep.subr.mxu0 0.0
        %4206 = vmatpush1.msra.mxu0 0.0
        %4207 = vmatprep.subr.mxu0 0.0
        %4208 = vmatpush1.msra.mxu0 0.0
        %4209 = vmatprep.subr.mxu0 0.0
        %4210 = vmatpush1.msra.mxu0 0.0
        %4211 = vmatprep.subr.mxu0 0.0
        %4212 = vmatpush1.msra.mxu0 0.0
        %4213 = vmatprep.subr.mxu0 0.0
        %4214 = vmatpush1.msra.mxu0 0.0
        %4215 = vmatprep.subr.mxu0 0.0
        %4216 = vmatpush1.msra.mxu0 0.0
        %4217 = vmatprep.subr.mxu0 0.0
        %4218 = vmatpush1.msra.mxu0 0.0
        %4219 = vmatprep.subr.mxu0 0.0
        %4220 = vmatpush1.msra.mxu0 0.0
        %4221 = vmatprep.subr.mxu0 0.0
        %4222 = vmatpush1.msra.mxu0 0.0
        %4223 = vmatprep.subr.mxu0 0.0
        %4224 = vmatpush1.msra.mxu0 0.0
        %4225 = vmatprep.subr.mxu0 0.0
        %4226 = vmatpush1.msra.mxu0 0.0
        %4227 = vmatprep.subr.mxu0 0.0
        %4228 = vmatpush1.msra.mxu0 0.0
        %4229 = vmatprep.subr.mxu0 0.0
        %4230 = vmatpush1.msra.mxu0 0.0
        %4231 = vmatprep.subr.mxu0 0.0
        %4232 = vmatpush1.msra.mxu0 0.0
        %4233 = vmatprep.subr.mxu0 0.0
        %4234 = vmatpush1.msra.mxu0 0.0
        %4235 = vmatprep.subr.mxu0 0.0
        %4236 = vmatpush1.msra.mxu0 0.0
        %4237 = vmatprep.subr.mxu0 0.0
        %4238 = vmatpush1.msra.mxu0 0.0
        %4239 = vmatprep.subr.mxu0 0.0
        %4240 = vmatpush1.msra.mxu0 0.0
        %4241 = vmatprep.mubr.f32.mxu0 0.0
        %4242 = vmatmul.mubr.f32.gmra.mrb[0].mxu0 %v4105
        %v4243 = vpop.f32.mrb[0].mxu0
        %v4244 = vadd.f32 0.0, %v4243
        %v4245 = vpop.f32.mrb[0].mxu0
        %4246 = vdwg.mxu0
        %4247 = vmatprep.subr.mxu0 0.0
        %4248 = vmatpush1.msra.mxu0 %v473
        %4249 = vmatprep.subr.mxu0 0.0
        %4250 = vmatpush1.msra.mxu0 %v474
        %4251 = vmatprep.subr.mxu0 0.0
        %4252 = vmatpush1.msra.mxu0 %v475
        %4253 = vmatprep.subr.mxu0 0.0
        %4254 = vmatpush1.msra.mxu0 %v476
        %4255 = vmatprep.subr.mxu0 0.0
        %4256 = vmatpush1.msra.mxu0 0.0
        %4257 = vmatprep.subr.mxu0 0.0
        %4258 = vmatpush1.msra.mxu0 0.0
        %4259 = vmatprep.subr.mxu0 0.0
        %4260 = vmatpush1.msra.mxu0 0.0
        %4261 = vmatprep.subr.mxu0 0.0
        %4262 = vmatpush1.msra.mxu0 0.0
        %4263 = vmatprep.subr.mxu0 0.0
        %4264 = vmatpush1.msra.mxu0 0.0
        %4265 = vmatprep.subr.mxu0 0.0
        %4266 = vmatpush1.msra.mxu0 0.0
        %4267 = vmatprep.subr.mxu0 0.0
        %4268 = vmatpush1.msra.mxu0 0.0
        %4269 = vmatprep.subr.mxu0 0.0
        %4270 = vmatpush1.msra.mxu0 0.0
        %4271 = vmatprep.subr.mxu0 0.0
        %4272 = vmatpush1.msra.mxu0 0.0
        %4273 = vmatprep.subr.mxu0 0.0
        %4274 = vmatpush1.msra.mxu0 0.0
        %4275 = vmatprep.subr.mxu0 0.0
        %4276 = vmatpush1.msra.mxu0 0.0
        %4277 = vmatprep.subr.mxu0 0.0
        %4278 = vmatpush1.msra.mxu0 0.0
        %4279 = vmatprep.subr.mxu0 0.0
        %4280 = vmatpush1.msra.mxu0 0.0
        %4281 = vmatprep.subr.mxu0 0.0
        %4282 = vmatpush1.msra.mxu0 0.0
        %4283 = vmatprep.subr.mxu0 0.0
        %4284 = vmatpush1.msra.mxu0 0.0
        %4285 = vmatprep.subr.mxu0 0.0
        %4286 = vmatpush1.msra.mxu0 0.0
        %4287 = vmatprep.subr.mxu0 0.0
        %4288 = vmatpush1.msra.mxu0 0.0
        %4289 = vmatprep.subr.mxu0 0.0
        %4290 = vmatpush1.msra.mxu0 0.0
        %4291 = vmatprep.subr.mxu0 0.0
        %4292 = vmatpush1.msra.mxu0 0.0
        %4293 = vmatprep.subr.mxu0 0.0
        %4294 = vmatpush1.msra.mxu0 0.0
        %4295 = vmatprep.subr.mxu0 0.0
        %4296 = vmatpush1.msra.mxu0 0.0
        %4297 = vmatprep.subr.mxu0 0.0
        %4298 = vmatpush1.msra.mxu0 0.0
        %4299 = vmatprep.subr.mxu0 0.0
        %4300 = vmatpush1.msra.mxu0 0.0
        %4301 = vmatprep.subr.mxu0 0.0
        %4302 = vmatpush1.msra.mxu0 0.0
        %4303 = vmatprep.subr.mxu0 0.0
        %4304 = vmatpush1.msra.mxu0 0.0
        %4305 = vmatprep.subr.mxu0 0.0
        %4306 = vmatpush1.msra.mxu0 0.0
        %4307 = vmatprep.subr.mxu0 0.0
        %4308 = vmatpush1.msra.mxu0 0.0
        %4309 = vmatprep.subr.mxu0 0.0
        %4310 = vmatpush1.msra.mxu0 0.0
        %4311 = vmatprep.mubr.f32.mxu0 0.0
        %4312 = vmatmul.mubr.f32.gmra.mrb[0].mxu0 %v4105
        %v4313 = vpop.f32.mrb[0].mxu0
        %v4314 = vadd.f32 %v626, %v4313
        %v4315 = vpop.f32.mrb[0].mxu0
        %4316 = vdwg.mxu0
        %v4317 = vld [vmem:[%s404 + $0xd] sm:$0x1]
        %v4318 = vld [vmem:[%s404 + $0x1d] sm:$0x1]
        %v4320 = vrot.slane %v4174, 1
        %v4323 = vadd.f32 %v4317, %v4174
        %v4324 = vadd.f32 %v4318, %v4320
        %v4325 = vxor.u32 %v4323, 2147483648
        %v4326 = vxor.u32 %v4324, 2147483648
        %v4327 = vmul.f32 %v4325, 1.442695
        %v4328 = vpow.pop %v4327
        %v4329 = vmul.f32 %v4326, 1.442695
        %v4330 = vpow.pop %v4329
        %v4331 = vadd.f32 %v4328, 1.0
        %v4332 = vadd.f32 %v4330, 1.0
        %v4333 = vrcp.pop %v4331
        %v4334 = vmul.f32 1.0, %v4333
        %v4335 = vrcp.pop %v4332
        %v4336 = vmul.f32 1.0, %v4335
        %v4337 = vld [vmem:[%s411 + $0xd] sm:$0x1]
        %v4338 = vld [vmem:[%s411 + $0x1d] sm:$0x1]
        %v4340 = vrot.slane %v4244, 1
        %v4343 = vadd.f32 %v4337, %v4244
        %v4344 = vadd.f32 %v4338, %v4340
        %v4345 = vxor.u32 %v4343, 2147483648
        %v4346 = vxor.u32 %v4344, 2147483648
        %v4347 = vmul.f32 %v4345, 1.442695
        %v4348 = vpow.pop %v4347
        %v4349 = vmul.f32 %v4346, 1.442695
        %v4350 = vpow.pop %v4349
        %v4351 = vadd.f32 %v4348, 1.0
        %v4352 = vadd.f32 %v4350, 1.0
        %v4353 = vrcp.pop %v4351
        %v4354 = vmul.f32 1.0, %v4353
        %v4355 = vrcp.pop %v4352
        %v4356 = vmul.f32 1.0, %v4355
        %v4357 = vld [vmem:[%s418 + $0xd] sm:$0x1]
        %v4358 = vld [vmem:[%s418 + $0x1d] sm:$0x1]
        %v4360 = vrot.slane %v4314, 1
        %v4363 = vmul.f32 %v4334, %v4314
        %v4364 = vmul.f32 %v4336, %v4360
        %v4365 = vadd.f32 %v4357, %v4363
        %v4366 = vadd.f32 %v4358, %v4364
        %v4367 = vtanh.pop %v4365
        %v4368 = vtanh.pop %v4366
        %v4369 = vsub.f32 1.0, %v4354
        %v4370 = vsub.f32 1.0, %v4356
        %v4371 = vmul.f32 %v4369, %v4367
        %v4372 = vmul.f32 %v4370, %v4368
        %v4373 = vmul.f32 %v4354, %v4097
        %v4374 = vmul.f32 %v4356, %v4098
        %v4375 = vadd.f32 %v4371, %v4373
        %v4376 = vadd.f32 %v4372, %v4374
        %4377 = vst.msk [vmem:[%s453 + $0xd] sm:$0x1] %vm761, %v4375
        %4378 = vst.msk [vmem:[%s453 + $0x1d] sm:$0x1] %vm761, %v4376
        %v4381 = vrot.slane %v4376, 7
        %v4382 = vsel %vm767, %v4381, %v4375
        %v4383 = vsel %vm478, %v4382, 0
        %4385 = vmatprep.subr.mxu0 0.0
        %4386 = vmatpush1.msra.mxu0 %v465
        %4387 = vmatprep.subr.mxu0 0.0
        %4388 = vmatpush1.msra.mxu0 %v466
        %4389 = vmatprep.subr.mxu0 0.0
        %4390 = vmatpush1.msra.mxu0 %v467
        %4391 = vmatprep.subr.mxu0 0.0
        %4392 = vmatpush1.msra.mxu0 %v468
        %4393 = vmatprep.subr.mxu0 0.0
        %4394 = vmatpush1.msra.mxu0 0.0
        %4395 = vmatprep.subr.mxu0 0.0
        %4396 = vmatpush1.msra.mxu0 0.0
        %4397 = vmatprep.subr.mxu0 0.0
        %4398 = vmatpush1.msra.mxu0 0.0
        %4399 = vmatprep.subr.mxu0 0.0
        %4400 = vmatpush1.msra.mxu0 0.0
        %4401 = vmatprep.subr.mxu0 0.0
        %4402 = vmatpush1.msra.mxu0 0.0
        %4403 = vmatprep.subr.mxu0 0.0
        %4404 = vmatpush1.msra.mxu0 0.0
        %4405 = vmatprep.subr.mxu0 0.0
        %4406 = vmatpush1.msra.mxu0 0.0
        %4407 = vmatprep.subr.mxu0 0.0
        %4408 = vmatpush1.msra.mxu0 0.0
        %4409 = vmatprep.subr.mxu0 0.0
        %4410 = vmatpush1.msra.mxu0 0.0
        %4411 = vmatprep.subr.mxu0 0.0
        %4412 = vmatpush1.msra.mxu0 0.0
        %4413 = vmatprep.subr.mxu0 0.0
        %4414 = vmatpush1.msra.mxu0 0.0
        %4415 = vmatprep.subr.mxu0 0.0
        %4416 = vmatpush1.msra.mxu0 0.0
        %4417 = vmatprep.subr.mxu0 0.0
        %4418 = vmatpush1.msra.mxu0 0.0
        %4419 = vmatprep.subr.mxu0 0.0
        %4420 = vmatpush1.msra.mxu0 0.0
        %4421 = vmatprep.subr.mxu0 0.0
        %4422 = vmatpush1.msra.mxu0 0.0
        %4423 = vmatprep.subr.mxu0 0.0
        %4424 = vmatpush1.msra.mxu0 0.0
        %4425 = vmatprep.subr.mxu0 0.0
        %4426 = vmatpush1.msra.mxu0 0.0
        %4427 = vmatprep.subr.mxu0 0.0
        %4428 = vmatpush1.msra.mxu0 0.0
        %4429 = vmatprep.subr.mxu0 0.0
        %4430 = vmatpush1.msra.mxu0 0.0
        %4431 = vmatprep.subr.mxu0 0.0
        %4432 = vmatpush1.msra.mxu0 0.0
        %4433 = vmatprep.subr.mxu0 0.0
        %4434 = vmatpush1.msra.mxu0 0.0
        %4435 = vmatprep.subr.mxu0 0.0
        %4436 = vmatpush1.msra.mxu0 0.0
        %4437 = vmatprep.subr.mxu0 0.0
        %4438 = vmatpush1.msra.mxu0 0.0
        %4439 = vmatprep.subr.mxu0 0.0
        %4440 = vmatpush1.msra.mxu0 0.0
        %4441 = vmatprep.subr.mxu0 0.0
        %4442 = vmatpush1.msra.mxu0 0.0
        %4443 = vmatprep.subr.mxu0 0.0
        %4444 = vmatpush1.msra.mxu0 0.0
        %4445 = vmatprep.subr.mxu0 0.0
        %4446 = vmatpush1.msra.mxu0 0.0
        %4447 = vmatprep.subr.mxu0 0.0
        %4448 = vmatpush1.msra.mxu0 0.0
        %4449 = vmatprep.mubr.f32.mxu0 0.0
        %4450 = vmatmul.mubr.f32.gmra.mrb[0].mxu0 %v4383
        %v4451 = vpop.f32.mrb[0].mxu0
        %v4452 = vadd.f32 0.0, %v4451
        %v4453 = vpop.f32.mrb[0].mxu0
        %4454 = vdwg.mxu0
        %4455 = vmatprep.subr.mxu0 0.0
        %4456 = vmatpush1.msra.mxu0 %v469
        %4457 = vmatprep.subr.mxu0 0.0
        %4458 = vmatpush1.msra.mxu0 %v470
        %4459 = vmatprep.subr.mxu0 0.0
        %4460 = vmatpush1.msra.mxu0 %v471
        %4461 = vmatprep.subr.mxu0 0.0
        %4462 = vmatpush1.msra.mxu0 %v472
        %4463 = vmatprep.subr.mxu0 0.0
        %4464 = vmatpush1.msra.mxu0 0.0
        %4465 = vmatprep.subr.mxu0 0.0
        %4466 = vmatpush1.msra.mxu0 0.0
        %4467 = vmatprep.subr.mxu0 0.0
        %4468 = vmatpush1.msra.mxu0 0.0
        %4469 = vmatprep.subr.mxu0 0.0
        %4470 = vmatpush1.msra.mxu0 0.0
        %4471 = vmatprep.subr.mxu0 0.0
        %4472 = vmatpush1.msra.mxu0 0.0
        %4473 = vmatprep.subr.mxu0 0.0
        %4474 = vmatpush1.msra.mxu0 0.0
        %4475 = vmatprep.subr.mxu0 0.0
        %4476 = vmatpush1.msra.mxu0 0.0
        %4477 = vmatprep.subr.mxu0 0.0
        %4478 = vmatpush1.msra.mxu0 0.0
        %4479 = vmatprep.subr.mxu0 0.0
        %4480 = vmatpush1.msra.mxu0 0.0
        %4481 = vmatprep.subr.mxu0 0.0
        %4482 = vmatpush1.msra.mxu0 0.0
        %4483 = vmatprep.subr.mxu0 0.0
        %4484 = vmatpush1.msra.mxu0 0.0
        %4485 = vmatprep.subr.mxu0 0.0
        %4486 = vmatpush1.msra.mxu0 0.0
        %4487 = vmatprep.subr.mxu0 0.0
        %4488 = vmatpush1.msra.mxu0 0.0
        %4489 = vmatprep.subr.mxu0 0.0
        %4490 = vmatpush1.msra.mxu0 0.0
        %4491 = vmatprep.subr.mxu0 0.0
        %4492 = vmatpush1.msra.mxu0 0.0
        %4493 = vmatprep.subr.mxu0 0.0
        %4494 = vmatpush1.msra.mxu0 0.0
        %4495 = vmatprep.subr.mxu0 0.0
        %4496 = vmatpush1.msra.mxu0 0.0
        %4497 = vmatprep.subr.mxu0 0.0
        %4498 = vmatpush1.msra.mxu0 0.0
        %4499 = vmatprep.subr.mxu0 0.0
        %4500 = vmatpush1.msra.mxu0 0.0
        %4501 = vmatprep.subr.mxu0 0.0
        %4502 = vmatpush1.msra.mxu0 0.0
        %4503 = vmatprep.subr.mxu0 0.0
        %4504 = vmatpush1.msra.mxu0 0.0
        %4505 = vmatprep.subr.mxu0 0.0
        %4506 = vmatpush1.msra.mxu0 0.0
        %4507 = vmatprep.subr.mxu0 0.0
        %4508 = vmatpush1.msra.mxu0 0.0
        %4509 = vmatprep.subr.mxu0 0.0
        %4510 = vmatpush1.msra.mxu0 0.0
        %4511 = vmatprep.subr.mxu0 0.0
        %4512 = vmatpush1.msra.mxu0 0.0
        %4513 = vmatprep.subr.mxu0 0.0
        %4514 = vmatpush1.msra.mxu0 0.0
        %4515 = vmatprep.subr.mxu0 0.0
        %4516 = vmatpush1.msra.mxu0 0.0
        %4517 = vmatprep.subr.mxu0 0.0
        %4518 = vmatpush1.msra.mxu0 0.0
        %4519 = vmatprep.mubr.f32.mxu0 0.0
        %4520 = vmatmul.mubr.f32.gmra.mrb[0].mxu0 %v4383
        %v4521 = vpop.f32.mrb[0].mxu0
        %v4522 = vadd.f32 0.0, %v4521
        %v4523 = vpop.f32.mrb[0].mxu0
        %4524 = vdwg.mxu0
        %4525 = vmatprep.subr.mxu0 0.0
        %4526 = vmatpush1.msra.mxu0 %v473
        %4527 = vmatprep.subr.mxu0 0.0
        %4528 = vmatpush1.msra.mxu0 %v474
        %4529 = vmatprep.subr.mxu0 0.0
        %4530 = vmatpush1.msra.mxu0 %v475
        %4531 = vmatprep.subr.mxu0 0.0
        %4532 = vmatpush1.msra.mxu0 %v476
        %4533 = vmatprep.subr.mxu0 0.0
        %4534 = vmatpush1.msra.mxu0 0.0
        %4535 = vmatprep.subr.mxu0 0.0
        %4536 = vmatpush1.msra.mxu0 0.0
        %4537 = vmatprep.subr.mxu0 0.0
        %4538 = vmatpush1.msra.mxu0 0.0
        %4539 = vmatprep.subr.mxu0 0.0
        %4540 = vmatpush1.msra.mxu0 0.0
        %4541 = vmatprep.subr.mxu0 0.0
        %4542 = vmatpush1.msra.mxu0 0.0
        %4543 = vmatprep.subr.mxu0 0.0
        %4544 = vmatpush1.msra.mxu0 0.0
        %4545 = vmatprep.subr.mxu0 0.0
        %4546 = vmatpush1.msra.mxu0 0.0
        %4547 = vmatprep.subr.mxu0 0.0
        %4548 = vmatpush1.msra.mxu0 0.0
        %4549 = vmatprep.subr.mxu0 0.0
        %4550 = vmatpush1.msra.mxu0 0.0
        %4551 = vmatprep.subr.mxu0 0.0
        %4552 = vmatpush1.msra.mxu0 0.0
        %4553 = vmatprep.subr.mxu0 0.0
        %4554 = vmatpush1.msra.mxu0 0.0
        %4555 = vmatprep.subr.mxu0 0.0
        %4556 = vmatpush1.msra.mxu0 0.0
        %4557 = vmatprep.subr.mxu0 0.0
        %4558 = vmatpush1.msra.mxu0 0.0
        %4559 = vmatprep.subr.mxu0 0.0
        %4560 = vmatpush1.msra.mxu0 0.0
        %4561 = vmatprep.subr.mxu0 0.0
        %4562 = vmatpush1.msra.mxu0 0.0
        %4563 = vmatprep.subr.mxu0 0.0
        %4564 = vmatpush1.msra.mxu0 0.0
        %4565 = vmatprep.subr.mxu0 0.0
        %4566 = vmatpush1.msra.mxu0 0.0
        %4567 = vmatprep.subr.mxu0 0.0
        %4568 = vmatpush1.msra.mxu0 0.0
        %4569 = vmatprep.subr.mxu0 0.0
        %4570 = vmatpush1.msra.mxu0 0.0
        %4571 = vmatprep.subr.mxu0 0.0
        %4572 = vmatpush1.msra.mxu0 0.0
        %4573 = vmatprep.subr.mxu0 0.0
        %4574 = vmatpush1.msra.mxu0 0.0
        %4575 = vmatprep.subr.mxu0 0.0
        %4576 = vmatpush1.msra.mxu0 0.0
        %4577 = vmatprep.subr.mxu0 0.0
        %4578 = vmatpush1.msra.mxu0 0.0
        %4579 = vmatprep.subr.mxu0 0.0
        %4580 = vmatpush1.msra.mxu0 0.0
        %4581 = vmatprep.subr.mxu0 0.0
        %4582 = vmatpush1.msra.mxu0 0.0
        %4583 = vmatprep.subr.mxu0 0.0
        %4584 = vmatpush1.msra.mxu0 0.0
        %4585 = vmatprep.subr.mxu0 0.0
        %4586 = vmatpush1.msra.mxu0 0.0
        %4587 = vmatprep.subr.mxu0 0.0
        %4588 = vmatpush1.msra.mxu0 0.0
        %4589 = vmatprep.mubr.f32.mxu0 0.0
        %4590 = vmatmul.mubr.f32.gmra.mrb[0].mxu0 %v4383
        %v4591 = vpop.f32.mrb[0].mxu0
        %v4592 = vadd.f32 %v626, %v4591
        %v4593 = vpop.f32.mrb[0].mxu0
        %4594 = vdwg.mxu0
        %v4595 = vld [vmem:[%s404 + $0xe] sm:$0x1]
        %v4596 = vld [vmem:[%s404 + $0x1e] sm:$0x1]
        %v4598 = vrot.slane %v4452, 1
        %v4601 = vadd.f32 %v4595, %v4452
        %v4602 = vadd.f32 %v4596, %v4598
        %v4603 = vxor.u32 %v4601, 2147483648
        %v4604 = vxor.u32 %v4602, 2147483648
        %v4605 = vmul.f32 %v4603, 1.442695
        %v4606 = vpow.pop %v4605
        %v4607 = vmul.f32 %v4604, 1.442695
        %v4608 = vpow.pop %v4607
        %v4609 = vadd.f32 %v4606, 1.0
        %v4610 = vadd.f32 %v4608, 1.0
        %v4611 = vrcp.pop %v4609
        %v4612 = vmul.f32 1.0, %v4611
        %v4613 = vrcp.pop %v4610
        %v4614 = vmul.f32 1.0, %v4613
        %v4615 = vld [vmem:[%s411 + $0xe] sm:$0x1]
        %v4616 = vld [vmem:[%s411 + $0x1e] sm:$0x1]
        %v4618 = vrot.slane %v4522, 1
        %v4621 = vadd.f32 %v4615, %v4522
        %v4622 = vadd.f32 %v4616, %v4618
        %v4623 = vxor.u32 %v4621, 2147483648
        %v4624 = vxor.u32 %v4622, 2147483648
        %v4625 = vmul.f32 %v4623, 1.442695
        %v4626 = vpow.pop %v4625
        %v4627 = vmul.f32 %v4624, 1.442695
        %v4628 = vpow.pop %v4627
        %v4629 = vadd.f32 %v4626, 1.0
        %v4630 = vadd.f32 %v4628, 1.0
        %v4631 = vrcp.pop %v4629
        %v4632 = vmul.f32 1.0, %v4631
        %v4633 = vrcp.pop %v4630
        %v4634 = vmul.f32 1.0, %v4633
        %v4635 = vld [vmem:[%s418 + $0xe] sm:$0x1]
        %v4636 = vld [vmem:[%s418 + $0x1e] sm:$0x1]
        %v4638 = vrot.slane %v4592, 1
        %v4641 = vmul.f32 %v4612, %v4592
        %v4642 = vmul.f32 %v4614, %v4638
        %v4643 = vadd.f32 %v4635, %v4641
        %v4644 = vadd.f32 %v4636, %v4642
        %v4645 = vtanh.pop %v4643
        %v4646 = vtanh.pop %v4644
        %v4647 = vsub.f32 1.0, %v4632
        %v4648 = vsub.f32 1.0, %v4634
        %v4649 = vmul.f32 %v4647, %v4645
        %v4650 = vmul.f32 %v4648, %v4646
        %v4651 = vmul.f32 %v4632, %v4375
        %v4652 = vmul.f32 %v4634, %v4376
        %v4653 = vadd.f32 %v4649, %v4651
        %v4654 = vadd.f32 %v4650, %v4652
        %4655 = vst.msk [vmem:[%s453 + $0xe] sm:$0x1] %vm761, %v4653
        %4656 = vst.msk [vmem:[%s453 + $0x1e] sm:$0x1] %vm761, %v4654
        %v4659 = vrot.slane %v4654, 7
        %v4660 = vsel %vm767, %v4659, %v4653
        %v4661 = vsel %vm478, %v4660, 0
        %4663 = vmatprep.subr.mxu0 0.0
        %4664 = vmatpush1.msra.mxu0 %v465
        %4665 = vmatprep.subr.mxu0 0.0
        %4666 = vmatpush1.msra.mxu0 %v466
        %4667 = vmatprep.subr.mxu0 0.0
        %4668 = vmatpush1.msra.mxu0 %v467
        %4669 = vmatprep.subr.mxu0 0.0
        %4670 = vmatpush1.msra.mxu0 %v468
        %4671 = vmatprep.subr.mxu0 0.0
        %4672 = vmatpush1.msra.mxu0 0.0
        %4673 = vmatprep.subr.mxu0 0.0
        %4674 = vmatpush1.msra.mxu0 0.0
        %4675 = vmatprep.subr.mxu0 0.0
        %4676 = vmatpush1.msra.mxu0 0.0
        %4677 = vmatprep.subr.mxu0 0.0
        %4678 = vmatpush1.msra.mxu0 0.0
        %4679 = vmatprep.subr.mxu0 0.0
        %4680 = vmatpush1.msra.mxu0 0.0
        %4681 = vmatprep.subr.mxu0 0.0
        %4682 = vmatpush1.msra.mxu0 0.0
        %4683 = vmatprep.subr.mxu0 0.0
        %4684 = vmatpush1.msra.mxu0 0.0
        %4685 = vmatprep.subr.mxu0 0.0
        %4686 = vmatpush1.msra.mxu0 0.0
        %4687 = vmatprep.subr.mxu0 0.0
        %4688 = vmatpush1.msra.mxu0 0.0
        %4689 = vmatprep.subr.mxu0 0.0
        %4690 = vmatpush1.msra.mxu0 0.0
        %4691 = vmatprep.subr.mxu0 0.0
        %4692 = vmatpush1.msra.mxu0 0.0
        %4693 = vmatprep.subr.mxu0 0.0
        %4694 = vmatpush1.msra.mxu0 0.0
        %4695 = vmatprep.subr.mxu0 0.0
        %4696 = vmatpush1.msra.mxu0 0.0
        %4697 = vmatprep.subr.mxu0 0.0
        %4698 = vmatpush1.msra.mxu0 0.0
        %4699 = vmatprep.subr.mxu0 0.0
        %4700 = vmatpush1.msra.mxu0 0.0
        %4701 = vmatprep.subr.mxu0 0.0
        %4702 = vmatpush1.msra.mxu0 0.0
        %4703 = vmatprep.subr.mxu0 0.0
        %4704 = vmatpush1.msra.mxu0 0.0
        %4705 = vmatprep.subr.mxu0 0.0
        %4706 = vmatpush1.msra.mxu0 0.0
        %4707 = vmatprep.subr.mxu0 0.0
        %4708 = vmatpush1.msra.mxu0 0.0
        %4709 = vmatprep.subr.mxu0 0.0
        %4710 = vmatpush1.msra.mxu0 0.0
        %4711 = vmatprep.subr.mxu0 0.0
        %4712 = vmatpush1.msra.mxu0 0.0
        %4713 = vmatprep.subr.mxu0 0.0
        %4714 = vmatpush1.msra.mxu0 0.0
        %4715 = vmatprep.subr.mxu0 0.0
        %4716 = vmatpush1.msra.mxu0 0.0
        %4717 = vmatprep.subr.mxu0 0.0
        %4718 = vmatpush1.msra.mxu0 0.0
        %4719 = vmatprep.subr.mxu0 0.0
        %4720 = vmatpush1.msra.mxu0 0.0
        %4721 = vmatprep.subr.mxu0 0.0
        %4722 = vmatpush1.msra.mxu0 0.0
        %4723 = vmatprep.subr.mxu0 0.0
        %4724 = vmatpush1.msra.mxu0 0.0
        %4725 = vmatprep.subr.mxu0 0.0
        %4726 = vmatpush1.msra.mxu0 0.0
        %4727 = vmatprep.mubr.f32.mxu0 0.0
        %4728 = vmatmul.mubr.f32.gmra.mrb[0].mxu0 %v4661
        %v4729 = vpop.f32.mrb[0].mxu0
        %v4730 = vadd.f32 0.0, %v4729
        %v4731 = vpop.f32.mrb[0].mxu0
        %4732 = vdwg.mxu0
        %4733 = vmatprep.subr.mxu0 0.0
        %4734 = vmatpush1.msra.mxu0 %v469
        %4735 = vmatprep.subr.mxu0 0.0
        %4736 = vmatpush1.msra.mxu0 %v470
        %4737 = vmatprep.subr.mxu0 0.0
        %4738 = vmatpush1.msra.mxu0 %v471
        %4739 = vmatprep.subr.mxu0 0.0
        %4740 = vmatpush1.msra.mxu0 %v472
        %4741 = vmatprep.subr.mxu0 0.0
        %4742 = vmatpush1.msra.mxu0 0.0
        %4743 = vmatprep.subr.mxu0 0.0
        %4744 = vmatpush1.msra.mxu0 0.0
        %4745 = vmatprep.subr.mxu0 0.0
        %4746 = vmatpush1.msra.mxu0 0.0
        %4747 = vmatprep.subr.mxu0 0.0
        %4748 = vmatpush1.msra.mxu0 0.0
        %4749 = vmatprep.subr.mxu0 0.0
        %4750 = vmatpush1.msra.mxu0 0.0
        %4751 = vmatprep.subr.mxu0 0.0
        %4752 = vmatpush1.msra.mxu0 0.0
        %4753 = vmatprep.subr.mxu0 0.0
        %4754 = vmatpush1.msra.mxu0 0.0
        %4755 = vmatprep.subr.mxu0 0.0
        %4756 = vmatpush1.msra.mxu0 0.0
        %4757 = vmatprep.subr.mxu0 0.0
        %4758 = vmatpush1.msra.mxu0 0.0
        %4759 = vmatprep.subr.mxu0 0.0
        %4760 = vmatpush1.msra.mxu0 0.0
        %4761 = vmatprep.subr.mxu0 0.0
        %4762 = vmatpush1.msra.mxu0 0.0
        %4763 = vmatprep.subr.mxu0 0.0
        %4764 = vmatpush1.msra.mxu0 0.0
        %4765 = vmatprep.subr.mxu0 0.0
        %4766 = vmatpush1.msra.mxu0 0.0
        %4767 = vmatprep.subr.mxu0 0.0
        %4768 = vmatpush1.msra.mxu0 0.0
        %4769 = vmatprep.subr.mxu0 0.0
        %4770 = vmatpush1.msra.mxu0 0.0
        %4771 = vmatprep.subr.mxu0 0.0
        %4772 = vmatpush1.msra.mxu0 0.0
        %4773 = vmatprep.subr.mxu0 0.0
        %4774 = vmatpush1.msra.mxu0 0.0
        %4775 = vmatprep.subr.mxu0 0.0
        %4776 = vmatpush1.msra.mxu0 0.0
        %4777 = vmatprep.subr.mxu0 0.0
        %4778 = vmatpush1.msra.mxu0 0.0
        %4779 = vmatprep.subr.mxu0 0.0
        %4780 = vmatpush1.msra.mxu0 0.0
        %4781 = vmatprep.subr.mxu0 0.0
        %4782 = vmatpush1.msra.mxu0 0.0
        %4783 = vmatprep.subr.mxu0 0.0
        %4784 = vmatpush1.msra.mxu0 0.0
        %4785 = vmatprep.subr.mxu0 0.0
        %4786 = vmatpush1.msra.mxu0 0.0
        %4787 = vmatprep.subr.mxu0 0.0
        %4788 = vmatpush1.msra.mxu0 0.0
        %4789 = vmatprep.subr.mxu0 0.0
        %4790 = vmatpush1.msra.mxu0 0.0
        %4791 = vmatprep.subr.mxu0 0.0
        %4792 = vmatpush1.msra.mxu0 0.0
        %4793 = vmatprep.subr.mxu0 0.0
        %4794 = vmatpush1.msra.mxu0 0.0
        %4795 = vmatprep.subr.mxu0 0.0
        %4796 = vmatpush1.msra.mxu0 0.0
        %4797 = vmatprep.mubr.f32.mxu0 0.0
        %4798 = vmatmul.mubr.f32.gmra.mrb[0].mxu0 %v4661
        %v4799 = vpop.f32.mrb[0].mxu0
        %v4800 = vadd.f32 0.0, %v4799
        %v4801 = vpop.f32.mrb[0].mxu0
        %4802 = vdwg.mxu0
        %4803 = vmatprep.subr.mxu0 0.0
        %4804 = vmatpush1.msra.mxu0 %v473
        %4805 = vmatprep.subr.mxu0 0.0
        %4806 = vmatpush1.msra.mxu0 %v474
        %4807 = vmatprep.subr.mxu0 0.0
        %4808 = vmatpush1.msra.mxu0 %v475
        %4809 = vmatprep.subr.mxu0 0.0
        %4810 = vmatpush1.msra.mxu0 %v476
        %4811 = vmatprep.subr.mxu0 0.0
        %4812 = vmatpush1.msra.mxu0 0.0
        %4813 = vmatprep.subr.mxu0 0.0
        %4814 = vmatpush1.msra.mxu0 0.0
        %4815 = vmatprep.subr.mxu0 0.0
        %4816 = vmatpush1.msra.mxu0 0.0
        %4817 = vmatprep.subr.mxu0 0.0
        %4818 = vmatpush1.msra.mxu0 0.0
        %4819 = vmatprep.subr.mxu0 0.0
        %4820 = vmatpush1.msra.mxu0 0.0
        %4821 = vmatprep.subr.mxu0 0.0
        %4822 = vmatpush1.msra.mxu0 0.0
        %4823 = vmatprep.subr.mxu0 0.0
        %4824 = vmatpush1.msra.mxu0 0.0
        %4825 = vmatprep.subr.mxu0 0.0
        %4826 = vmatpush1.msra.mxu0 0.0
        %4827 = vmatprep.subr.mxu0 0.0
        %4828 = vmatpush1.msra.mxu0 0.0
        %4829 = vmatprep.subr.mxu0 0.0
        %4830 = vmatpush1.msra.mxu0 0.0
        %4831 = vmatprep.subr.mxu0 0.0
        %4832 = vmatpush1.msra.mxu0 0.0
        %4833 = vmatprep.subr.mxu0 0.0
        %4834 = vmatpush1.msra.mxu0 0.0
        %4835 = vmatprep.subr.mxu0 0.0
        %4836 = vmatpush1.msra.mxu0 0.0
        %4837 = vmatprep.subr.mxu0 0.0
        %4838 = vmatpush1.msra.mxu0 0.0
        %4839 = vmatprep.subr.mxu0 0.0
        %4840 = vmatpush1.msra.mxu0 0.0
        %4841 = vmatprep.subr.mxu0 0.0
        %4842 = vmatpush1.msra.mxu0 0.0
        %4843 = vmatprep.subr.mxu0 0.0
        %4844 = vmatpush1.msra.mxu0 0.0
        %4845 = vmatprep.subr.mxu0 0.0
        %4846 = vmatpush1.msra.mxu0 0.0
        %4847 = vmatprep.subr.mxu0 0.0
        %4848 = vmatpush1.msra.mxu0 0.0
        %4849 = vmatprep.subr.mxu0 0.0
        %4850 = vmatpush1.msra.mxu0 0.0
        %4851 = vmatprep.subr.mxu0 0.0
        %4852 = vmatpush1.msra.mxu0 0.0
        %4853 = vmatprep.subr.mxu0 0.0
        %4854 = vmatpush1.msra.mxu0 0.0
        %4855 = vmatprep.subr.mxu0 0.0
        %4856 = vmatpush1.msra.mxu0 0.0
        %4857 = vmatprep.subr.mxu0 0.0
        %4858 = vmatpush1.msra.mxu0 0.0
        %4859 = vmatprep.subr.mxu0 0.0
        %4860 = vmatpush1.msra.mxu0 0.0
        %4861 = vmatprep.subr.mxu0 0.0
        %4862 = vmatpush1.msra.mxu0 0.0
        %4863 = vmatprep.subr.mxu0 0.0
        %4864 = vmatpush1.msra.mxu0 0.0
        %4865 = vmatprep.subr.mxu0 0.0
        %4866 = vmatpush1.msra.mxu0 0.0
        %4867 = vmatprep.mubr.f32.mxu0 0.0
        %4868 = vmatmul.mubr.f32.gmra.mrb[0].mxu0 %v4661
        %v4869 = vpop.f32.mrb[0].mxu0
        %v4870 = vadd.f32 %v626, %v4869
        %v4871 = vpop.f32.mrb[0].mxu0
        %4872 = vdwg.mxu0
        %v4873 = vld [vmem:[%s404 + $0xf] sm:$0x1]
        %v4874 = vld [vmem:[%s404 + $0x1f] sm:$0x1]
        %v4876 = vrot.slane %v4730, 1
        %v4879 = vadd.f32 %v4873, %v4730
        %v4880 = vadd.f32 %v4874, %v4876
        %v4881 = vxor.u32 %v4879, 2147483648
        %v4882 = vxor.u32 %v4880, 2147483648
        %v4883 = vmul.f32 %v4881, 1.442695
        %v4884 = vpow.pop %v4883
        %v4885 = vmul.f32 %v4882, 1.442695
        %v4886 = vpow.pop %v4885
        %v4887 = vadd.f32 %v4884, 1.0
        %v4888 = vadd.f32 %v4886, 1.0
        %v4889 = vrcp.pop %v4887
        %v4890 = vmul.f32 1.0, %v4889
        %v4891 = vrcp.pop %v4888
        %v4892 = vmul.f32 1.0, %v4891
        %v4893 = vld [vmem:[%s411 + $0xf] sm:$0x1]
        %v4894 = vld [vmem:[%s411 + $0x1f] sm:$0x1]
        %v4896 = vrot.slane %v4800, 1
        %v4899 = vadd.f32 %v4893, %v4800
        %v4900 = vadd.f32 %v4894, %v4896
        %v4901 = vxor.u32 %v4899, 2147483648
        %v4902 = vxor.u32 %v4900, 2147483648
        %v4903 = vmul.f32 %v4901, 1.442695
        %v4904 = vpow.pop %v4903
        %v4905 = vmul.f32 %v4902, 1.442695
        %v4906 = vpow.pop %v4905
        %v4907 = vadd.f32 %v4904, 1.0
        %v4908 = vadd.f32 %v4906, 1.0
        %v4909 = vrcp.pop %v4907
        %v4910 = vmul.f32 1.0, %v4909
        %v4911 = vrcp.pop %v4908
        %v4912 = vmul.f32 1.0, %v4911
        %v4913 = vld [vmem:[%s418 + $0xf] sm:$0x1]
        %v4914 = vld [vmem:[%s418 + $0x1f] sm:$0x1]
        %v4916 = vrot.slane %v4870, 1
        %v4919 = vmul.f32 %v4890, %v4870
        %v4920 = vmul.f32 %v4892, %v4916
        %v4921 = vadd.f32 %v4913, %v4919
        %v4922 = vadd.f32 %v4914, %v4920
        %v4923 = vtanh.pop %v4921
        %v4924 = vtanh.pop %v4922
        %v4925 = vsub.f32 1.0, %v4910
        %v4926 = vsub.f32 1.0, %v4912
        %v4927 = vmul.f32 %v4925, %v4923
        %v4928 = vmul.f32 %v4926, %v4924
        %v4929 = vmul.f32 %v4910, %v4653
        %v4930 = vmul.f32 %v4912, %v4654
        %v4931 = vadd.f32 %v4927, %v4929
        %v4932 = vadd.f32 %v4928, %v4930
        %4933 = vst.msk [vmem:[%s453 + $0xf] sm:$0x1] %vm761, %v4931
        %4934 = vst.msk [vmem:[%s453 + $0x1f] sm:$0x1] %vm761, %v4932
        %v4937 = vrot.slane %v4932, 7
        %v4938 = vsel %vm767, %v4937, %v4931
        %vm4940 = vcmask 254976
        %4941 = vst.msk [vmem:[#allocation2] sm:$0x3] %vm4940, %v4938
        %s4942 = sand.u32 %s188, 1
        %s4943 = sand.u32 %s188, 1
        %s4944 = smul.addr %s4943, 32
        %s4945 = scalar_lea.vmem [#allocation6], %s4944
        // Predicated region
        $region167: #{model_forward.4} parent=149 // pred_check
          %p4946 = pneg %p198
        $region168: #{model_forward.4} parent=149 // pred_check_branch
          %4948 = sbr.rel (%p4946) target = $region170
        $region169: #{model_forward.4} parent=149 // pred_region
          %s4949 = smul.u32 2, %s18
          %s4950 = smul.addr %s4949, 8
          %s4951 = scalar_lea.vmem %s7, %s4950
          // Predicated region
          $region171: #{model_forward.4} parent=169 // pred_check
            _
          $region172: #{model_forward.4} parent=169 // pred_check_branch
            %4953 = sbr.rel (0) target = $region174
          $region173: #{model_forward.4} parent=169 // pred_region
            // Predicated region
            $region175: #{model_forward.4} parent=173 // pred_check
              _
            $region176: #{model_forward.4} parent=173 // pred_check_branch
              %4955 = sbr.rel (0) target = $region178
            $region177: #{model_forward.4} parent=173 // pred_region
              // Predicated region
              $region190: #{model_forward.4} parent=177 // pred_check
                _
              $region191: #{model_forward.4} parent=177 // pred_check_branch
                %4976 = sbr.rel (0) target = $region193
              $region192: #{model_forward.4} parent=177 // pred_region
                loop: start=0, step=1, limit=1
                $region194: #{model_forward.4} parent=192 // loop_pre_header
                  _
                $region195: #{model_forward.4} parent=192 // loop_header
                  %s4978 = sphi 0, %s4982
                  %p4979 = scmp.ge.s32.totalorder %s4978, 1
                  %s4983 = sphi %s4945, %s4945
                  %s4984 = sphi %s4951, %s4951
                $region196: #{model_forward.4} parent=192 // loop_header_branch
                  %4981 = sbr.rel (%p4979) target = $region200
                $region197: #{model_forward.4} parent=192 // loop_body
                  %v4985 = vld [vmem:[%s4983] sm:$0xff]
                  %4986 = vst [vmem:[%s4984] sm:$0xff] %v4985
                  %v4987 = vld [vmem:[%s4983 + $0x8] sm:$0xff]
                  %4988 = vst [vmem:[%s4984 + $0x8] sm:$0xff] %v4987
                  %v4989 = vld [vmem:[%s4983 + $0x10] sm:$0xff]
                  %4990 = vst [vmem:[%s4984 + $0x20] sm:$0xff] %v4989
                  %v4991 = vld [vmem:[%s4983 + $0x18] sm:$0xff]
                  %4992 = vst [vmem:[%s4984 + $0x28] sm:$0xff] %v4991
                $region198: #{model_forward.4} parent=192 // loop_footer
                  %s4982 = sadd.s32 1, %s4978
                $region199: #{model_forward.4} parent=192 // loop_footer_branch
                  %4977 = sbr.rel target = $region195
                $region200: #{model_forward.4} parent=192 // loop_exit
                  _
              $region193: #{model_forward.4} parent=177 // pred_fallthru
                _
              // Predicated region
              $region201: #{model_forward.4} parent=177 // pred_check
                _
              $region202: #{model_forward.4} parent=177 // pred_check_branch
                %4994 = sbr.rel target = $region204
              $region203: #{model_forward.4} parent=177 // pred_region
                _
              $region204: #{model_forward.4} parent=177 // pred_fallthru
                _
            $region178: #{model_forward.4} parent=173 // pred_fallthru
              _
            // Predicated region
            $region179: #{model_forward.4} parent=173 // pred_check
              _
            $region180: #{model_forward.4} parent=173 // pred_check_branch
              %4957 = sbr.rel target = $region182
            $region181: #{model_forward.4} parent=173 // pred_region
              loop: start=0, step=1, limit=1
              $region183: #{model_forward.4} parent=181 // loop_pre_header
                _
              $region184: #{model_forward.4} parent=181 // loop_header
                %s4960 = sphi 0, %s4964
                %p4961 = scmp.ge.s32.totalorder %s4960, 1
                %s4965 = sphi %s4945, %s4945
                %s4966 = sphi %s4951, %s4951
              $region185: #{model_forward.4} parent=181 // loop_header_branch
                %4963 = sbr.rel (%p4961) target = $region189
              $region186: #{model_forward.4} parent=181 // loop_body
                %v4967 = vld [vmem:[%s4965] sm:$0xff]
                %4968 = vst [vmem:[%s4966] sm:$0xff] %v4967
                %v4969 = vld [vmem:[%s4965 + $0x8] sm:$0xff]
                %4970 = vst [vmem:[%s4966 + $0x8] sm:$0xff] %v4969
                %v4971 = vld [vmem:[%s4965 + $0x10] sm:$0xff]
                %4972 = vst [vmem:[%s4966 + $0x20] sm:$0xff] %v4971
                %v4973 = vld [vmem:[%s4965 + $0x18] sm:$0xff]
                %4974 = vst [vmem:[%s4966 + $0x28] sm:$0xff] %v4973
              $region187: #{model_forward.4} parent=181 // loop_footer
                %s4964 = sadd.s32 1, %s4960
              $region188: #{model_forward.4} parent=181 // loop_footer_branch
                %4959 = sbr.rel target = $region184
              $region189: #{model_forward.4} parent=181 // loop_exit
                _
            $region182: #{model_forward.4} parent=173 // pred_fallthru
              _
          $region174: #{model_forward.4} parent=169 // pred_fallthru
            _
          %4995 = vnop
        $region170: #{model_forward.4} parent=149 // pred_fallthru
          _
      $region150: #{model_forward.4} parent=5 // pred_fallthru
        _
      %p4996 = scmp.le.s32.totalorder 2, %s13
      // Predicated region
      $region205: #{model_forward.4} parent=5 // pred_check
        %p4997 = pneg %p4996
      $region206: #{model_forward.4} parent=5 // pred_check_branch
        %4999 = sbr.rel (%p4997) target = $region208
      $region207: #{model_forward.4} parent=5 // pred_region
        %s5000 = ssub.s32 %s13, 2
        // Predicated region
        $region209: #{model_forward.4} parent=207 // pred_check
          %p5001 = pneg %p204
        $region210: #{model_forward.4} parent=207 // pred_check_branch
          %5003 = sbr.rel (%p5001) target = $region212
        $region211: #{model_forward.4} parent=207 // pred_region
          %s5004 = sand.u32 %s189, 1
          %s5005 = sand.u32 %s189, 1
          %s5006 = smul.addr %s5005, 32
          %s5007 = scalar_lea.vmem [#allocation6], %s5006
        $region212: #{model_forward.4} parent=207 // pred_fallthru
          _
      $region208: #{model_forward.4} parent=5 // pred_fallthru
        _
    $region6: #{model_forward.4} parent=1 // loop_footer
      %s17 = sadd.s32 1, %s13
    $region7: #{model_forward.4} parent=1 // loop_footer_branch
      %12 = sbr.rel target = $region3
    $region8: #{model_forward.4} parent=1 // loop_exit
      _

</llo_original>
